<compile_context>
chip_gen: v6e
topology: v6e:2x2x1
jax: 0.10.0
libtpu: 0.0.40
codegen_flags: <defaults>
</compile_context>

<pallas_src>
import math

import jax
import jax.numpy as jnp
import numpy as np
from jax.experimental import pallas as pl
from jax.experimental.pallas import tpu as pltpu


# ---------------------------------------------------------------------------
# Fused kernel: x (T*B_pad, D) time-major padded -> out (B, output_dim).
# ---------------------------------------------------------------------------
def _make_fused_kernel(T, B_pad, H, num_lstm_layers, num_mlp_layers):
    NG = 4  # LSTM gates, order (i, f, g, o); g is the tanh cell candidate.

    def kernel(*refs):
        idx = 0
        x_ref = refs[idx]; idx += 1                                    # (T*B_pad, D)
        lstm_refs = refs[idx: idx + 3 * NG * num_lstm_layers]
        idx += 3 * NG * num_lstm_layers
        mlp_refs = refs[idx: idx + 2 * num_mlp_layers]
        idx += 2 * num_mlp_layers
        out_ref = refs[idx]; idx += 1
        proj_scr = refs[idx: idx + NG]                                 # NG x (T*B_pad, H)

        def layer_weights(layer):
            base = 3 * NG * layer
            w_ih = [lstm_refs[base + g][...] for g in range(NG)]           # (D_in, H)
            w_hh = [lstm_refs[base + NG + g][...] for g in range(NG)]      # (H, H)
            b = [lstm_refs[base + 2 * NG + g][...] for g in range(NG)]     # (1, H)
            return w_ih, w_hh, b

        def cell(pre_i, pre_f, pre_g, pre_o, c_prev):
            i_t = jax.nn.sigmoid(pre_i)
            f_t = jax.nn.sigmoid(pre_f)
            g_t = jnp.tanh(pre_g)
            o_t = jax.nn.sigmoid(pre_o)
            c_new = f_t * c_prev + i_t * g_t
            h_new = o_t * jnp.tanh(c_new)
            return h_new, c_new

        # ---- Layer 0: hoist the x-projection for the whole sequence, per gate,
        # off the serial recurrent chain. Each gate lands at lane offset 0. -----
        w_ih0, w_hh0, b0 = layer_weights(0)
        x_all = x_ref[...]                                             # (T*B_pad, D)
        for g in range(NG):
            proj_scr[g][...] = (
                jnp.dot(x_all, w_ih0[g], preferred_element_type=jnp.float32) + b0[g])

        # Upper-layer weights read once; biases broadcast once (hoisted out of loop).
        upper = [layer_weights(l) for l in range(1, num_lstm_layers)]
        upper_bias = [[jnp.broadcast_to(b[g], (B_pad, H)) for g in range(NG)]
                      for (_, _, b) in upper]

        zero = jnp.zeros((B_pad, H), jnp.float32)
        h = [zero] * num_lstm_layers
        c = [zero] * num_lstm_layers

        # ---- Wavefront time loop: every layer advances one step per iteration.
        # Statically unrolled (T is small here); h/c stay as register values.
        # TODO(synk): for production T switch to lax.fori_loop(..., unroll=4..8)
        #             and chunk the hoisted projection over T (v7x 64 MiB VMEM).
        # TODO(synk): for v6e/v7x production shapes, feed bf16 weights to the dots
        #             (keep f32 gate math) and consider pltpu.matmul_push_rhs to
        #             stage the loop-invariant W_hh across all T steps.
        for t in range(T):
            row = t * B_pad                                            # 8-aligned
            pre = [proj_scr[g][row:row + B_pad, :]
                   + jnp.dot(h[0], w_hh0[g], preferred_element_type=jnp.float32)
                   for g in range(NG)]
            h[0], c[0] = cell(pre[0], pre[1], pre[2], pre[3], c[0])

            for l in range(1, num_lstm_layers):
                w_ih, w_hh, _ = upper[l - 1]
                bias = upper_bias[l - 1]
                below = h[l - 1]
                pre = [jnp.dot(below, w_ih[g], preferred_element_type=jnp.float32)
                       + bias[g]
                       + jnp.dot(h[l], w_hh[g], preferred_element_type=jnp.float32)
                       for g in range(NG)]
                h[l], c[l] = cell(pre[0], pre[1], pre[2], pre[3], c[l])

        # ---- MLP head on r_out[:, -1, :] == last layer's final hidden state ----
        z = h[-1]                                                      # (B_pad, H)
        for m in range(num_mlp_layers):
            w = mlp_refs[2 * m][...]
            b = mlp_refs[2 * m + 1][...]
            z = jnp.dot(z, w, preferred_element_type=jnp.float32) + b
            if m < num_mlp_layers - 1:
                z = jnp.maximum(z, 0.0)
        out_ref[...] = z[:out_ref.shape[0], :]

    return kernel


@jax.jit
def lstm_model_abc_forward(x_btd, packed):
    """x_btd: (B, T, D) batch-first. packed: output of pack_kernel_params."""
    B, T, D = x_btd.shape
    lstm_flat = list(packed["lstm"])
    mlp_flat = list(packed["mlp"])
    H = lstm_flat[4].shape[0]            # layer-0 W_hh_i is (H, H)
    L = len(lstm_flat) // 12
    M = len(mlp_flat) // 2
    out_dim = mlp_flat[-2].shape[1]
    B_pad = ((B + 7) // 8) * 8           # pad batch to a sublane multiple

    # One-time relayout of the tiny raw input outside Mosaic:
    # (B,T,D) batch-first -> (T, B_pad, D) time-major, zero-padded batch rows.
    x_tm = jnp.transpose(x_btd, (1, 0, 2)).astype(jnp.float32)
    x_pad = jnp.pad(x_tm, ((0, 0), (0, B_pad - B), (0, 0)))
    x_flat = x_pad.reshape(T * B_pad, D)

    vmem = pltpu.MemorySpace.VMEM
    n_in = 1 + len(lstm_flat) + len(mlp_flat)
    return pl.pallas_call(
        _make_fused_kernel(T, B_pad, H, L, M),
        out_shape=jax.ShapeDtypeStruct((B, out_dim), jnp.float32),
        in_specs=[pl.BlockSpec(memory_space=vmem)] * n_in,
        out_specs=pl.BlockSpec(memory_space=vmem),
        scratch_shapes=[pltpu.VMEM((T * B_pad, H), jnp.float32) for _ in range(4)],
        # TODO(synk): when B grows (v7x megacore), add a batch grid axis with
        #             dimension_semantics=("parallel",) so both TensorCores are used.
    )(x_flat, *lstm_flat, *mlp_flat)


# ---------------------------------------------------------------------------
# Parameter construction (matches module __init__) and kernel-layout packing.
# ---------------------------------------------------------------------------
def init_params(key, input_dim, hidden_dim, layer_dim, output_dim,
                mlp_hidden_dim_list=(32, 16, 32)):
    """PyTorch-convention params: LSTM gate order [i, f, g, o], weights transposed."""
    params = {"lstm": [], "mlp": []}
    for layer in range(layer_dim):
        d_in = input_dim if layer == 0 else hidden_dim
        key, k1, k2 = jax.random.split(key, 3)
        # xavier_normal_ on PyTorch shapes (4H, d_in) / (4H, H); zero biases.
        std_ih = math.sqrt(2.0 / (4 * hidden_dim + d_in))
        std_hh = math.sqrt(2.0 / (4 * hidden_dim + hidden_dim))
        w_ih = (jax.random.normal(k1, (4 * hidden_dim, d_in), jnp.float32) * std_ih).T
        w_hh = (jax.random.normal(k2, (4 * hidden_dim, hidden_dim), jnp.float32) * std_hh).T
        b = jnp.zeros((1, 4 * hidden_dim), jnp.float32)   # b_ih + b_hh, both zero
        params["lstm"].append((w_ih, w_hh, b))

    dims = [hidden_dim] + list(mlp_hidden_dim_list) + [output_dim]
    for i in range(len(dims) - 1):
        key, k1, k2 = jax.random.split(key, 3)
        bound = 1.0 / math.sqrt(dims[i])                  # nn.Linear default init scale
        w = jax.random.uniform(k1, (dims[i], dims[i + 1]), jnp.float32,
                               minval=-bound, maxval=bound)
        bias = jax.random.uniform(k2, (1, dims[i + 1]), jnp.float32,
                                  minval=-bound, maxval=bound)
        params["mlp"].append((w, bias))
    return params


def pack_kernel_params(params, hidden_dim):
    """Split LSTM weights/biases per gate (i, f, g, o) so the kernel never slices
    sub-128-lane gate columns inside the recurrent loop."""
    H = hidden_dim
    lstm_flat = []
    for (w_ih, w_hh, b) in params["lstm"]:
        lstm_flat += [w_ih[:, g * H:(g + 1) * H] for g in range(4)]
        lstm_flat += [w_hh[:, g * H:(g + 1) * H] for g in range(4)]
        lstm_flat += [b[:, g * H:(g + 1) * H] for g in range(4)]
    mlp_flat = [a for layer in params["mlp"] for a in layer]
    return {"lstm": lstm_flat, "mlp": mlp_flat}


# ---------------------------------------------------------------------------
# Pure-JAX reference (PyTorch gate order) for correctness checking.
# ---------------------------------------------------------------------------
def reference_forward(x_btd, params):
    hp = jax.lax.Precision.HIGHEST     # full-f32 matmuls, comparable to the kernel
    h_seq = jnp.transpose(x_btd, (1, 0, 2))
    for (w_ih, w_hh, b) in params["lstm"]:
        T, B, _ = h_seq.shape
        H = w_hh.shape[0]
        h = jnp.zeros((B, H), jnp.float32)
        c = jnp.zeros((B, H), jnp.float32)
        outs = []
        for t in range(T):
            gates = (jnp.dot(h_seq[t], w_ih, precision=hp)
                     + jnp.dot(h, w_hh, precision=hp) + b)
            i = jax.nn.sigmoid(gates[:, 0 * H:1 * H])
            f = jax.nn.sigmoid(gates[:, 1 * H:2 * H])
            g = jnp.tanh(gates[:, 2 * H:3 * H])
            o = jax.nn.sigmoid(gates[:, 3 * H:4 * H])
            c = f * c + i * g
            h = o * jnp.tanh(c)
            outs.append(h)
        h_seq = jnp.stack(outs, axis=0)
    out = h_seq[-1]
    n = len(params["mlp"])
    for idx, (w, bias) in enumerate(params["mlp"]):
        out = jnp.dot(out, w, precision=hp) + bias
        if idx < n - 1:
            out = jnp.maximum(out, 0.0)
    return out


if __name__ == "__main__":
    # Small shapes consistent with the module's forward.
    B, T, D = 2, 8, 4            # batch, seq_len, input_dim
    H, L, O = 32, 2, 4           # hidden_dim, layer_dim, output_dim

    key = jax.random.PRNGKey(0)
    key, kx, kp = jax.random.split(key, 3)
    x = jax.random.normal(kx, (B, T, D), jnp.float32)    # (B, T, D) batch_first
    params = init_params(kp, D, H, L, O)
    kparams = pack_kernel_params(params, H)

    out = lstm_model_abc_forward(x, kparams)
    out = jax.block_until_ready(out)
    assert out.shape == (B, O), out.shape

    ref = reference_forward(x, params)
    # Tolerance covers Mosaic-vs-XLA transcendental / f32 matmul-pass differences.
    np.testing.assert_allclose(np.asarray(out), np.asarray(ref),
                               rtol=1e-3, atol=1e-3)
    print("KERNEL_OK")
</pallas_src>

<mosaic_0001>
module attributes {stable_mosaic.version = 11 : i64} {
  func.func @kernel(%arg0: memref<64x4xf32, #tpu.memory_space<vmem>>, %arg1: memref<4x32xf32, #tpu.memory_space<vmem>>, %arg2: memref<4x32xf32, #tpu.memory_space<vmem>>, %arg3: memref<4x32xf32, #tpu.memory_space<vmem>>, %arg4: memref<4x32xf32, #tpu.memory_space<vmem>>, %arg5: memref<32x32xf32, #tpu.memory_space<vmem>>, %arg6: memref<32x32xf32, #tpu.memory_space<vmem>>, %arg7: memref<32x32xf32, #tpu.memory_space<vmem>>, %arg8: memref<32x32xf32, #tpu.memory_space<vmem>>, %arg9: memref<1x32xf32, #tpu.memory_space<vmem>>, %arg10: memref<1x32xf32, #tpu.memory_space<vmem>>, %arg11: memref<1x32xf32, #tpu.memory_space<vmem>>, %arg12: memref<1x32xf32, #tpu.memory_space<vmem>>, %arg13: memref<32x32xf32, #tpu.memory_space<vmem>>, %arg14: memref<32x32xf32, #tpu.memory_space<vmem>>, %arg15: memref<32x32xf32, #tpu.memory_space<vmem>>, %arg16: memref<32x32xf32, #tpu.memory_space<vmem>>, %arg17: memref<32x32xf32, #tpu.memory_space<vmem>>, %arg18: memref<32x32xf32, #tpu.memory_space<vmem>>, %arg19: memref<32x32xf32, #tpu.memory_space<vmem>>, %arg20: memref<32x32xf32, #tpu.memory_space<vmem>>, %arg21: memref<1x32xf32, #tpu.memory_space<vmem>>, %arg22: memref<1x32xf32, #tpu.memory_space<vmem>>, %arg23: memref<1x32xf32, #tpu.memory_space<vmem>>, %arg24: memref<1x32xf32, #tpu.memory_space<vmem>>, %arg25: memref<32x32xf32, #tpu.memory_space<vmem>>, %arg26: memref<1x32xf32, #tpu.memory_space<vmem>>, %arg27: memref<32x16xf32, #tpu.memory_space<vmem>>, %arg28: memref<1x16xf32, #tpu.memory_space<vmem>>, %arg29: memref<16x32xf32, #tpu.memory_space<vmem>>, %arg30: memref<1x32xf32, #tpu.memory_space<vmem>>, %arg31: memref<32x4xf32, #tpu.memory_space<vmem>>, %arg32: memref<1x4xf32, #tpu.memory_space<vmem>>, %arg33: memref<2x4xf32, #tpu.memory_space<vmem>>, %arg34: memref<64x32xf32, #tpu.memory_space<vmem>>, %arg35: memref<64x32xf32, #tpu.memory_space<vmem>>, %arg36: memref<64x32xf32, #tpu.memory_space<vmem>>, %arg37: memref<64x32xf32, #tpu.memory_space<vmem>>) attributes {dimension_semantics = [], scalar_prefetch = 0 : i64, scratch_operands = 4 : i64, tpu.core_type = #tpu.core_type<tc>} {
    %c0 = arith.constant 0 : index
    %c0_0 = arith.constant 0 : index
    %0 = vector.load %arg1[%c0, %c0_0] : memref<4x32xf32, #tpu.memory_space<vmem>>, vector<4x32xf32>
    %c0_1 = arith.constant 0 : index
    %c0_2 = arith.constant 0 : index
    %1 = vector.load %arg2[%c0_1, %c0_2] : memref<4x32xf32, #tpu.memory_space<vmem>>, vector<4x32xf32>
    %c0_3 = arith.constant 0 : index
    %c0_4 = arith.constant 0 : index
    %2 = vector.load %arg3[%c0_3, %c0_4] : memref<4x32xf32, #tpu.memory_space<vmem>>, vector<4x32xf32>
    %c0_5 = arith.constant 0 : index
    %c0_6 = arith.constant 0 : index
    %3 = vector.load %arg4[%c0_5, %c0_6] : memref<4x32xf32, #tpu.memory_space<vmem>>, vector<4x32xf32>
    %c0_7 = arith.constant 0 : index
    %c0_8 = arith.constant 0 : index
    %4 = vector.load %arg5[%c0_7, %c0_8] : memref<32x32xf32, #tpu.memory_space<vmem>>, vector<32x32xf32>
    %c0_9 = arith.constant 0 : index
    %c0_10 = arith.constant 0 : index
    %5 = vector.load %arg6[%c0_9, %c0_10] : memref<32x32xf32, #tpu.memory_space<vmem>>, vector<32x32xf32>
    %c0_11 = arith.constant 0 : index
    %c0_12 = arith.constant 0 : index
    %6 = vector.load %arg7[%c0_11, %c0_12] : memref<32x32xf32, #tpu.memory_space<vmem>>, vector<32x32xf32>
    %c0_13 = arith.constant 0 : index
    %c0_14 = arith.constant 0 : index
    %7 = vector.load %arg8[%c0_13, %c0_14] : memref<32x32xf32, #tpu.memory_space<vmem>>, vector<32x32xf32>
    %c0_15 = arith.constant 0 : index
    %c0_16 = arith.constant 0 : index
    %8 = vector.load %arg9[%c0_15, %c0_16] : memref<1x32xf32, #tpu.memory_space<vmem>>, vector<1x32xf32>
    %c0_17 = arith.constant 0 : index
    %c0_18 = arith.constant 0 : index
    %9 = vector.load %arg10[%c0_17, %c0_18] : memref<1x32xf32, #tpu.memory_space<vmem>>, vector<1x32xf32>
    %c0_19 = arith.constant 0 : index
    %c0_20 = arith.constant 0 : index
    %10 = vector.load %arg11[%c0_19, %c0_20] : memref<1x32xf32, #tpu.memory_space<vmem>>, vector<1x32xf32>
    %c0_21 = arith.constant 0 : index
    %c0_22 = arith.constant 0 : index
    %11 = vector.load %arg12[%c0_21, %c0_22] : memref<1x32xf32, #tpu.memory_space<vmem>>, vector<1x32xf32>
    %c0_23 = arith.constant 0 : index
    %c0_24 = arith.constant 0 : index
    %12 = vector.load %arg0[%c0_23, %c0_24] : memref<64x4xf32, #tpu.memory_space<vmem>>, vector<64x4xf32>
    %cst = arith.constant dense<0.000000e+00> : vector<64x32xf32>
    %13 = tpu.matmul %12, %0, %cst {dimension_numbers = #tpu.dot_dimension_numbers<[1], [0], [0], [1], [0, 0, 1, 1], [], []>} : vector<64x4xf32>, vector<4x32xf32>, vector<64x32xf32> -> vector<64x32xf32>
    %14 = vector.broadcast %8 : vector<1x32xf32> to vector<64x32xf32>
    %15 = arith.addf %13, %14 : vector<64x32xf32>
    %c0_25 = arith.constant 0 : index
    %c0_26 = arith.constant 0 : index
    %16 = vector.load %arg34[%c0_25, %c0_26] : memref<64x32xf32, #tpu.memory_space<vmem>>, vector<64x32xf32>
    tpu.vector_store %arg34[%c0_25, %c0_26], %15 {strides = array<i32>} : memref<64x32xf32, #tpu.memory_space<vmem>>, vector<64x32xf32>,
    %cst_27 = arith.constant dense<0.000000e+00> : vector<64x32xf32>
    %17 = tpu.matmul %12, %1, %cst_27 {dimension_numbers = #tpu.dot_dimension_numbers<[1], [0], [0], [1], [0, 0, 1, 1], [], []>} : vector<64x4xf32>, vector<4x32xf32>, vector<64x32xf32> -> vector<64x32xf32>
    %18 = vector.broadcast %9 : vector<1x32xf32> to vector<64x32xf32>
    %19 = arith.addf %17, %18 : vector<64x32xf32>
    %c0_28 = arith.constant 0 : index
    %c0_29 = arith.constant 0 : index
    %20 = vector.load %arg35[%c0_28, %c0_29] : memref<64x32xf32, #tpu.memory_space<vmem>>, vector<64x32xf32>
    tpu.vector_store %arg35[%c0_28, %c0_29], %19 {strides = array<i32>} : memref<64x32xf32, #tpu.memory_space<vmem>>, vector<64x32xf32>,
    %cst_30 = arith.constant dense<0.000000e+00> : vector<64x32xf32>
    %21 = tpu.matmul %12, %2, %cst_30 {dimension_numbers = #tpu.dot_dimension_numbers<[1], [0], [0], [1], [0, 0, 1, 1], [], []>} : vector<64x4xf32>, vector<4x32xf32>, vector<64x32xf32> -> vector<64x32xf32>
    %22 = vector.broadcast %10 : vector<1x32xf32> to vector<64x32xf32>
    %23 = arith.addf %21, %22 : vector<64x32xf32>
    %c0_31 = arith.constant 0 : index
    %c0_32 = arith.constant 0 : index
    %24 = vector.load %arg36[%c0_31, %c0_32] : memref<64x32xf32, #tpu.memory_space<vmem>>, vector<64x32xf32>
    tpu.vector_store %arg36[%c0_31, %c0_32], %23 {strides = array<i32>} : memref<64x32xf32, #tpu.memory_space<vmem>>, vector<64x32xf32>,
    %cst_33 = arith.constant dense<0.000000e+00> : vector<64x32xf32>
    %25 = tpu.matmul %12, %3, %cst_33 {dimension_numbers = #tpu.dot_dimension_numbers<[1], [0], [0], [1], [0, 0, 1, 1], [], []>} : vector<64x4xf32>, vector<4x32xf32>, vector<64x32xf32> -> vector<64x32xf32>
    %26 = vector.broadcast %11 : vector<1x32xf32> to vector<64x32xf32>
    %27 = arith.addf %25, %26 : vector<64x32xf32>
    %c0_34 = arith.constant 0 : index
    %c0_35 = arith.constant 0 : index
    %28 = vector.load %arg37[%c0_34, %c0_35] : memref<64x32xf32, #tpu.memory_space<vmem>>, vector<64x32xf32>
    tpu.vector_store %arg37[%c0_34, %c0_35], %27 {strides = array<i32>} : memref<64x32xf32, #tpu.memory_space<vmem>>, vector<64x32xf32>,
    %c0_36 = arith.constant 0 : index
    %c0_37 = arith.constant 0 : index
    %29 = vector.load %arg13[%c0_36, %c0_37] : memref<32x32xf32, #tpu.memory_space<vmem>>, vector<32x32xf32>
    %c0_38 = arith.constant 0 : index
    %c0_39 = arith.constant 0 : index
    %30 = vector.load %arg14[%c0_38, %c0_39] : memref<32x32xf32, #tpu.memory_space<vmem>>, vector<32x32xf32>
    %c0_40 = arith.constant 0 : index
    %c0_41 = arith.constant 0 : index
    %31 = vector.load %arg15[%c0_40, %c0_41] : memref<32x32xf32, #tpu.memory_space<vmem>>, vector<32x32xf32>
    %c0_42 = arith.constant 0 : index
    %c0_43 = arith.constant 0 : index
    %32 = vector.load %arg16[%c0_42, %c0_43] : memref<32x32xf32, #tpu.memory_space<vmem>>, vector<32x32xf32>
    %c0_44 = arith.constant 0 : index
    %c0_45 = arith.constant 0 : index
    %33 = vector.load %arg17[%c0_44, %c0_45] : memref<32x32xf32, #tpu.memory_space<vmem>>, vector<32x32xf32>
    %c0_46 = arith.constant 0 : index
    %c0_47 = arith.constant 0 : index
    %34 = vector.load %arg18[%c0_46, %c0_47] : memref<32x32xf32, #tpu.memory_space<vmem>>, vector<32x32xf32>
    %c0_48 = arith.constant 0 : index
    %c0_49 = arith.constant 0 : index
    %35 = vector.load %arg19[%c0_48, %c0_49] : memref<32x32xf32, #tpu.memory_space<vmem>>, vector<32x32xf32>
    %c0_50 = arith.constant 0 : index
    %c0_51 = arith.constant 0 : index
    %36 = vector.load %arg20[%c0_50, %c0_51] : memref<32x32xf32, #tpu.memory_space<vmem>>, vector<32x32xf32>
    %c0_52 = arith.constant 0 : index
    %c0_53 = arith.constant 0 : index
    %37 = vector.load %arg21[%c0_52, %c0_53] : memref<1x32xf32, #tpu.memory_space<vmem>>, vector<1x32xf32>
    %c0_54 = arith.constant 0 : index
    %c0_55 = arith.constant 0 : index
    %38 = vector.load %arg22[%c0_54, %c0_55] : memref<1x32xf32, #tpu.memory_space<vmem>>, vector<1x32xf32>
    %c0_56 = arith.constant 0 : index
    %c0_57 = arith.constant 0 : index
    %39 = vector.load %arg23[%c0_56, %c0_57] : memref<1x32xf32, #tpu.memory_space<vmem>>, vector<1x32xf32>
    %c0_58 = arith.constant 0 : index
    %c0_59 = arith.constant 0 : index
    %40 = vector.load %arg24[%c0_58, %c0_59] : memref<1x32xf32, #tpu.memory_space<vmem>>, vector<1x32xf32>
    %41 = vector.shape_cast %37 : vector<1x32xf32> to vector<1x32xf32>
    %42 = vector.broadcast %41 : vector<1x32xf32> to vector<8x32xf32>
    %43 = vector.shape_cast %38 : vector<1x32xf32> to vector<1x32xf32>
    %44 = vector.broadcast %43 : vector<1x32xf32> to vector<8x32xf32>
    %45 = vector.shape_cast %39 : vector<1x32xf32> to vector<1x32xf32>
    %46 = vector.broadcast %45 : vector<1x32xf32> to vector<8x32xf32>
    %47 = vector.shape_cast %40 : vector<1x32xf32> to vector<1x32xf32>
    %48 = vector.broadcast %47 : vector<1x32xf32> to vector<8x32xf32>
    %cst_60 = arith.constant 0.000000e+00 : f32
    %49 = vector.broadcast %cst_60 : f32 to vector<8x32xf32>
    %c0_61 = arith.constant 0 : index
    %c0_62 = arith.constant 0 : index
    %50 = vector.load %arg34[%c0_61, %c0_62] : memref<64x32xf32, #tpu.memory_space<vmem>>, vector<8x32xf32>
    %cst_63 = arith.constant dense<0.000000e+00> : vector<8x32xf32>
    %51 = tpu.matmul %49, %4, %cst_63 {dimension_numbers = #tpu.dot_dimension_numbers<[1], [0], [0], [1], [0, 0, 1, 1], [], []>} : vector<8x32xf32>, vector<32x32xf32>, vector<8x32xf32> -> vector<8x32xf32>
    %52 = arith.addf %50, %51 : vector<8x32xf32>
    %c0_64 = arith.constant 0 : index
    %c0_65 = arith.constant 0 : index
    %53 = vector.load %arg35[%c0_64, %c0_65] : memref<64x32xf32, #tpu.memory_space<vmem>>, vector<8x32xf32>
    %cst_66 = arith.constant dense<0.000000e+00> : vector<8x32xf32>
    %54 = tpu.matmul %49, %5, %cst_66 {dimension_numbers = #tpu.dot_dimension_numbers<[1], [0], [0], [1], [0, 0, 1, 1], [], []>} : vector<8x32xf32>, vector<32x32xf32>, vector<8x32xf32> -> vector<8x32xf32>
    %55 = arith.addf %53, %54 : vector<8x32xf32>
    %c0_67 = arith.constant 0 : index
    %c0_68 = arith.constant 0 : index
    %56 = vector.load %arg36[%c0_67, %c0_68] : memref<64x32xf32, #tpu.memory_space<vmem>>, vector<8x32xf32>
    %cst_69 = arith.constant dense<0.000000e+00> : vector<8x32xf32>
    %57 = tpu.matmul %49, %6, %cst_69 {dimension_numbers = #tpu.dot_dimension_numbers<[1], [0], [0], [1], [0, 0, 1, 1], [], []>} : vector<8x32xf32>, vector<32x32xf32>, vector<8x32xf32> -> vector<8x32xf32>
    %58 = arith.addf %56, %57 : vector<8x32xf32>
    %c0_70 = arith.constant 0 : index
    %c0_71 = arith.constant 0 : index
    %59 = vector.load %arg37[%c0_70, %c0_71] : memref<64x32xf32, #tpu.memory_space<vmem>>, vector<8x32xf32>
    %cst_72 = arith.constant dense<0.000000e+00> : vector<8x32xf32>
    %60 = tpu.matmul %49, %7, %cst_72 {dimension_numbers = #tpu.dot_dimension_numbers<[1], [0], [0], [1], [0, 0, 1, 1], [], []>} : vector<8x32xf32>, vector<32x32xf32>, vector<8x32xf32> -> vector<8x32xf32>
    %61 = arith.addf %59, %60 : vector<8x32xf32>
    %62 = arith.negf %52 : vector<8x32xf32>
    %63 = math.exp %62 : vector<8x32xf32>
    %cst_73 = arith.constant 1.000000e+00 : f32
    %64 = vector.broadcast %cst_73 : f32 to vector<8x32xf32>
    %65 = arith.addf %64, %63 : vector<8x32xf32>
    %66 = arith.divf %64, %65 : vector<8x32xf32>
    %67 = arith.negf %55 : vector<8x32xf32>
    %68 = math.exp %67 : vector<8x32xf32>
    %cst_74 = arith.constant 1.000000e+00 : f32
    %69 = vector.broadcast %cst_74 : f32 to vector<8x32xf32>
    %70 = arith.addf %69, %68 : vector<8x32xf32>
    %71 = arith.divf %69, %70 : vector<8x32xf32>
    %72 = math.tanh %58 : vector<8x32xf32>
    %73 = arith.negf %61 : vector<8x32xf32>
    %74 = math.exp %73 : vector<8x32xf32>
    %cst_75 = arith.constant 1.000000e+00 : f32
    %75 = vector.broadcast %cst_75 : f32 to vector<8x32xf32>
    %76 = arith.addf %75, %74 : vector<8x32xf32>
    %77 = arith.divf %75, %76 : vector<8x32xf32>
    %78 = arith.mulf %71, %49 : vector<8x32xf32>
    %79 = arith.mulf %66, %72 : vector<8x32xf32>
    %80 = arith.addf %78, %79 : vector<8x32xf32>
    %81 = math.tanh %80 : vector<8x32xf32>
    %82 = arith.mulf %77, %81 : vector<8x32xf32>
    %cst_76 = arith.constant dense<0.000000e+00> : vector<8x32xf32>
    %83 = tpu.matmul %82, %29, %cst_76 {dimension_numbers = #tpu.dot_dimension_numbers<[1], [0], [0], [1], [0, 0, 1, 1], [], []>} : vector<8x32xf32>, vector<32x32xf32>, vector<8x32xf32> -> vector<8x32xf32>
    %84 = arith.addf %83, %42 : vector<8x32xf32>
    %cst_77 = arith.constant dense<0.000000e+00> : vector<8x32xf32>
    %85 = tpu.matmul %49, %33, %cst_77 {dimension_numbers = #tpu.dot_dimension_numbers<[1], [0], [0], [1], [0, 0, 1, 1], [], []>} : vector<8x32xf32>, vector<32x32xf32>, vector<8x32xf32> -> vector<8x32xf32>
    %86 = arith.addf %84, %85 : vector<8x32xf32>
    %cst_78 = arith.constant dense<0.000000e+00> : vector<8x32xf32>
    %87 = tpu.matmul %82, %30, %cst_78 {dimension_numbers = #tpu.dot_dimension_numbers<[1], [0], [0], [1], [0, 0, 1, 1], [], []>} : vector<8x32xf32>, vector<32x32xf32>, vector<8x32xf32> -> vector<8x32xf32>
    %88 = arith.addf %87, %44 : vector<8x32xf32>
    %cst_79 = arith.constant dense<0.000000e+00> : vector<8x32xf32>
    %89 = tpu.matmul %49, %34, %cst_79 {dimension_numbers = #tpu.dot_dimension_numbers<[1], [0], [0], [1], [0, 0, 1, 1], [], []>} : vector<8x32xf32>, vector<32x32xf32>, vector<8x32xf32> -> vector<8x32xf32>
    %90 = arith.addf %88, %89 : vector<8x32xf32>
    %cst_80 = arith.constant dense<0.000000e+00> : vector<8x32xf32>
    %91 = tpu.matmul %82, %31, %cst_80 {dimension_numbers = #tpu.dot_dimension_numbers<[1], [0], [0], [1], [0, 0, 1, 1], [], []>} : vector<8x32xf32>, vector<32x32xf32>, vector<8x32xf32> -> vector<8x32xf32>
    %92 = arith.addf %91, %46 : vector<8x32xf32>
    %cst_81 = arith.constant dense<0.000000e+00> : vector<8x32xf32>
    %93 = tpu.matmul %49, %35, %cst_81 {dimension_numbers = #tpu.dot_dimension_numbers<[1], [0], [0], [1], [0, 0, 1, 1], [], []>} : vector<8x32xf32>, vector<32x32xf32>, vector<8x32xf32> -> vector<8x32xf32>
    %94 = arith.addf %92, %93 : vector<8x32xf32>
    %cst_82 = arith.constant dense<0.000000e+00> : vector<8x32xf32>
    %95 = tpu.matmul %82, %32, %cst_82 {dimension_numbers = #tpu.dot_dimension_numbers<[1], [0], [0], [1], [0, 0, 1, 1], [], []>} : vector<8x32xf32>, vector<32x32xf32>, vector<8x32xf32> -> vector<8x32xf32>
    %96 = arith.addf %95, %48 : vector<8x32xf32>
    %cst_83 = arith.constant dense<0.000000e+00> : vector<8x32xf32>
    %97 = tpu.matmul %49, %36, %cst_83 {dimension_numbers = #tpu.dot_dimension_numbers<[1], [0], [0], [1], [0, 0, 1, 1], [], []>} : vector<8x32xf32>, vector<32x32xf32>, vector<8x32xf32> -> vector<8x32xf32>
    %98 = arith.addf %96, %97 : vector<8x32xf32>
    %99 = arith.negf %86 : vector<8x32xf32>
    %100 = math.exp %99 : vector<8x32xf32>
    %cst_84 = arith.constant 1.000000e+00 : f32
    %101 = vector.broadcast %cst_84 : f32 to vector<8x32xf32>
    %102 = arith.addf %101, %100 : vector<8x32xf32>
    %103 = arith.divf %101, %102 : vector<8x32xf32>
    %104 = arith.negf %90 : vector<8x32xf32>
    %105 = math.exp %104 : vector<8x32xf32>
    %cst_85 = arith.constant 1.000000e+00 : f32
    %106 = vector.broadcast %cst_85 : f32 to vector<8x32xf32>
    %107 = arith.addf %106, %105 : vector<8x32xf32>
    %108 = arith.divf %106, %107 : vector<8x32xf32>
    %109 = math.tanh %94 : vector<8x32xf32>
    %110 = arith.negf %98 : vector<8x32xf32>
    %111 = math.exp %110 : vector<8x32xf32>
    %cst_86 = arith.constant 1.000000e+00 : f32
    %112 = vector.broadcast %cst_86 : f32 to vector<8x32xf32>
    %113 = arith.addf %112, %111 : vector<8x32xf32>
    %114 = arith.divf %112, %113 : vector<8x32xf32>
    %115 = arith.mulf %108, %49 : vector<8x32xf32>
    %116 = arith.mulf %103, %109 : vector<8x32xf32>
    %117 = arith.addf %115, %116 : vector<8x32xf32>
    %118 = math.tanh %117 : vector<8x32xf32>
    %119 = arith.mulf %114, %118 : vector<8x32xf32>
    %c8 = arith.constant 8 : index
    %c0_87 = arith.constant 0 : index
    %120 = vector.load %arg34[%c8, %c0_87] : memref<64x32xf32, #tpu.memory_space<vmem>>, vector<8x32xf32>
    %cst_88 = arith.constant dense<0.000000e+00> : vector<8x32xf32>
    %121 = tpu.matmul %82, %4, %cst_88 {dimension_numbers = #tpu.dot_dimension_numbers<[1], [0], [0], [1], [0, 0, 1, 1], [], []>} : vector<8x32xf32>, vector<32x32xf32>, vector<8x32xf32> -> vector<8x32xf32>
    %122 = arith.addf %120, %121 : vector<8x32xf32>
    %c8_89 = arith.constant 8 : index
    %c0_90 = arith.constant 0 : index
    %123 = vector.load %arg35[%c8_89, %c0_90] : memref<64x32xf32, #tpu.memory_space<vmem>>, vector<8x32xf32>
    %cst_91 = arith.constant dense<0.000000e+00> : vector<8x32xf32>
    %124 = tpu.matmul %82, %5, %cst_91 {dimension_numbers = #tpu.dot_dimension_numbers<[1], [0], [0], [1], [0, 0, 1, 1], [], []>} : vector<8x32xf32>, vector<32x32xf32>, vector<8x32xf32> -> vector<8x32xf32>
    %125 = arith.addf %123, %124 : vector<8x32xf32>
    %c8_92 = arith.constant 8 : index
    %c0_93 = arith.constant 0 : index
    %126 = vector.load %arg36[%c8_92, %c0_93] : memref<64x32xf32, #tpu.memory_space<vmem>>, vector<8x32xf32>
    %cst_94 = arith.constant dense<0.000000e+00> : vector<8x32xf32>
    %127 = tpu.matmul %82, %6, %cst_94 {dimension_numbers = #tpu.dot_dimension_numbers<[1], [0], [0], [1], [0, 0, 1, 1], [], []>} : vector<8x32xf32>, vector<32x32xf32>, vector<8x32xf32> -> vector<8x32xf32>
    %128 = arith.addf %126, %127 : vector<8x32xf32>
    %c8_95 = arith.constant 8 : index
    %c0_96 = arith.constant 0 : index
    %129 = vector.load %arg37[%c8_95, %c0_96] : memref<64x32xf32, #tpu.memory_space<vmem>>, vector<8x32xf32>
    %cst_97 = arith.constant dense<0.000000e+00> : vector<8x32xf32>
    %130 = tpu.matmul %82, %7, %cst_97 {dimension_numbers = #tpu.dot_dimension_numbers<[1], [0], [0], [1], [0, 0, 1, 1], [], []>} : vector<8x32xf32>, vector<32x32xf32>, vector<8x32xf32> -> vector<8x32xf32>
    %131 = arith.addf %129, %130 : vector<8x32xf32>
    %132 = arith.negf %122 : vector<8x32xf32>
    %133 = math.exp %132 : vector<8x32xf32>
    %cst_98 = arith.constant 1.000000e+00 : f32
    %134 = vector.broadcast %cst_98 : f32 to vector<8x32xf32>
    %135 = arith.addf %134, %133 : vector<8x32xf32>
    %136 = arith.divf %134, %135 : vector<8x32xf32>
    %137 = arith.negf %125 : vector<8x32xf32>
    %138 = math.exp %137 : vector<8x32xf32>
    %cst_99 = arith.constant 1.000000e+00 : f32
    %139 = vector.broadcast %cst_99 : f32 to vector<8x32xf32>
    %140 = arith.addf %139, %138 : vector<8x32xf32>
    %141 = arith.divf %139, %140 : vector<8x32xf32>
    %142 = math.tanh %128 : vector<8x32xf32>
    %143 = arith.negf %131 : vector<8x32xf32>
    %144 = math.exp %143 : vector<8x32xf32>
    %cst_100 = arith.constant 1.000000e+00 : f32
    %145 = vector.broadcast %cst_100 : f32 to vector<8x32xf32>
    %146 = arith.addf %145, %144 : vector<8x32xf32>
    %147 = arith.divf %145, %146 : vector<8x32xf32>
    %148 = arith.mulf %141, %80 : vector<8x32xf32>
    %149 = arith.mulf %136, %142 : vector<8x32xf32>
    %150 = arith.addf %148, %149 : vector<8x32xf32>
    %151 = math.tanh %150 : vector<8x32xf32>
    %152 = arith.mulf %147, %151 : vector<8x32xf32>
    %cst_101 = arith.constant dense<0.000000e+00> : vector<8x32xf32>
    %153 = tpu.matmul %152, %29, %cst_101 {dimension_numbers = #tpu.dot_dimension_numbers<[1], [0], [0], [1], [0, 0, 1, 1], [], []>} : vector<8x32xf32>, vector<32x32xf32>, vector<8x32xf32> -> vector<8x32xf32>
    %154 = arith.addf %153, %42 : vector<8x32xf32>
    %cst_102 = arith.constant dense<0.000000e+00> : vector<8x32xf32>
    %155 = tpu.matmul %119, %33, %cst_102 {dimension_numbers = #tpu.dot_dimension_numbers<[1], [0], [0], [1], [0, 0, 1, 1], [], []>} : vector<8x32xf32>, vector<32x32xf32>, vector<8x32xf32> -> vector<8x32xf32>
    %156 = arith.addf %154, %155 : vector<8x32xf32>
    %cst_103 = arith.constant dense<0.000000e+00> : vector<8x32xf32>
    %157 = tpu.matmul %152, %30, %cst_103 {dimension_numbers = #tpu.dot_dimension_numbers<[1], [0], [0], [1], [0, 0, 1, 1], [], []>} : vector<8x32xf32>, vector<32x32xf32>, vector<8x32xf32> -> vector<8x32xf32>
    %158 = arith.addf %157, %44 : vector<8x32xf32>
    %cst_104 = arith.constant dense<0.000000e+00> : vector<8x32xf32>
    %159 = tpu.matmul %119, %34, %cst_104 {dimension_numbers = #tpu.dot_dimension_numbers<[1], [0], [0], [1], [0, 0, 1, 1], [], []>} : vector<8x32xf32>, vector<32x32xf32>, vector<8x32xf32> -> vector<8x32xf32>
    %160 = arith.addf %158, %159 : vector<8x32xf32>
    %cst_105 = arith.constant dense<0.000000e+00> : vector<8x32xf32>
    %161 = tpu.matmul %152, %31, %cst_105 {dimension_numbers = #tpu.dot_dimension_numbers<[1], [0], [0], [1], [0, 0, 1, 1], [], []>} : vector<8x32xf32>, vector<32x32xf32>, vector<8x32xf32> -> vector<8x32xf32>
    %162 = arith.addf %161, %46 : vector<8x32xf32>
    %cst_106 = arith.constant dense<0.000000e+00> : vector<8x32xf32>
    %163 = tpu.matmul %119, %35, %cst_106 {dimension_numbers = #tpu.dot_dimension_numbers<[1], [0], [0], [1], [0, 0, 1, 1], [], []>} : vector<8x32xf32>, vector<32x32xf32>, vector<8x32xf32> -> vector<8x32xf32>
    %164 = arith.addf %162, %163 : vector<8x32xf32>
    %cst_107 = arith.constant dense<0.000000e+00> : vector<8x32xf32>
    %165 = tpu.matmul %152, %32, %cst_107 {dimension_numbers = #tpu.dot_dimension_numbers<[1], [0], [0], [1], [0, 0, 1, 1], [], []>} : vector<8x32xf32>, vector<32x32xf32>, vector<8x32xf32> -> vector<8x32xf32>
    %166 = arith.addf %165, %48 : vector<8x32xf32>
    %cst_108 = arith.constant dense<0.000000e+00> : vector<8x32xf32>
    %167 = tpu.matmul %119, %36, %cst_108 {dimension_numbers = #tpu.dot_dimension_numbers<[1], [0], [0], [1], [0, 0, 1, 1], [], []>} : vector<8x32xf32>, vector<32x32xf32>, vector<8x32xf32> -> vector<8x32xf32>
    %168 = arith.addf %166, %167 : vector<8x32xf32>
    %169 = arith.negf %156 : vector<8x32xf32>
    %170 = math.exp %169 : vector<8x32xf32>
    %cst_109 = arith.constant 1.000000e+00 : f32
    %171 = vector.broadcast %cst_109 : f32 to vector<8x32xf32>
    %172 = arith.addf %171, %170 : vector<8x32xf32>
    %173 = arith.divf %171, %172 : vector<8x32xf32>
    %174 = arith.negf %160 : vector<8x32xf32>
    %175 = math.exp %174 : vector<8x32xf32>
    %cst_110 = arith.constant 1.000000e+00 : f32
    %176 = vector.broadcast %cst_110 : f32 to vector<8x32xf32>
    %177 = arith.addf %176, %175 : vector<8x32xf32>
    %178 = arith.divf %176, %177 : vector<8x32xf32>
    %179 = math.tanh %164 : vector<8x32xf32>
    %180 = arith.negf %168 : vector<8x32xf32>
    %181 = math.exp %180 : vector<8x32xf32>
    %cst_111 = arith.constant 1.000000e+00 : f32
    %182 = vector.broadcast %cst_111 : f32 to vector<8x32xf32>
    %183 = arith.addf %182, %181 : vector<8x32xf32>
    %184 = arith.divf %182, %183 : vector<8x32xf32>
    %185 = arith.mulf %178, %117 : vector<8x32xf32>
    %186 = arith.mulf %173, %179 : vector<8x32xf32>
    %187 = arith.addf %185, %186 : vector<8x32xf32>
    %188 = math.tanh %187 : vector<8x32xf32>
    %189 = arith.mulf %184, %188 : vector<8x32xf32>
    %c16 = arith.constant 16 : index
    %c0_112 = arith.constant 0 : index
    %190 = vector.load %arg34[%c16, %c0_112] : memref<64x32xf32, #tpu.memory_space<vmem>>, vector<8x32xf32>
    %cst_113 = arith.constant dense<0.000000e+00> : vector<8x32xf32>
    %191 = tpu.matmul %152, %4, %cst_113 {dimension_numbers = #tpu.dot_dimension_numbers<[1], [0], [0], [1], [0, 0, 1, 1], [], []>} : vector<8x32xf32>, vector<32x32xf32>, vector<8x32xf32> -> vector<8x32xf32>
    %192 = arith.addf %190, %191 : vector<8x32xf32>
    %c16_114 = arith.constant 16 : index
    %c0_115 = arith.constant 0 : index
    %193 = vector.load %arg35[%c16_114, %c0_115] : memref<64x32xf32, #tpu.memory_space<vmem>>, vector<8x32xf32>
    %cst_116 = arith.constant dense<0.000000e+00> : vector<8x32xf32>
    %194 = tpu.matmul %152, %5, %cst_116 {dimension_numbers = #tpu.dot_dimension_numbers<[1], [0], [0], [1], [0, 0, 1, 1], [], []>} : vector<8x32xf32>, vector<32x32xf32>, vector<8x32xf32> -> vector<8x32xf32>
    %195 = arith.addf %193, %194 : vector<8x32xf32>
    %c16_117 = arith.constant 16 : index
    %c0_118 = arith.constant 0 : index
    %196 = vector.load %arg36[%c16_117, %c0_118] : memref<64x32xf32, #tpu.memory_space<vmem>>, vector<8x32xf32>
    %cst_119 = arith.constant dense<0.000000e+00> : vector<8x32xf32>
    %197 = tpu.matmul %152, %6, %cst_119 {dimension_numbers = #tpu.dot_dimension_numbers<[1], [0], [0], [1], [0, 0, 1, 1], [], []>} : vector<8x32xf32>, vector<32x32xf32>, vector<8x32xf32> -> vector<8x32xf32>
    %198 = arith.addf %196, %197 : vector<8x32xf32>
    %c16_120 = arith.constant 16 : index
    %c0_121 = arith.constant 0 : index
    %199 = vector.load %arg37[%c16_120, %c0_121] : memref<64x32xf32, #tpu.memory_space<vmem>>, vector<8x32xf32>
    %cst_122 = arith.constant dense<0.000000e+00> : vector<8x32xf32>
    %200 = tpu.matmul %152, %7, %cst_122 {dimension_numbers = #tpu.dot_dimension_numbers<[1], [0], [0], [1], [0, 0, 1, 1], [], []>} : vector<8x32xf32>, vector<32x32xf32>, vector<8x32xf32> -> vector<8x32xf32>
    %201 = arith.addf %199, %200 : vector<8x32xf32>
    %202 = arith.negf %192 : vector<8x32xf32>
    %203 = math.exp %202 : vector<8x32xf32>
    %cst_123 = arith.constant 1.000000e+00 : f32
    %204 = vector.broadcast %cst_123 : f32 to vector<8x32xf32>
    %205 = arith.addf %204, %203 : vector<8x32xf32>
    %206 = arith.divf %204, %205 : vector<8x32xf32>
    %207 = arith.negf %195 : vector<8x32xf32>
    %208 = math.exp %207 : vector<8x32xf32>
    %cst_124 = arith.constant 1.000000e+00 : f32
    %209 = vector.broadcast %cst_124 : f32 to vector<8x32xf32>
    %210 = arith.addf %209, %208 : vector<8x32xf32>
    %211 = arith.divf %209, %210 : vector<8x32xf32>
    %212 = math.tanh %198 : vector<8x32xf32>
    %213 = arith.negf %201 : vector<8x32xf32>
    %214 = math.exp %213 : vector<8x32xf32>
    %cst_125 = arith.constant 1.000000e+00 : f32
    %215 = vector.broadcast %cst_125 : f32 to vector<8x32xf32>
    %216 = arith.addf %215, %214 : vector<8x32xf32>
    %217 = arith.divf %215, %216 : vector<8x32xf32>
    %218 = arith.mulf %211, %150 : vector<8x32xf32>
    %219 = arith.mulf %206, %212 : vector<8x32xf32>
    %220 = arith.addf %218, %219 : vector<8x32xf32>
    %221 = math.tanh %220 : vector<8x32xf32>
    %222 = arith.mulf %217, %221 : vector<8x32xf32>
    %cst_126 = arith.constant dense<0.000000e+00> : vector<8x32xf32>
    %223 = tpu.matmul %222, %29, %cst_126 {dimension_numbers = #tpu.dot_dimension_numbers<[1], [0], [0], [1], [0, 0, 1, 1], [], []>} : vector<8x32xf32>, vector<32x32xf32>, vector<8x32xf32> -> vector<8x32xf32>
    %224 = arith.addf %223, %42 : vector<8x32xf32>
    %cst_127 = arith.constant dense<0.000000e+00> : vector<8x32xf32>
    %225 = tpu.matmul %189, %33, %cst_127 {dimension_numbers = #tpu.dot_dimension_numbers<[1], [0], [0], [1], [0, 0, 1, 1], [], []>} : vector<8x32xf32>, vector<32x32xf32>, vector<8x32xf32> -> vector<8x32xf32>
    %226 = arith.addf %224, %225 : vector<8x32xf32>
    %cst_128 = arith.constant dense<0.000000e+00> : vector<8x32xf32>
    %227 = tpu.matmul %222, %30, %cst_128 {dimension_numbers = #tpu.dot_dimension_numbers<[1], [0], [0], [1], [0, 0, 1, 1], [], []>} : vector<8x32xf32>, vector<32x32xf32>, vector<8x32xf32> -> vector<8x32xf32>
    %228 = arith.addf %227, %44 : vector<8x32xf32>
    %cst_129 = arith.constant dense<0.000000e+00> : vector<8x32xf32>
    %229 = tpu.matmul %189, %34, %cst_129 {dimension_numbers = #tpu.dot_dimension_numbers<[1], [0], [0], [1], [0, 0, 1, 1], [], []>} : vector<8x32xf32>, vector<32x32xf32>, vector<8x32xf32> -> vector<8x32xf32>
    %230 = arith.addf %228, %229 : vector<8x32xf32>
    %cst_130 = arith.constant dense<0.000000e+00> : vector<8x32xf32>
    %231 = tpu.matmul %222, %31, %cst_130 {dimension_numbers = #tpu.dot_dimension_numbers<[1], [0], [0], [1], [0, 0, 1, 1], [], []>} : vector<8x32xf32>, vector<32x32xf32>, vector<8x32xf32> -> vector<8x32xf32>
    %232 = arith.addf %231, %46 : vector<8x32xf32>
    %cst_131 = arith.constant dense<0.000000e+00> : vector<8x32xf32>
    %233 = tpu.matmul %189, %35, %cst_131 {dimension_numbers = #tpu.dot_dimension_numbers<[1], [0], [0], [1], [0, 0, 1, 1], [], []>} : vector<8x32xf32>, vector<32x32xf32>, vector<8x32xf32> -> vector<8x32xf32>
    %234 = arith.addf %232, %233 : vector<8x32xf32>
    %cst_132 = arith.constant dense<0.000000e+00> : vector<8x32xf32>
    %235 = tpu.matmul %222, %32, %cst_132 {dimension_numbers = #tpu.dot_dimension_numbers<[1], [0], [0], [1], [0, 0, 1, 1], [], []>} : vector<8x32xf32>, vector<32x32xf32>, vector<8x32xf32> -> vector<8x32xf32>
    %236 = arith.addf %235, %48 : vector<8x32xf32>
    %cst_133 = arith.constant dense<0.000000e+00> : vector<8x32xf32>
    %237 = tpu.matmul %189, %36, %cst_133 {dimension_numbers = #tpu.dot_dimension_numbers<[1], [0], [0], [1], [0, 0, 1, 1], [], []>} : vector<8x32xf32>, vector<32x32xf32>, vector<8x32xf32> -> vector<8x32xf32>
    %238 = arith.addf %236, %237 : vector<8x32xf32>
    %239 = arith.negf %226 : vector<8x32xf32>
    %240 = math.exp %239 : vector<8x32xf32>
    %cst_134 = arith.constant 1.000000e+00 : f32
    %241 = vector.broadcast %cst_134 : f32 to vector<8x32xf32>
    %242 = arith.addf %241, %240 : vector<8x32xf32>
    %243 = arith.divf %241, %242 : vector<8x32xf32>
    %244 = arith.negf %230 : vector<8x32xf32>
    %245 = math.exp %244 : vector<8x32xf32>
    %cst_135 = arith.constant 1.000000e+00 : f32
    %246 = vector.broadcast %cst_135 : f32 to vector<8x32xf32>
    %247 = arith.addf %246, %245 : vector<8x32xf32>
    %248 = arith.divf %246, %247 : vector<8x32xf32>
    %249 = math.tanh %234 : vector<8x32xf32>
    %250 = arith.negf %238 : vector<8x32xf32>
    %251 = math.exp %250 : vector<8x32xf32>
    %cst_136 = arith.constant 1.000000e+00 : f32
    %252 = vector.broadcast %cst_136 : f32 to vector<8x32xf32>
    %253 = arith.addf %252, %251 : vector<8x32xf32>
    %254 = arith.divf %252, %253 : vector<8x32xf32>
    %255 = arith.mulf %248, %187 : vector<8x32xf32>
    %256 = arith.mulf %243, %249 : vector<8x32xf32>
    %257 = arith.addf %255, %256 : vector<8x32xf32>
    %258 = math.tanh %257 : vector<8x32xf32>
    %259 = arith.mulf %254, %258 : vector<8x32xf32>
    %c24 = arith.constant 24 : index
    %c0_137 = arith.constant 0 : index
    %260 = vector.load %arg34[%c24, %c0_137] : memref<64x32xf32, #tpu.memory_space<vmem>>, vector<8x32xf32>
    %cst_138 = arith.constant dense<0.000000e+00> : vector<8x32xf32>
    %261 = tpu.matmul %222, %4, %cst_138 {dimension_numbers = #tpu.dot_dimension_numbers<[1], [0], [0], [1], [0, 0, 1, 1], [], []>} : vector<8x32xf32>, vector<32x32xf32>, vector<8x32xf32> -> vector<8x32xf32>
    %262 = arith.addf %260, %261 : vector<8x32xf32>
    %c24_139 = arith.constant 24 : index
    %c0_140 = arith.constant 0 : index
    %263 = vector.load %arg35[%c24_139, %c0_140] : memref<64x32xf32, #tpu.memory_space<vmem>>, vector<8x32xf32>
    %cst_141 = arith.constant dense<0.000000e+00> : vector<8x32xf32>
    %264 = tpu.matmul %222, %5, %cst_141 {dimension_numbers = #tpu.dot_dimension_numbers<[1], [0], [0], [1], [0, 0, 1, 1], [], []>} : vector<8x32xf32>, vector<32x32xf32>, vector<8x32xf32> -> vector<8x32xf32>
    %265 = arith.addf %263, %264 : vector<8x32xf32>
    %c24_142 = arith.constant 24 : index
    %c0_143 = arith.constant 0 : index
    %266 = vector.load %arg36[%c24_142, %c0_143] : memref<64x32xf32, #tpu.memory_space<vmem>>, vector<8x32xf32>
    %cst_144 = arith.constant dense<0.000000e+00> : vector<8x32xf32>
    %267 = tpu.matmul %222, %6, %cst_144 {dimension_numbers = #tpu.dot_dimension_numbers<[1], [0], [0], [1], [0, 0, 1, 1], [], []>} : vector<8x32xf32>, vector<32x32xf32>, vector<8x32xf32> -> vector<8x32xf32>
    %268 = arith.addf %266, %267 : vector<8x32xf32>
    %c24_145 = arith.constant 24 : index
    %c0_146 = arith.constant 0 : index
    %269 = vector.load %arg37[%c24_145, %c0_146] : memref<64x32xf32, #tpu.memory_space<vmem>>, vector<8x32xf32>
    %cst_147 = arith.constant dense<0.000000e+00> : vector<8x32xf32>
    %270 = tpu.matmul %222, %7, %cst_147 {dimension_numbers = #tpu.dot_dimension_numbers<[1], [0], [0], [1], [0, 0, 1, 1], [], []>} : vector<8x32xf32>, vector<32x32xf32>, vector<8x32xf32> -> vector<8x32xf32>
    %271 = arith.addf %269, %270 : vector<8x32xf32>
    %272 = arith.negf %262 : vector<8x32xf32>
    %273 = math.exp %272 : vector<8x32xf32>
    %cst_148 = arith.constant 1.000000e+00 : f32
    %274 = vector.broadcast %cst_148 : f32 to vector<8x32xf32>
    %275 = arith.addf %274, %273 : vector<8x32xf32>
    %276 = arith.divf %274, %275 : vector<8x32xf32>
    %277 = arith.negf %265 : vector<8x32xf32>
    %278 = math.exp %277 : vector<8x32xf32>
    %cst_149 = arith.constant 1.000000e+00 : f32
    %279 = vector.broadcast %cst_149 : f32 to vector<8x32xf32>
    %280 = arith.addf %279, %278 : vector<8x32xf32>
    %281 = arith.divf %279, %280 : vector<8x32xf32>
    %282 = math.tanh %268 : vector<8x32xf32>
    %283 = arith.negf %271 : vector<8x32xf32>
    %284 = math.exp %283 : vector<8x32xf32>
    %cst_150 = arith.constant 1.000000e+00 : f32
    %285 = vector.broadcast %cst_150 : f32 to vector<8x32xf32>
    %286 = arith.addf %285, %284 : vector<8x32xf32>
    %287 = arith.divf %285, %286 : vector<8x32xf32>
    %288 = arith.mulf %281, %220 : vector<8x32xf32>
    %289 = arith.mulf %276, %282 : vector<8x32xf32>
    %290 = arith.addf %288, %289 : vector<8x32xf32>
    %291 = math.tanh %290 : vector<8x32xf32>
    %292 = arith.mulf %287, %291 : vector<8x32xf32>
    %cst_151 = arith.constant dense<0.000000e+00> : vector<8x32xf32>
    %293 = tpu.matmul %292, %29, %cst_151 {dimension_numbers = #tpu.dot_dimension_numbers<[1], [0], [0], [1], [0, 0, 1, 1], [], []>} : vector<8x32xf32>, vector<32x32xf32>, vector<8x32xf32> -> vector<8x32xf32>
    %294 = arith.addf %293, %42 : vector<8x32xf32>
    %cst_152 = arith.constant dense<0.000000e+00> : vector<8x32xf32>
    %295 = tpu.matmul %259, %33, %cst_152 {dimension_numbers = #tpu.dot_dimension_numbers<[1], [0], [0], [1], [0, 0, 1, 1], [], []>} : vector<8x32xf32>, vector<32x32xf32>, vector<8x32xf32> -> vector<8x32xf32>
    %296 = arith.addf %294, %295 : vector<8x32xf32>
    %cst_153 = arith.constant dense<0.000000e+00> : vector<8x32xf32>
    %297 = tpu.matmul %292, %30, %cst_153 {dimension_numbers = #tpu.dot_dimension_numbers<[1], [0], [0], [1], [0, 0, 1, 1], [], []>} : vector<8x32xf32>, vector<32x32xf32>, vector<8x32xf32> -> vector<8x32xf32>
    %298 = arith.addf %297, %44 : vector<8x32xf32>
    %cst_154 = arith.constant dense<0.000000e+00> : vector<8x32xf32>
    %299 = tpu.matmul %259, %34, %cst_154 {dimension_numbers = #tpu.dot_dimension_numbers<[1], [0], [0], [1], [0, 0, 1, 1], [], []>} : vector<8x32xf32>, vector<32x32xf32>, vector<8x32xf32> -> vector<8x32xf32>
    %300 = arith.addf %298, %299 : vector<8x32xf32>
    %cst_155 = arith.constant dense<0.000000e+00> : vector<8x32xf32>
    %301 = tpu.matmul %292, %31, %cst_155 {dimension_numbers = #tpu.dot_dimension_numbers<[1], [0], [0], [1], [0, 0, 1, 1], [], []>} : vector<8x32xf32>, vector<32x32xf32>, vector<8x32xf32> -> vector<8x32xf32>
    %302 = arith.addf %301, %46 : vector<8x32xf32>
    %cst_156 = arith.constant dense<0.000000e+00> : vector<8x32xf32>
    %303 = tpu.matmul %259, %35, %cst_156 {dimension_numbers = #tpu.dot_dimension_numbers<[1], [0], [0], [1], [0, 0, 1, 1], [], []>} : vector<8x32xf32>, vector<32x32xf32>, vector<8x32xf32> -> vector<8x32xf32>
    %304 = arith.addf %302, %303 : vector<8x32xf32>
    %cst_157 = arith.constant dense<0.000000e+00> : vector<8x32xf32>
    %305 = tpu.matmul %292, %32, %cst_157 {dimension_numbers = #tpu.dot_dimension_numbers<[1], [0], [0], [1], [0, 0, 1, 1], [], []>} : vector<8x32xf32>, vector<32x32xf32>, vector<8x32xf32> -> vector<8x32xf32>
    %306 = arith.addf %305, %48 : vector<8x32xf32>
    %cst_158 = arith.constant dense<0.000000e+00> : vector<8x32xf32>
    %307 = tpu.matmul %259, %36, %cst_158 {dimension_numbers = #tpu.dot_dimension_numbers<[1], [0], [0], [1], [0, 0, 1, 1], [], []>} : vector<8x32xf32>, vector<32x32xf32>, vector<8x32xf32> -> vector<8x32xf32>
    %308 = arith.addf %306, %307 : vector<8x32xf32>
    %309 = arith.negf %296 : vector<8x32xf32>
    %310 = math.exp %309 : vector<8x32xf32>
    %cst_159 = arith.constant 1.000000e+00 : f32
    %311 = vector.broadcast %cst_159 : f32 to vector<8x32xf32>
    %312 = arith.addf %311, %310 : vector<8x32xf32>
    %313 = arith.divf %311, %312 : vector<8x32xf32>
    %314 = arith.negf %300 : vector<8x32xf32>
    %315 = math.exp %314 : vector<8x32xf32>
    %cst_160 = arith.constant 1.000000e+00 : f32
    %316 = vector.broadcast %cst_160 : f32 to vector<8x32xf32>
    %317 = arith.addf %316, %315 : vector<8x32xf32>
    %318 = arith.divf %316, %317 : vector<8x32xf32>
    %319 = math.tanh %304 : vector<8x32xf32>
    %320 = arith.negf %308 : vector<8x32xf32>
    %321 = math.exp %320 : vector<8x32xf32>
    %cst_161 = arith.constant 1.000000e+00 : f32
    %322 = vector.broadcast %cst_161 : f32 to vector<8x32xf32>
    %323 = arith.addf %322, %321 : vector<8x32xf32>
    %324 = arith.divf %322, %323 : vector<8x32xf32>
    %325 = arith.mulf %318, %257 : vector<8x32xf32>
    %326 = arith.mulf %313, %319 : vector<8x32xf32>
    %327 = arith.addf %325, %326 : vector<8x32xf32>
    %328 = math.tanh %327 : vector<8x32xf32>
    %329 = arith.mulf %324, %328 : vector<8x32xf32>
    %c32 = arith.constant 32 : index
    %c0_162 = arith.constant 0 : index
    %330 = vector.load %arg34[%c32, %c0_162] : memref<64x32xf32, #tpu.memory_space<vmem>>, vector<8x32xf32>
    %cst_163 = arith.constant dense<0.000000e+00> : vector<8x32xf32>
    %331 = tpu.matmul %292, %4, %cst_163 {dimension_numbers = #tpu.dot_dimension_numbers<[1], [0], [0], [1], [0, 0, 1, 1], [], []>} : vector<8x32xf32>, vector<32x32xf32>, vector<8x32xf32> -> vector<8x32xf32>
    %332 = arith.addf %330, %331 : vector<8x32xf32>
    %c32_164 = arith.constant 32 : index
    %c0_165 = arith.constant 0 : index
    %333 = vector.load %arg35[%c32_164, %c0_165] : memref<64x32xf32, #tpu.memory_space<vmem>>, vector<8x32xf32>
    %cst_166 = arith.constant dense<0.000000e+00> : vector<8x32xf32>
    %334 = tpu.matmul %292, %5, %cst_166 {dimension_numbers = #tpu.dot_dimension_numbers<[1], [0], [0], [1], [0, 0, 1, 1], [], []>} : vector<8x32xf32>, vector<32x32xf32>, vector<8x32xf32> -> vector<8x32xf32>
    %335 = arith.addf %333, %334 : vector<8x32xf32>
    %c32_167 = arith.constant 32 : index
    %c0_168 = arith.constant 0 : index
    %336 = vector.load %arg36[%c32_167, %c0_168] : memref<64x32xf32, #tpu.memory_space<vmem>>, vector<8x32xf32>
    %cst_169 = arith.constant dense<0.000000e+00> : vector<8x32xf32>
    %337 = tpu.matmul %292, %6, %cst_169 {dimension_numbers = #tpu.dot_dimension_numbers<[1], [0], [0], [1], [0, 0, 1, 1], [], []>} : vector<8x32xf32>, vector<32x32xf32>, vector<8x32xf32> -> vector<8x32xf32>
    %338 = arith.addf %336, %337 : vector<8x32xf32>
    %c32_170 = arith.constant 32 : index
    %c0_171 = arith.constant 0 : index
    %339 = vector.load %arg37[%c32_170, %c0_171] : memref<64x32xf32, #tpu.memory_space<vmem>>, vector<8x32xf32>
    %cst_172 = arith.constant dense<0.000000e+00> : vector<8x32xf32>
    %340 = tpu.matmul %292, %7, %cst_172 {dimension_numbers = #tpu.dot_dimension_numbers<[1], [0], [0], [1], [0, 0, 1, 1], [], []>} : vector<8x32xf32>, vector<32x32xf32>, vector<8x32xf32> -> vector<8x32xf32>
    %341 = arith.addf %339, %340 : vector<8x32xf32>
    %342 = arith.negf %332 : vector<8x32xf32>
    %343 = math.exp %342 : vector<8x32xf32>
    %cst_173 = arith.constant 1.000000e+00 : f32
    %344 = vector.broadcast %cst_173 : f32 to vector<8x32xf32>
    %345 = arith.addf %344, %343 : vector<8x32xf32>
    %346 = arith.divf %344, %345 : vector<8x32xf32>
    %347 = arith.negf %335 : vector<8x32xf32>
    %348 = math.exp %347 : vector<8x32xf32>
    %cst_174 = arith.constant 1.000000e+00 : f32
    %349 = vector.broadcast %cst_174 : f32 to vector<8x32xf32>
    %350 = arith.addf %349, %348 : vector<8x32xf32>
    %351 = arith.divf %349, %350 : vector<8x32xf32>
    %352 = math.tanh %338 : vector<8x32xf32>
    %353 = arith.negf %341 : vector<8x32xf32>
    %354 = math.exp %353 : vector<8x32xf32>
    %cst_175 = arith.constant 1.000000e+00 : f32
    %355 = vector.broadcast %cst_175 : f32 to vector<8x32xf32>
    %356 = arith.addf %355, %354 : vector<8x32xf32>
    %357 = arith.divf %355, %356 : vector<8x32xf32>
    %358 = arith.mulf %351, %290 : vector<8x32xf32>
    %359 = arith.mulf %346, %352 : vector<8x32xf32>
    %360 = arith.addf %358, %359 : vector<8x32xf32>
    %361 = math.tanh %360 : vector<8x32xf32>
    %362 = arith.mulf %357, %361 : vector<8x32xf32>
    %cst_176 = arith.constant dense<0.000000e+00> : vector<8x32xf32>
    %363 = tpu.matmul %362, %29, %cst_176 {dimension_numbers = #tpu.dot_dimension_numbers<[1], [0], [0], [1], [0, 0, 1, 1], [], []>} : vector<8x32xf32>, vector<32x32xf32>, vector<8x32xf32> -> vector<8x32xf32>
    %364 = arith.addf %363, %42 : vector<8x32xf32>
    %cst_177 = arith.constant dense<0.000000e+00> : vector<8x32xf32>
    %365 = tpu.matmul %329, %33, %cst_177 {dimension_numbers = #tpu.dot_dimension_numbers<[1], [0], [0], [1], [0, 0, 1, 1], [], []>} : vector<8x32xf32>, vector<32x32xf32>, vector<8x32xf32> -> vector<8x32xf32>
    %366 = arith.addf %364, %365 : vector<8x32xf32>
    %cst_178 = arith.constant dense<0.000000e+00> : vector<8x32xf32>
    %367 = tpu.matmul %362, %30, %cst_178 {dimension_numbers = #tpu.dot_dimension_numbers<[1], [0], [0], [1], [0, 0, 1, 1], [], []>} : vector<8x32xf32>, vector<32x32xf32>, vector<8x32xf32> -> vector<8x32xf32>
    %368 = arith.addf %367, %44 : vector<8x32xf32>
    %cst_179 = arith.constant dense<0.000000e+00> : vector<8x32xf32>
    %369 = tpu.matmul %329, %34, %cst_179 {dimension_numbers = #tpu.dot_dimension_numbers<[1], [0], [0], [1], [0, 0, 1, 1], [], []>} : vector<8x32xf32>, vector<32x32xf32>, vector<8x32xf32> -> vector<8x32xf32>
    %370 = arith.addf %368, %369 : vector<8x32xf32>
    %cst_180 = arith.constant dense<0.000000e+00> : vector<8x32xf32>
    %371 = tpu.matmul %362, %31, %cst_180 {dimension_numbers = #tpu.dot_dimension_numbers<[1], [0], [0], [1], [0, 0, 1, 1], [], []>} : vector<8x32xf32>, vector<32x32xf32>, vector<8x32xf32> -> vector<8x32xf32>
    %372 = arith.addf %371, %46 : vector<8x32xf32>
    %cst_181 = arith.constant dense<0.000000e+00> : vector<8x32xf32>
    %373 = tpu.matmul %329, %35, %cst_181 {dimension_numbers = #tpu.dot_dimension_numbers<[1], [0], [0], [1], [0, 0, 1, 1], [], []>} : vector<8x32xf32>, vector<32x32xf32>, vector<8x32xf32> -> vector<8x32xf32>
    %374 = arith.addf %372, %373 : vector<8x32xf32>
    %cst_182 = arith.constant dense<0.000000e+00> : vector<8x32xf32>
    %375 = tpu.matmul %362, %32, %cst_182 {dimension_numbers = #tpu.dot_dimension_numbers<[1], [0], [0], [1], [0, 0, 1, 1], [], []>} : vector<8x32xf32>, vector<32x32xf32>, vector<8x32xf32> -> vector<8x32xf32>
    %376 = arith.addf %375, %48 : vector<8x32xf32>
    %cst_183 = arith.constant dense<0.000000e+00> : vector<8x32xf32>
    %377 = tpu.matmul %329, %36, %cst_183 {dimension_numbers = #tpu.dot_dimension_numbers<[1], [0], [0], [1], [0, 0, 1, 1], [], []>} : vector<8x32xf32>, vector<32x32xf32>, vector<8x32xf32> -> vector<8x32xf32>
    %378 = arith.addf %376, %377 : vector<8x32xf32>
    %379 = arith.negf %366 : vector<8x32xf32>
    %380 = math.exp %379 : vector<8x32xf32>
    %cst_184 = arith.constant 1.000000e+00 : f32
    %381 = vector.broadcast %cst_184 : f32 to vector<8x32xf32>
    %382 = arith.addf %381, %380 : vector<8x32xf32>
    %383 = arith.divf %381, %382 : vector<8x32xf32>
    %384 = arith.negf %370 : vector<8x32xf32>
    %385 = math.exp %384 : vector<8x32xf32>
    %cst_185 = arith.constant 1.000000e+00 : f32
    %386 = vector.broadcast %cst_185 : f32 to vector<8x32xf32>
    %387 = arith.addf %386, %385 : vector<8x32xf32>
    %388 = arith.divf %386, %387 : vector<8x32xf32>
    %389 = math.tanh %374 : vector<8x32xf32>
    %390 = arith.negf %378 : vector<8x32xf32>
    %391 = math.exp %390 : vector<8x32xf32>
    %cst_186 = arith.constant 1.000000e+00 : f32
    %392 = vector.broadcast %cst_186 : f32 to vector<8x32xf32>
    %393 = arith.addf %392, %391 : vector<8x32xf32>
    %394 = arith.divf %392, %393 : vector<8x32xf32>
    %395 = arith.mulf %388, %327 : vector<8x32xf32>
    %396 = arith.mulf %383, %389 : vector<8x32xf32>
    %397 = arith.addf %395, %396 : vector<8x32xf32>
    %398 = math.tanh %397 : vector<8x32xf32>
    %399 = arith.mulf %394, %398 : vector<8x32xf32>
    %c40 = arith.constant 40 : index
    %c0_187 = arith.constant 0 : index
    %400 = vector.load %arg34[%c40, %c0_187] : memref<64x32xf32, #tpu.memory_space<vmem>>, vector<8x32xf32>
    %cst_188 = arith.constant dense<0.000000e+00> : vector<8x32xf32>
    %401 = tpu.matmul %362, %4, %cst_188 {dimension_numbers = #tpu.dot_dimension_numbers<[1], [0], [0], [1], [0, 0, 1, 1], [], []>} : vector<8x32xf32>, vector<32x32xf32>, vector<8x32xf32> -> vector<8x32xf32>
    %402 = arith.addf %400, %401 : vector<8x32xf32>
    %c40_189 = arith.constant 40 : index
    %c0_190 = arith.constant 0 : index
    %403 = vector.load %arg35[%c40_189, %c0_190] : memref<64x32xf32, #tpu.memory_space<vmem>>, vector<8x32xf32>
    %cst_191 = arith.constant dense<0.000000e+00> : vector<8x32xf32>
    %404 = tpu.matmul %362, %5, %cst_191 {dimension_numbers = #tpu.dot_dimension_numbers<[1], [0], [0], [1], [0, 0, 1, 1], [], []>} : vector<8x32xf32>, vector<32x32xf32>, vector<8x32xf32> -> vector<8x32xf32>
    %405 = arith.addf %403, %404 : vector<8x32xf32>
    %c40_192 = arith.constant 40 : index
    %c0_193 = arith.constant 0 : index
    %406 = vector.load %arg36[%c40_192, %c0_193] : memref<64x32xf32, #tpu.memory_space<vmem>>, vector<8x32xf32>
    %cst_194 = arith.constant dense<0.000000e+00> : vector<8x32xf32>
    %407 = tpu.matmul %362, %6, %cst_194 {dimension_numbers = #tpu.dot_dimension_numbers<[1], [0], [0], [1], [0, 0, 1, 1], [], []>} : vector<8x32xf32>, vector<32x32xf32>, vector<8x32xf32> -> vector<8x32xf32>
    %408 = arith.addf %406, %407 : vector<8x32xf32>
    %c40_195 = arith.constant 40 : index
    %c0_196 = arith.constant 0 : index
    %409 = vector.load %arg37[%c40_195, %c0_196] : memref<64x32xf32, #tpu.memory_space<vmem>>, vector<8x32xf32>
    %cst_197 = arith.constant dense<0.000000e+00> : vector<8x32xf32>
    %410 = tpu.matmul %362, %7, %cst_197 {dimension_numbers = #tpu.dot_dimension_numbers<[1], [0], [0], [1], [0, 0, 1, 1], [], []>} : vector<8x32xf32>, vector<32x32xf32>, vector<8x32xf32> -> vector<8x32xf32>
    %411 = arith.addf %409, %410 : vector<8x32xf32>
    %412 = arith.negf %402 : vector<8x32xf32>
    %413 = math.exp %412 : vector<8x32xf32>
    %cst_198 = arith.constant 1.000000e+00 : f32
    %414 = vector.broadcast %cst_198 : f32 to vector<8x32xf32>
    %415 = arith.addf %414, %413 : vector<8x32xf32>
    %416 = arith.divf %414, %415 : vector<8x32xf32>
    %417 = arith.negf %405 : vector<8x32xf32>
    %418 = math.exp %417 : vector<8x32xf32>
    %cst_199 = arith.constant 1.000000e+00 : f32
    %419 = vector.broadcast %cst_199 : f32 to vector<8x32xf32>
    %420 = arith.addf %419, %418 : vector<8x32xf32>
    %421 = arith.divf %419, %420 : vector<8x32xf32>
    %422 = math.tanh %408 : vector<8x32xf32>
    %423 = arith.negf %411 : vector<8x32xf32>
    %424 = math.exp %423 : vector<8x32xf32>
    %cst_200 = arith.constant 1.000000e+00 : f32
    %425 = vector.broadcast %cst_200 : f32 to vector<8x32xf32>
    %426 = arith.addf %425, %424 : vector<8x32xf32>
    %427 = arith.divf %425, %426 : vector<8x32xf32>
    %428 = arith.mulf %421, %360 : vector<8x32xf32>
    %429 = arith.mulf %416, %422 : vector<8x32xf32>
    %430 = arith.addf %428, %429 : vector<8x32xf32>
    %431 = math.tanh %430 : vector<8x32xf32>
    %432 = arith.mulf %427, %431 : vector<8x32xf32>
    %cst_201 = arith.constant dense<0.000000e+00> : vector<8x32xf32>
    %433 = tpu.matmul %432, %29, %cst_201 {dimension_numbers = #tpu.dot_dimension_numbers<[1], [0], [0], [1], [0, 0, 1, 1], [], []>} : vector<8x32xf32>, vector<32x32xf32>, vector<8x32xf32> -> vector<8x32xf32>
    %434 = arith.addf %433, %42 : vector<8x32xf32>
    %cst_202 = arith.constant dense<0.000000e+00> : vector<8x32xf32>
    %435 = tpu.matmul %399, %33, %cst_202 {dimension_numbers = #tpu.dot_dimension_numbers<[1], [0], [0], [1], [0, 0, 1, 1], [], []>} : vector<8x32xf32>, vector<32x32xf32>, vector<8x32xf32> -> vector<8x32xf32>
    %436 = arith.addf %434, %435 : vector<8x32xf32>
    %cst_203 = arith.constant dense<0.000000e+00> : vector<8x32xf32>
    %437 = tpu.matmul %432, %30, %cst_203 {dimension_numbers = #tpu.dot_dimension_numbers<[1], [0], [0], [1], [0, 0, 1, 1], [], []>} : vector<8x32xf32>, vector<32x32xf32>, vector<8x32xf32> -> vector<8x32xf32>
    %438 = arith.addf %437, %44 : vector<8x32xf32>
    %cst_204 = arith.constant dense<0.000000e+00> : vector<8x32xf32>
    %439 = tpu.matmul %399, %34, %cst_204 {dimension_numbers = #tpu.dot_dimension_numbers<[1], [0], [0], [1], [0, 0, 1, 1], [], []>} : vector<8x32xf32>, vector<32x32xf32>, vector<8x32xf32> -> vector<8x32xf32>
    %440 = arith.addf %438, %439 : vector<8x32xf32>
    %cst_205 = arith.constant dense<0.000000e+00> : vector<8x32xf32>
    %441 = tpu.matmul %432, %31, %cst_205 {dimension_numbers = #tpu.dot_dimension_numbers<[1], [0], [0], [1], [0, 0, 1, 1], [], []>} : vector<8x32xf32>, vector<32x32xf32>, vector<8x32xf32> -> vector<8x32xf32>
    %442 = arith.addf %441, %46 : vector<8x32xf32>
    %cst_206 = arith.constant dense<0.000000e+00> : vector<8x32xf32>
    %443 = tpu.matmul %399, %35, %cst_206 {dimension_numbers = #tpu.dot_dimension_numbers<[1], [0], [0], [1], [0, 0, 1, 1], [], []>} : vector<8x32xf32>, vector<32x32xf32>, vector<8x32xf32> -> vector<8x32xf32>
    %444 = arith.addf %442, %443 : vector<8x32xf32>
    %cst_207 = arith.constant dense<0.000000e+00> : vector<8x32xf32>
    %445 = tpu.matmul %432, %32, %cst_207 {dimension_numbers = #tpu.dot_dimension_numbers<[1], [0], [0], [1], [0, 0, 1, 1], [], []>} : vector<8x32xf32>, vector<32x32xf32>, vector<8x32xf32> -> vector<8x32xf32>
    %446 = arith.addf %445, %48 : vector<8x32xf32>
    %cst_208 = arith.constant dense<0.000000e+00> : vector<8x32xf32>
    %447 = tpu.matmul %399, %36, %cst_208 {dimension_numbers = #tpu.dot_dimension_numbers<[1], [0], [0], [1], [0, 0, 1, 1], [], []>} : vector<8x32xf32>, vector<32x32xf32>, vector<8x32xf32> -> vector<8x32xf32>
    %448 = arith.addf %446, %447 : vector<8x32xf32>
    %449 = arith.negf %436 : vector<8x32xf32>
    %450 = math.exp %449 : vector<8x32xf32>
    %cst_209 = arith.constant 1.000000e+00 : f32
    %451 = vector.broadcast %cst_209 : f32 to vector<8x32xf32>
    %452 = arith.addf %451, %450 : vector<8x32xf32>
    %453 = arith.divf %451, %452 : vector<8x32xf32>
    %454 = arith.negf %440 : vector<8x32xf32>
    %455 = math.exp %454 : vector<8x32xf32>
    %cst_210 = arith.constant 1.000000e+00 : f32
    %456 = vector.broadcast %cst_210 : f32 to vector<8x32xf32>
    %457 = arith.addf %456, %455 : vector<8x32xf32>
    %458 = arith.divf %456, %457 : vector<8x32xf32>
    %459 = math.tanh %444 : vector<8x32xf32>
    %460 = arith.negf %448 : vector<8x32xf32>
    %461 = math.exp %460 : vector<8x32xf32>
    %cst_211 = arith.constant 1.000000e+00 : f32
    %462 = vector.broadcast %cst_211 : f32 to vector<8x32xf32>
    %463 = arith.addf %462, %461 : vector<8x32xf32>
    %464 = arith.divf %462, %463 : vector<8x32xf32>
    %465 = arith.mulf %458, %397 : vector<8x32xf32>
    %466 = arith.mulf %453, %459 : vector<8x32xf32>
    %467 = arith.addf %465, %466 : vector<8x32xf32>
    %468 = math.tanh %467 : vector<8x32xf32>
    %469 = arith.mulf %464, %468 : vector<8x32xf32>
    %c48 = arith.constant 48 : index
    %c0_212 = arith.constant 0 : index
    %470 = vector.load %arg34[%c48, %c0_212] : memref<64x32xf32, #tpu.memory_space<vmem>>, vector<8x32xf32>
    %cst_213 = arith.constant dense<0.000000e+00> : vector<8x32xf32>
    %471 = tpu.matmul %432, %4, %cst_213 {dimension_numbers = #tpu.dot_dimension_numbers<[1], [0], [0], [1], [0, 0, 1, 1], [], []>} : vector<8x32xf32>, vector<32x32xf32>, vector<8x32xf32> -> vector<8x32xf32>
    %472 = arith.addf %470, %471 : vector<8x32xf32>
    %c48_214 = arith.constant 48 : index
    %c0_215 = arith.constant 0 : index
    %473 = vector.load %arg35[%c48_214, %c0_215] : memref<64x32xf32, #tpu.memory_space<vmem>>, vector<8x32xf32>
    %cst_216 = arith.constant dense<0.000000e+00> : vector<8x32xf32>
    %474 = tpu.matmul %432, %5, %cst_216 {dimension_numbers = #tpu.dot_dimension_numbers<[1], [0], [0], [1], [0, 0, 1, 1], [], []>} : vector<8x32xf32>, vector<32x32xf32>, vector<8x32xf32> -> vector<8x32xf32>
    %475 = arith.addf %473, %474 : vector<8x32xf32>
    %c48_217 = arith.constant 48 : index
    %c0_218 = arith.constant 0 : index
    %476 = vector.load %arg36[%c48_217, %c0_218] : memref<64x32xf32, #tpu.memory_space<vmem>>, vector<8x32xf32>
    %cst_219 = arith.constant dense<0.000000e+00> : vector<8x32xf32>
    %477 = tpu.matmul %432, %6, %cst_219 {dimension_numbers = #tpu.dot_dimension_numbers<[1], [0], [0], [1], [0, 0, 1, 1], [], []>} : vector<8x32xf32>, vector<32x32xf32>, vector<8x32xf32> -> vector<8x32xf32>
    %478 = arith.addf %476, %477 : vector<8x32xf32>
    %c48_220 = arith.constant 48 : index
    %c0_221 = arith.constant 0 : index
    %479 = vector.load %arg37[%c48_220, %c0_221] : memref<64x32xf32, #tpu.memory_space<vmem>>, vector<8x32xf32>
    %cst_222 = arith.constant dense<0.000000e+00> : vector<8x32xf32>
    %480 = tpu.matmul %432, %7, %cst_222 {dimension_numbers = #tpu.dot_dimension_numbers<[1], [0], [0], [1], [0, 0, 1, 1], [], []>} : vector<8x32xf32>, vector<32x32xf32>, vector<8x32xf32> -> vector<8x32xf32>
    %481 = arith.addf %479, %480 : vector<8x32xf32>
    %482 = arith.negf %472 : vector<8x32xf32>
    %483 = math.exp %482 : vector<8x32xf32>
    %cst_223 = arith.constant 1.000000e+00 : f32
    %484 = vector.broadcast %cst_223 : f32 to vector<8x32xf32>
    %485 = arith.addf %484, %483 : vector<8x32xf32>
    %486 = arith.divf %484, %485 : vector<8x32xf32>
    %487 = arith.negf %475 : vector<8x32xf32>
    %488 = math.exp %487 : vector<8x32xf32>
    %cst_224 = arith.constant 1.000000e+00 : f32
    %489 = vector.broadcast %cst_224 : f32 to vector<8x32xf32>
    %490 = arith.addf %489, %488 : vector<8x32xf32>
    %491 = arith.divf %489, %490 : vector<8x32xf32>
    %492 = math.tanh %478 : vector<8x32xf32>
    %493 = arith.negf %481 : vector<8x32xf32>
    %494 = math.exp %493 : vector<8x32xf32>
    %cst_225 = arith.constant 1.000000e+00 : f32
    %495 = vector.broadcast %cst_225 : f32 to vector<8x32xf32>
    %496 = arith.addf %495, %494 : vector<8x32xf32>
    %497 = arith.divf %495, %496 : vector<8x32xf32>
    %498 = arith.mulf %491, %430 : vector<8x32xf32>
    %499 = arith.mulf %486, %492 : vector<8x32xf32>
    %500 = arith.addf %498, %499 : vector<8x32xf32>
    %501 = math.tanh %500 : vector<8x32xf32>
    %502 = arith.mulf %497, %501 : vector<8x32xf32>
    %cst_226 = arith.constant dense<0.000000e+00> : vector<8x32xf32>
    %503 = tpu.matmul %502, %29, %cst_226 {dimension_numbers = #tpu.dot_dimension_numbers<[1], [0], [0], [1], [0, 0, 1, 1], [], []>} : vector<8x32xf32>, vector<32x32xf32>, vector<8x32xf32> -> vector<8x32xf32>
    %504 = arith.addf %503, %42 : vector<8x32xf32>
    %cst_227 = arith.constant dense<0.000000e+00> : vector<8x32xf32>
    %505 = tpu.matmul %469, %33, %cst_227 {dimension_numbers = #tpu.dot_dimension_numbers<[1], [0], [0], [1], [0, 0, 1, 1], [], []>} : vector<8x32xf32>, vector<32x32xf32>, vector<8x32xf32> -> vector<8x32xf32>
    %506 = arith.addf %504, %505 : vector<8x32xf32>
    %cst_228 = arith.constant dense<0.000000e+00> : vector<8x32xf32>
    %507 = tpu.matmul %502, %30, %cst_228 {dimension_numbers = #tpu.dot_dimension_numbers<[1], [0], [0], [1], [0, 0, 1, 1], [], []>} : vector<8x32xf32>, vector<32x32xf32>, vector<8x32xf32> -> vector<8x32xf32>
    %508 = arith.addf %507, %44 : vector<8x32xf32>
    %cst_229 = arith.constant dense<0.000000e+00> : vector<8x32xf32>
    %509 = tpu.matmul %469, %34, %cst_229 {dimension_numbers = #tpu.dot_dimension_numbers<[1], [0], [0], [1], [0, 0, 1, 1], [], []>} : vector<8x32xf32>, vector<32x32xf32>, vector<8x32xf32> -> vector<8x32xf32>
    %510 = arith.addf %508, %509 : vector<8x32xf32>
    %cst_230 = arith.constant dense<0.000000e+00> : vector<8x32xf32>
    %511 = tpu.matmul %502, %31, %cst_230 {dimension_numbers = #tpu.dot_dimension_numbers<[1], [0], [0], [1], [0, 0, 1, 1], [], []>} : vector<8x32xf32>, vector<32x32xf32>, vector<8x32xf32> -> vector<8x32xf32>
    %512 = arith.addf %511, %46 : vector<8x32xf32>
    %cst_231 = arith.constant dense<0.000000e+00> : vector<8x32xf32>
    %513 = tpu.matmul %469, %35, %cst_231 {dimension_numbers = #tpu.dot_dimension_numbers<[1], [0], [0], [1], [0, 0, 1, 1], [], []>} : vector<8x32xf32>, vector<32x32xf32>, vector<8x32xf32> -> vector<8x32xf32>
    %514 = arith.addf %512, %513 : vector<8x32xf32>
    %cst_232 = arith.constant dense<0.000000e+00> : vector<8x32xf32>
    %515 = tpu.matmul %502, %32, %cst_232 {dimension_numbers = #tpu.dot_dimension_numbers<[1], [0], [0], [1], [0, 0, 1, 1], [], []>} : vector<8x32xf32>, vector<32x32xf32>, vector<8x32xf32> -> vector<8x32xf32>
    %516 = arith.addf %515, %48 : vector<8x32xf32>
    %cst_233 = arith.constant dense<0.000000e+00> : vector<8x32xf32>
    %517 = tpu.matmul %469, %36, %cst_233 {dimension_numbers = #tpu.dot_dimension_numbers<[1], [0], [0], [1], [0, 0, 1, 1], [], []>} : vector<8x32xf32>, vector<32x32xf32>, vector<8x32xf32> -> vector<8x32xf32>
    %518 = arith.addf %516, %517 : vector<8x32xf32>
    %519 = arith.negf %506 : vector<8x32xf32>
    %520 = math.exp %519 : vector<8x32xf32>
    %cst_234 = arith.constant 1.000000e+00 : f32
    %521 = vector.broadcast %cst_234 : f32 to vector<8x32xf32>
    %522 = arith.addf %521, %520 : vector<8x32xf32>
    %523 = arith.divf %521, %522 : vector<8x32xf32>
    %524 = arith.negf %510 : vector<8x32xf32>
    %525 = math.exp %524 : vector<8x32xf32>
    %cst_235 = arith.constant 1.000000e+00 : f32
    %526 = vector.broadcast %cst_235 : f32 to vector<8x32xf32>
    %527 = arith.addf %526, %525 : vector<8x32xf32>
    %528 = arith.divf %526, %527 : vector<8x32xf32>
    %529 = math.tanh %514 : vector<8x32xf32>
    %530 = arith.negf %518 : vector<8x32xf32>
    %531 = math.exp %530 : vector<8x32xf32>
    %cst_236 = arith.constant 1.000000e+00 : f32
    %532 = vector.broadcast %cst_236 : f32 to vector<8x32xf32>
    %533 = arith.addf %532, %531 : vector<8x32xf32>
    %534 = arith.divf %532, %533 : vector<8x32xf32>
    %535 = arith.mulf %528, %467 : vector<8x32xf32>
    %536 = arith.mulf %523, %529 : vector<8x32xf32>
    %537 = arith.addf %535, %536 : vector<8x32xf32>
    %538 = math.tanh %537 : vector<8x32xf32>
    %539 = arith.mulf %534, %538 : vector<8x32xf32>
    %c56 = arith.constant 56 : index
    %c0_237 = arith.constant 0 : index
    %540 = vector.load %arg34[%c56, %c0_237] : memref<64x32xf32, #tpu.memory_space<vmem>>, vector<8x32xf32>
    %cst_238 = arith.constant dense<0.000000e+00> : vector<8x32xf32>
    %541 = tpu.matmul %502, %4, %cst_238 {dimension_numbers = #tpu.dot_dimension_numbers<[1], [0], [0], [1], [0, 0, 1, 1], [], []>} : vector<8x32xf32>, vector<32x32xf32>, vector<8x32xf32> -> vector<8x32xf32>
    %542 = arith.addf %540, %541 : vector<8x32xf32>
    %c56_239 = arith.constant 56 : index
    %c0_240 = arith.constant 0 : index
    %543 = vector.load %arg35[%c56_239, %c0_240] : memref<64x32xf32, #tpu.memory_space<vmem>>, vector<8x32xf32>
    %cst_241 = arith.constant dense<0.000000e+00> : vector<8x32xf32>
    %544 = tpu.matmul %502, %5, %cst_241 {dimension_numbers = #tpu.dot_dimension_numbers<[1], [0], [0], [1], [0, 0, 1, 1], [], []>} : vector<8x32xf32>, vector<32x32xf32>, vector<8x32xf32> -> vector<8x32xf32>
    %545 = arith.addf %543, %544 : vector<8x32xf32>
    %c56_242 = arith.constant 56 : index
    %c0_243 = arith.constant 0 : index
    %546 = vector.load %arg36[%c56_242, %c0_243] : memref<64x32xf32, #tpu.memory_space<vmem>>, vector<8x32xf32>
    %cst_244 = arith.constant dense<0.000000e+00> : vector<8x32xf32>
    %547 = tpu.matmul %502, %6, %cst_244 {dimension_numbers = #tpu.dot_dimension_numbers<[1], [0], [0], [1], [0, 0, 1, 1], [], []>} : vector<8x32xf32>, vector<32x32xf32>, vector<8x32xf32> -> vector<8x32xf32>
    %548 = arith.addf %546, %547 : vector<8x32xf32>
    %c56_245 = arith.constant 56 : index
    %c0_246 = arith.constant 0 : index
    %549 = vector.load %arg37[%c56_245, %c0_246] : memref<64x32xf32, #tpu.memory_space<vmem>>, vector<8x32xf32>
    %cst_247 = arith.constant dense<0.000000e+00> : vector<8x32xf32>
    %550 = tpu.matmul %502, %7, %cst_247 {dimension_numbers = #tpu.dot_dimension_numbers<[1], [0], [0], [1], [0, 0, 1, 1], [], []>} : vector<8x32xf32>, vector<32x32xf32>, vector<8x32xf32> -> vector<8x32xf32>
    %551 = arith.addf %549, %550 : vector<8x32xf32>
    %552 = arith.negf %542 : vector<8x32xf32>
    %553 = math.exp %552 : vector<8x32xf32>
    %cst_248 = arith.constant 1.000000e+00 : f32
    %554 = vector.broadcast %cst_248 : f32 to vector<8x32xf32>
    %555 = arith.addf %554, %553 : vector<8x32xf32>
    %556 = arith.divf %554, %555 : vector<8x32xf32>
    %557 = arith.negf %545 : vector<8x32xf32>
    %558 = math.exp %557 : vector<8x32xf32>
    %cst_249 = arith.constant 1.000000e+00 : f32
    %559 = vector.broadcast %cst_249 : f32 to vector<8x32xf32>
    %560 = arith.addf %559, %558 : vector<8x32xf32>
    %561 = arith.divf %559, %560 : vector<8x32xf32>
    %562 = math.tanh %548 : vector<8x32xf32>
    %563 = arith.negf %551 : vector<8x32xf32>
    %564 = math.exp %563 : vector<8x32xf32>
    %cst_250 = arith.constant 1.000000e+00 : f32
    %565 = vector.broadcast %cst_250 : f32 to vector<8x32xf32>
    %566 = arith.addf %565, %564 : vector<8x32xf32>
    %567 = arith.divf %565, %566 : vector<8x32xf32>
    %568 = arith.mulf %561, %500 : vector<8x32xf32>
    %569 = arith.mulf %556, %562 : vector<8x32xf32>
    %570 = arith.addf %568, %569 : vector<8x32xf32>
    %571 = math.tanh %570 : vector<8x32xf32>
    %572 = arith.mulf %567, %571 : vector<8x32xf32>
    %cst_251 = arith.constant dense<0.000000e+00> : vector<8x32xf32>
    %573 = tpu.matmul %572, %29, %cst_251 {dimension_numbers = #tpu.dot_dimension_numbers<[1], [0], [0], [1], [0, 0, 1, 1], [], []>} : vector<8x32xf32>, vector<32x32xf32>, vector<8x32xf32> -> vector<8x32xf32>
    %574 = arith.addf %573, %42 : vector<8x32xf32>
    %cst_252 = arith.constant dense<0.000000e+00> : vector<8x32xf32>
    %575 = tpu.matmul %539, %33, %cst_252 {dimension_numbers = #tpu.dot_dimension_numbers<[1], [0], [0], [1], [0, 0, 1, 1], [], []>} : vector<8x32xf32>, vector<32x32xf32>, vector<8x32xf32> -> vector<8x32xf32>
    %576 = arith.addf %574, %575 : vector<8x32xf32>
    %cst_253 = arith.constant dense<0.000000e+00> : vector<8x32xf32>
    %577 = tpu.matmul %572, %30, %cst_253 {dimension_numbers = #tpu.dot_dimension_numbers<[1], [0], [0], [1], [0, 0, 1, 1], [], []>} : vector<8x32xf32>, vector<32x32xf32>, vector<8x32xf32> -> vector<8x32xf32>
    %578 = arith.addf %577, %44 : vector<8x32xf32>
    %cst_254 = arith.constant dense<0.000000e+00> : vector<8x32xf32>
    %579 = tpu.matmul %539, %34, %cst_254 {dimension_numbers = #tpu.dot_dimension_numbers<[1], [0], [0], [1], [0, 0, 1, 1], [], []>} : vector<8x32xf32>, vector<32x32xf32>, vector<8x32xf32> -> vector<8x32xf32>
    %580 = arith.addf %578, %579 : vector<8x32xf32>
    %cst_255 = arith.constant dense<0.000000e+00> : vector<8x32xf32>
    %581 = tpu.matmul %572, %31, %cst_255 {dimension_numbers = #tpu.dot_dimension_numbers<[1], [0], [0], [1], [0, 0, 1, 1], [], []>} : vector<8x32xf32>, vector<32x32xf32>, vector<8x32xf32> -> vector<8x32xf32>
    %582 = arith.addf %581, %46 : vector<8x32xf32>
    %cst_256 = arith.constant dense<0.000000e+00> : vector<8x32xf32>
    %583 = tpu.matmul %539, %35, %cst_256 {dimension_numbers = #tpu.dot_dimension_numbers<[1], [0], [0], [1], [0, 0, 1, 1], [], []>} : vector<8x32xf32>, vector<32x32xf32>, vector<8x32xf32> -> vector<8x32xf32>
    %584 = arith.addf %582, %583 : vector<8x32xf32>
    %cst_257 = arith.constant dense<0.000000e+00> : vector<8x32xf32>
    %585 = tpu.matmul %572, %32, %cst_257 {dimension_numbers = #tpu.dot_dimension_numbers<[1], [0], [0], [1], [0, 0, 1, 1], [], []>} : vector<8x32xf32>, vector<32x32xf32>, vector<8x32xf32> -> vector<8x32xf32>
    %586 = arith.addf %585, %48 : vector<8x32xf32>
    %cst_258 = arith.constant dense<0.000000e+00> : vector<8x32xf32>
    %587 = tpu.matmul %539, %36, %cst_258 {dimension_numbers = #tpu.dot_dimension_numbers<[1], [0], [0], [1], [0, 0, 1, 1], [], []>} : vector<8x32xf32>, vector<32x32xf32>, vector<8x32xf32> -> vector<8x32xf32>
    %588 = arith.addf %586, %587 : vector<8x32xf32>
    %589 = arith.negf %576 : vector<8x32xf32>
    %590 = math.exp %589 : vector<8x32xf32>
    %cst_259 = arith.constant 1.000000e+00 : f32
    %591 = vector.broadcast %cst_259 : f32 to vector<8x32xf32>
    %592 = arith.addf %591, %590 : vector<8x32xf32>
    %593 = arith.divf %591, %592 : vector<8x32xf32>
    %594 = arith.negf %580 : vector<8x32xf32>
    %595 = math.exp %594 : vector<8x32xf32>
    %cst_260 = arith.constant 1.000000e+00 : f32
    %596 = vector.broadcast %cst_260 : f32 to vector<8x32xf32>
    %597 = arith.addf %596, %595 : vector<8x32xf32>
    %598 = arith.divf %596, %597 : vector<8x32xf32>
    %599 = math.tanh %584 : vector<8x32xf32>
    %600 = arith.negf %588 : vector<8x32xf32>
    %601 = math.exp %600 : vector<8x32xf32>
    %cst_261 = arith.constant 1.000000e+00 : f32
    %602 = vector.broadcast %cst_261 : f32 to vector<8x32xf32>
    %603 = arith.addf %602, %601 : vector<8x32xf32>
    %604 = arith.divf %602, %603 : vector<8x32xf32>
    %605 = arith.mulf %598, %537 : vector<8x32xf32>
    %606 = arith.mulf %593, %599 : vector<8x32xf32>
    %607 = arith.addf %605, %606 : vector<8x32xf32>
    %608 = math.tanh %607 : vector<8x32xf32>
    %609 = arith.mulf %604, %608 : vector<8x32xf32>
    %c0_262 = arith.constant 0 : index
    %c0_263 = arith.constant 0 : index
    %610 = vector.load %arg25[%c0_262, %c0_263] : memref<32x32xf32, #tpu.memory_space<vmem>>, vector<32x32xf32>
    %c0_264 = arith.constant 0 : index
    %c0_265 = arith.constant 0 : index
    %611 = vector.load %arg26[%c0_264, %c0_265] : memref<1x32xf32, #tpu.memory_space<vmem>>, vector<1x32xf32>
    %cst_266 = arith.constant dense<0.000000e+00> : vector<8x32xf32>
    %612 = tpu.matmul %609, %610, %cst_266 {dimension_numbers = #tpu.dot_dimension_numbers<[1], [0], [0], [1], [0, 0, 1, 1], [], []>} : vector<8x32xf32>, vector<32x32xf32>, vector<8x32xf32> -> vector<8x32xf32>
    %613 = vector.broadcast %611 : vector<1x32xf32> to vector<8x32xf32>
    %614 = arith.addf %612, %613 : vector<8x32xf32>
    %cst_267 = arith.constant 0.000000e+00 : f32
    %615 = vector.broadcast %cst_267 : f32 to vector<8x32xf32>
    %616 = arith.maximumf %614, %615 : vector<8x32xf32>
    %c0_268 = arith.constant 0 : index
    %c0_269 = arith.constant 0 : index
    %617 = vector.load %arg27[%c0_268, %c0_269] : memref<32x16xf32, #tpu.memory_space<vmem>>, vector<32x16xf32>
    %c0_270 = arith.constant 0 : index
    %c0_271 = arith.constant 0 : index
    %618 = vector.load %arg28[%c0_270, %c0_271] : memref<1x16xf32, #tpu.memory_space<vmem>>, vector<1x16xf32>
    %cst_272 = arith.constant dense<0.000000e+00> : vector<8x16xf32>
    %619 = tpu.matmul %616, %617, %cst_272 {dimension_numbers = #tpu.dot_dimension_numbers<[1], [0], [0], [1], [0, 0, 1, 1], [], []>} : vector<8x32xf32>, vector<32x16xf32>, vector<8x16xf32> -> vector<8x16xf32>
    %620 = vector.broadcast %618 : vector<1x16xf32> to vector<8x16xf32>
    %621 = arith.addf %619, %620 : vector<8x16xf32>
    %cst_273 = arith.constant 0.000000e+00 : f32
    %622 = vector.broadcast %cst_273 : f32 to vector<8x16xf32>
    %623 = arith.maximumf %621, %622 : vector<8x16xf32>
    %c0_274 = arith.constant 0 : index
    %c0_275 = arith.constant 0 : index
    %624 = vector.load %arg29[%c0_274, %c0_275] : memref<16x32xf32, #tpu.memory_space<vmem>>, vector<16x32xf32>
    %c0_276 = arith.constant 0 : index
    %c0_277 = arith.constant 0 : index
    %625 = vector.load %arg30[%c0_276, %c0_277] : memref<1x32xf32, #tpu.memory_space<vmem>>, vector<1x32xf32>
    %cst_278 = arith.constant dense<0.000000e+00> : vector<8x32xf32>
    %626 = tpu.matmul %623, %624, %cst_278 {dimension_numbers = #tpu.dot_dimension_numbers<[1], [0], [0], [1], [0, 0, 1, 1], [], []>} : vector<8x16xf32>, vector<16x32xf32>, vector<8x32xf32> -> vector<8x32xf32>
    %627 = vector.broadcast %625 : vector<1x32xf32> to vector<8x32xf32>
    %628 = arith.addf %626, %627 : vector<8x32xf32>
    %cst_279 = arith.constant 0.000000e+00 : f32
    %629 = vector.broadcast %cst_279 : f32 to vector<8x32xf32>
    %630 = arith.maximumf %628, %629 : vector<8x32xf32>
    %c0_280 = arith.constant 0 : index
    %c0_281 = arith.constant 0 : index
    %631 = vector.load %arg31[%c0_280, %c0_281] : memref<32x4xf32, #tpu.memory_space<vmem>>, vector<32x4xf32>
    %c0_282 = arith.constant 0 : index
    %c0_283 = arith.constant 0 : index
    %632 = vector.load %arg32[%c0_282, %c0_283] : memref<1x4xf32, #tpu.memory_space<vmem>>, vector<1x4xf32>
    %cst_284 = arith.constant dense<0.000000e+00> : vector<8x4xf32>
    %633 = tpu.matmul %630, %631, %cst_284 {dimension_numbers = #tpu.dot_dimension_numbers<[1], [0], [0], [1], [0, 0, 1, 1], [], []>} : vector<8x32xf32>, vector<32x4xf32>, vector<8x4xf32> -> vector<8x4xf32>
    %634 = vector.broadcast %632 : vector<1x4xf32> to vector<8x4xf32>
    %635 = arith.addf %633, %634 : vector<8x4xf32>
    %636 = vector.extract_strided_slice %635 {offsets = [0, 0], sizes = [2, 4], strides = [1, 1]} : vector<8x4xf32> to vector<2x4xf32>
    %c0_285 = arith.constant 0 : index
    %c0_286 = arith.constant 0 : index
    %637 = vector.load %arg33[%c0_285, %c0_286] : memref<2x4xf32, #tpu.memory_space<vmem>>, vector<2x4xf32>
    tpu.vector_store %arg33[%c0_285, %c0_286], %636 {strides = array<i32>} : memref<2x4xf32, #tpu.memory_space<vmem>>, vector<2x4xf32>,
    return
  }
}

</mosaic_0001>

<llo_original>
// kernel: lstm_model_abc_forward.1
$region0: #{lstm_model_abc_forward.1}
  #allocation0 [shape = 'u32[]', space=smem, size = 0x4, offset = 0x4, fixed_abs, tag = 'smem constant byte address 0x4 - core index']
  #allocation1 [shape = 'u32[144,128]{1,0:T(1,128)}', space=vmem, size = 0x12000, scoped, tag = 'internal scratch']
  #allocation2 [shape = 'f32[64,32]{1,0:T(8,128)}', space=vmem, size = 0x8000, scoped, tag = 'scratch operand']
  #allocation3 [shape = 'f32[64,32]{1,0:T(8,128)}', space=vmem, size = 0x8000, scoped, tag = 'scratch operand']
  #allocation4 [shape = 'f32[64,32]{1,0:T(8,128)}', space=vmem, size = 0x8000, scoped, tag = 'scratch operand']
  #allocation5 [shape = 'f32[64,32]{1,0:T(8,128)}', space=vmem, size = 0x8000, scoped, tag = 'scratch operand']
  %s0 = inlined_call_operand.smem [shape: u32[34], index: -1, kind: input, shape index: {}]
  %s1 = sld [smem:[%s0]]
  %s2 = scalar_lea.smem %s0, 1
  %s3 = sld [smem:[%s2]]
  %s4 = scalar_lea.smem %s0, 2
  %s5 = sld [smem:[%s4]]
  %s6 = scalar_lea.smem %s0, 3
  %s7 = sld [smem:[%s6]]
  %s8 = scalar_lea.smem %s0, 4
  %s9 = sld [smem:[%s8]]
  %s10 = scalar_lea.smem %s0, 5
  %s11 = sld [smem:[%s10]]
  %s12 = scalar_lea.smem %s0, 6
  %s13 = sld [smem:[%s12]]
  %s14 = scalar_lea.smem %s0, 7
  %s15 = sld [smem:[%s14]]
  %s16 = scalar_lea.smem %s0, 8
  %s17 = sld [smem:[%s16]]
  %s18 = scalar_lea.smem %s0, 9
  %s19 = sld [smem:[%s18]]
  %s20 = scalar_lea.smem %s0, 10
  %s21 = sld [smem:[%s20]]
  %s22 = scalar_lea.smem %s0, 11
  %s23 = sld [smem:[%s22]]
  %s24 = scalar_lea.smem %s0, 12
  %s25 = sld [smem:[%s24]]
  %s26 = scalar_lea.smem %s0, 13
  %s27 = sld [smem:[%s26]]
  %s28 = scalar_lea.smem %s0, 14
  %s29 = sld [smem:[%s28]]
  %s30 = scalar_lea.smem %s0, 15
  %s31 = sld [smem:[%s30]]
  %s32 = scalar_lea.smem %s0, 16
  %s33 = sld [smem:[%s32]]
  %s34 = scalar_lea.smem %s0, 17
  %s35 = sld [smem:[%s34]]
  %s36 = scalar_lea.smem %s0, 18
  %s37 = sld [smem:[%s36]]
  %s38 = scalar_lea.smem %s0, 19
  %s39 = sld [smem:[%s38]]
  %s40 = scalar_lea.smem %s0, 20
  %s41 = sld [smem:[%s40]]
  %s42 = scalar_lea.smem %s0, 21
  %s43 = sld [smem:[%s42]]
  %s44 = scalar_lea.smem %s0, 22
  %s45 = sld [smem:[%s44]]
  %s46 = scalar_lea.smem %s0, 23
  %s47 = sld [smem:[%s46]]
  %s48 = scalar_lea.smem %s0, 24
  %s49 = sld [smem:[%s48]]
  %s50 = scalar_lea.smem %s0, 25
  %s51 = sld [smem:[%s50]]
  %s52 = scalar_lea.smem %s0, 26
  %s53 = sld [smem:[%s52]]
  %s54 = scalar_lea.smem %s0, 27
  %s55 = sld [smem:[%s54]]
  %s56 = scalar_lea.smem %s0, 28
  %s57 = sld [smem:[%s56]]
  %s58 = scalar_lea.smem %s0, 29
  %s59 = sld [smem:[%s58]]
  %s60 = scalar_lea.smem %s0, 30
  %s61 = sld [smem:[%s60]]
  %s62 = scalar_lea.smem %s0, 31
  %s63 = sld [smem:[%s62]]
  %s64 = scalar_lea.smem %s0, 32
  %s65 = sld [smem:[%s64]]
  %s66 = scalar_lea.smem %s0, 33
  %s67 = sld [smem:[%s66]]
  %s68 = sld [smem:[#allocation0]]
  $region234: #{lstm_model_abc_forward.1} parent=0
    _
  %s70 = ssub.s32 1, %s68
  %s71 = scalar_select 0, %s70, %s68
  $region1: #{lstm_model_abc_forward.1} parent=0
    #allocation6 [shape = 'u8[2048]{0}', space=vmem, size = 0x800, scoped, tag = 'input window, operand 1, single buffered']
    #allocation7 [shape = 's32[1]{0}', space=sflag, size = 0x4, scoped, tag = 'scoped memory for lstm_model_abc_forward.1']
    #allocation8 [shape = 's32[1]{0}', space=sflag, size = 0x4, scoped, tag = 'scoped memory for lstm_model_abc_forward.1']
    #allocation9 [shape = 'u8[2048]{0}', space=vmem, size = 0x800, scoped, tag = 'input window, operand 2, single buffered']
    #allocation10 [shape = 's32[1]{0}', space=sflag, size = 0x4, scoped, tag = 'scoped memory for lstm_model_abc_forward.1']
    #allocation11 [shape = 'u8[2048]{0}', space=vmem, size = 0x800, scoped, tag = 'input window, operand 3, single buffered']
    #allocation12 [shape = 'u8[2048]{0}', space=vmem, size = 0x800, scoped, tag = 'input window, operand 4, single buffered']
    #allocation13 [shape = 's32[1]{0}', space=sflag, size = 0x4, scoped, tag = 'scoped memory for lstm_model_abc_forward.1']
    #allocation14 [shape = 'u8[512]{0}', space=vmem, size = 0x400, scoped, tag = 'input window, operand 9, single buffered']
    #allocation15 [shape = 'u8[512]{0}', space=vmem, size = 0x400, scoped, tag = 'input window, operand 10, single buffered']
    #allocation16 [shape = 's32[1]{0}', space=sflag, size = 0x4, scoped, tag = 'scoped memory for lstm_model_abc_forward.1']
    #allocation17 [shape = 'u8[512]{0}', space=vmem, size = 0x400, scoped, tag = 'input window, operand 11, single buffered']
    #allocation18 [shape = 'u8[512]{0}', space=vmem, size = 0x400, scoped, tag = 'input window, operand 12, single buffered']
    #allocation19 [shape = 's32[1]{0}', space=sflag, size = 0x4, scoped, tag = 'scoped memory for lstm_model_abc_forward.1']
    #allocation20 [shape = 'u8[16384]{0}', space=vmem, size = 0x4000, scoped, tag = 'input window, operand 16, single buffered']
    #allocation21 [shape = 'u8[16384]{0}', space=vmem, size = 0x4000, scoped, tag = 'input window, operand 17, single buffered']
    #allocation22 [shape = 's32[1]{0}', space=sflag, size = 0x4, scoped, tag = 'scoped memory for lstm_model_abc_forward.1']
    #allocation23 [shape = 'u8[16384]{0}', space=vmem, size = 0x4000, scoped, tag = 'input window, operand 18, single buffered']
    #allocation24 [shape = 'u8[16384]{0}', space=vmem, size = 0x4000, scoped, tag = 'input window, operand 19, single buffered']
    #allocation25 [shape = 's32[1]{0}', space=sflag, size = 0x4, scoped, tag = 'scoped memory for lstm_model_abc_forward.1']
    #allocation26 [shape = 'u8[16384]{0}', space=vmem, size = 0x4000, scoped, tag = 'input window, operand 20, single buffered']
    #allocation27 [shape = 'u8[512]{0}', space=vmem, size = 0x400, scoped, tag = 'input window, operand 21, single buffered']
    #allocation28 [shape = 's32[1]{0}', space=sflag, size = 0x4, scoped, tag = 'scoped memory for lstm_model_abc_forward.1']
    #allocation29 [shape = 'u8[512]{0}', space=vmem, size = 0x400, scoped, tag = 'input window, operand 22, single buffered']
    #allocation30 [shape = 'u8[512]{0}', space=vmem, size = 0x400, scoped, tag = 'input window, operand 23, single buffered']
    #allocation31 [shape = 's32[1]{0}', space=sflag, size = 0x4, scoped, tag = 'scoped memory for lstm_model_abc_forward.1']
    #allocation32 [shape = 'u8[512]{0}', space=vmem, size = 0x400, scoped, tag = 'input window, operand 24, single buffered']
    #allocation33 [shape = 'u8[16384]{0}', space=vmem, size = 0x4000, scoped, tag = 'input window, operand 25, single buffered']
    #allocation34 [shape = 's32[1]{0}', space=sflag, size = 0x4, scoped, tag = 'scoped memory for lstm_model_abc_forward.1']
    #allocation35 [shape = 'u8[512]{0}', space=vmem, size = 0x400, scoped, tag = 'input window, operand 26, single buffered']
    #allocation36 [shape = 'u8[512]{0}', space=vmem, size = 0x400, scoped, tag = 'input window, operand 28, single buffered']
    #allocation37 [shape = 's32[1]{0}', space=sflag, size = 0x4, scoped, tag = 'scoped memory for lstm_model_abc_forward.1']
    #allocation38 [shape = 'u8[8192]{0}', space=vmem, size = 0x2000, scoped, tag = 'input window, operand 29, single buffered']
    #allocation39 [shape = 'u8[512]{0}', space=vmem, size = 0x400, scoped, tag = 'input window, operand 30, single buffered']
    #allocation40 [shape = 's32[1]{0}', space=sflag, size = 0x4, scoped, tag = 'scoped memory for lstm_model_abc_forward.1']
    #allocation41 [shape = 'u8[512]{0}', space=vmem, size = 0x400, scoped, tag = 'input window, operand 32, single buffered']
    #allocation42 [shape = 'u8[1024]{0}', space=vmem, size = 0x400, scoped, tag = 'output window, operand 0, single buffered']
    %72 = vsyncpa [#allocation7], 0
    %73 = vsyncpa [#allocation10], 0
    %74 = vsyncpa [#allocation13], 0
    %75 = vsyncpa [#allocation16], 0
    %76 = vsyncpa [#allocation19], 0
    %77 = vsyncpa [#allocation22], 0
    %78 = vsyncpa [#allocation25], 0
    %79 = vsyncpa [#allocation28], 0
    %80 = vsyncpa [#allocation31], 0
    %81 = vsyncpa [#allocation34], 0
    %82 = vsyncpa [#allocation37], 0
    %83 = vsyncpa [#allocation40], 0
    %84 = vsyncpa [#allocation8], 0
    // Predicated region
    $region2: #{lstm_model_abc_forward.1} parent=1 // pred_check
      _
    $region3: #{lstm_model_abc_forward.1} parent=1 // pred_check_branch
      %86 = sbr.rel (0) target = $region5
    $region4: #{lstm_model_abc_forward.1} parent=1 // pred_region
      _
    $region5: #{lstm_model_abc_forward.1} parent=1 // pred_fallthru
      _
    // Predicated region
    $region6: #{lstm_model_abc_forward.1} parent=1 // pred_check
      _
    $region7: #{lstm_model_abc_forward.1} parent=1 // pred_check_branch
      %88 = sbr.rel (0) target = $region9
    $region8: #{lstm_model_abc_forward.1} parent=1 // pred_region
      %s90 = ssub.s32 64, 64
      %91 = vsyncadd [#allocation7], %s90
      %s93 = sshll.u32 [#allocation6], 4
      %s94 = int_to_ptr.vmem [resolvable:$true] %s93
      %96 = dma.hbm_to_vmem [thread:$0]  %s3, 64, %s94, [#allocation7]
    $region9: #{lstm_model_abc_forward.1} parent=1 // pred_fallthru
      _
    // Predicated region
    $region10: #{lstm_model_abc_forward.1} parent=1 // pred_check
      _
    $region11: #{lstm_model_abc_forward.1} parent=1 // pred_check_branch
      %98 = sbr.rel (0) target = $region13
    $region12: #{lstm_model_abc_forward.1} parent=1 // pred_region
      %s100 = ssub.s32 64, 64
      %101 = vsyncadd [#allocation10], %s100
      %s103 = sshll.u32 [#allocation9], 4
      %s104 = int_to_ptr.vmem [resolvable:$true] %s103
      %106 = dma.hbm_to_vmem [thread:$0]  %s5, 64, %s104, [#allocation10]
    $region13: #{lstm_model_abc_forward.1} parent=1 // pred_fallthru
      _
    // Predicated region
    $region14: #{lstm_model_abc_forward.1} parent=1 // pred_check
      _
    $region15: #{lstm_model_abc_forward.1} parent=1 // pred_check_branch
      %108 = sbr.rel (0) target = $region17
    $region16: #{lstm_model_abc_forward.1} parent=1 // pred_region
      %s110 = ssub.s32 64, 64
      %111 = vsyncadd [#allocation10], %s110
      %s113 = sshll.u32 [#allocation11], 4
      %s114 = int_to_ptr.vmem [resolvable:$true] %s113
      %116 = dma.hbm_to_vmem [thread:$0]  %s7, 64, %s114, [#allocation10]
    $region17: #{lstm_model_abc_forward.1} parent=1 // pred_fallthru
      _
    // Predicated region
    $region18: #{lstm_model_abc_forward.1} parent=1 // pred_check
      _
    $region19: #{lstm_model_abc_forward.1} parent=1 // pred_check_branch
      %118 = sbr.rel (0) target = $region21
    $region20: #{lstm_model_abc_forward.1} parent=1 // pred_region
      %s120 = ssub.s32 64, 64
      %121 = vsyncadd [#allocation13], %s120
      %s123 = sshll.u32 [#allocation12], 4
      %s124 = int_to_ptr.vmem [resolvable:$true] %s123
      %126 = dma.hbm_to_vmem [thread:$0]  %s9, 64, %s124, [#allocation13]
    $region21: #{lstm_model_abc_forward.1} parent=1 // pred_fallthru
      _
    // Predicated region
    $region22: #{lstm_model_abc_forward.1} parent=1 // pred_check
      _
    $region23: #{lstm_model_abc_forward.1} parent=1 // pred_check_branch
      %128 = sbr.rel (0) target = $region25
    $region24: #{lstm_model_abc_forward.1} parent=1 // pred_region
      _
    $region25: #{lstm_model_abc_forward.1} parent=1 // pred_fallthru
      _
    // Predicated region
    $region26: #{lstm_model_abc_forward.1} parent=1 // pred_check
      _
    $region27: #{lstm_model_abc_forward.1} parent=1 // pred_check_branch
      %130 = sbr.rel (0) target = $region29
    $region28: #{lstm_model_abc_forward.1} parent=1 // pred_region
      _
    $region29: #{lstm_model_abc_forward.1} parent=1 // pred_fallthru
      _
    // Predicated region
    $region30: #{lstm_model_abc_forward.1} parent=1 // pred_check
      _
    $region31: #{lstm_model_abc_forward.1} parent=1 // pred_check_branch
      %132 = sbr.rel (0) target = $region33
    $region32: #{lstm_model_abc_forward.1} parent=1 // pred_region
      _
    $region33: #{lstm_model_abc_forward.1} parent=1 // pred_fallthru
      _
    // Predicated region
    $region34: #{lstm_model_abc_forward.1} parent=1 // pred_check
      _
    $region35: #{lstm_model_abc_forward.1} parent=1 // pred_check_branch
      %134 = sbr.rel (0) target = $region37
    $region36: #{lstm_model_abc_forward.1} parent=1 // pred_region
      _
    $region37: #{lstm_model_abc_forward.1} parent=1 // pred_fallthru
      _
    // Predicated region
    $region38: #{lstm_model_abc_forward.1} parent=1 // pred_check
      _
    $region39: #{lstm_model_abc_forward.1} parent=1 // pred_check_branch
      %136 = sbr.rel (0) target = $region41
    $region40: #{lstm_model_abc_forward.1} parent=1 // pred_region
      %s138 = ssub.s32 16, 16
      %139 = vsyncadd [#allocation13], %s138
      %s141 = sshll.u32 [#allocation14], 4
      %s142 = int_to_ptr.vmem [resolvable:$true] %s141
      %144 = dma.hbm_to_vmem [thread:$0]  %s19, 16, %s142, [#allocation13]
    $region41: #{lstm_model_abc_forward.1} parent=1 // pred_fallthru
      _
    // Predicated region
    $region42: #{lstm_model_abc_forward.1} parent=1 // pred_check
      _
    $region43: #{lstm_model_abc_forward.1} parent=1 // pred_check_branch
      %146 = sbr.rel (0) target = $region45
    $region44: #{lstm_model_abc_forward.1} parent=1 // pred_region
      %s148 = ssub.s32 16, 16
      %149 = vsyncadd [#allocation16], %s148
      %s151 = sshll.u32 [#allocation15], 4
      %s152 = int_to_ptr.vmem [resolvable:$true] %s151
      %154 = dma.hbm_to_vmem [thread:$0]  %s21, 16, %s152, [#allocation16]
    $region45: #{lstm_model_abc_forward.1} parent=1 // pred_fallthru
      _
    // Predicated region
    $region46: #{lstm_model_abc_forward.1} parent=1 // pred_check
      _
    $region47: #{lstm_model_abc_forward.1} parent=1 // pred_check_branch
      %156 = sbr.rel (0) target = $region49
    $region48: #{lstm_model_abc_forward.1} parent=1 // pred_region
      %s158 = ssub.s32 16, 16
      %159 = vsyncadd [#allocation16], %s158
      %s161 = sshll.u32 [#allocation17], 4
      %s162 = int_to_ptr.vmem [resolvable:$true] %s161
      %164 = dma.hbm_to_vmem [thread:$0]  %s23, 16, %s162, [#allocation16]
    $region49: #{lstm_model_abc_forward.1} parent=1 // pred_fallthru
      _
    // Predicated region
    $region50: #{lstm_model_abc_forward.1} parent=1 // pred_check
      _
    $region51: #{lstm_model_abc_forward.1} parent=1 // pred_check_branch
      %166 = sbr.rel (0) target = $region53
    $region52: #{lstm_model_abc_forward.1} parent=1 // pred_region
      %s168 = ssub.s32 16, 16
      %169 = vsyncadd [#allocation19], %s168
      %s171 = sshll.u32 [#allocation18], 4
      %s172 = int_to_ptr.vmem [resolvable:$true] %s171
      %174 = dma.hbm_to_vmem [thread:$0]  %s25, 16, %s172, [#allocation19]
    $region53: #{lstm_model_abc_forward.1} parent=1 // pred_fallthru
      _
    // Predicated region
    $region54: #{lstm_model_abc_forward.1} parent=1 // pred_check
      _
    $region55: #{lstm_model_abc_forward.1} parent=1 // pred_check_branch
      %176 = sbr.rel (0) target = $region57
    $region56: #{lstm_model_abc_forward.1} parent=1 // pred_region
      _
    $region57: #{lstm_model_abc_forward.1} parent=1 // pred_fallthru
      _
    // Predicated region
    $region58: #{lstm_model_abc_forward.1} parent=1 // pred_check
      _
    $region59: #{lstm_model_abc_forward.1} parent=1 // pred_check_branch
      %178 = sbr.rel (0) target = $region61
    $region60: #{lstm_model_abc_forward.1} parent=1 // pred_region
      _
    $region61: #{lstm_model_abc_forward.1} parent=1 // pred_fallthru
      _
    // Predicated region
    $region62: #{lstm_model_abc_forward.1} parent=1 // pred_check
      _
    $region63: #{lstm_model_abc_forward.1} parent=1 // pred_check_branch
      %180 = sbr.rel (0) target = $region65
    $region64: #{lstm_model_abc_forward.1} parent=1 // pred_region
      _
    $region65: #{lstm_model_abc_forward.1} parent=1 // pred_fallthru
      _
    // Predicated region
    $region66: #{lstm_model_abc_forward.1} parent=1 // pred_check
      _
    $region67: #{lstm_model_abc_forward.1} parent=1 // pred_check_branch
      %182 = sbr.rel (0) target = $region69
    $region68: #{lstm_model_abc_forward.1} parent=1 // pred_region
      %s184 = ssub.s32 512, 512
      %185 = vsyncadd [#allocation19], %s184
      %s186 = sshll.u32 [#allocation20], 4
      %s187 = int_to_ptr.vmem [resolvable:$true] %s186
      %192 = dma.hbm_to_vmem [thread:$0]  %s33, 512, %s187, [#allocation19], 128, 128, 8
    $region69: #{lstm_model_abc_forward.1} parent=1 // pred_fallthru
      _
    // Predicated region
    $region70: #{lstm_model_abc_forward.1} parent=1 // pred_check
      _
    $region71: #{lstm_model_abc_forward.1} parent=1 // pred_check_branch
      %194 = sbr.rel (0) target = $region73
    $region72: #{lstm_model_abc_forward.1} parent=1 // pred_region
      %s196 = ssub.s32 512, 512
      %197 = vsyncadd [#allocation22], %s196
      %s198 = sshll.u32 [#allocation21], 4
      %s199 = int_to_ptr.vmem [resolvable:$true] %s198
      %204 = dma.hbm_to_vmem [thread:$0]  %s35, 512, %s199, [#allocation22], 128, 128, 8
    $region73: #{lstm_model_abc_forward.1} parent=1 // pred_fallthru
      _
    // Predicated region
    $region74: #{lstm_model_abc_forward.1} parent=1 // pred_check
      _
    $region75: #{lstm_model_abc_forward.1} parent=1 // pred_check_branch
      %206 = sbr.rel (0) target = $region77
    $region76: #{lstm_model_abc_forward.1} parent=1 // pred_region
      %s208 = ssub.s32 512, 512
      %209 = vsyncadd [#allocation22], %s208
      %s210 = sshll.u32 [#allocation23], 4
      %s211 = int_to_ptr.vmem [resolvable:$true] %s210
      %216 = dma.hbm_to_vmem [thread:$0]  %s37, 512, %s211, [#allocation22], 128, 128, 8
    $region77: #{lstm_model_abc_forward.1} parent=1 // pred_fallthru
      _
    // Predicated region
    $region78: #{lstm_model_abc_forward.1} parent=1 // pred_check
      _
    $region79: #{lstm_model_abc_forward.1} parent=1 // pred_check_branch
      %218 = sbr.rel (0) target = $region81
    $region80: #{lstm_model_abc_forward.1} parent=1 // pred_region
      %s220 = ssub.s32 512, 512
      %221 = vsyncadd [#allocation25], %s220
      %s222 = sshll.u32 [#allocation24], 4
      %s223 = int_to_ptr.vmem [resolvable:$true] %s222
      %228 = dma.hbm_to_vmem [thread:$0]  %s39, 512, %s223, [#allocation25], 128, 128, 8
    $region81: #{lstm_model_abc_forward.1} parent=1 // pred_fallthru
      _
    // Predicated region
    $region82: #{lstm_model_abc_forward.1} parent=1 // pred_check
      _
    $region83: #{lstm_model_abc_forward.1} parent=1 // pred_check_branch
      %230 = sbr.rel (0) target = $region85
    $region84: #{lstm_model_abc_forward.1} parent=1 // pred_region
      %s232 = ssub.s32 512, 512
      %233 = vsyncadd [#allocation25], %s232
      %s234 = sshll.u32 [#allocation26], 4
      %s235 = int_to_ptr.vmem [resolvable:$true] %s234
      %240 = dma.hbm_to_vmem [thread:$0]  %s41, 512, %s235, [#allocation25], 128, 128, 8
    $region85: #{lstm_model_abc_forward.1} parent=1 // pred_fallthru
      _
    // Predicated region
    $region86: #{lstm_model_abc_forward.1} parent=1 // pred_check
      _
    $region87: #{lstm_model_abc_forward.1} parent=1 // pred_check_branch
      %242 = sbr.rel (0) target = $region89
    $region88: #{lstm_model_abc_forward.1} parent=1 // pred_region
      %s244 = ssub.s32 16, 16
      %245 = vsyncadd [#allocation28], %s244
      %s247 = sshll.u32 [#allocation27], 4
      %s248 = int_to_ptr.vmem [resolvable:$true] %s247
      %250 = dma.hbm_to_vmem [thread:$0]  %s43, 16, %s248, [#allocation28]
    $region89: #{lstm_model_abc_forward.1} parent=1 // pred_fallthru
      _
    // Predicated region
    $region90: #{lstm_model_abc_forward.1} parent=1 // pred_check
      _
    $region91: #{lstm_model_abc_forward.1} parent=1 // pred_check_branch
      %252 = sbr.rel (0) target = $region93
    $region92: #{lstm_model_abc_forward.1} parent=1 // pred_region
      %s254 = ssub.s32 16, 16
      %255 = vsyncadd [#allocation28], %s254
      %s257 = sshll.u32 [#allocation29], 4
      %s258 = int_to_ptr.vmem [resolvable:$true] %s257
      %260 = dma.hbm_to_vmem [thread:$0]  %s45, 16, %s258, [#allocation28]
    $region93: #{lstm_model_abc_forward.1} parent=1 // pred_fallthru
      _
    // Predicated region
    $region94: #{lstm_model_abc_forward.1} parent=1 // pred_check
      _
    $region95: #{lstm_model_abc_forward.1} parent=1 // pred_check_branch
      %262 = sbr.rel (0) target = $region97
    $region96: #{lstm_model_abc_forward.1} parent=1 // pred_region
      %s264 = ssub.s32 16, 16
      %265 = vsyncadd [#allocation31], %s264
      %s267 = sshll.u32 [#allocation30], 4
      %s268 = int_to_ptr.vmem [resolvable:$true] %s267
      %270 = dma.hbm_to_vmem [thread:$0]  %s47, 16, %s268, [#allocation31]
    $region97: #{lstm_model_abc_forward.1} parent=1 // pred_fallthru
      _
    // Predicated region
    $region98: #{lstm_model_abc_forward.1} parent=1 // pred_check
      _
    $region99: #{lstm_model_abc_forward.1} parent=1 // pred_check_branch
      %272 = sbr.rel (0) target = $region101
    $region100: #{lstm_model_abc_forward.1} parent=1 // pred_region
      %s274 = ssub.s32 16, 16
      %275 = vsyncadd [#allocation31], %s274
      %s277 = sshll.u32 [#allocation32], 4
      %s278 = int_to_ptr.vmem [resolvable:$true] %s277
      %280 = dma.hbm_to_vmem [thread:$0]  %s49, 16, %s278, [#allocation31]
    $region101: #{lstm_model_abc_forward.1} parent=1 // pred_fallthru
      _
    // Predicated region
    $region102: #{lstm_model_abc_forward.1} parent=1 // pred_check
      _
    $region103: #{lstm_model_abc_forward.1} parent=1 // pred_check_branch
      %282 = sbr.rel (0) target = $region105
    $region104: #{lstm_model_abc_forward.1} parent=1 // pred_region
      %s284 = ssub.s32 512, 512
      %285 = vsyncadd [#allocation34], %s284
      %s286 = sshll.u32 [#allocation33], 4
      %s287 = int_to_ptr.vmem [resolvable:$true] %s286
      %292 = dma.hbm_to_vmem [thread:$0]  %s51, 512, %s287, [#allocation34], 128, 128, 8
    $region105: #{lstm_model_abc_forward.1} parent=1 // pred_fallthru
      _
    // Predicated region
    $region106: #{lstm_model_abc_forward.1} parent=1 // pred_check
      _
    $region107: #{lstm_model_abc_forward.1} parent=1 // pred_check_branch
      %294 = sbr.rel (0) target = $region109
    $region108: #{lstm_model_abc_forward.1} parent=1 // pred_region
      %s296 = ssub.s32 16, 16
      %297 = vsyncadd [#allocation34], %s296
      %s299 = sshll.u32 [#allocation35], 4
      %s300 = int_to_ptr.vmem [resolvable:$true] %s299
      %302 = dma.hbm_to_vmem [thread:$0]  %s53, 16, %s300, [#allocation34]
    $region109: #{lstm_model_abc_forward.1} parent=1 // pred_fallthru
      _
    // Predicated region
    $region110: #{lstm_model_abc_forward.1} parent=1 // pred_check
      _
    $region111: #{lstm_model_abc_forward.1} parent=1 // pred_check_branch
      %304 = sbr.rel (0) target = $region113
    $region112: #{lstm_model_abc_forward.1} parent=1 // pred_region
      _
    $region113: #{lstm_model_abc_forward.1} parent=1 // pred_fallthru
      _
    // Predicated region
    $region114: #{lstm_model_abc_forward.1} parent=1 // pred_check
      _
    $region115: #{lstm_model_abc_forward.1} parent=1 // pred_check_branch
      %306 = sbr.rel (0) target = $region117
    $region116: #{lstm_model_abc_forward.1} parent=1 // pred_region
      %s308 = ssub.s32 16, 16
      %309 = vsyncadd [#allocation37], %s308
      %s311 = sshll.u32 [#allocation36], 4
      %s312 = int_to_ptr.vmem [resolvable:$true] %s311
      %314 = dma.hbm_to_vmem [thread:$0]  %s57, 16, %s312, [#allocation37]
    $region117: #{lstm_model_abc_forward.1} parent=1 // pred_fallthru
      _
    // Predicated region
    $region118: #{lstm_model_abc_forward.1} parent=1 // pred_check
      _
    $region119: #{lstm_model_abc_forward.1} parent=1 // pred_check_branch
      %316 = sbr.rel (0) target = $region121
    $region120: #{lstm_model_abc_forward.1} parent=1 // pred_region
      %s318 = ssub.s32 256, 256
      %319 = vsyncadd [#allocation37], %s318
      %s320 = sshll.u32 [#allocation38], 4
      %s321 = int_to_ptr.vmem [resolvable:$true] %s320
      %326 = dma.hbm_to_vmem [thread:$0]  %s59, 256, %s321, [#allocation37], 128, 128, 8
    $region121: #{lstm_model_abc_forward.1} parent=1 // pred_fallthru
      _
    // Predicated region
    $region122: #{lstm_model_abc_forward.1} parent=1 // pred_check
      _
    $region123: #{lstm_model_abc_forward.1} parent=1 // pred_check_branch
      %328 = sbr.rel (0) target = $region125
    $region124: #{lstm_model_abc_forward.1} parent=1 // pred_region
      %s330 = ssub.s32 16, 16
      %331 = vsyncadd [#allocation40], %s330
      %s333 = sshll.u32 [#allocation39], 4
      %s334 = int_to_ptr.vmem [resolvable:$true] %s333
      %336 = dma.hbm_to_vmem [thread:$0]  %s61, 16, %s334, [#allocation40]
    $region125: #{lstm_model_abc_forward.1} parent=1 // pred_fallthru
      _
    // Predicated region
    $region126: #{lstm_model_abc_forward.1} parent=1 // pred_check
      _
    $region127: #{lstm_model_abc_forward.1} parent=1 // pred_check_branch
      %338 = sbr.rel (0) target = $region129
    $region128: #{lstm_model_abc_forward.1} parent=1 // pred_region
      _
    $region129: #{lstm_model_abc_forward.1} parent=1 // pred_fallthru
      _
    // Predicated region
    $region130: #{lstm_model_abc_forward.1} parent=1 // pred_check
      _
    $region131: #{lstm_model_abc_forward.1} parent=1 // pred_check_branch
      %340 = sbr.rel (0) target = $region133
    $region132: #{lstm_model_abc_forward.1} parent=1 // pred_region
      %s342 = ssub.s32 16, 16
      %343 = vsyncadd [#allocation40], %s342
      %s345 = sshll.u32 [#allocation41], 4
      %s346 = int_to_ptr.vmem [resolvable:$true] %s345
      %348 = dma.hbm_to_vmem [thread:$0]  %s65, 16, %s346, [#allocation40]
    $region133: #{lstm_model_abc_forward.1} parent=1 // pred_fallthru
      _
    // Predicated region
    $region134: #{lstm_model_abc_forward.1} parent=1 // pred_check
      _
    $region135: #{lstm_model_abc_forward.1} parent=1 // pred_check_branch
      %350 = sbr.rel (0) target = $region137
    $region136: #{lstm_model_abc_forward.1} parent=1 // pred_region
      %351 = dma.done [#allocation7], 64
    $region137: #{lstm_model_abc_forward.1} parent=1 // pred_fallthru
      _
    // Predicated region
    $region138: #{lstm_model_abc_forward.1} parent=1 // pred_check
      _
    $region139: #{lstm_model_abc_forward.1} parent=1 // pred_check_branch
      %353 = sbr.rel (0) target = $region141
    $region140: #{lstm_model_abc_forward.1} parent=1 // pred_region
      %354 = dma.done [#allocation10], 64
    $region141: #{lstm_model_abc_forward.1} parent=1 // pred_fallthru
      _
    // Predicated region
    $region142: #{lstm_model_abc_forward.1} parent=1 // pred_check
      _
    $region143: #{lstm_model_abc_forward.1} parent=1 // pred_check_branch
      %356 = sbr.rel (0) target = $region145
    $region144: #{lstm_model_abc_forward.1} parent=1 // pred_region
      %357 = dma.done [#allocation10], 64
    $region145: #{lstm_model_abc_forward.1} parent=1 // pred_fallthru
      _
    // Predicated region
    $region146: #{lstm_model_abc_forward.1} parent=1 // pred_check
      _
    $region147: #{lstm_model_abc_forward.1} parent=1 // pred_check_branch
      %359 = sbr.rel (0) target = $region149
    $region148: #{lstm_model_abc_forward.1} parent=1 // pred_region
      %360 = dma.done [#allocation13], 64
    $region149: #{lstm_model_abc_forward.1} parent=1 // pred_fallthru
      _
    // Predicated region
    $region150: #{lstm_model_abc_forward.1} parent=1 // pred_check
      _
    $region151: #{lstm_model_abc_forward.1} parent=1 // pred_check_branch
      %362 = sbr.rel (0) target = $region153
    $region152: #{lstm_model_abc_forward.1} parent=1 // pred_region
      %363 = dma.done [#allocation13], 16
    $region153: #{lstm_model_abc_forward.1} parent=1 // pred_fallthru
      _
    // Predicated region
    $region154: #{lstm_model_abc_forward.1} parent=1 // pred_check
      _
    $region155: #{lstm_model_abc_forward.1} parent=1 // pred_check_branch
      %365 = sbr.rel (0) target = $region157
    $region156: #{lstm_model_abc_forward.1} parent=1 // pred_region
      %366 = dma.done [#allocation16], 16
    $region157: #{lstm_model_abc_forward.1} parent=1 // pred_fallthru
      _
    // Predicated region
    $region158: #{lstm_model_abc_forward.1} parent=1 // pred_check
      _
    $region159: #{lstm_model_abc_forward.1} parent=1 // pred_check_branch
      %368 = sbr.rel (0) target = $region161
    $region160: #{lstm_model_abc_forward.1} parent=1 // pred_region
      %369 = dma.done [#allocation16], 16
    $region161: #{lstm_model_abc_forward.1} parent=1 // pred_fallthru
      _
    // Predicated region
    $region162: #{lstm_model_abc_forward.1} parent=1 // pred_check
      _
    $region163: #{lstm_model_abc_forward.1} parent=1 // pred_check_branch
      %371 = sbr.rel (0) target = $region165
    $region164: #{lstm_model_abc_forward.1} parent=1 // pred_region
      %372 = dma.done [#allocation19], 16
    $region165: #{lstm_model_abc_forward.1} parent=1 // pred_fallthru
      _
    // Predicated region
    $region166: #{lstm_model_abc_forward.1} parent=1 // pred_check
      _
    $region167: #{lstm_model_abc_forward.1} parent=1 // pred_check_branch
      %374 = sbr.rel (0) target = $region169
    $region168: #{lstm_model_abc_forward.1} parent=1 // pred_region
      %375 = dma.done [#allocation19], 512
    $region169: #{lstm_model_abc_forward.1} parent=1 // pred_fallthru
      _
    // Predicated region
    $region170: #{lstm_model_abc_forward.1} parent=1 // pred_check
      _
    $region171: #{lstm_model_abc_forward.1} parent=1 // pred_check_branch
      %377 = sbr.rel (0) target = $region173
    $region172: #{lstm_model_abc_forward.1} parent=1 // pred_region
      %378 = dma.done [#allocation22], 512
    $region173: #{lstm_model_abc_forward.1} parent=1 // pred_fallthru
      _
    // Predicated region
    $region174: #{lstm_model_abc_forward.1} parent=1 // pred_check
      _
    $region175: #{lstm_model_abc_forward.1} parent=1 // pred_check_branch
      %380 = sbr.rel (0) target = $region177
    $region176: #{lstm_model_abc_forward.1} parent=1 // pred_region
      %381 = dma.done [#allocation22], 512
    $region177: #{lstm_model_abc_forward.1} parent=1 // pred_fallthru
      _
    // Predicated region
    $region178: #{lstm_model_abc_forward.1} parent=1 // pred_check
      _
    $region179: #{lstm_model_abc_forward.1} parent=1 // pred_check_branch
      %383 = sbr.rel (0) target = $region181
    $region180: #{lstm_model_abc_forward.1} parent=1 // pred_region
      %384 = dma.done [#allocation25], 512
    $region181: #{lstm_model_abc_forward.1} parent=1 // pred_fallthru
      _
    // Predicated region
    $region182: #{lstm_model_abc_forward.1} parent=1 // pred_check
      _
    $region183: #{lstm_model_abc_forward.1} parent=1 // pred_check_branch
      %386 = sbr.rel (0) target = $region185
    $region184: #{lstm_model_abc_forward.1} parent=1 // pred_region
      %387 = dma.done [#allocation25], 512
    $region185: #{lstm_model_abc_forward.1} parent=1 // pred_fallthru
      _
    // Predicated region
    $region186: #{lstm_model_abc_forward.1} parent=1 // pred_check
      _
    $region187: #{lstm_model_abc_forward.1} parent=1 // pred_check_branch
      %389 = sbr.rel (0) target = $region189
    $region188: #{lstm_model_abc_forward.1} parent=1 // pred_region
      %390 = dma.done [#allocation28], 16
    $region189: #{lstm_model_abc_forward.1} parent=1 // pred_fallthru
      _
    // Predicated region
    $region190: #{lstm_model_abc_forward.1} parent=1 // pred_check
      _
    $region191: #{lstm_model_abc_forward.1} parent=1 // pred_check_branch
      %392 = sbr.rel (0) target = $region193
    $region192: #{lstm_model_abc_forward.1} parent=1 // pred_region
      %393 = dma.done [#allocation28], 16
    $region193: #{lstm_model_abc_forward.1} parent=1 // pred_fallthru
      _
    // Predicated region
    $region194: #{lstm_model_abc_forward.1} parent=1 // pred_check
      _
    $region195: #{lstm_model_abc_forward.1} parent=1 // pred_check_branch
      %395 = sbr.rel (0) target = $region197
    $region196: #{lstm_model_abc_forward.1} parent=1 // pred_region
      %396 = dma.done [#allocation31], 16
    $region197: #{lstm_model_abc_forward.1} parent=1 // pred_fallthru
      _
    // Predicated region
    $region198: #{lstm_model_abc_forward.1} parent=1 // pred_check
      _
    $region199: #{lstm_model_abc_forward.1} parent=1 // pred_check_branch
      %398 = sbr.rel (0) target = $region201
    $region200: #{lstm_model_abc_forward.1} parent=1 // pred_region
      %399 = dma.done [#allocation31], 16
    $region201: #{lstm_model_abc_forward.1} parent=1 // pred_fallthru
      _
    // Predicated region
    $region202: #{lstm_model_abc_forward.1} parent=1 // pred_check
      _
    $region203: #{lstm_model_abc_forward.1} parent=1 // pred_check_branch
      %401 = sbr.rel (0) target = $region205
    $region204: #{lstm_model_abc_forward.1} parent=1 // pred_region
      %402 = dma.done [#allocation34], 512
    $region205: #{lstm_model_abc_forward.1} parent=1 // pred_fallthru
      _
    // Predicated region
    $region206: #{lstm_model_abc_forward.1} parent=1 // pred_check
      _
    $region207: #{lstm_model_abc_forward.1} parent=1 // pred_check_branch
      %404 = sbr.rel (0) target = $region209
    $region208: #{lstm_model_abc_forward.1} parent=1 // pred_region
      %405 = dma.done [#allocation34], 16
    $region209: #{lstm_model_abc_forward.1} parent=1 // pred_fallthru
      _
    // Predicated region
    $region210: #{lstm_model_abc_forward.1} parent=1 // pred_check
      _
    $region211: #{lstm_model_abc_forward.1} parent=1 // pred_check_branch
      %407 = sbr.rel (0) target = $region213
    $region212: #{lstm_model_abc_forward.1} parent=1 // pred_region
      %408 = dma.done [#allocation37], 16
    $region213: #{lstm_model_abc_forward.1} parent=1 // pred_fallthru
      _
    // Predicated region
    $region214: #{lstm_model_abc_forward.1} parent=1 // pred_check
      _
    $region215: #{lstm_model_abc_forward.1} parent=1 // pred_check_branch
      %410 = sbr.rel (0) target = $region217
    $region216: #{lstm_model_abc_forward.1} parent=1 // pred_region
      %411 = dma.done [#allocation37], 256
    $region217: #{lstm_model_abc_forward.1} parent=1 // pred_fallthru
      _
    // Predicated region
    $region218: #{lstm_model_abc_forward.1} parent=1 // pred_check
      _
    $region219: #{lstm_model_abc_forward.1} parent=1 // pred_check_branch
      %413 = sbr.rel (0) target = $region221
    $region220: #{lstm_model_abc_forward.1} parent=1 // pred_region
      %414 = dma.done [#allocation40], 16
    $region221: #{lstm_model_abc_forward.1} parent=1 // pred_fallthru
      _
    // Predicated region
    $region222: #{lstm_model_abc_forward.1} parent=1 // pred_check
      _
    $region223: #{lstm_model_abc_forward.1} parent=1 // pred_check_branch
      %416 = sbr.rel (0) target = $region225
    $region224: #{lstm_model_abc_forward.1} parent=1 // pred_region
      %417 = dma.done [#allocation40], 16
    $region225: #{lstm_model_abc_forward.1} parent=1 // pred_fallthru
      _
    %v418 = vld [vmem:[#allocation6] sm:$0xf]
    %v419 = vld [vmem:[#allocation9] sm:$0xf]
    %v420 = vld [vmem:[#allocation11] sm:$0xf]
    %v421 = vld [vmem:[#allocation12] sm:$0xf]
    %v422 = vld [vmem:[%s11] sm:$0xff]
    %v423 = vld [vmem:[%s11 + $0x8] sm:$0xff]
    %v424 = vld [vmem:[%s11 + $0x10] sm:$0xff]
    %v425 = vld [vmem:[%s11 + $0x18] sm:$0xff]
    %v426 = vld [vmem:[%s13] sm:$0xff]
    %v427 = vld [vmem:[%s13 + $0x8] sm:$0xff]
    %v428 = vld [vmem:[%s13 + $0x10] sm:$0xff]
    %v429 = vld [vmem:[%s13 + $0x18] sm:$0xff]
    %v430 = vld [vmem:[%s15] sm:$0xff]
    %v431 = vld [vmem:[%s15 + $0x8] sm:$0xff]
    %v432 = vld [vmem:[%s15 + $0x10] sm:$0xff]
    %v433 = vld [vmem:[%s15 + $0x18] sm:$0xff]
    %v434 = vld [vmem:[%s17] sm:$0xff]
    %v435 = vld [vmem:[%s17 + $0x8] sm:$0xff]
    %v436 = vld [vmem:[%s17 + $0x10] sm:$0xff]
    %v437 = vld [vmem:[%s17 + $0x18] sm:$0xff]
    %v438 = vld [vmem:[#allocation14] sm:$0x1]
    %v439 = vld [vmem:[#allocation15] sm:$0x1]
    %v440 = vld [vmem:[#allocation17] sm:$0x1]
    %v441 = vld [vmem:[#allocation18] sm:$0x1]
    %v442 = vld [vmem:[%s1] sm:$0xff]
    %v443 = vld [vmem:[%s1 + $0x8] sm:$0xff]
    %v444 = vld [vmem:[%s1 + $0x10] sm:$0xff]
    %v445 = vld [vmem:[%s1 + $0x18] sm:$0xff]
    %v446 = vld [vmem:[%s1 + $0x20] sm:$0xff]
    %v447 = vld [vmem:[%s1 + $0x28] sm:$0xff]
    %v448 = vld [vmem:[%s1 + $0x30] sm:$0xff]
    %v449 = vld [vmem:[%s1 + $0x38] sm:$0xff]
    %v451 = vlaneseq
    %v452 = vshrl.u32 %v451, 7
    %v453 = vsub.s32 0, %v452
    %v454 = vrot.slane %v438, %v453
    %vm456 = vcmask 31744
    %v458 = vsel %vm456, %v442, 0
    %v461 = vsel %vm456, %v443, 0
    %v464 = vsel %vm456, %v444, 0
    %v467 = vsel %vm456, %v445, 0
    %v470 = vsel %vm456, %v446, 0
    %v473 = vsel %vm456, %v447, 0
    %v476 = vsel %vm456, %v448, 0
    %v479 = vsel %vm456, %v449, 0
    %vm481 = vcmask 1043456
    %v483 = vsel %vm481, %v418, 0
    %485 = vmatprep.subr.mxu0 0.0
    %486 = vmatpush1.msra.mxu0 0.0
    %487 = vmatprep.subr.mxu0 0.0
    %488 = vmatpush1.msra.mxu0 0.0
    %489 = vmatprep.subr.mxu0 0.0
    %490 = vmatpush1.msra.mxu0 0.0
    %491 = vmatprep.subr.mxu0 0.0
    %492 = vmatpush1.msra.mxu0 0.0
    %493 = vmatprep.subr.mxu0 0.0
    %494 = vmatpush1.msra.mxu0 0.0
    %495 = vmatprep.subr.mxu0 0.0
    %496 = vmatpush1.msra.mxu0 0.0
    %497 = vmatprep.subr.mxu0 0.0
    %498 = vmatpush1.msra.mxu0 0.0
    %499 = vmatprep.subr.mxu0 0.0
    %500 = vmatpush1.msra.mxu0 0.0
    %501 = vmatprep.subr.mxu0 0.0
    %502 = vmatpush1.msra.mxu0 0.0
    %503 = vmatprep.subr.mxu0 0.0
    %504 = vmatpush1.msra.mxu0 0.0
    %505 = vmatprep.subr.mxu0 0.0
    %506 = vmatpush1.msra.mxu0 0.0
    %507 = vmatprep.subr.mxu0 0.0
    %508 = vmatpush1.msra.mxu0 0.0
    %509 = vmatprep.subr.mxu0 0.0
    %510 = vmatpush1.msra.mxu0 0.0
    %511 = vmatprep.subr.mxu0 0.0
    %512 = vmatpush1.msra.mxu0 0.0
    %513 = vmatprep.subr.mxu0 0.0
    %514 = vmatpush1.msra.mxu0 0.0
    %515 = vmatprep.subr.mxu0 0.0
    %516 = vmatpush1.msra.mxu0 %v483
    %517 = vmatprep.subr.mxu0 0.0
    %518 = vmatpush2.msra.mxu0 0.0
    %519 = vmatprep.subr.mxu0 0.0
    %520 = vmatpush2.msra.mxu0 0.0
    %521 = vmatprep.subr.mxu0 0.0
    %522 = vmatpush2.msra.mxu0 0.0
    %523 = vmatprep.subr.mxu0 0.0
    %524 = vmatpush2.msra.mxu0 0.0
    %525 = vmatprep.subr.mxu0 0.0
    %526 = vmatpush2.msra.mxu0 0.0
    %527 = vmatprep.subr.mxu0 0.0
    %528 = vmatpush2.msra.mxu0 0.0
    %529 = vmatprep.subr.mxu0 0.0
    %530 = vmatpush2.msra.mxu0 0.0
    %531 = vmatprep.subr.mxu0 0.0
    %532 = vmatpush2.msra.mxu0 0.0
    %533 = vmatprep.subr.mxu0 0.0
    %534 = vmatpush2.msra.mxu0 0.0
    %535 = vmatprep.subr.mxu0 0.0
    %536 = vmatpush2.msra.mxu0 0.0
    %537 = vmatprep.subr.mxu0 0.0
    %538 = vmatpush2.msra.mxu0 0.0
    %539 = vmatprep.subr.mxu0 0.0
    %540 = vmatpush2.msra.mxu0 0.0
    %541 = vmatprep.subr.mxu0 0.0
    %542 = vmatpush2.msra.mxu0 0.0
    %543 = vmatprep.subr.mxu0 0.0
    %544 = vmatpush2.msra.mxu0 0.0
    %545 = vmatprep.subr.mxu0 0.0
    %546 = vmatpush2.msra.mxu0 0.0
    %547 = vmatprep.subr.mxu0 0.0
    %548 = vmatpush2.msra.mxu0 0.0
    %549 = vmatprep.mubr.f32.mxu0 0.0
    %550 = vmatmul.mubr.f32.gmra.mxu0 %v458
    %v551 = vpop.f32.mrf.mxu0
    %v552 = vadd.f32 %v454, %v551
    %v553 = vpop.f32.mrf.mxu0
    %554 = vmatprep.mubr.f32.mxu0 0.0
    %555 = vmatmul.mubr.f32.gmra.mxu0 %v461
    %v556 = vpop.f32.mrf.mxu0
    %v557 = vadd.f32 %v454, %v556
    %v558 = vpop.f32.mrf.mxu0
    %559 = vmatprep.mubr.f32.mxu0 0.0
    %560 = vmatmul.mubr.f32.gmra.mxu0 %v464
    %v561 = vpop.f32.mrf.mxu0
    %v562 = vadd.f32 %v454, %v561
    %v563 = vpop.f32.mrf.mxu0
    %564 = vmatprep.mubr.f32.mxu0 0.0
    %565 = vmatmul.mubr.f32.gmra.mxu0 %v467
    %v566 = vpop.f32.mrf.mxu0
    %v567 = vadd.f32 %v454, %v566
    %v568 = vpop.f32.mrf.mxu0
    %569 = vmatprep.mubr.f32.mxu0 0.0
    %570 = vmatmul.mubr.f32.gmra.mxu0 %v470
    %v571 = vpop.f32.mrf.mxu0
    %v572 = vadd.f32 %v454, %v571
    %v573 = vpop.f32.mrf.mxu0
    %574 = vmatprep.mubr.f32.mxu0 0.0
    %575 = vmatmul.mubr.f32.gmra.mxu0 %v473
    %v576 = vpop.f32.mrf.mxu0
    %v577 = vadd.f32 %v454, %v576
    %v578 = vpop.f32.mrf.mxu0
    %579 = vmatprep.mubr.f32.mxu0 0.0
    %580 = vmatmul.mubr.f32.gmra.mxu0 %v476
    %v581 = vpop.f32.mrf.mxu0
    %v582 = vadd.f32 %v454, %v581
    %v583 = vpop.f32.mrf.mxu0
    %584 = vmatprep.mubr.f32.mxu0 0.0
    %585 = vmatmul.mubr.f32.gmra.mxu0 %v479
    %v586 = vpop.f32.mrf.mxu0
    %v587 = vadd.f32 %v454, %v586
    %v588 = vpop.f32.mrf.mxu0
    %589 = vdwg.mxu0
    %vm590 = vcmask 261120
    %591 = vst.msk [vmem:[#allocation2] sm:$0xff] %vm590, %v552
    %592 = vst.msk [vmem:[#allocation2 + $0x8] sm:$0xff] %vm590, %v557
    %593 = vst.msk [vmem:[#allocation2 + $0x10] sm:$0xff] %vm590, %v562
    %594 = vst.msk [vmem:[#allocation2 + $0x18] sm:$0xff] %vm590, %v567
    %595 = vst.msk [vmem:[#allocation2 + $0x20] sm:$0xff] %vm590, %v572
    %596 = vst.msk [vmem:[#allocation2 + $0x28] sm:$0xff] %vm590, %v577
    %597 = vst.msk [vmem:[#allocation2 + $0x30] sm:$0xff] %vm590, %v582
    %598 = vst.msk [vmem:[#allocation2 + $0x38] sm:$0xff] %vm590, %v587
    %v600 = vlaneseq
    %v601 = vshrl.u32 %v600, 7
    %v602 = vsub.s32 0, %v601
    %v603 = vrot.slane %v439, %v602
    %v606 = vsel %vm481, %v419, 0
    %608 = vmatprep.subr.mxu0 0.0
    %609 = vmatpush1.msra.mxu0 0.0
    %610 = vmatprep.subr.mxu0 0.0
    %611 = vmatpush1.msra.mxu0 0.0
    %612 = vmatprep.subr.mxu0 0.0
    %613 = vmatpush1.msra.mxu0 0.0
    %614 = vmatprep.subr.mxu0 0.0
    %615 = vmatpush1.msra.mxu0 0.0
    %616 = vmatprep.subr.mxu0 0.0
    %617 = vmatpush1.msra.mxu0 0.0
    %618 = vmatprep.subr.mxu0 0.0
    %619 = vmatpush1.msra.mxu0 0.0
    %620 = vmatprep.subr.mxu0 0.0
    %621 = vmatpush1.msra.mxu0 0.0
    %622 = vmatprep.subr.mxu0 0.0
    %623 = vmatpush1.msra.mxu0 0.0
    %624 = vmatprep.subr.mxu0 0.0
    %625 = vmatpush1.msra.mxu0 0.0
    %626 = vmatprep.subr.mxu0 0.0
    %627 = vmatpush1.msra.mxu0 0.0
    %628 = vmatprep.subr.mxu0 0.0
    %629 = vmatpush1.msra.mxu0 0.0
    %630 = vmatprep.subr.mxu0 0.0
    %631 = vmatpush1.msra.mxu0 0.0
    %632 = vmatprep.subr.mxu0 0.0
    %633 = vmatpush1.msra.mxu0 0.0
    %634 = vmatprep.subr.mxu0 0.0
    %635 = vmatpush1.msra.mxu0 0.0
    %636 = vmatprep.subr.mxu0 0.0
    %637 = vmatpush1.msra.mxu0 0.0
    %638 = vmatprep.subr.mxu0 0.0
    %639 = vmatpush1.msra.mxu0 %v606
    %640 = vmatprep.subr.mxu0 0.0
    %641 = vmatpush2.msra.mxu0 0.0
    %642 = vmatprep.subr.mxu0 0.0
    %643 = vmatpush2.msra.mxu0 0.0
    %644 = vmatprep.subr.mxu0 0.0
    %645 = vmatpush2.msra.mxu0 0.0
    %646 = vmatprep.subr.mxu0 0.0
    %647 = vmatpush2.msra.mxu0 0.0
    %648 = vmatprep.subr.mxu0 0.0
    %649 = vmatpush2.msra.mxu0 0.0
    %650 = vmatprep.subr.mxu0 0.0
    %651 = vmatpush2.msra.mxu0 0.0
    %652 = vmatprep.subr.mxu0 0.0
    %653 = vmatpush2.msra.mxu0 0.0
    %654 = vmatprep.subr.mxu0 0.0
    %655 = vmatpush2.msra.mxu0 0.0
    %656 = vmatprep.subr.mxu0 0.0
    %657 = vmatpush2.msra.mxu0 0.0
    %658 = vmatprep.subr.mxu0 0.0
    %659 = vmatpush2.msra.mxu0 0.0
    %660 = vmatprep.subr.mxu0 0.0
    %661 = vmatpush2.msra.mxu0 0.0
    %662 = vmatprep.subr.mxu0 0.0
    %663 = vmatpush2.msra.mxu0 0.0
    %664 = vmatprep.subr.mxu0 0.0
    %665 = vmatpush2.msra.mxu0 0.0
    %666 = vmatprep.subr.mxu0 0.0
    %667 = vmatpush2.msra.mxu0 0.0
    %668 = vmatprep.subr.mxu0 0.0
    %669 = vmatpush2.msra.mxu0 0.0
    %670 = vmatprep.subr.mxu0 0.0
    %671 = vmatpush2.msra.mxu0 0.0
    %672 = vmatprep.mubr.f32.mxu0 0.0
    %673 = vmatmul.mubr.f32.gmra.mxu0 %v458
    %v674 = vpop.f32.mrf.mxu0
    %v675 = vadd.f32 %v603, %v674
    %v676 = vpop.f32.mrf.mxu0
    %677 = vmatprep.mubr.f32.mxu0 0.0
    %678 = vmatmul.mubr.f32.gmra.mxu0 %v461
    %v679 = vpop.f32.mrf.mxu0
    %v680 = vadd.f32 %v603, %v679
    %v681 = vpop.f32.mrf.mxu0
    %682 = vmatprep.mubr.f32.mxu0 0.0
    %683 = vmatmul.mubr.f32.gmra.mxu0 %v464
    %v684 = vpop.f32.mrf.mxu0
    %v685 = vadd.f32 %v603, %v684
    %v686 = vpop.f32.mrf.mxu0
    %687 = vmatprep.mubr.f32.mxu0 0.0
    %688 = vmatmul.mubr.f32.gmra.mxu0 %v467
    %v689 = vpop.f32.mrf.mxu0
    %v690 = vadd.f32 %v603, %v689
    %v691 = vpop.f32.mrf.mxu0
    %692 = vmatprep.mubr.f32.mxu0 0.0
    %693 = vmatmul.mubr.f32.gmra.mxu0 %v470
    %v694 = vpop.f32.mrf.mxu0
    %v695 = vadd.f32 %v603, %v694
    %v696 = vpop.f32.mrf.mxu0
    %697 = vmatprep.mubr.f32.mxu0 0.0
    %698 = vmatmul.mubr.f32.gmra.mxu0 %v473
    %v699 = vpop.f32.mrf.mxu0
    %v700 = vadd.f32 %v603, %v699
    %v701 = vpop.f32.mrf.mxu0
    %702 = vmatprep.mubr.f32.mxu0 0.0
    %703 = vmatmul.mubr.f32.gmra.mxu0 %v476
    %v704 = vpop.f32.mrf.mxu0
    %v705 = vadd.f32 %v603, %v704
    %v706 = vpop.f32.mrf.mxu0
    %707 = vmatprep.mubr.f32.mxu0 0.0
    %708 = vmatmul.mubr.f32.gmra.mxu0 %v479
    %v709 = vpop.f32.mrf.mxu0
    %v710 = vadd.f32 %v603, %v709
    %v711 = vpop.f32.mrf.mxu0
    %712 = vdwg.mxu0
    %713 = vst.msk [vmem:[#allocation3] sm:$0xff] %vm590, %v675
    %714 = vst.msk [vmem:[#allocation3 + $0x8] sm:$0xff] %vm590, %v680
    %715 = vst.msk [vmem:[#allocation3 + $0x10] sm:$0xff] %vm590, %v685
    %716 = vst.msk [vmem:[#allocation3 + $0x18] sm:$0xff] %vm590, %v690
    %717 = vst.msk [vmem:[#allocation3 + $0x20] sm:$0xff] %vm590, %v695
    %718 = vst.msk [vmem:[#allocation3 + $0x28] sm:$0xff] %vm590, %v700
    %719 = vst.msk [vmem:[#allocation3 + $0x30] sm:$0xff] %vm590, %v705
    %720 = vst.msk [vmem:[#allocation3 + $0x38] sm:$0xff] %vm590, %v710
    %v722 = vlaneseq
    %v723 = vshrl.u32 %v722, 7
    %v724 = vsub.s32 0, %v723
    %v725 = vrot.slane %v440, %v724
    %v728 = vsel %vm481, %v420, 0
    %730 = vmatprep.subr.mxu0 0.0
    %731 = vmatpush1.msra.mxu0 0.0
    %732 = vmatprep.subr.mxu0 0.0
    %733 = vmatpush1.msra.mxu0 0.0
    %734 = vmatprep.subr.mxu0 0.0
    %735 = vmatpush1.msra.mxu0 0.0
    %736 = vmatprep.subr.mxu0 0.0
    %737 = vmatpush1.msra.mxu0 0.0
    %738 = vmatprep.subr.mxu0 0.0
    %739 = vmatpush1.msra.mxu0 0.0
    %740 = vmatprep.subr.mxu0 0.0
    %741 = vmatpush1.msra.mxu0 0.0
    %742 = vmatprep.subr.mxu0 0.0
    %743 = vmatpush1.msra.mxu0 0.0
    %744 = vmatprep.subr.mxu0 0.0
    %745 = vmatpush1.msra.mxu0 0.0
    %746 = vmatprep.subr.mxu0 0.0
    %747 = vmatpush1.msra.mxu0 0.0
    %748 = vmatprep.subr.mxu0 0.0
    %749 = vmatpush1.msra.mxu0 0.0
    %750 = vmatprep.subr.mxu0 0.0
    %751 = vmatpush1.msra.mxu0 0.0
    %752 = vmatprep.subr.mxu0 0.0
    %753 = vmatpush1.msra.mxu0 0.0
    %754 = vmatprep.subr.mxu0 0.0
    %755 = vmatpush1.msra.mxu0 0.0
    %756 = vmatprep.subr.mxu0 0.0
    %757 = vmatpush1.msra.mxu0 0.0
    %758 = vmatprep.subr.mxu0 0.0
    %759 = vmatpush1.msra.mxu0 0.0
    %760 = vmatprep.subr.mxu0 0.0
    %761 = vmatpush1.msra.mxu0 %v728
    %762 = vmatprep.subr.mxu0 0.0
    %763 = vmatpush2.msra.mxu0 0.0
    %764 = vmatprep.subr.mxu0 0.0
    %765 = vmatpush2.msra.mxu0 0.0
    %766 = vmatprep.subr.mxu0 0.0
    %767 = vmatpush2.msra.mxu0 0.0
    %768 = vmatprep.subr.mxu0 0.0
    %769 = vmatpush2.msra.mxu0 0.0
    %770 = vmatprep.subr.mxu0 0.0
    %771 = vmatpush2.msra.mxu0 0.0
    %772 = vmatprep.subr.mxu0 0.0
    %773 = vmatpush2.msra.mxu0 0.0
    %774 = vmatprep.subr.mxu0 0.0
    %775 = vmatpush2.msra.mxu0 0.0
    %776 = vmatprep.subr.mxu0 0.0
    %777 = vmatpush2.msra.mxu0 0.0
    %778 = vmatprep.subr.mxu0 0.0
    %779 = vmatpush2.msra.mxu0 0.0
    %780 = vmatprep.subr.mxu0 0.0
    %781 = vmatpush2.msra.mxu0 0.0
    %782 = vmatprep.subr.mxu0 0.0
    %783 = vmatpush2.msra.mxu0 0.0
    %784 = vmatprep.subr.mxu0 0.0
    %785 = vmatpush2.msra.mxu0 0.0
    %786 = vmatprep.subr.mxu0 0.0
    %787 = vmatpush2.msra.mxu0 0.0
    %788 = vmatprep.subr.mxu0 0.0
    %789 = vmatpush2.msra.mxu0 0.0
    %790 = vmatprep.subr.mxu0 0.0
    %791 = vmatpush2.msra.mxu0 0.0
    %792 = vmatprep.subr.mxu0 0.0
    %793 = vmatpush2.msra.mxu0 0.0
    %794 = vmatprep.mubr.f32.mxu0 0.0
    %795 = vmatmul.mubr.f32.gmra.mxu0 %v458
    %v796 = vpop.f32.mrf.mxu0
    %v797 = vadd.f32 %v725, %v796
    %v798 = vpop.f32.mrf.mxu0
    %799 = vmatprep.mubr.f32.mxu0 0.0
    %800 = vmatmul.mubr.f32.gmra.mxu0 %v461
    %v801 = vpop.f32.mrf.mxu0
    %v802 = vadd.f32 %v725, %v801
    %v803 = vpop.f32.mrf.mxu0
    %804 = vmatprep.mubr.f32.mxu0 0.0
    %805 = vmatmul.mubr.f32.gmra.mxu0 %v464
    %v806 = vpop.f32.mrf.mxu0
    %v807 = vadd.f32 %v725, %v806
    %v808 = vpop.f32.mrf.mxu0
    %809 = vmatprep.mubr.f32.mxu0 0.0
    %810 = vmatmul.mubr.f32.gmra.mxu0 %v467
    %v811 = vpop.f32.mrf.mxu0
    %v812 = vadd.f32 %v725, %v811
    %v813 = vpop.f32.mrf.mxu0
    %814 = vmatprep.mubr.f32.mxu0 0.0
    %815 = vmatmul.mubr.f32.gmra.mxu0 %v470
    %v816 = vpop.f32.mrf.mxu0
    %v817 = vadd.f32 %v725, %v816
    %v818 = vpop.f32.mrf.mxu0
    %819 = vmatprep.mubr.f32.mxu0 0.0
    %820 = vmatmul.mubr.f32.gmra.mxu0 %v473
    %v821 = vpop.f32.mrf.mxu0
    %v822 = vadd.f32 %v725, %v821
    %v823 = vpop.f32.mrf.mxu0
    %824 = vmatprep.mubr.f32.mxu0 0.0
    %825 = vmatmul.mubr.f32.gmra.mxu0 %v476
    %v826 = vpop.f32.mrf.mxu0
    %v827 = vadd.f32 %v725, %v826
    %v828 = vpop.f32.mrf.mxu0
    %829 = vmatprep.mubr.f32.mxu0 0.0
    %830 = vmatmul.mubr.f32.gmra.mxu0 %v479
    %v831 = vpop.f32.mrf.mxu0
    %v832 = vadd.f32 %v725, %v831
    %v833 = vpop.f32.mrf.mxu0
    %834 = vdwg.mxu0
    %835 = vst.msk [vmem:[#allocation4] sm:$0xff] %vm590, %v797
    %836 = vst.msk [vmem:[#allocation4 + $0x8] sm:$0xff] %vm590, %v802
    %837 = vst.msk [vmem:[#allocation4 + $0x10] sm:$0xff] %vm590, %v807
    %838 = vst.msk [vmem:[#allocation4 + $0x18] sm:$0xff] %vm590, %v812
    %839 = vst.msk [vmem:[#allocation4 + $0x20] sm:$0xff] %vm590, %v817
    %840 = vst.msk [vmem:[#allocation4 + $0x28] sm:$0xff] %vm590, %v822
    %841 = vst.msk [vmem:[#allocation4 + $0x30] sm:$0xff] %vm590, %v827
    %842 = vst.msk [vmem:[#allocation4 + $0x38] sm:$0xff] %vm590, %v832
    %v844 = vlaneseq
    %v845 = vshrl.u32 %v844, 7
    %v846 = vsub.s32 0, %v845
    %v847 = vrot.slane %v441, %v846
    %v850 = vsel %vm481, %v421, 0
    %852 = vmatprep.subr.mxu0 0.0
    %853 = vmatpush1.msra.mxu0 0.0
    %854 = vmatprep.subr.mxu0 0.0
    %855 = vmatpush1.msra.mxu0 0.0
    %856 = vmatprep.subr.mxu0 0.0
    %857 = vmatpush1.msra.mxu0 0.0
    %858 = vmatprep.subr.mxu0 0.0
    %859 = vmatpush1.msra.mxu0 0.0
    %860 = vmatprep.subr.mxu0 0.0
    %861 = vmatpush1.msra.mxu0 0.0
    %862 = vmatprep.subr.mxu0 0.0
    %863 = vmatpush1.msra.mxu0 0.0
    %864 = vmatprep.subr.mxu0 0.0
    %865 = vmatpush1.msra.mxu0 0.0
    %866 = vmatprep.subr.mxu0 0.0
    %867 = vmatpush1.msra.mxu0 0.0
    %868 = vmatprep.subr.mxu0 0.0
    %869 = vmatpush1.msra.mxu0 0.0
    %870 = vmatprep.subr.mxu0 0.0
    %871 = vmatpush1.msra.mxu0 0.0
    %872 = vmatprep.subr.mxu0 0.0
    %873 = vmatpush1.msra.mxu0 0.0
    %874 = vmatprep.subr.mxu0 0.0
    %875 = vmatpush1.msra.mxu0 0.0
    %876 = vmatprep.subr.mxu0 0.0
    %877 = vmatpush1.msra.mxu0 0.0
    %878 = vmatprep.subr.mxu0 0.0
    %879 = vmatpush1.msra.mxu0 0.0
    %880 = vmatprep.subr.mxu0 0.0
    %881 = vmatpush1.msra.mxu0 0.0
    %882 = vmatprep.subr.mxu0 0.0
    %883 = vmatpush1.msra.mxu0 %v850
    %884 = vmatprep.subr.mxu0 0.0
    %885 = vmatpush2.msra.mxu0 0.0
    %886 = vmatprep.subr.mxu0 0.0
    %887 = vmatpush2.msra.mxu0 0.0
    %888 = vmatprep.subr.mxu0 0.0
    %889 = vmatpush2.msra.mxu0 0.0
    %890 = vmatprep.subr.mxu0 0.0
    %891 = vmatpush2.msra.mxu0 0.0
    %892 = vmatprep.subr.mxu0 0.0
    %893 = vmatpush2.msra.mxu0 0.0
    %894 = vmatprep.subr.mxu0 0.0
    %895 = vmatpush2.msra.mxu0 0.0
    %896 = vmatprep.subr.mxu0 0.0
    %897 = vmatpush2.msra.mxu0 0.0
    %898 = vmatprep.subr.mxu0 0.0
    %899 = vmatpush2.msra.mxu0 0.0
    %900 = vmatprep.subr.mxu0 0.0
    %901 = vmatpush2.msra.mxu0 0.0
    %902 = vmatprep.subr.mxu0 0.0
    %903 = vmatpush2.msra.mxu0 0.0
    %904 = vmatprep.subr.mxu0 0.0
    %905 = vmatpush2.msra.mxu0 0.0
    %906 = vmatprep.subr.mxu0 0.0
    %907 = vmatpush2.msra.mxu0 0.0
    %908 = vmatprep.subr.mxu0 0.0
    %909 = vmatpush2.msra.mxu0 0.0
    %910 = vmatprep.subr.mxu0 0.0
    %911 = vmatpush2.msra.mxu0 0.0
    %912 = vmatprep.subr.mxu0 0.0
    %913 = vmatpush2.msra.mxu0 0.0
    %914 = vmatprep.subr.mxu0 0.0
    %915 = vmatpush2.msra.mxu0 0.0
    %916 = vmatprep.mubr.f32.mxu0 0.0
    %917 = vmatmul.mubr.f32.gmra.mxu0 %v458
    %v918 = vpop.f32.mrf.mxu0
    %v919 = vadd.f32 %v847, %v918
    %v920 = vpop.f32.mrf.mxu0
    %921 = vmatprep.mubr.f32.mxu0 0.0
    %922 = vmatmul.mubr.f32.gmra.mxu0 %v461
    %v923 = vpop.f32.mrf.mxu0
    %v924 = vadd.f32 %v847, %v923
    %v925 = vpop.f32.mrf.mxu0
    %926 = vmatprep.mubr.f32.mxu0 0.0
    %927 = vmatmul.mubr.f32.gmra.mxu0 %v464
    %v928 = vpop.f32.mrf.mxu0
    %v929 = vadd.f32 %v847, %v928
    %v930 = vpop.f32.mrf.mxu0
    %931 = vmatprep.mubr.f32.mxu0 0.0
    %932 = vmatmul.mubr.f32.gmra.mxu0 %v467
    %v933 = vpop.f32.mrf.mxu0
    %v934 = vadd.f32 %v847, %v933
    %v935 = vpop.f32.mrf.mxu0
    %936 = vmatprep.mubr.f32.mxu0 0.0
    %937 = vmatmul.mubr.f32.gmra.mxu0 %v470
    %v938 = vpop.f32.mrf.mxu0
    %v939 = vadd.f32 %v847, %v938
    %v940 = vpop.f32.mrf.mxu0
    %941 = vmatprep.mubr.f32.mxu0 0.0
    %942 = vmatmul.mubr.f32.gmra.mxu0 %v473
    %v943 = vpop.f32.mrf.mxu0
    %v944 = vadd.f32 %v847, %v943
    %v945 = vpop.f32.mrf.mxu0
    %946 = vmatprep.mubr.f32.mxu0 0.0
    %947 = vmatmul.mubr.f32.gmra.mxu0 %v476
    %v948 = vpop.f32.mrf.mxu0
    %v949 = vadd.f32 %v847, %v948
    %v950 = vpop.f32.mrf.mxu0
    %951 = vmatprep.mubr.f32.mxu0 0.0
    %952 = vmatmul.mubr.f32.gmra.mxu0 %v479
    %v953 = vpop.f32.mrf.mxu0
    %v954 = vadd.f32 %v847, %v953
    %v955 = vpop.f32.mrf.mxu0
    %956 = vdwg.mxu0
    %957 = vst.msk [vmem:[#allocation5] sm:$0xff] %vm590, %v919
    %958 = vst.msk [vmem:[#allocation5 + $0x8] sm:$0xff] %vm590, %v924
    %959 = vst.msk [vmem:[#allocation5 + $0x10] sm:$0xff] %vm590, %v929
    %960 = vst.msk [vmem:[#allocation5 + $0x18] sm:$0xff] %vm590, %v934
    %961 = vst.msk [vmem:[#allocation5 + $0x20] sm:$0xff] %vm590, %v939
    %962 = vst.msk [vmem:[#allocation5 + $0x28] sm:$0xff] %vm590, %v944
    %963 = vst.msk [vmem:[#allocation5 + $0x30] sm:$0xff] %vm590, %v949
    %964 = vst.msk [vmem:[#allocation5 + $0x38] sm:$0xff] %vm590, %v954
    %v965 = vld [vmem:[%s27] sm:$0xff]
    %v966 = vld [vmem:[%s27 + $0x8] sm:$0xff]
    %v967 = vld [vmem:[%s27 + $0x10] sm:$0xff]
    %v968 = vld [vmem:[%s27 + $0x18] sm:$0xff]
    %v969 = vld [vmem:[%s29] sm:$0xff]
    %v970 = vld [vmem:[%s29 + $0x8] sm:$0xff]
    %v971 = vld [vmem:[%s29 + $0x10] sm:$0xff]
    %v972 = vld [vmem:[%s29 + $0x18] sm:$0xff]
    %v973 = vld [vmem:[%s31] sm:$0xff]
    %v974 = vld [vmem:[%s31 + $0x8] sm:$0xff]
    %v975 = vld [vmem:[%s31 + $0x10] sm:$0xff]
    %v976 = vld [vmem:[%s31 + $0x18] sm:$0xff]
    %v977 = vld [vmem:[#allocation20] sm:$0xff]
    %v978 = vld [vmem:[#allocation20 + $0x8] sm:$0xff]
    %v979 = vld [vmem:[#allocation20 + $0x10] sm:$0xff]
    %v980 = vld [vmem:[#allocation20 + $0x18] sm:$0xff]
    %v981 = vld [vmem:[#allocation21] sm:$0xff]
    %v982 = vld [vmem:[#allocation21 + $0x8] sm:$0xff]
    %v983 = vld [vmem:[#allocation21 + $0x10] sm:$0xff]
    %v984 = vld [vmem:[#allocation21 + $0x18] sm:$0xff]
    %v985 = vld [vmem:[#allocation23] sm:$0xff]
    %v986 = vld [vmem:[#allocation23 + $0x8] sm:$0xff]
    %v987 = vld [vmem:[#allocation23 + $0x10] sm:$0xff]
    %v988 = vld [vmem:[#allocation23 + $0x18] sm:$0xff]
    %v989 = vld [vmem:[#allocation24] sm:$0xff]
    %v990 = vld [vmem:[#allocation24 + $0x8] sm:$0xff]
    %v991 = vld [vmem:[#allocation24 + $0x10] sm:$0xff]
    %v992 = vld [vmem:[#allocation24 + $0x18] sm:$0xff]
    %v993 = vld [vmem:[#allocation26] sm:$0xff]
    %v994 = vld [vmem:[#allocation26 + $0x8] sm:$0xff]
    %v995 = vld [vmem:[#allocation26 + $0x10] sm:$0xff]
    %v996 = vld [vmem:[#allocation26 + $0x18] sm:$0xff]
    %v997 = vld [vmem:[#allocation27] sm:$0x1]
    %v998 = vld [vmem:[#allocation29] sm:$0x1]
    %v999 = vld [vmem:[#allocation30] sm:$0x1]
    %v1000 = vld [vmem:[#allocation32] sm:$0x1]
    %v1002 = vlaneseq
    %v1003 = vshrl.u32 %v1002, 7
    %v1004 = vsub.s32 0, %v1003
    %v1005 = vrot.slane %v997, %v1004
    %v1008 = vlaneseq
    %v1009 = vshrl.u32 %v1008, 7
    %v1010 = vsub.s32 0, %v1009
    %v1011 = vrot.slane %v998, %v1010
    %v1014 = vlaneseq
    %v1015 = vshrl.u32 %v1014, 7
    %v1016 = vsub.s32 0, %v1015
    %v1017 = vrot.slane %v999, %v1016
    %v1020 = vlaneseq
    %v1021 = vshrl.u32 %v1020, 7
    %v1022 = vsub.s32 0, %v1021
    %v1023 = vrot.slane %v1000, %v1022
    %v1025 = vld [vmem:[#allocation2] sm:$0xff]
    %v1027 = vsel %vm590, 0.0, 0
    %1029 = vmatprep.subr.mxu0 0.0
    %1030 = vmatpush1.msra.mxu0 0.0
    %1031 = vmatprep.subr.mxu0 0.0
    %1032 = vmatpush1.msra.mxu0 0.0
    %1033 = vmatprep.subr.mxu0 0.0
    %1034 = vmatpush1.msra.mxu0 0.0
    %1035 = vmatprep.subr.mxu0 0.0
    %1036 = vmatpush1.msra.mxu0 0.0
    %1037 = vmatprep.subr.mxu0 0.0
    %1038 = vmatpush1.msra.mxu0 0.0
    %1039 = vmatprep.subr.mxu0 0.0
    %1040 = vmatpush1.msra.mxu0 0.0
    %1041 = vmatprep.subr.mxu0 0.0
    %1042 = vmatpush1.msra.mxu0 0.0
    %1043 = vmatprep.subr.mxu0 0.0
    %1044 = vmatpush1.msra.mxu0 0.0
    %1045 = vmatprep.subr.mxu0 0.0
    %1046 = vmatpush1.msra.mxu0 0.0
    %1047 = vmatprep.subr.mxu0 0.0
    %1048 = vmatpush1.msra.mxu0 0.0
    %1049 = vmatprep.subr.mxu0 0.0
    %1050 = vmatpush1.msra.mxu0 0.0
    %1051 = vmatprep.subr.mxu0 0.0
    %1052 = vmatpush1.msra.mxu0 0.0
    %1053 = vmatprep.subr.mxu0 0.0
    %1054 = vmatpush1.msra.mxu0 %v425
    %1055 = vmatprep.subr.mxu0 0.0
    %1056 = vmatpush1.msra.mxu0 %v424
    %1057 = vmatprep.subr.mxu0 0.0
    %1058 = vmatpush1.msra.mxu0 %v423
    %1059 = vmatprep.subr.mxu0 0.0
    %1060 = vmatpush1.msra.mxu0 %v422
    %1061 = vmatprep.subr.mxu0 0.0
    %1062 = vmatpush2.msra.mxu0 0.0
    %1063 = vmatprep.subr.mxu0 0.0
    %1064 = vmatpush2.msra.mxu0 0.0
    %1065 = vmatprep.subr.mxu0 0.0
    %1066 = vmatpush2.msra.mxu0 0.0
    %1067 = vmatprep.subr.mxu0 0.0
    %1068 = vmatpush2.msra.mxu0 0.0
    %1069 = vmatprep.subr.mxu0 0.0
    %1070 = vmatpush2.msra.mxu0 0.0
    %1071 = vmatprep.subr.mxu0 0.0
    %1072 = vmatpush2.msra.mxu0 0.0
    %1073 = vmatprep.subr.mxu0 0.0
    %1074 = vmatpush2.msra.mxu0 0.0
    %1075 = vmatprep.subr.mxu0 0.0
    %1076 = vmatpush2.msra.mxu0 0.0
    %1077 = vmatprep.subr.mxu0 0.0
    %1078 = vmatpush2.msra.mxu0 0.0
    %1079 = vmatprep.subr.mxu0 0.0
    %1080 = vmatpush2.msra.mxu0 0.0
    %1081 = vmatprep.subr.mxu0 0.0
    %1082 = vmatpush2.msra.mxu0 0.0
    %1083 = vmatprep.subr.mxu0 0.0
    %1084 = vmatpush2.msra.mxu0 0.0
    %1085 = vmatprep.subr.mxu0 0.0
    %1086 = vmatpush2.msra.mxu0 0.0
    %1087 = vmatprep.subr.mxu0 0.0
    %1088 = vmatpush2.msra.mxu0 0.0
    %1089 = vmatprep.subr.mxu0 0.0
    %1090 = vmatpush2.msra.mxu0 0.0
    %1091 = vmatprep.subr.mxu0 0.0
    %1092 = vmatpush2.msra.mxu0 0.0
    %1093 = vmatprep.mubr.f32.mxu0 0.0
    %1094 = vmatmul.mubr.f32.gmra.mxu0 %v1027
    %v1095 = vpop.f32.mrf.mxu0
    %v1096 = vadd.f32 0.0, %v1095
    %v1097 = vpop.f32.mrf.mxu0
    %1098 = vdwg.mxu0
    %v1099 = vadd.f32 %v1025, %v1096
    %v1100 = vld [vmem:[#allocation3] sm:$0xff]
    %1101 = vmatprep.subr.mxu0 0.0
    %1102 = vmatpush1.msra.mxu0 0.0
    %1103 = vmatprep.subr.mxu0 0.0
    %1104 = vmatpush1.msra.mxu0 0.0
    %1105 = vmatprep.subr.mxu0 0.0
    %1106 = vmatpush1.msra.mxu0 0.0
    %1107 = vmatprep.subr.mxu0 0.0
    %1108 = vmatpush1.msra.mxu0 0.0
    %1109 = vmatprep.subr.mxu0 0.0
    %1110 = vmatpush1.msra.mxu0 0.0
    %1111 = vmatprep.subr.mxu0 0.0
    %1112 = vmatpush1.msra.mxu0 0.0
    %1113 = vmatprep.subr.mxu0 0.0
    %1114 = vmatpush1.msra.mxu0 0.0
    %1115 = vmatprep.subr.mxu0 0.0
    %1116 = vmatpush1.msra.mxu0 0.0
    %1117 = vmatprep.subr.mxu0 0.0
    %1118 = vmatpush1.msra.mxu0 0.0
    %1119 = vmatprep.subr.mxu0 0.0
    %1120 = vmatpush1.msra.mxu0 0.0
    %1121 = vmatprep.subr.mxu0 0.0
    %1122 = vmatpush1.msra.mxu0 0.0
    %1123 = vmatprep.subr.mxu0 0.0
    %1124 = vmatpush1.msra.mxu0 0.0
    %1125 = vmatprep.subr.mxu0 0.0
    %1126 = vmatpush1.msra.mxu0 %v429
    %1127 = vmatprep.subr.mxu0 0.0
    %1128 = vmatpush1.msra.mxu0 %v428
    %1129 = vmatprep.subr.mxu0 0.0
    %1130 = vmatpush1.msra.mxu0 %v427
    %1131 = vmatprep.subr.mxu0 0.0
    %1132 = vmatpush1.msra.mxu0 %v426
    %1133 = vmatprep.subr.mxu0 0.0
    %1134 = vmatpush2.msra.mxu0 0.0
    %1135 = vmatprep.subr.mxu0 0.0
    %1136 = vmatpush2.msra.mxu0 0.0
    %1137 = vmatprep.subr.mxu0 0.0
    %1138 = vmatpush2.msra.mxu0 0.0
    %1139 = vmatprep.subr.mxu0 0.0
    %1140 = vmatpush2.msra.mxu0 0.0
    %1141 = vmatprep.subr.mxu0 0.0
    %1142 = vmatpush2.msra.mxu0 0.0
    %1143 = vmatprep.subr.mxu0 0.0
    %1144 = vmatpush2.msra.mxu0 0.0
    %1145 = vmatprep.subr.mxu0 0.0
    %1146 = vmatpush2.msra.mxu0 0.0
    %1147 = vmatprep.subr.mxu0 0.0
    %1148 = vmatpush2.msra.mxu0 0.0
    %1149 = vmatprep.subr.mxu0 0.0
    %1150 = vmatpush2.msra.mxu0 0.0
    %1151 = vmatprep.subr.mxu0 0.0
    %1152 = vmatpush2.msra.mxu0 0.0
    %1153 = vmatprep.subr.mxu0 0.0
    %1154 = vmatpush2.msra.mxu0 0.0
    %1155 = vmatprep.subr.mxu0 0.0
    %1156 = vmatpush2.msra.mxu0 0.0
    %1157 = vmatprep.subr.mxu0 0.0
    %1158 = vmatpush2.msra.mxu0 0.0
    %1159 = vmatprep.subr.mxu0 0.0
    %1160 = vmatpush2.msra.mxu0 0.0
    %1161 = vmatprep.subr.mxu0 0.0
    %1162 = vmatpush2.msra.mxu0 0.0
    %1163 = vmatprep.subr.mxu0 0.0
    %1164 = vmatpush2.msra.mxu0 0.0
    %1165 = vmatprep.mubr.f32.mxu0 0.0
    %1166 = vmatmul.mubr.f32.gmra.mxu0 %v1027
    %v1167 = vpop.f32.mrf.mxu0
    %v1168 = vadd.f32 0.0, %v1167
    %v1169 = vpop.f32.mrf.mxu0
    %1170 = vdwg.mxu0
    %v1171 = vadd.f32 %v1100, %v1168
    %v1172 = vld [vmem:[#allocation4] sm:$0xff]
    %1173 = vmatprep.subr.mxu0 0.0
    %1174 = vmatpush1.msra.mxu0 0.0
    %1175 = vmatprep.subr.mxu0 0.0
    %1176 = vmatpush1.msra.mxu0 0.0
    %1177 = vmatprep.subr.mxu0 0.0
    %1178 = vmatpush1.msra.mxu0 0.0
    %1179 = vmatprep.subr.mxu0 0.0
    %1180 = vmatpush1.msra.mxu0 0.0
    %1181 = vmatprep.subr.mxu0 0.0
    %1182 = vmatpush1.msra.mxu0 0.0
    %1183 = vmatprep.subr.mxu0 0.0
    %1184 = vmatpush1.msra.mxu0 0.0
    %1185 = vmatprep.subr.mxu0 0.0
    %1186 = vmatpush1.msra.mxu0 0.0
    %1187 = vmatprep.subr.mxu0 0.0
    %1188 = vmatpush1.msra.mxu0 0.0
    %1189 = vmatprep.subr.mxu0 0.0
    %1190 = vmatpush1.msra.mxu0 0.0
    %1191 = vmatprep.subr.mxu0 0.0
    %1192 = vmatpush1.msra.mxu0 0.0
    %1193 = vmatprep.subr.mxu0 0.0
    %1194 = vmatpush1.msra.mxu0 0.0
    %1195 = vmatprep.subr.mxu0 0.0
    %1196 = vmatpush1.msra.mxu0 0.0
    %1197 = vmatprep.subr.mxu0 0.0
    %1198 = vmatpush1.msra.mxu0 %v433
    %1199 = vmatprep.subr.mxu0 0.0
    %1200 = vmatpush1.msra.mxu0 %v432
    %1201 = vmatprep.subr.mxu0 0.0
    %1202 = vmatpush1.msra.mxu0 %v431
    %1203 = vmatprep.subr.mxu0 0.0
    %1204 = vmatpush1.msra.mxu0 %v430
    %1205 = vmatprep.subr.mxu0 0.0
    %1206 = vmatpush2.msra.mxu0 0.0
    %1207 = vmatprep.subr.mxu0 0.0
    %1208 = vmatpush2.msra.mxu0 0.0
    %1209 = vmatprep.subr.mxu0 0.0
    %1210 = vmatpush2.msra.mxu0 0.0
    %1211 = vmatprep.subr.mxu0 0.0
    %1212 = vmatpush2.msra.mxu0 0.0
    %1213 = vmatprep.subr.mxu0 0.0
    %1214 = vmatpush2.msra.mxu0 0.0
    %1215 = vmatprep.subr.mxu0 0.0
    %1216 = vmatpush2.msra.mxu0 0.0
    %1217 = vmatprep.subr.mxu0 0.0
    %1218 = vmatpush2.msra.mxu0 0.0
    %1219 = vmatprep.subr.mxu0 0.0
    %1220 = vmatpush2.msra.mxu0 0.0
    %1221 = vmatprep.subr.mxu0 0.0
    %1222 = vmatpush2.msra.mxu0 0.0
    %1223 = vmatprep.subr.mxu0 0.0
    %1224 = vmatpush2.msra.mxu0 0.0
    %1225 = vmatprep.subr.mxu0 0.0
    %1226 = vmatpush2.msra.mxu0 0.0
    %1227 = vmatprep.subr.mxu0 0.0
    %1228 = vmatpush2.msra.mxu0 0.0
    %1229 = vmatprep.subr.mxu0 0.0
    %1230 = vmatpush2.msra.mxu0 0.0
    %1231 = vmatprep.subr.mxu0 0.0
    %1232 = vmatpush2.msra.mxu0 0.0
    %1233 = vmatprep.subr.mxu0 0.0
    %1234 = vmatpush2.msra.mxu0 0.0
    %1235 = vmatprep.subr.mxu0 0.0
    %1236 = vmatpush2.msra.mxu0 0.0
    %1237 = vmatprep.mubr.f32.mxu0 0.0
    %1238 = vmatmul.mubr.f32.gmra.mxu0 %v1027
    %v1239 = vpop.f32.mrf.mxu0
    %v1240 = vadd.f32 0.0, %v1239
    %v1241 = vpop.f32.mrf.mxu0
    %1242 = vdwg.mxu0
    %v1243 = vadd.f32 %v1172, %v1240
    %v1244 = vld [vmem:[#allocation5] sm:$0xff]
    %1245 = vmatprep.subr.mxu0 0.0
    %1246 = vmatpush1.msra.mxu0 0.0
    %1247 = vmatprep.subr.mxu0 0.0
    %1248 = vmatpush1.msra.mxu0 0.0
    %1249 = vmatprep.subr.mxu0 0.0
    %1250 = vmatpush1.msra.mxu0 0.0
    %1251 = vmatprep.subr.mxu0 0.0
    %1252 = vmatpush1.msra.mxu0 0.0
    %1253 = vmatprep.subr.mxu0 0.0
    %1254 = vmatpush1.msra.mxu0 0.0
    %1255 = vmatprep.subr.mxu0 0.0
    %1256 = vmatpush1.msra.mxu0 0.0
    %1257 = vmatprep.subr.mxu0 0.0
    %1258 = vmatpush1.msra.mxu0 0.0
    %1259 = vmatprep.subr.mxu0 0.0
    %1260 = vmatpush1.msra.mxu0 0.0
    %1261 = vmatprep.subr.mxu0 0.0
    %1262 = vmatpush1.msra.mxu0 0.0
    %1263 = vmatprep.subr.mxu0 0.0
    %1264 = vmatpush1.msra.mxu0 0.0
    %1265 = vmatprep.subr.mxu0 0.0
    %1266 = vmatpush1.msra.mxu0 0.0
    %1267 = vmatprep.subr.mxu0 0.0
    %1268 = vmatpush1.msra.mxu0 0.0
    %1269 = vmatprep.subr.mxu0 0.0
    %1270 = vmatpush1.msra.mxu0 %v437
    %1271 = vmatprep.subr.mxu0 0.0
    %1272 = vmatpush1.msra.mxu0 %v436
    %1273 = vmatprep.subr.mxu0 0.0
    %1274 = vmatpush1.msra.mxu0 %v435
    %1275 = vmatprep.subr.mxu0 0.0
    %1276 = vmatpush1.msra.mxu0 %v434
    %1277 = vmatprep.subr.mxu0 0.0
    %1278 = vmatpush2.msra.mxu0 0.0
    %1279 = vmatprep.subr.mxu0 0.0
    %1280 = vmatpush2.msra.mxu0 0.0
    %1281 = vmatprep.subr.mxu0 0.0
    %1282 = vmatpush2.msra.mxu0 0.0
    %1283 = vmatprep.subr.mxu0 0.0
    %1284 = vmatpush2.msra.mxu0 0.0
    %1285 = vmatprep.subr.mxu0 0.0
    %1286 = vmatpush2.msra.mxu0 0.0
    %1287 = vmatprep.subr.mxu0 0.0
    %1288 = vmatpush2.msra.mxu0 0.0
    %1289 = vmatprep.subr.mxu0 0.0
    %1290 = vmatpush2.msra.mxu0 0.0
    %1291 = vmatprep.subr.mxu0 0.0
    %1292 = vmatpush2.msra.mxu0 0.0
    %1293 = vmatprep.subr.mxu0 0.0
    %1294 = vmatpush2.msra.mxu0 0.0
    %1295 = vmatprep.subr.mxu0 0.0
    %1296 = vmatpush2.msra.mxu0 0.0
    %1297 = vmatprep.subr.mxu0 0.0
    %1298 = vmatpush2.msra.mxu0 0.0
    %1299 = vmatprep.subr.mxu0 0.0
    %1300 = vmatpush2.msra.mxu0 0.0
    %1301 = vmatprep.subr.mxu0 0.0
    %1302 = vmatpush2.msra.mxu0 0.0
    %1303 = vmatprep.subr.mxu0 0.0
    %1304 = vmatpush2.msra.mxu0 0.0
    %1305 = vmatprep.subr.mxu0 0.0
    %1306 = vmatpush2.msra.mxu0 0.0
    %1307 = vmatprep.subr.mxu0 0.0
    %1308 = vmatpush2.msra.mxu0 0.0
    %1309 = vmatprep.mubr.f32.mxu0 0.0
    %1310 = vmatmul.mubr.f32.gmra.mxu0 %v1027
    %v1311 = vpop.f32.mrf.mxu0
    %v1312 = vadd.f32 0.0, %v1311
    %v1313 = vpop.f32.mrf.mxu0
    %1314 = vdwg.mxu0
    %v1315 = vadd.f32 %v1244, %v1312
    %v1316 = vxor.u32 %v1099, 2147483648
    %v1317 = vmul.f32 %v1316, 1.442695
    %v1318 = vpow.pop %v1317
    %v1319 = vadd.f32 %v1318, 1.0
    %v1320 = vrcp.pop %v1319
    %v1321 = vmul.f32 1.0, %v1320
    %v1322 = vxor.u32 %v1171, 2147483648
    %v1323 = vmul.f32 %v1322, 1.442695
    %v1324 = vpow.pop %v1323
    %v1325 = vadd.f32 %v1324, 1.0
    %v1326 = vrcp.pop %v1325
    %v1327 = vmul.f32 1.0, %v1326
    %v1328 = vtanh.pop %v1243
    %v1329 = vxor.u32 %v1315, 2147483648
    %v1330 = vmul.f32 %v1329, 1.442695
    %v1331 = vpow.pop %v1330
    %v1332 = vadd.f32 %v1331, 1.0
    %v1333 = vrcp.pop %v1332
    %v1334 = vmul.f32 1.0, %v1333
    %v1335 = vmul.f32 %v1327, 0.0
    %v1336 = vmul.f32 %v1321, %v1328
    %v1337 = vadd.f32 %v1335, %v1336
    %v1338 = vtanh.pop %v1337
    %v1339 = vmul.f32 %v1334, %v1338
    %v1341 = vsel %vm590, %v1339, 0
    %1343 = vmatprep.subr.mxu0 0.0
    %1344 = vmatpush1.msra.mxu0 0.0
    %1345 = vmatprep.subr.mxu0 0.0
    %1346 = vmatpush1.msra.mxu0 0.0
    %1347 = vmatprep.subr.mxu0 0.0
    %1348 = vmatpush1.msra.mxu0 0.0
    %1349 = vmatprep.subr.mxu0 0.0
    %1350 = vmatpush1.msra.mxu0 0.0
    %1351 = vmatprep.subr.mxu0 0.0
    %1352 = vmatpush1.msra.mxu0 0.0
    %1353 = vmatprep.subr.mxu0 0.0
    %1354 = vmatpush1.msra.mxu0 0.0
    %1355 = vmatprep.subr.mxu0 0.0
    %1356 = vmatpush1.msra.mxu0 0.0
    %1357 = vmatprep.subr.mxu0 0.0
    %1358 = vmatpush1.msra.mxu0 0.0
    %1359 = vmatprep.subr.mxu0 0.0
    %1360 = vmatpush1.msra.mxu0 0.0
    %1361 = vmatprep.subr.mxu0 0.0
    %1362 = vmatpush1.msra.mxu0 0.0
    %1363 = vmatprep.subr.mxu0 0.0
    %1364 = vmatpush1.msra.mxu0 0.0
    %1365 = vmatprep.subr.mxu0 0.0
    %1366 = vmatpush1.msra.mxu0 0.0
    %1367 = vmatprep.subr.mxu0 0.0
    %1368 = vmatpush1.msra.mxu0 %v968
    %1369 = vmatprep.subr.mxu0 0.0
    %1370 = vmatpush1.msra.mxu0 %v967
    %1371 = vmatprep.subr.mxu0 0.0
    %1372 = vmatpush1.msra.mxu0 %v966
    %1373 = vmatprep.subr.mxu0 0.0
    %1374 = vmatpush1.msra.mxu0 %v965
    %1375 = vmatprep.subr.mxu0 0.0
    %1376 = vmatpush2.msra.mxu0 0.0
    %1377 = vmatprep.subr.mxu0 0.0
    %1378 = vmatpush2.msra.mxu0 0.0
    %1379 = vmatprep.subr.mxu0 0.0
    %1380 = vmatpush2.msra.mxu0 0.0
    %1381 = vmatprep.subr.mxu0 0.0
    %1382 = vmatpush2.msra.mxu0 0.0
    %1383 = vmatprep.subr.mxu0 0.0
    %1384 = vmatpush2.msra.mxu0 0.0
    %1385 = vmatprep.subr.mxu0 0.0
    %1386 = vmatpush2.msra.mxu0 0.0
    %1387 = vmatprep.subr.mxu0 0.0
    %1388 = vmatpush2.msra.mxu0 0.0
    %1389 = vmatprep.subr.mxu0 0.0
    %1390 = vmatpush2.msra.mxu0 0.0
    %1391 = vmatprep.subr.mxu0 0.0
    %1392 = vmatpush2.msra.mxu0 0.0
    %1393 = vmatprep.subr.mxu0 0.0
    %1394 = vmatpush2.msra.mxu0 0.0
    %1395 = vmatprep.subr.mxu0 0.0
    %1396 = vmatpush2.msra.mxu0 0.0
    %1397 = vmatprep.subr.mxu0 0.0
    %1398 = vmatpush2.msra.mxu0 0.0
    %1399 = vmatprep.subr.mxu0 0.0
    %1400 = vmatpush2.msra.mxu0 0.0
    %1401 = vmatprep.subr.mxu0 0.0
    %1402 = vmatpush2.msra.mxu0 0.0
    %1403 = vmatprep.subr.mxu0 0.0
    %1404 = vmatpush2.msra.mxu0 0.0
    %1405 = vmatprep.subr.mxu0 0.0
    %1406 = vmatpush2.msra.mxu0 0.0
    %1407 = vmatprep.mubr.f32.mxu0 0.0
    %1408 = vmatmul.mubr.f32.gmra.mxu0 %v1341
    %v1409 = vpop.f32.mrf.mxu0
    %v1410 = vadd.f32 %v1005, %v1409
    %v1411 = vpop.f32.mrf.mxu0
    %1412 = vdwg.mxu0
    %1413 = vmatprep.subr.mxu0 0.0
    %1414 = vmatpush1.msra.mxu0 0.0
    %1415 = vmatprep.subr.mxu0 0.0
    %1416 = vmatpush1.msra.mxu0 0.0
    %1417 = vmatprep.subr.mxu0 0.0
    %1418 = vmatpush1.msra.mxu0 0.0
    %1419 = vmatprep.subr.mxu0 0.0
    %1420 = vmatpush1.msra.mxu0 0.0
    %1421 = vmatprep.subr.mxu0 0.0
    %1422 = vmatpush1.msra.mxu0 0.0
    %1423 = vmatprep.subr.mxu0 0.0
    %1424 = vmatpush1.msra.mxu0 0.0
    %1425 = vmatprep.subr.mxu0 0.0
    %1426 = vmatpush1.msra.mxu0 0.0
    %1427 = vmatprep.subr.mxu0 0.0
    %1428 = vmatpush1.msra.mxu0 0.0
    %1429 = vmatprep.subr.mxu0 0.0
    %1430 = vmatpush1.msra.mxu0 0.0
    %1431 = vmatprep.subr.mxu0 0.0
    %1432 = vmatpush1.msra.mxu0 0.0
    %1433 = vmatprep.subr.mxu0 0.0
    %1434 = vmatpush1.msra.mxu0 0.0
    %1435 = vmatprep.subr.mxu0 0.0
    %1436 = vmatpush1.msra.mxu0 0.0
    %1437 = vmatprep.subr.mxu0 0.0
    %1438 = vmatpush1.msra.mxu0 %v984
    %1439 = vmatprep.subr.mxu0 0.0
    %1440 = vmatpush1.msra.mxu0 %v983
    %1441 = vmatprep.subr.mxu0 0.0
    %1442 = vmatpush1.msra.mxu0 %v982
    %1443 = vmatprep.subr.mxu0 0.0
    %1444 = vmatpush1.msra.mxu0 %v981
    %1445 = vmatprep.subr.mxu0 0.0
    %1446 = vmatpush2.msra.mxu0 0.0
    %1447 = vmatprep.subr.mxu0 0.0
    %1448 = vmatpush2.msra.mxu0 0.0
    %1449 = vmatprep.subr.mxu0 0.0
    %1450 = vmatpush2.msra.mxu0 0.0
    %1451 = vmatprep.subr.mxu0 0.0
    %1452 = vmatpush2.msra.mxu0 0.0
    %1453 = vmatprep.subr.mxu0 0.0
    %1454 = vmatpush2.msra.mxu0 0.0
    %1455 = vmatprep.subr.mxu0 0.0
    %1456 = vmatpush2.msra.mxu0 0.0
    %1457 = vmatprep.subr.mxu0 0.0
    %1458 = vmatpush2.msra.mxu0 0.0
    %1459 = vmatprep.subr.mxu0 0.0
    %1460 = vmatpush2.msra.mxu0 0.0
    %1461 = vmatprep.subr.mxu0 0.0
    %1462 = vmatpush2.msra.mxu0 0.0
    %1463 = vmatprep.subr.mxu0 0.0
    %1464 = vmatpush2.msra.mxu0 0.0
    %1465 = vmatprep.subr.mxu0 0.0
    %1466 = vmatpush2.msra.mxu0 0.0
    %1467 = vmatprep.subr.mxu0 0.0
    %1468 = vmatpush2.msra.mxu0 0.0
    %1469 = vmatprep.subr.mxu0 0.0
    %1470 = vmatpush2.msra.mxu0 0.0
    %1471 = vmatprep.subr.mxu0 0.0
    %1472 = vmatpush2.msra.mxu0 0.0
    %1473 = vmatprep.subr.mxu0 0.0
    %1474 = vmatpush2.msra.mxu0 0.0
    %1475 = vmatprep.subr.mxu0 0.0
    %1476 = vmatpush2.msra.mxu0 0.0
    %1477 = vmatprep.mubr.f32.mxu0 0.0
    %1478 = vmatmul.mubr.f32.gmra.mxu0 %v1027
    %v1479 = vpop.f32.mrf.mxu0
    %v1480 = vadd.f32 0.0, %v1479
    %v1481 = vpop.f32.mrf.mxu0
    %1482 = vdwg.mxu0
    %v1483 = vadd.f32 %v1410, %v1480
    %1484 = vmatprep.subr.mxu0 0.0
    %1485 = vmatpush1.msra.mxu0 0.0
    %1486 = vmatprep.subr.mxu0 0.0
    %1487 = vmatpush1.msra.mxu0 0.0
    %1488 = vmatprep.subr.mxu0 0.0
    %1489 = vmatpush1.msra.mxu0 0.0
    %1490 = vmatprep.subr.mxu0 0.0
    %1491 = vmatpush1.msra.mxu0 0.0
    %1492 = vmatprep.subr.mxu0 0.0
    %1493 = vmatpush1.msra.mxu0 0.0
    %1494 = vmatprep.subr.mxu0 0.0
    %1495 = vmatpush1.msra.mxu0 0.0
    %1496 = vmatprep.subr.mxu0 0.0
    %1497 = vmatpush1.msra.mxu0 0.0
    %1498 = vmatprep.subr.mxu0 0.0
    %1499 = vmatpush1.msra.mxu0 0.0
    %1500 = vmatprep.subr.mxu0 0.0
    %1501 = vmatpush1.msra.mxu0 0.0
    %1502 = vmatprep.subr.mxu0 0.0
    %1503 = vmatpush1.msra.mxu0 0.0
    %1504 = vmatprep.subr.mxu0 0.0
    %1505 = vmatpush1.msra.mxu0 0.0
    %1506 = vmatprep.subr.mxu0 0.0
    %1507 = vmatpush1.msra.mxu0 0.0
    %1508 = vmatprep.subr.mxu0 0.0
    %1509 = vmatpush1.msra.mxu0 %v972
    %1510 = vmatprep.subr.mxu0 0.0
    %1511 = vmatpush1.msra.mxu0 %v971
    %1512 = vmatprep.subr.mxu0 0.0
    %1513 = vmatpush1.msra.mxu0 %v970
    %1514 = vmatprep.subr.mxu0 0.0
    %1515 = vmatpush1.msra.mxu0 %v969
    %1516 = vmatprep.subr.mxu0 0.0
    %1517 = vmatpush2.msra.mxu0 0.0
    %1518 = vmatprep.subr.mxu0 0.0
    %1519 = vmatpush2.msra.mxu0 0.0
    %1520 = vmatprep.subr.mxu0 0.0
    %1521 = vmatpush2.msra.mxu0 0.0
    %1522 = vmatprep.subr.mxu0 0.0
    %1523 = vmatpush2.msra.mxu0 0.0
    %1524 = vmatprep.subr.mxu0 0.0
    %1525 = vmatpush2.msra.mxu0 0.0
    %1526 = vmatprep.subr.mxu0 0.0
    %1527 = vmatpush2.msra.mxu0 0.0
    %1528 = vmatprep.subr.mxu0 0.0
    %1529 = vmatpush2.msra.mxu0 0.0
    %1530 = vmatprep.subr.mxu0 0.0
    %1531 = vmatpush2.msra.mxu0 0.0
    %1532 = vmatprep.subr.mxu0 0.0
    %1533 = vmatpush2.msra.mxu0 0.0
    %1534 = vmatprep.subr.mxu0 0.0
    %1535 = vmatpush2.msra.mxu0 0.0
    %1536 = vmatprep.subr.mxu0 0.0
    %1537 = vmatpush2.msra.mxu0 0.0
    %1538 = vmatprep.subr.mxu0 0.0
    %1539 = vmatpush2.msra.mxu0 0.0
    %1540 = vmatprep.subr.mxu0 0.0
    %1541 = vmatpush2.msra.mxu0 0.0
    %1542 = vmatprep.subr.mxu0 0.0
    %1543 = vmatpush2.msra.mxu0 0.0
    %1544 = vmatprep.subr.mxu0 0.0
    %1545 = vmatpush2.msra.mxu0 0.0
    %1546 = vmatprep.subr.mxu0 0.0
    %1547 = vmatpush2.msra.mxu0 0.0
    %1548 = vmatprep.mubr.f32.mxu0 0.0
    %1549 = vmatmul.mubr.f32.gmra.mxu0 %v1341
    %v1550 = vpop.f32.mrf.mxu0
    %v1551 = vadd.f32 %v1011, %v1550
    %v1552 = vpop.f32.mrf.mxu0
    %1553 = vdwg.mxu0
    %1554 = vmatprep.subr.mxu0 0.0
    %1555 = vmatpush1.msra.mxu0 0.0
    %1556 = vmatprep.subr.mxu0 0.0
    %1557 = vmatpush1.msra.mxu0 0.0
    %1558 = vmatprep.subr.mxu0 0.0
    %1559 = vmatpush1.msra.mxu0 0.0
    %1560 = vmatprep.subr.mxu0 0.0
    %1561 = vmatpush1.msra.mxu0 0.0
    %1562 = vmatprep.subr.mxu0 0.0
    %1563 = vmatpush1.msra.mxu0 0.0
    %1564 = vmatprep.subr.mxu0 0.0
    %1565 = vmatpush1.msra.mxu0 0.0
    %1566 = vmatprep.subr.mxu0 0.0
    %1567 = vmatpush1.msra.mxu0 0.0
    %1568 = vmatprep.subr.mxu0 0.0
    %1569 = vmatpush1.msra.mxu0 0.0
    %1570 = vmatprep.subr.mxu0 0.0
    %1571 = vmatpush1.msra.mxu0 0.0
    %1572 = vmatprep.subr.mxu0 0.0
    %1573 = vmatpush1.msra.mxu0 0.0
    %1574 = vmatprep.subr.mxu0 0.0
    %1575 = vmatpush1.msra.mxu0 0.0
    %1576 = vmatprep.subr.mxu0 0.0
    %1577 = vmatpush1.msra.mxu0 0.0
    %1578 = vmatprep.subr.mxu0 0.0
    %1579 = vmatpush1.msra.mxu0 %v988
    %1580 = vmatprep.subr.mxu0 0.0
    %1581 = vmatpush1.msra.mxu0 %v987
    %1582 = vmatprep.subr.mxu0 0.0
    %1583 = vmatpush1.msra.mxu0 %v986
    %1584 = vmatprep.subr.mxu0 0.0
    %1585 = vmatpush1.msra.mxu0 %v985
    %1586 = vmatprep.subr.mxu0 0.0
    %1587 = vmatpush2.msra.mxu0 0.0
    %1588 = vmatprep.subr.mxu0 0.0
    %1589 = vmatpush2.msra.mxu0 0.0
    %1590 = vmatprep.subr.mxu0 0.0
    %1591 = vmatpush2.msra.mxu0 0.0
    %1592 = vmatprep.subr.mxu0 0.0
    %1593 = vmatpush2.msra.mxu0 0.0
    %1594 = vmatprep.subr.mxu0 0.0
    %1595 = vmatpush2.msra.mxu0 0.0
    %1596 = vmatprep.subr.mxu0 0.0
    %1597 = vmatpush2.msra.mxu0 0.0
    %1598 = vmatprep.subr.mxu0 0.0
    %1599 = vmatpush2.msra.mxu0 0.0
    %1600 = vmatprep.subr.mxu0 0.0
    %1601 = vmatpush2.msra.mxu0 0.0
    %1602 = vmatprep.subr.mxu0 0.0
    %1603 = vmatpush2.msra.mxu0 0.0
    %1604 = vmatprep.subr.mxu0 0.0
    %1605 = vmatpush2.msra.mxu0 0.0
    %1606 = vmatprep.subr.mxu0 0.0
    %1607 = vmatpush2.msra.mxu0 0.0
    %1608 = vmatprep.subr.mxu0 0.0
    %1609 = vmatpush2.msra.mxu0 0.0
    %1610 = vmatprep.subr.mxu0 0.0
    %1611 = vmatpush2.msra.mxu0 0.0
    %1612 = vmatprep.subr.mxu0 0.0
    %1613 = vmatpush2.msra.mxu0 0.0
    %1614 = vmatprep.subr.mxu0 0.0
    %1615 = vmatpush2.msra.mxu0 0.0
    %1616 = vmatprep.subr.mxu0 0.0
    %1617 = vmatpush2.msra.mxu0 0.0
    %1618 = vmatprep.mubr.f32.mxu0 0.0
    %1619 = vmatmul.mubr.f32.gmra.mxu0 %v1027
    %v1620 = vpop.f32.mrf.mxu0
    %v1621 = vadd.f32 0.0, %v1620
    %v1622 = vpop.f32.mrf.mxu0
    %1623 = vdwg.mxu0
    %v1624 = vadd.f32 %v1551, %v1621
    %1625 = vmatprep.subr.mxu0 0.0
    %1626 = vmatpush1.msra.mxu0 0.0
    %1627 = vmatprep.subr.mxu0 0.0
    %1628 = vmatpush1.msra.mxu0 0.0
    %1629 = vmatprep.subr.mxu0 0.0
    %1630 = vmatpush1.msra.mxu0 0.0
    %1631 = vmatprep.subr.mxu0 0.0
    %1632 = vmatpush1.msra.mxu0 0.0
    %1633 = vmatprep.subr.mxu0 0.0
    %1634 = vmatpush1.msra.mxu0 0.0
    %1635 = vmatprep.subr.mxu0 0.0
    %1636 = vmatpush1.msra.mxu0 0.0
    %1637 = vmatprep.subr.mxu0 0.0
    %1638 = vmatpush1.msra.mxu0 0.0
    %1639 = vmatprep.subr.mxu0 0.0
    %1640 = vmatpush1.msra.mxu0 0.0
    %1641 = vmatprep.subr.mxu0 0.0
    %1642 = vmatpush1.msra.mxu0 0.0
    %1643 = vmatprep.subr.mxu0 0.0
    %1644 = vmatpush1.msra.mxu0 0.0
    %1645 = vmatprep.subr.mxu0 0.0
    %1646 = vmatpush1.msra.mxu0 0.0
    %1647 = vmatprep.subr.mxu0 0.0
    %1648 = vmatpush1.msra.mxu0 0.0
    %1649 = vmatprep.subr.mxu0 0.0
    %1650 = vmatpush1.msra.mxu0 %v976
    %1651 = vmatprep.subr.mxu0 0.0
    %1652 = vmatpush1.msra.mxu0 %v975
    %1653 = vmatprep.subr.mxu0 0.0
    %1654 = vmatpush1.msra.mxu0 %v974
    %1655 = vmatprep.subr.mxu0 0.0
    %1656 = vmatpush1.msra.mxu0 %v973
    %1657 = vmatprep.subr.mxu0 0.0
    %1658 = vmatpush2.msra.mxu0 0.0
    %1659 = vmatprep.subr.mxu0 0.0
    %1660 = vmatpush2.msra.mxu0 0.0
    %1661 = vmatprep.subr.mxu0 0.0
    %1662 = vmatpush2.msra.mxu0 0.0
    %1663 = vmatprep.subr.mxu0 0.0
    %1664 = vmatpush2.msra.mxu0 0.0
    %1665 = vmatprep.subr.mxu0 0.0
    %1666 = vmatpush2.msra.mxu0 0.0
    %1667 = vmatprep.subr.mxu0 0.0
    %1668 = vmatpush2.msra.mxu0 0.0
    %1669 = vmatprep.subr.mxu0 0.0
    %1670 = vmatpush2.msra.mxu0 0.0
    %1671 = vmatprep.subr.mxu0 0.0
    %1672 = vmatpush2.msra.mxu0 0.0
    %1673 = vmatprep.subr.mxu0 0.0
    %1674 = vmatpush2.msra.mxu0 0.0
    %1675 = vmatprep.subr.mxu0 0.0
    %1676 = vmatpush2.msra.mxu0 0.0
    %1677 = vmatprep.subr.mxu0 0.0
    %1678 = vmatpush2.msra.mxu0 0.0
    %1679 = vmatprep.subr.mxu0 0.0
    %1680 = vmatpush2.msra.mxu0 0.0
    %1681 = vmatprep.subr.mxu0 0.0
    %1682 = vmatpush2.msra.mxu0 0.0
    %1683 = vmatprep.subr.mxu0 0.0
    %1684 = vmatpush2.msra.mxu0 0.0
    %1685 = vmatprep.subr.mxu0 0.0
    %1686 = vmatpush2.msra.mxu0 0.0
    %1687 = vmatprep.subr.mxu0 0.0
    %1688 = vmatpush2.msra.mxu0 0.0
    %1689 = vmatprep.mubr.f32.mxu0 0.0
    %1690 = vmatmul.mubr.f32.gmra.mxu0 %v1341
    %v1691 = vpop.f32.mrf.mxu0
    %v1692 = vadd.f32 %v1017, %v1691
    %v1693 = vpop.f32.mrf.mxu0
    %1694 = vdwg.mxu0
    %1695 = vmatprep.subr.mxu0 0.0
    %1696 = vmatpush1.msra.mxu0 0.0
    %1697 = vmatprep.subr.mxu0 0.0
    %1698 = vmatpush1.msra.mxu0 0.0
    %1699 = vmatprep.subr.mxu0 0.0
    %1700 = vmatpush1.msra.mxu0 0.0
    %1701 = vmatprep.subr.mxu0 0.0
    %1702 = vmatpush1.msra.mxu0 0.0
    %1703 = vmatprep.subr.mxu0 0.0
    %1704 = vmatpush1.msra.mxu0 0.0
    %1705 = vmatprep.subr.mxu0 0.0
    %1706 = vmatpush1.msra.mxu0 0.0
    %1707 = vmatprep.subr.mxu0 0.0
    %1708 = vmatpush1.msra.mxu0 0.0
    %1709 = vmatprep.subr.mxu0 0.0
    %1710 = vmatpush1.msra.mxu0 0.0
    %1711 = vmatprep.subr.mxu0 0.0
    %1712 = vmatpush1.msra.mxu0 0.0
    %1713 = vmatprep.subr.mxu0 0.0
    %1714 = vmatpush1.msra.mxu0 0.0
    %1715 = vmatprep.subr.mxu0 0.0
    %1716 = vmatpush1.msra.mxu0 0.0
    %1717 = vmatprep.subr.mxu0 0.0
    %1718 = vmatpush1.msra.mxu0 0.0
    %1719 = vmatprep.subr.mxu0 0.0
    %1720 = vmatpush1.msra.mxu0 %v992
    %1721 = vmatprep.subr.mxu0 0.0
    %1722 = vmatpush1.msra.mxu0 %v991
    %1723 = vmatprep.subr.mxu0 0.0
    %1724 = vmatpush1.msra.mxu0 %v990
    %1725 = vmatprep.subr.mxu0 0.0
    %1726 = vmatpush1.msra.mxu0 %v989
    %1727 = vmatprep.subr.mxu0 0.0
    %1728 = vmatpush2.msra.mxu0 0.0
    %1729 = vmatprep.subr.mxu0 0.0
    %1730 = vmatpush2.msra.mxu0 0.0
    %1731 = vmatprep.subr.mxu0 0.0
    %1732 = vmatpush2.msra.mxu0 0.0
    %1733 = vmatprep.subr.mxu0 0.0
    %1734 = vmatpush2.msra.mxu0 0.0
    %1735 = vmatprep.subr.mxu0 0.0
    %1736 = vmatpush2.msra.mxu0 0.0
    %1737 = vmatprep.subr.mxu0 0.0
    %1738 = vmatpush2.msra.mxu0 0.0
    %1739 = vmatprep.subr.mxu0 0.0
    %1740 = vmatpush2.msra.mxu0 0.0
    %1741 = vmatprep.subr.mxu0 0.0
    %1742 = vmatpush2.msra.mxu0 0.0
    %1743 = vmatprep.subr.mxu0 0.0
    %1744 = vmatpush2.msra.mxu0 0.0
    %1745 = vmatprep.subr.mxu0 0.0
    %1746 = vmatpush2.msra.mxu0 0.0
    %1747 = vmatprep.subr.mxu0 0.0
    %1748 = vmatpush2.msra.mxu0 0.0
    %1749 = vmatprep.subr.mxu0 0.0
    %1750 = vmatpush2.msra.mxu0 0.0
    %1751 = vmatprep.subr.mxu0 0.0
    %1752 = vmatpush2.msra.mxu0 0.0
    %1753 = vmatprep.subr.mxu0 0.0
    %1754 = vmatpush2.msra.mxu0 0.0
    %1755 = vmatprep.subr.mxu0 0.0
    %1756 = vmatpush2.msra.mxu0 0.0
    %1757 = vmatprep.subr.mxu0 0.0
    %1758 = vmatpush2.msra.mxu0 0.0
    %1759 = vmatprep.mubr.f32.mxu0 0.0
    %1760 = vmatmul.mubr.f32.gmra.mxu0 %v1027
    %v1761 = vpop.f32.mrf.mxu0
    %v1762 = vadd.f32 0.0, %v1761
    %v1763 = vpop.f32.mrf.mxu0
    %1764 = vdwg.mxu0
    %v1765 = vadd.f32 %v1692, %v1762
    %1766 = vmatprep.subr.mxu0 0.0
    %1767 = vmatpush1.msra.mxu0 0.0
    %1768 = vmatprep.subr.mxu0 0.0
    %1769 = vmatpush1.msra.mxu0 0.0
    %1770 = vmatprep.subr.mxu0 0.0
    %1771 = vmatpush1.msra.mxu0 0.0
    %1772 = vmatprep.subr.mxu0 0.0
    %1773 = vmatpush1.msra.mxu0 0.0
    %1774 = vmatprep.subr.mxu0 0.0
    %1775 = vmatpush1.msra.mxu0 0.0
    %1776 = vmatprep.subr.mxu0 0.0
    %1777 = vmatpush1.msra.mxu0 0.0
    %1778 = vmatprep.subr.mxu0 0.0
    %1779 = vmatpush1.msra.mxu0 0.0
    %1780 = vmatprep.subr.mxu0 0.0
    %1781 = vmatpush1.msra.mxu0 0.0
    %1782 = vmatprep.subr.mxu0 0.0
    %1783 = vmatpush1.msra.mxu0 0.0
    %1784 = vmatprep.subr.mxu0 0.0
    %1785 = vmatpush1.msra.mxu0 0.0
    %1786 = vmatprep.subr.mxu0 0.0
    %1787 = vmatpush1.msra.mxu0 0.0
    %1788 = vmatprep.subr.mxu0 0.0
    %1789 = vmatpush1.msra.mxu0 0.0
    %1790 = vmatprep.subr.mxu0 0.0
    %1791 = vmatpush1.msra.mxu0 %v980
    %1792 = vmatprep.subr.mxu0 0.0
    %1793 = vmatpush1.msra.mxu0 %v979
    %1794 = vmatprep.subr.mxu0 0.0
    %1795 = vmatpush1.msra.mxu0 %v978
    %1796 = vmatprep.subr.mxu0 0.0
    %1797 = vmatpush1.msra.mxu0 %v977
    %1798 = vmatprep.subr.mxu0 0.0
    %1799 = vmatpush2.msra.mxu0 0.0
    %1800 = vmatprep.subr.mxu0 0.0
    %1801 = vmatpush2.msra.mxu0 0.0
    %1802 = vmatprep.subr.mxu0 0.0
    %1803 = vmatpush2.msra.mxu0 0.0
    %1804 = vmatprep.subr.mxu0 0.0
    %1805 = vmatpush2.msra.mxu0 0.0
    %1806 = vmatprep.subr.mxu0 0.0
    %1807 = vmatpush2.msra.mxu0 0.0
    %1808 = vmatprep.subr.mxu0 0.0
    %1809 = vmatpush2.msra.mxu0 0.0
    %1810 = vmatprep.subr.mxu0 0.0
    %1811 = vmatpush2.msra.mxu0 0.0
    %1812 = vmatprep.subr.mxu0 0.0
    %1813 = vmatpush2.msra.mxu0 0.0
    %1814 = vmatprep.subr.mxu0 0.0
    %1815 = vmatpush2.msra.mxu0 0.0
    %1816 = vmatprep.subr.mxu0 0.0
    %1817 = vmatpush2.msra.mxu0 0.0
    %1818 = vmatprep.subr.mxu0 0.0
    %1819 = vmatpush2.msra.mxu0 0.0
    %1820 = vmatprep.subr.mxu0 0.0
    %1821 = vmatpush2.msra.mxu0 0.0
    %1822 = vmatprep.subr.mxu0 0.0
    %1823 = vmatpush2.msra.mxu0 0.0
    %1824 = vmatprep.subr.mxu0 0.0
    %1825 = vmatpush2.msra.mxu0 0.0
    %1826 = vmatprep.subr.mxu0 0.0
    %1827 = vmatpush2.msra.mxu0 0.0
    %1828 = vmatprep.subr.mxu0 0.0
    %1829 = vmatpush2.msra.mxu0 0.0
    %1830 = vmatprep.mubr.f32.mxu0 0.0
    %1831 = vmatmul.mubr.f32.gmra.mxu0 %v1341
    %v1832 = vpop.f32.mrf.mxu0
    %v1833 = vadd.f32 %v1023, %v1832
    %v1834 = vpop.f32.mrf.mxu0
    %1835 = vdwg.mxu0
    %1836 = vmatprep.subr.mxu0 0.0
    %1837 = vmatpush1.msra.mxu0 0.0
    %1838 = vmatprep.subr.mxu0 0.0
    %1839 = vmatpush1.msra.mxu0 0.0
    %1840 = vmatprep.subr.mxu0 0.0
    %1841 = vmatpush1.msra.mxu0 0.0
    %1842 = vmatprep.subr.mxu0 0.0
    %1843 = vmatpush1.msra.mxu0 0.0
    %1844 = vmatprep.subr.mxu0 0.0
    %1845 = vmatpush1.msra.mxu0 0.0
    %1846 = vmatprep.subr.mxu0 0.0
    %1847 = vmatpush1.msra.mxu0 0.0
    %1848 = vmatprep.subr.mxu0 0.0
    %1849 = vmatpush1.msra.mxu0 0.0
    %1850 = vmatprep.subr.mxu0 0.0
    %1851 = vmatpush1.msra.mxu0 0.0
    %1852 = vmatprep.subr.mxu0 0.0
    %1853 = vmatpush1.msra.mxu0 0.0
    %1854 = vmatprep.subr.mxu0 0.0
    %1855 = vmatpush1.msra.mxu0 0.0
    %1856 = vmatprep.subr.mxu0 0.0
    %1857 = vmatpush1.msra.mxu0 0.0
    %1858 = vmatprep.subr.mxu0 0.0
    %1859 = vmatpush1.msra.mxu0 0.0
    %1860 = vmatprep.subr.mxu0 0.0
    %1861 = vmatpush1.msra.mxu0 %v996
    %1862 = vmatprep.subr.mxu0 0.0
    %1863 = vmatpush1.msra.mxu0 %v995
    %1864 = vmatprep.subr.mxu0 0.0
    %1865 = vmatpush1.msra.mxu0 %v994
    %1866 = vmatprep.subr.mxu0 0.0
    %1867 = vmatpush1.msra.mxu0 %v993
    %1868 = vmatprep.subr.mxu0 0.0
    %1869 = vmatpush2.msra.mxu0 0.0
    %1870 = vmatprep.subr.mxu0 0.0
    %1871 = vmatpush2.msra.mxu0 0.0
    %1872 = vmatprep.subr.mxu0 0.0
    %1873 = vmatpush2.msra.mxu0 0.0
    %1874 = vmatprep.subr.mxu0 0.0
    %1875 = vmatpush2.msra.mxu0 0.0
    %1876 = vmatprep.subr.mxu0 0.0
    %1877 = vmatpush2.msra.mxu0 0.0
    %1878 = vmatprep.subr.mxu0 0.0
    %1879 = vmatpush2.msra.mxu0 0.0
    %1880 = vmatprep.subr.mxu0 0.0
    %1881 = vmatpush2.msra.mxu0 0.0
    %1882 = vmatprep.subr.mxu0 0.0
    %1883 = vmatpush2.msra.mxu0 0.0
    %1884 = vmatprep.subr.mxu0 0.0
    %1885 = vmatpush2.msra.mxu0 0.0
    %1886 = vmatprep.subr.mxu0 0.0
    %1887 = vmatpush2.msra.mxu0 0.0
    %1888 = vmatprep.subr.mxu0 0.0
    %1889 = vmatpush2.msra.mxu0 0.0
    %1890 = vmatprep.subr.mxu0 0.0
    %1891 = vmatpush2.msra.mxu0 0.0
    %1892 = vmatprep.subr.mxu0 0.0
    %1893 = vmatpush2.msra.mxu0 0.0
    %1894 = vmatprep.subr.mxu0 0.0
    %1895 = vmatpush2.msra.mxu0 0.0
    %1896 = vmatprep.subr.mxu0 0.0
    %1897 = vmatpush2.msra.mxu0 0.0
    %1898 = vmatprep.subr.mxu0 0.0
    %1899 = vmatpush2.msra.mxu0 0.0
    %1900 = vmatprep.mubr.f32.mxu0 0.0
    %1901 = vmatmul.mubr.f32.gmra.mxu0 %v1027
    %v1902 = vpop.f32.mrf.mxu0
    %v1903 = vadd.f32 0.0, %v1902
    %v1904 = vpop.f32.mrf.mxu0
    %1905 = vdwg.mxu0
    %v1906 = vadd.f32 %v1833, %v1903
    %v1907 = vxor.u32 %v1483, 2147483648
    %v1908 = vmul.f32 %v1907, 1.442695
    %v1909 = vpow.pop %v1908
    %v1910 = vadd.f32 %v1909, 1.0
    %v1911 = vrcp.pop %v1910
    %v1912 = vmul.f32 1.0, %v1911
    %v1913 = vxor.u32 %v1624, 2147483648
    %v1914 = vmul.f32 %v1913, 1.442695
    %v1915 = vpow.pop %v1914
    %v1916 = vadd.f32 %v1915, 1.0
    %v1917 = vrcp.pop %v1916
    %v1918 = vmul.f32 1.0, %v1917
    %v1919 = vtanh.pop %v1765
    %v1920 = vxor.u32 %v1906, 2147483648
    %v1921 = vmul.f32 %v1920, 1.442695
    %v1922 = vpow.pop %v1921
    %v1923 = vadd.f32 %v1922, 1.0
    %v1924 = vrcp.pop %v1923
    %v1925 = vmul.f32 1.0, %v1924
    %v1926 = vmul.f32 %v1918, 0.0
    %v1927 = vmul.f32 %v1912, %v1919
    %v1928 = vadd.f32 %v1926, %v1927
    %v1929 = vtanh.pop %v1928
    %v1930 = vmul.f32 %v1925, %v1929
    %v1931 = vld [vmem:[#allocation2 + $0x8] sm:$0xff]
    %1932 = vmatprep.subr.mxu0 0.0
    %1933 = vmatpush1.msra.mxu0 0.0
    %1934 = vmatprep.subr.mxu0 0.0
    %1935 = vmatpush1.msra.mxu0 0.0
    %1936 = vmatprep.subr.mxu0 0.0
    %1937 = vmatpush1.msra.mxu0 0.0
    %1938 = vmatprep.subr.mxu0 0.0
    %1939 = vmatpush1.msra.mxu0 0.0
    %1940 = vmatprep.subr.mxu0 0.0
    %1941 = vmatpush1.msra.mxu0 0.0
    %1942 = vmatprep.subr.mxu0 0.0
    %1943 = vmatpush1.msra.mxu0 0.0
    %1944 = vmatprep.subr.mxu0 0.0
    %1945 = vmatpush1.msra.mxu0 0.0
    %1946 = vmatprep.subr.mxu0 0.0
    %1947 = vmatpush1.msra.mxu0 0.0
    %1948 = vmatprep.subr.mxu0 0.0
    %1949 = vmatpush1.msra.mxu0 0.0
    %1950 = vmatprep.subr.mxu0 0.0
    %1951 = vmatpush1.msra.mxu0 0.0
    %1952 = vmatprep.subr.mxu0 0.0
    %1953 = vmatpush1.msra.mxu0 0.0
    %1954 = vmatprep.subr.mxu0 0.0
    %1955 = vmatpush1.msra.mxu0 0.0
    %1956 = vmatprep.subr.mxu0 0.0
    %1957 = vmatpush1.msra.mxu0 %v425
    %1958 = vmatprep.subr.mxu0 0.0
    %1959 = vmatpush1.msra.mxu0 %v424
    %1960 = vmatprep.subr.mxu0 0.0
    %1961 = vmatpush1.msra.mxu0 %v423
    %1962 = vmatprep.subr.mxu0 0.0
    %1963 = vmatpush1.msra.mxu0 %v422
    %1964 = vmatprep.subr.mxu0 0.0
    %1965 = vmatpush2.msra.mxu0 0.0
    %1966 = vmatprep.subr.mxu0 0.0
    %1967 = vmatpush2.msra.mxu0 0.0
    %1968 = vmatprep.subr.mxu0 0.0
    %1969 = vmatpush2.msra.mxu0 0.0
    %1970 = vmatprep.subr.mxu0 0.0
    %1971 = vmatpush2.msra.mxu0 0.0
    %1972 = vmatprep.subr.mxu0 0.0
    %1973 = vmatpush2.msra.mxu0 0.0
    %1974 = vmatprep.subr.mxu0 0.0
    %1975 = vmatpush2.msra.mxu0 0.0
    %1976 = vmatprep.subr.mxu0 0.0
    %1977 = vmatpush2.msra.mxu0 0.0
    %1978 = vmatprep.subr.mxu0 0.0
    %1979 = vmatpush2.msra.mxu0 0.0
    %1980 = vmatprep.subr.mxu0 0.0
    %1981 = vmatpush2.msra.mxu0 0.0
    %1982 = vmatprep.subr.mxu0 0.0
    %1983 = vmatpush2.msra.mxu0 0.0
    %1984 = vmatprep.subr.mxu0 0.0
    %1985 = vmatpush2.msra.mxu0 0.0
    %1986 = vmatprep.subr.mxu0 0.0
    %1987 = vmatpush2.msra.mxu0 0.0
    %1988 = vmatprep.subr.mxu0 0.0
    %1989 = vmatpush2.msra.mxu0 0.0
    %1990 = vmatprep.subr.mxu0 0.0
    %1991 = vmatpush2.msra.mxu0 0.0
    %1992 = vmatprep.subr.mxu0 0.0
    %1993 = vmatpush2.msra.mxu0 0.0
    %1994 = vmatprep.subr.mxu0 0.0
    %1995 = vmatpush2.msra.mxu0 0.0
    %1996 = vmatprep.mubr.f32.mxu0 0.0
    %1997 = vmatmul.mubr.f32.gmra.mxu0 %v1341
    %v1998 = vpop.f32.mrf.mxu0
    %v1999 = vadd.f32 0.0, %v1998
    %v2000 = vpop.f32.mrf.mxu0
    %2001 = vdwg.mxu0
    %v2002 = vadd.f32 %v1931, %v1999
    %v2003 = vld [vmem:[#allocation3 + $0x8] sm:$0xff]
    %2004 = vmatprep.subr.mxu0 0.0
    %2005 = vmatpush1.msra.mxu0 0.0
    %2006 = vmatprep.subr.mxu0 0.0
    %2007 = vmatpush1.msra.mxu0 0.0
    %2008 = vmatprep.subr.mxu0 0.0
    %2009 = vmatpush1.msra.mxu0 0.0
    %2010 = vmatprep.subr.mxu0 0.0
    %2011 = vmatpush1.msra.mxu0 0.0
    %2012 = vmatprep.subr.mxu0 0.0
    %2013 = vmatpush1.msra.mxu0 0.0
    %2014 = vmatprep.subr.mxu0 0.0
    %2015 = vmatpush1.msra.mxu0 0.0
    %2016 = vmatprep.subr.mxu0 0.0
    %2017 = vmatpush1.msra.mxu0 0.0
    %2018 = vmatprep.subr.mxu0 0.0
    %2019 = vmatpush1.msra.mxu0 0.0
    %2020 = vmatprep.subr.mxu0 0.0
    %2021 = vmatpush1.msra.mxu0 0.0
    %2022 = vmatprep.subr.mxu0 0.0
    %2023 = vmatpush1.msra.mxu0 0.0
    %2024 = vmatprep.subr.mxu0 0.0
    %2025 = vmatpush1.msra.mxu0 0.0
    %2026 = vmatprep.subr.mxu0 0.0
    %2027 = vmatpush1.msra.mxu0 0.0
    %2028 = vmatprep.subr.mxu0 0.0
    %2029 = vmatpush1.msra.mxu0 %v429
    %2030 = vmatprep.subr.mxu0 0.0
    %2031 = vmatpush1.msra.mxu0 %v428
    %2032 = vmatprep.subr.mxu0 0.0
    %2033 = vmatpush1.msra.mxu0 %v427
    %2034 = vmatprep.subr.mxu0 0.0
    %2035 = vmatpush1.msra.mxu0 %v426
    %2036 = vmatprep.subr.mxu0 0.0
    %2037 = vmatpush2.msra.mxu0 0.0
    %2038 = vmatprep.subr.mxu0 0.0
    %2039 = vmatpush2.msra.mxu0 0.0
    %2040 = vmatprep.subr.mxu0 0.0
    %2041 = vmatpush2.msra.mxu0 0.0
    %2042 = vmatprep.subr.mxu0 0.0
    %2043 = vmatpush2.msra.mxu0 0.0
    %2044 = vmatprep.subr.mxu0 0.0
    %2045 = vmatpush2.msra.mxu0 0.0
    %2046 = vmatprep.subr.mxu0 0.0
    %2047 = vmatpush2.msra.mxu0 0.0
    %2048 = vmatprep.subr.mxu0 0.0
    %2049 = vmatpush2.msra.mxu0 0.0
    %2050 = vmatprep.subr.mxu0 0.0
    %2051 = vmatpush2.msra.mxu0 0.0
    %2052 = vmatprep.subr.mxu0 0.0
    %2053 = vmatpush2.msra.mxu0 0.0
    %2054 = vmatprep.subr.mxu0 0.0
    %2055 = vmatpush2.msra.mxu0 0.0
    %2056 = vmatprep.subr.mxu0 0.0
    %2057 = vmatpush2.msra.mxu0 0.0
    %2058 = vmatprep.subr.mxu0 0.0
    %2059 = vmatpush2.msra.mxu0 0.0
    %2060 = vmatprep.subr.mxu0 0.0
    %2061 = vmatpush2.msra.mxu0 0.0
    %2062 = vmatprep.subr.mxu0 0.0
    %2063 = vmatpush2.msra.mxu0 0.0
    %2064 = vmatprep.subr.mxu0 0.0
    %2065 = vmatpush2.msra.mxu0 0.0
    %2066 = vmatprep.subr.mxu0 0.0
    %2067 = vmatpush2.msra.mxu0 0.0
    %2068 = vmatprep.mubr.f32.mxu0 0.0
    %2069 = vmatmul.mubr.f32.gmra.mxu0 %v1341
    %v2070 = vpop.f32.mrf.mxu0
    %v2071 = vadd.f32 0.0, %v2070
    %v2072 = vpop.f32.mrf.mxu0
    %2073 = vdwg.mxu0
    %v2074 = vadd.f32 %v2003, %v2071
    %v2075 = vld [vmem:[#allocation4 + $0x8] sm:$0xff]
    %2076 = vmatprep.subr.mxu0 0.0
    %2077 = vmatpush1.msra.mxu0 0.0
    %2078 = vmatprep.subr.mxu0 0.0
    %2079 = vmatpush1.msra.mxu0 0.0
    %2080 = vmatprep.subr.mxu0 0.0
    %2081 = vmatpush1.msra.mxu0 0.0
    %2082 = vmatprep.subr.mxu0 0.0
    %2083 = vmatpush1.msra.mxu0 0.0
    %2084 = vmatprep.subr.mxu0 0.0
    %2085 = vmatpush1.msra.mxu0 0.0
    %2086 = vmatprep.subr.mxu0 0.0
    %2087 = vmatpush1.msra.mxu0 0.0
    %2088 = vmatprep.subr.mxu0 0.0
    %2089 = vmatpush1.msra.mxu0 0.0
    %2090 = vmatprep.subr.mxu0 0.0
    %2091 = vmatpush1.msra.mxu0 0.0
    %2092 = vmatprep.subr.mxu0 0.0
    %2093 = vmatpush1.msra.mxu0 0.0
    %2094 = vmatprep.subr.mxu0 0.0
    %2095 = vmatpush1.msra.mxu0 0.0
    %2096 = vmatprep.subr.mxu0 0.0
    %2097 = vmatpush1.msra.mxu0 0.0
    %2098 = vmatprep.subr.mxu0 0.0
    %2099 = vmatpush1.msra.mxu0 0.0
    %2100 = vmatprep.subr.mxu0 0.0
    %2101 = vmatpush1.msra.mxu0 %v433
    %2102 = vmatprep.subr.mxu0 0.0
    %2103 = vmatpush1.msra.mxu0 %v432
    %2104 = vmatprep.subr.mxu0 0.0
    %2105 = vmatpush1.msra.mxu0 %v431
    %2106 = vmatprep.subr.mxu0 0.0
    %2107 = vmatpush1.msra.mxu0 %v430
    %2108 = vmatprep.subr.mxu0 0.0
    %2109 = vmatpush2.msra.mxu0 0.0
    %2110 = vmatprep.subr.mxu0 0.0
    %2111 = vmatpush2.msra.mxu0 0.0
    %2112 = vmatprep.subr.mxu0 0.0
    %2113 = vmatpush2.msra.mxu0 0.0
    %2114 = vmatprep.subr.mxu0 0.0
    %2115 = vmatpush2.msra.mxu0 0.0
    %2116 = vmatprep.subr.mxu0 0.0
    %2117 = vmatpush2.msra.mxu0 0.0
    %2118 = vmatprep.subr.mxu0 0.0
    %2119 = vmatpush2.msra.mxu0 0.0
    %2120 = vmatprep.subr.mxu0 0.0
    %2121 = vmatpush2.msra.mxu0 0.0
    %2122 = vmatprep.subr.mxu0 0.0
    %2123 = vmatpush2.msra.mxu0 0.0
    %2124 = vmatprep.subr.mxu0 0.0
    %2125 = vmatpush2.msra.mxu0 0.0
    %2126 = vmatprep.subr.mxu0 0.0
    %2127 = vmatpush2.msra.mxu0 0.0
    %2128 = vmatprep.subr.mxu0 0.0
    %2129 = vmatpush2.msra.mxu0 0.0
    %2130 = vmatprep.subr.mxu0 0.0
    %2131 = vmatpush2.msra.mxu0 0.0
    %2132 = vmatprep.subr.mxu0 0.0
    %2133 = vmatpush2.msra.mxu0 0.0
    %2134 = vmatprep.subr.mxu0 0.0
    %2135 = vmatpush2.msra.mxu0 0.0
    %2136 = vmatprep.subr.mxu0 0.0
    %2137 = vmatpush2.msra.mxu0 0.0
    %2138 = vmatprep.subr.mxu0 0.0
    %2139 = vmatpush2.msra.mxu0 0.0
    %2140 = vmatprep.mubr.f32.mxu0 0.0
    %2141 = vmatmul.mubr.f32.gmra.mxu0 %v1341
    %v2142 = vpop.f32.mrf.mxu0
    %v2143 = vadd.f32 0.0, %v2142
    %v2144 = vpop.f32.mrf.mxu0
    %2145 = vdwg.mxu0
    %v2146 = vadd.f32 %v2075, %v2143
    %v2147 = vld [vmem:[#allocation5 + $0x8] sm:$0xff]
    %2148 = vmatprep.subr.mxu0 0.0
    %2149 = vmatpush1.msra.mxu0 0.0
    %2150 = vmatprep.subr.mxu0 0.0
    %2151 = vmatpush1.msra.mxu0 0.0
    %2152 = vmatprep.subr.mxu0 0.0
    %2153 = vmatpush1.msra.mxu0 0.0
    %2154 = vmatprep.subr.mxu0 0.0
    %2155 = vmatpush1.msra.mxu0 0.0
    %2156 = vmatprep.subr.mxu0 0.0
    %2157 = vmatpush1.msra.mxu0 0.0
    %2158 = vmatprep.subr.mxu0 0.0
    %2159 = vmatpush1.msra.mxu0 0.0
    %2160 = vmatprep.subr.mxu0 0.0
    %2161 = vmatpush1.msra.mxu0 0.0
    %2162 = vmatprep.subr.mxu0 0.0
    %2163 = vmatpush1.msra.mxu0 0.0
    %2164 = vmatprep.subr.mxu0 0.0
    %2165 = vmatpush1.msra.mxu0 0.0
    %2166 = vmatprep.subr.mxu0 0.0
    %2167 = vmatpush1.msra.mxu0 0.0
    %2168 = vmatprep.subr.mxu0 0.0
    %2169 = vmatpush1.msra.mxu0 0.0
    %2170 = vmatprep.subr.mxu0 0.0
    %2171 = vmatpush1.msra.mxu0 0.0
    %2172 = vmatprep.subr.mxu0 0.0
    %2173 = vmatpush1.msra.mxu0 %v437
    %2174 = vmatprep.subr.mxu0 0.0
    %2175 = vmatpush1.msra.mxu0 %v436
    %2176 = vmatprep.subr.mxu0 0.0
    %2177 = vmatpush1.msra.mxu0 %v435
    %2178 = vmatprep.subr.mxu0 0.0
    %2179 = vmatpush1.msra.mxu0 %v434
    %2180 = vmatprep.subr.mxu0 0.0
    %2181 = vmatpush2.msra.mxu0 0.0
    %2182 = vmatprep.subr.mxu0 0.0
    %2183 = vmatpush2.msra.mxu0 0.0
    %2184 = vmatprep.subr.mxu0 0.0
    %2185 = vmatpush2.msra.mxu0 0.0
    %2186 = vmatprep.subr.mxu0 0.0
    %2187 = vmatpush2.msra.mxu0 0.0
    %2188 = vmatprep.subr.mxu0 0.0
    %2189 = vmatpush2.msra.mxu0 0.0
    %2190 = vmatprep.subr.mxu0 0.0
    %2191 = vmatpush2.msra.mxu0 0.0
    %2192 = vmatprep.subr.mxu0 0.0
    %2193 = vmatpush2.msra.mxu0 0.0
    %2194 = vmatprep.subr.mxu0 0.0
    %2195 = vmatpush2.msra.mxu0 0.0
    %2196 = vmatprep.subr.mxu0 0.0
    %2197 = vmatpush2.msra.mxu0 0.0
    %2198 = vmatprep.subr.mxu0 0.0
    %2199 = vmatpush2.msra.mxu0 0.0
    %2200 = vmatprep.subr.mxu0 0.0
    %2201 = vmatpush2.msra.mxu0 0.0
    %2202 = vmatprep.subr.mxu0 0.0
    %2203 = vmatpush2.msra.mxu0 0.0
    %2204 = vmatprep.subr.mxu0 0.0
    %2205 = vmatpush2.msra.mxu0 0.0
    %2206 = vmatprep.subr.mxu0 0.0
    %2207 = vmatpush2.msra.mxu0 0.0
    %2208 = vmatprep.subr.mxu0 0.0
    %2209 = vmatpush2.msra.mxu0 0.0
    %2210 = vmatprep.subr.mxu0 0.0
    %2211 = vmatpush2.msra.mxu0 0.0
    %2212 = vmatprep.mubr.f32.mxu0 0.0
    %2213 = vmatmul.mubr.f32.gmra.mxu0 %v1341
    %v2214 = vpop.f32.mrf.mxu0
    %v2215 = vadd.f32 0.0, %v2214
    %v2216 = vpop.f32.mrf.mxu0
    %2217 = vdwg.mxu0
    %v2218 = vadd.f32 %v2147, %v2215
    %v2219 = vxor.u32 %v2002, 2147483648
    %v2220 = vmul.f32 %v2219, 1.442695
    %v2221 = vpow.pop %v2220
    %v2222 = vadd.f32 %v2221, 1.0
    %v2223 = vrcp.pop %v2222
    %v2224 = vmul.f32 1.0, %v2223
    %v2225 = vxor.u32 %v2074, 2147483648
    %v2226 = vmul.f32 %v2225, 1.442695
    %v2227 = vpow.pop %v2226
    %v2228 = vadd.f32 %v2227, 1.0
    %v2229 = vrcp.pop %v2228
    %v2230 = vmul.f32 1.0, %v2229
    %v2231 = vtanh.pop %v2146
    %v2232 = vxor.u32 %v2218, 2147483648
    %v2233 = vmul.f32 %v2232, 1.442695
    %v2234 = vpow.pop %v2233
    %v2235 = vadd.f32 %v2234, 1.0
    %v2236 = vrcp.pop %v2235
    %v2237 = vmul.f32 1.0, %v2236
    %v2238 = vmul.f32 %v2230, %v1337
    %v2239 = vmul.f32 %v2224, %v2231
    %v2240 = vadd.f32 %v2238, %v2239
    %v2241 = vtanh.pop %v2240
    %v2242 = vmul.f32 %v2237, %v2241
    %v2244 = vsel %vm590, %v2242, 0
    %2246 = vmatprep.subr.mxu0 0.0
    %2247 = vmatpush1.msra.mxu0 0.0
    %2248 = vmatprep.subr.mxu0 0.0
    %2249 = vmatpush1.msra.mxu0 0.0
    %2250 = vmatprep.subr.mxu0 0.0
    %2251 = vmatpush1.msra.mxu0 0.0
    %2252 = vmatprep.subr.mxu0 0.0
    %2253 = vmatpush1.msra.mxu0 0.0
    %2254 = vmatprep.subr.mxu0 0.0
    %2255 = vmatpush1.msra.mxu0 0.0
    %2256 = vmatprep.subr.mxu0 0.0
    %2257 = vmatpush1.msra.mxu0 0.0
    %2258 = vmatprep.subr.mxu0 0.0
    %2259 = vmatpush1.msra.mxu0 0.0
    %2260 = vmatprep.subr.mxu0 0.0
    %2261 = vmatpush1.msra.mxu0 0.0
    %2262 = vmatprep.subr.mxu0 0.0
    %2263 = vmatpush1.msra.mxu0 0.0
    %2264 = vmatprep.subr.mxu0 0.0
    %2265 = vmatpush1.msra.mxu0 0.0
    %2266 = vmatprep.subr.mxu0 0.0
    %2267 = vmatpush1.msra.mxu0 0.0
    %2268 = vmatprep.subr.mxu0 0.0
    %2269 = vmatpush1.msra.mxu0 0.0
    %2270 = vmatprep.subr.mxu0 0.0
    %2271 = vmatpush1.msra.mxu0 %v968
    %2272 = vmatprep.subr.mxu0 0.0
    %2273 = vmatpush1.msra.mxu0 %v967
    %2274 = vmatprep.subr.mxu0 0.0
    %2275 = vmatpush1.msra.mxu0 %v966
    %2276 = vmatprep.subr.mxu0 0.0
    %2277 = vmatpush1.msra.mxu0 %v965
    %2278 = vmatprep.subr.mxu0 0.0
    %2279 = vmatpush2.msra.mxu0 0.0
    %2280 = vmatprep.subr.mxu0 0.0
    %2281 = vmatpush2.msra.mxu0 0.0
    %2282 = vmatprep.subr.mxu0 0.0
    %2283 = vmatpush2.msra.mxu0 0.0
    %2284 = vmatprep.subr.mxu0 0.0
    %2285 = vmatpush2.msra.mxu0 0.0
    %2286 = vmatprep.subr.mxu0 0.0
    %2287 = vmatpush2.msra.mxu0 0.0
    %2288 = vmatprep.subr.mxu0 0.0
    %2289 = vmatpush2.msra.mxu0 0.0
    %2290 = vmatprep.subr.mxu0 0.0
    %2291 = vmatpush2.msra.mxu0 0.0
    %2292 = vmatprep.subr.mxu0 0.0
    %2293 = vmatpush2.msra.mxu0 0.0
    %2294 = vmatprep.subr.mxu0 0.0
    %2295 = vmatpush2.msra.mxu0 0.0
    %2296 = vmatprep.subr.mxu0 0.0
    %2297 = vmatpush2.msra.mxu0 0.0
    %2298 = vmatprep.subr.mxu0 0.0
    %2299 = vmatpush2.msra.mxu0 0.0
    %2300 = vmatprep.subr.mxu0 0.0
    %2301 = vmatpush2.msra.mxu0 0.0
    %2302 = vmatprep.subr.mxu0 0.0
    %2303 = vmatpush2.msra.mxu0 0.0
    %2304 = vmatprep.subr.mxu0 0.0
    %2305 = vmatpush2.msra.mxu0 0.0
    %2306 = vmatprep.subr.mxu0 0.0
    %2307 = vmatpush2.msra.mxu0 0.0
    %2308 = vmatprep.subr.mxu0 0.0
    %2309 = vmatpush2.msra.mxu0 0.0
    %2310 = vmatprep.mubr.f32.mxu0 0.0
    %2311 = vmatmul.mubr.f32.gmra.mxu0 %v2244
    %v2312 = vpop.f32.mrf.mxu0
    %v2313 = vadd.f32 %v1005, %v2312
    %v2314 = vpop.f32.mrf.mxu0
    %2315 = vdwg.mxu0
    %v2317 = vsel %vm590, %v1930, 0
    %2319 = vmatprep.subr.mxu0 0.0
    %2320 = vmatpush1.msra.mxu0 0.0
    %2321 = vmatprep.subr.mxu0 0.0
    %2322 = vmatpush1.msra.mxu0 0.0
    %2323 = vmatprep.subr.mxu0 0.0
    %2324 = vmatpush1.msra.mxu0 0.0
    %2325 = vmatprep.subr.mxu0 0.0
    %2326 = vmatpush1.msra.mxu0 0.0
    %2327 = vmatprep.subr.mxu0 0.0
    %2328 = vmatpush1.msra.mxu0 0.0
    %2329 = vmatprep.subr.mxu0 0.0
    %2330 = vmatpush1.msra.mxu0 0.0
    %2331 = vmatprep.subr.mxu0 0.0
    %2332 = vmatpush1.msra.mxu0 0.0
    %2333 = vmatprep.subr.mxu0 0.0
    %2334 = vmatpush1.msra.mxu0 0.0
    %2335 = vmatprep.subr.mxu0 0.0
    %2336 = vmatpush1.msra.mxu0 0.0
    %2337 = vmatprep.subr.mxu0 0.0
    %2338 = vmatpush1.msra.mxu0 0.0
    %2339 = vmatprep.subr.mxu0 0.0
    %2340 = vmatpush1.msra.mxu0 0.0
    %2341 = vmatprep.subr.mxu0 0.0
    %2342 = vmatpush1.msra.mxu0 0.0
    %2343 = vmatprep.subr.mxu0 0.0
    %2344 = vmatpush1.msra.mxu0 %v984
    %2345 = vmatprep.subr.mxu0 0.0
    %2346 = vmatpush1.msra.mxu0 %v983
    %2347 = vmatprep.subr.mxu0 0.0
    %2348 = vmatpush1.msra.mxu0 %v982
    %2349 = vmatprep.subr.mxu0 0.0
    %2350 = vmatpush1.msra.mxu0 %v981
    %2351 = vmatprep.subr.mxu0 0.0
    %2352 = vmatpush2.msra.mxu0 0.0
    %2353 = vmatprep.subr.mxu0 0.0
    %2354 = vmatpush2.msra.mxu0 0.0
    %2355 = vmatprep.subr.mxu0 0.0
    %2356 = vmatpush2.msra.mxu0 0.0
    %2357 = vmatprep.subr.mxu0 0.0
    %2358 = vmatpush2.msra.mxu0 0.0
    %2359 = vmatprep.subr.mxu0 0.0
    %2360 = vmatpush2.msra.mxu0 0.0
    %2361 = vmatprep.subr.mxu0 0.0
    %2362 = vmatpush2.msra.mxu0 0.0
    %2363 = vmatprep.subr.mxu0 0.0
    %2364 = vmatpush2.msra.mxu0 0.0
    %2365 = vmatprep.subr.mxu0 0.0
    %2366 = vmatpush2.msra.mxu0 0.0
    %2367 = vmatprep.subr.mxu0 0.0
    %2368 = vmatpush2.msra.mxu0 0.0
    %2369 = vmatprep.subr.mxu0 0.0
    %2370 = vmatpush2.msra.mxu0 0.0
    %2371 = vmatprep.subr.mxu0 0.0
    %2372 = vmatpush2.msra.mxu0 0.0
    %2373 = vmatprep.subr.mxu0 0.0
    %2374 = vmatpush2.msra.mxu0 0.0
    %2375 = vmatprep.subr.mxu0 0.0
    %2376 = vmatpush2.msra.mxu0 0.0
    %2377 = vmatprep.subr.mxu0 0.0
    %2378 = vmatpush2.msra.mxu0 0.0
    %2379 = vmatprep.subr.mxu0 0.0
    %2380 = vmatpush2.msra.mxu0 0.0
    %2381 = vmatprep.subr.mxu0 0.0
    %2382 = vmatpush2.msra.mxu0 0.0
    %2383 = vmatprep.mubr.f32.mxu0 0.0
    %2384 = vmatmul.mubr.f32.gmra.mxu0 %v2317
    %v2385 = vpop.f32.mrf.mxu0
    %v2386 = vadd.f32 0.0, %v2385
    %v2387 = vpop.f32.mrf.mxu0
    %2388 = vdwg.mxu0
    %v2389 = vadd.f32 %v2313, %v2386
    %2390 = vmatprep.subr.mxu0 0.0
    %2391 = vmatpush1.msra.mxu0 0.0
    %2392 = vmatprep.subr.mxu0 0.0
    %2393 = vmatpush1.msra.mxu0 0.0
    %2394 = vmatprep.subr.mxu0 0.0
    %2395 = vmatpush1.msra.mxu0 0.0
    %2396 = vmatprep.subr.mxu0 0.0
    %2397 = vmatpush1.msra.mxu0 0.0
    %2398 = vmatprep.subr.mxu0 0.0
    %2399 = vmatpush1.msra.mxu0 0.0
    %2400 = vmatprep.subr.mxu0 0.0
    %2401 = vmatpush1.msra.mxu0 0.0
    %2402 = vmatprep.subr.mxu0 0.0
    %2403 = vmatpush1.msra.mxu0 0.0
    %2404 = vmatprep.subr.mxu0 0.0
    %2405 = vmatpush1.msra.mxu0 0.0
    %2406 = vmatprep.subr.mxu0 0.0
    %2407 = vmatpush1.msra.mxu0 0.0
    %2408 = vmatprep.subr.mxu0 0.0
    %2409 = vmatpush1.msra.mxu0 0.0
    %2410 = vmatprep.subr.mxu0 0.0
    %2411 = vmatpush1.msra.mxu0 0.0
    %2412 = vmatprep.subr.mxu0 0.0
    %2413 = vmatpush1.msra.mxu0 0.0
    %2414 = vmatprep.subr.mxu0 0.0
    %2415 = vmatpush1.msra.mxu0 %v972
    %2416 = vmatprep.subr.mxu0 0.0
    %2417 = vmatpush1.msra.mxu0 %v971
    %2418 = vmatprep.subr.mxu0 0.0
    %2419 = vmatpush1.msra.mxu0 %v970
    %2420 = vmatprep.subr.mxu0 0.0
    %2421 = vmatpush1.msra.mxu0 %v969
    %2422 = vmatprep.subr.mxu0 0.0
    %2423 = vmatpush2.msra.mxu0 0.0
    %2424 = vmatprep.subr.mxu0 0.0
    %2425 = vmatpush2.msra.mxu0 0.0
    %2426 = vmatprep.subr.mxu0 0.0
    %2427 = vmatpush2.msra.mxu0 0.0
    %2428 = vmatprep.subr.mxu0 0.0
    %2429 = vmatpush2.msra.mxu0 0.0
    %2430 = vmatprep.subr.mxu0 0.0
    %2431 = vmatpush2.msra.mxu0 0.0
    %2432 = vmatprep.subr.mxu0 0.0
    %2433 = vmatpush2.msra.mxu0 0.0
    %2434 = vmatprep.subr.mxu0 0.0
    %2435 = vmatpush2.msra.mxu0 0.0
    %2436 = vmatprep.subr.mxu0 0.0
    %2437 = vmatpush2.msra.mxu0 0.0
    %2438 = vmatprep.subr.mxu0 0.0
    %2439 = vmatpush2.msra.mxu0 0.0
    %2440 = vmatprep.subr.mxu0 0.0
    %2441 = vmatpush2.msra.mxu0 0.0
    %2442 = vmatprep.subr.mxu0 0.0
    %2443 = vmatpush2.msra.mxu0 0.0
    %2444 = vmatprep.subr.mxu0 0.0
    %2445 = vmatpush2.msra.mxu0 0.0
    %2446 = vmatprep.subr.mxu0 0.0
    %2447 = vmatpush2.msra.mxu0 0.0
    %2448 = vmatprep.subr.mxu0 0.0
    %2449 = vmatpush2.msra.mxu0 0.0
    %2450 = vmatprep.subr.mxu0 0.0
    %2451 = vmatpush2.msra.mxu0 0.0
    %2452 = vmatprep.subr.mxu0 0.0
    %2453 = vmatpush2.msra.mxu0 0.0
    %2454 = vmatprep.mubr.f32.mxu0 0.0
    %2455 = vmatmul.mubr.f32.gmra.mxu0 %v2244
    %v2456 = vpop.f32.mrf.mxu0
    %v2457 = vadd.f32 %v1011, %v2456
    %v2458 = vpop.f32.mrf.mxu0
    %2459 = vdwg.mxu0
    %2460 = vmatprep.subr.mxu0 0.0
    %2461 = vmatpush1.msra.mxu0 0.0
    %2462 = vmatprep.subr.mxu0 0.0
    %2463 = vmatpush1.msra.mxu0 0.0
    %2464 = vmatprep.subr.mxu0 0.0
    %2465 = vmatpush1.msra.mxu0 0.0
    %2466 = vmatprep.subr.mxu0 0.0
    %2467 = vmatpush1.msra.mxu0 0.0
    %2468 = vmatprep.subr.mxu0 0.0
    %2469 = vmatpush1.msra.mxu0 0.0
    %2470 = vmatprep.subr.mxu0 0.0
    %2471 = vmatpush1.msra.mxu0 0.0
    %2472 = vmatprep.subr.mxu0 0.0
    %2473 = vmatpush1.msra.mxu0 0.0
    %2474 = vmatprep.subr.mxu0 0.0
    %2475 = vmatpush1.msra.mxu0 0.0
    %2476 = vmatprep.subr.mxu0 0.0
    %2477 = vmatpush1.msra.mxu0 0.0
    %2478 = vmatprep.subr.mxu0 0.0
    %2479 = vmatpush1.msra.mxu0 0.0
    %2480 = vmatprep.subr.mxu0 0.0
    %2481 = vmatpush1.msra.mxu0 0.0
    %2482 = vmatprep.subr.mxu0 0.0
    %2483 = vmatpush1.msra.mxu0 0.0
    %2484 = vmatprep.subr.mxu0 0.0
    %2485 = vmatpush1.msra.mxu0 %v988
    %2486 = vmatprep.subr.mxu0 0.0
    %2487 = vmatpush1.msra.mxu0 %v987
    %2488 = vmatprep.subr.mxu0 0.0
    %2489 = vmatpush1.msra.mxu0 %v986
    %2490 = vmatprep.subr.mxu0 0.0
    %2491 = vmatpush1.msra.mxu0 %v985
    %2492 = vmatprep.subr.mxu0 0.0
    %2493 = vmatpush2.msra.mxu0 0.0
    %2494 = vmatprep.subr.mxu0 0.0
    %2495 = vmatpush2.msra.mxu0 0.0
    %2496 = vmatprep.subr.mxu0 0.0
    %2497 = vmatpush2.msra.mxu0 0.0
    %2498 = vmatprep.subr.mxu0 0.0
    %2499 = vmatpush2.msra.mxu0 0.0
    %2500 = vmatprep.subr.mxu0 0.0
    %2501 = vmatpush2.msra.mxu0 0.0
    %2502 = vmatprep.subr.mxu0 0.0
    %2503 = vmatpush2.msra.mxu0 0.0
    %2504 = vmatprep.subr.mxu0 0.0
    %2505 = vmatpush2.msra.mxu0 0.0
    %2506 = vmatprep.subr.mxu0 0.0
    %2507 = vmatpush2.msra.mxu0 0.0
    %2508 = vmatprep.subr.mxu0 0.0
    %2509 = vmatpush2.msra.mxu0 0.0
    %2510 = vmatprep.subr.mxu0 0.0
    %2511 = vmatpush2.msra.mxu0 0.0
    %2512 = vmatprep.subr.mxu0 0.0
    %2513 = vmatpush2.msra.mxu0 0.0
    %2514 = vmatprep.subr.mxu0 0.0
    %2515 = vmatpush2.msra.mxu0 0.0
    %2516 = vmatprep.subr.mxu0 0.0
    %2517 = vmatpush2.msra.mxu0 0.0
    %2518 = vmatprep.subr.mxu0 0.0
    %2519 = vmatpush2.msra.mxu0 0.0
    %2520 = vmatprep.subr.mxu0 0.0
    %2521 = vmatpush2.msra.mxu0 0.0
    %2522 = vmatprep.subr.mxu0 0.0
    %2523 = vmatpush2.msra.mxu0 0.0
    %2524 = vmatprep.mubr.f32.mxu0 0.0
    %2525 = vmatmul.mubr.f32.gmra.mxu0 %v2317
    %v2526 = vpop.f32.mrf.mxu0
    %v2527 = vadd.f32 0.0, %v2526
    %v2528 = vpop.f32.mrf.mxu0
    %2529 = vdwg.mxu0
    %v2530 = vadd.f32 %v2457, %v2527
    %2531 = vmatprep.subr.mxu0 0.0
    %2532 = vmatpush1.msra.mxu0 0.0
    %2533 = vmatprep.subr.mxu0 0.0
    %2534 = vmatpush1.msra.mxu0 0.0
    %2535 = vmatprep.subr.mxu0 0.0
    %2536 = vmatpush1.msra.mxu0 0.0
    %2537 = vmatprep.subr.mxu0 0.0
    %2538 = vmatpush1.msra.mxu0 0.0
    %2539 = vmatprep.subr.mxu0 0.0
    %2540 = vmatpush1.msra.mxu0 0.0
    %2541 = vmatprep.subr.mxu0 0.0
    %2542 = vmatpush1.msra.mxu0 0.0
    %2543 = vmatprep.subr.mxu0 0.0
    %2544 = vmatpush1.msra.mxu0 0.0
    %2545 = vmatprep.subr.mxu0 0.0
    %2546 = vmatpush1.msra.mxu0 0.0
    %2547 = vmatprep.subr.mxu0 0.0
    %2548 = vmatpush1.msra.mxu0 0.0
    %2549 = vmatprep.subr.mxu0 0.0
    %2550 = vmatpush1.msra.mxu0 0.0
    %2551 = vmatprep.subr.mxu0 0.0
    %2552 = vmatpush1.msra.mxu0 0.0
    %2553 = vmatprep.subr.mxu0 0.0
    %2554 = vmatpush1.msra.mxu0 0.0
    %2555 = vmatprep.subr.mxu0 0.0
    %2556 = vmatpush1.msra.mxu0 %v976
    %2557 = vmatprep.subr.mxu0 0.0
    %2558 = vmatpush1.msra.mxu0 %v975
    %2559 = vmatprep.subr.mxu0 0.0
    %2560 = vmatpush1.msra.mxu0 %v974
    %2561 = vmatprep.subr.mxu0 0.0
    %2562 = vmatpush1.msra.mxu0 %v973
    %2563 = vmatprep.subr.mxu0 0.0
    %2564 = vmatpush2.msra.mxu0 0.0
    %2565 = vmatprep.subr.mxu0 0.0
    %2566 = vmatpush2.msra.mxu0 0.0
    %2567 = vmatprep.subr.mxu0 0.0
    %2568 = vmatpush2.msra.mxu0 0.0
    %2569 = vmatprep.subr.mxu0 0.0
    %2570 = vmatpush2.msra.mxu0 0.0
    %2571 = vmatprep.subr.mxu0 0.0
    %2572 = vmatpush2.msra.mxu0 0.0
    %2573 = vmatprep.subr.mxu0 0.0
    %2574 = vmatpush2.msra.mxu0 0.0
    %2575 = vmatprep.subr.mxu0 0.0
    %2576 = vmatpush2.msra.mxu0 0.0
    %2577 = vmatprep.subr.mxu0 0.0
    %2578 = vmatpush2.msra.mxu0 0.0
    %2579 = vmatprep.subr.mxu0 0.0
    %2580 = vmatpush2.msra.mxu0 0.0
    %2581 = vmatprep.subr.mxu0 0.0
    %2582 = vmatpush2.msra.mxu0 0.0
    %2583 = vmatprep.subr.mxu0 0.0
    %2584 = vmatpush2.msra.mxu0 0.0
    %2585 = vmatprep.subr.mxu0 0.0
    %2586 = vmatpush2.msra.mxu0 0.0
    %2587 = vmatprep.subr.mxu0 0.0
    %2588 = vmatpush2.msra.mxu0 0.0
    %2589 = vmatprep.subr.mxu0 0.0
    %2590 = vmatpush2.msra.mxu0 0.0
    %2591 = vmatprep.subr.mxu0 0.0
    %2592 = vmatpush2.msra.mxu0 0.0
    %2593 = vmatprep.subr.mxu0 0.0
    %2594 = vmatpush2.msra.mxu0 0.0
    %2595 = vmatprep.mubr.f32.mxu0 0.0
    %2596 = vmatmul.mubr.f32.gmra.mxu0 %v2244
    %v2597 = vpop.f32.mrf.mxu0
    %v2598 = vadd.f32 %v1017, %v2597
    %v2599 = vpop.f32.mrf.mxu0
    %2600 = vdwg.mxu0
    %2601 = vmatprep.subr.mxu0 0.0
    %2602 = vmatpush1.msra.mxu0 0.0
    %2603 = vmatprep.subr.mxu0 0.0
    %2604 = vmatpush1.msra.mxu0 0.0
    %2605 = vmatprep.subr.mxu0 0.0
    %2606 = vmatpush1.msra.mxu0 0.0
    %2607 = vmatprep.subr.mxu0 0.0
    %2608 = vmatpush1.msra.mxu0 0.0
    %2609 = vmatprep.subr.mxu0 0.0
    %2610 = vmatpush1.msra.mxu0 0.0
    %2611 = vmatprep.subr.mxu0 0.0
    %2612 = vmatpush1.msra.mxu0 0.0
    %2613 = vmatprep.subr.mxu0 0.0
    %2614 = vmatpush1.msra.mxu0 0.0
    %2615 = vmatprep.subr.mxu0 0.0
    %2616 = vmatpush1.msra.mxu0 0.0
    %2617 = vmatprep.subr.mxu0 0.0
    %2618 = vmatpush1.msra.mxu0 0.0
    %2619 = vmatprep.subr.mxu0 0.0
    %2620 = vmatpush1.msra.mxu0 0.0
    %2621 = vmatprep.subr.mxu0 0.0
    %2622 = vmatpush1.msra.mxu0 0.0
    %2623 = vmatprep.subr.mxu0 0.0
    %2624 = vmatpush1.msra.mxu0 0.0
    %2625 = vmatprep.subr.mxu0 0.0
    %2626 = vmatpush1.msra.mxu0 %v992
    %2627 = vmatprep.subr.mxu0 0.0
    %2628 = vmatpush1.msra.mxu0 %v991
    %2629 = vmatprep.subr.mxu0 0.0
    %2630 = vmatpush1.msra.mxu0 %v990
    %2631 = vmatprep.subr.mxu0 0.0
    %2632 = vmatpush1.msra.mxu0 %v989
    %2633 = vmatprep.subr.mxu0 0.0
    %2634 = vmatpush2.msra.mxu0 0.0
    %2635 = vmatprep.subr.mxu0 0.0
    %2636 = vmatpush2.msra.mxu0 0.0
    %2637 = vmatprep.subr.mxu0 0.0
    %2638 = vmatpush2.msra.mxu0 0.0
    %2639 = vmatprep.subr.mxu0 0.0
    %2640 = vmatpush2.msra.mxu0 0.0
    %2641 = vmatprep.subr.mxu0 0.0
    %2642 = vmatpush2.msra.mxu0 0.0
    %2643 = vmatprep.subr.mxu0 0.0
    %2644 = vmatpush2.msra.mxu0 0.0
    %2645 = vmatprep.subr.mxu0 0.0
    %2646 = vmatpush2.msra.mxu0 0.0
    %2647 = vmatprep.subr.mxu0 0.0
    %2648 = vmatpush2.msra.mxu0 0.0
    %2649 = vmatprep.subr.mxu0 0.0
    %2650 = vmatpush2.msra.mxu0 0.0
    %2651 = vmatprep.subr.mxu0 0.0
    %2652 = vmatpush2.msra.mxu0 0.0
    %2653 = vmatprep.subr.mxu0 0.0
    %2654 = vmatpush2.msra.mxu0 0.0
    %2655 = vmatprep.subr.mxu0 0.0
    %2656 = vmatpush2.msra.mxu0 0.0
    %2657 = vmatprep.subr.mxu0 0.0
    %2658 = vmatpush2.msra.mxu0 0.0
    %2659 = vmatprep.subr.mxu0 0.0
    %2660 = vmatpush2.msra.mxu0 0.0
    %2661 = vmatprep.subr.mxu0 0.0
    %2662 = vmatpush2.msra.mxu0 0.0
    %2663 = vmatprep.subr.mxu0 0.0
    %2664 = vmatpush2.msra.mxu0 0.0
    %2665 = vmatprep.mubr.f32.mxu0 0.0
    %2666 = vmatmul.mubr.f32.gmra.mxu0 %v2317
    %v2667 = vpop.f32.mrf.mxu0
    %v2668 = vadd.f32 0.0, %v2667
    %v2669 = vpop.f32.mrf.mxu0
    %2670 = vdwg.mxu0
    %v2671 = vadd.f32 %v2598, %v2668
    %2672 = vmatprep.subr.mxu0 0.0
    %2673 = vmatpush1.msra.mxu0 0.0
    %2674 = vmatprep.subr.mxu0 0.0
    %2675 = vmatpush1.msra.mxu0 0.0
    %2676 = vmatprep.subr.mxu0 0.0
    %2677 = vmatpush1.msra.mxu0 0.0
    %2678 = vmatprep.subr.mxu0 0.0
    %2679 = vmatpush1.msra.mxu0 0.0
    %2680 = vmatprep.subr.mxu0 0.0
    %2681 = vmatpush1.msra.mxu0 0.0
    %2682 = vmatprep.subr.mxu0 0.0
    %2683 = vmatpush1.msra.mxu0 0.0
    %2684 = vmatprep.subr.mxu0 0.0
    %2685 = vmatpush1.msra.mxu0 0.0
    %2686 = vmatprep.subr.mxu0 0.0
    %2687 = vmatpush1.msra.mxu0 0.0
    %2688 = vmatprep.subr.mxu0 0.0
    %2689 = vmatpush1.msra.mxu0 0.0
    %2690 = vmatprep.subr.mxu0 0.0
    %2691 = vmatpush1.msra.mxu0 0.0
    %2692 = vmatprep.subr.mxu0 0.0
    %2693 = vmatpush1.msra.mxu0 0.0
    %2694 = vmatprep.subr.mxu0 0.0
    %2695 = vmatpush1.msra.mxu0 0.0
    %2696 = vmatprep.subr.mxu0 0.0
    %2697 = vmatpush1.msra.mxu0 %v980
    %2698 = vmatprep.subr.mxu0 0.0
    %2699 = vmatpush1.msra.mxu0 %v979
    %2700 = vmatprep.subr.mxu0 0.0
    %2701 = vmatpush1.msra.mxu0 %v978
    %2702 = vmatprep.subr.mxu0 0.0
    %2703 = vmatpush1.msra.mxu0 %v977
    %2704 = vmatprep.subr.mxu0 0.0
    %2705 = vmatpush2.msra.mxu0 0.0
    %2706 = vmatprep.subr.mxu0 0.0
    %2707 = vmatpush2.msra.mxu0 0.0
    %2708 = vmatprep.subr.mxu0 0.0
    %2709 = vmatpush2.msra.mxu0 0.0
    %2710 = vmatprep.subr.mxu0 0.0
    %2711 = vmatpush2.msra.mxu0 0.0
    %2712 = vmatprep.subr.mxu0 0.0
    %2713 = vmatpush2.msra.mxu0 0.0
    %2714 = vmatprep.subr.mxu0 0.0
    %2715 = vmatpush2.msra.mxu0 0.0
    %2716 = vmatprep.subr.mxu0 0.0
    %2717 = vmatpush2.msra.mxu0 0.0
    %2718 = vmatprep.subr.mxu0 0.0
    %2719 = vmatpush2.msra.mxu0 0.0
    %2720 = vmatprep.subr.mxu0 0.0
    %2721 = vmatpush2.msra.mxu0 0.0
    %2722 = vmatprep.subr.mxu0 0.0
    %2723 = vmatpush2.msra.mxu0 0.0
    %2724 = vmatprep.subr.mxu0 0.0
    %2725 = vmatpush2.msra.mxu0 0.0
    %2726 = vmatprep.subr.mxu0 0.0
    %2727 = vmatpush2.msra.mxu0 0.0
    %2728 = vmatprep.subr.mxu0 0.0
    %2729 = vmatpush2.msra.mxu0 0.0
    %2730 = vmatprep.subr.mxu0 0.0
    %2731 = vmatpush2.msra.mxu0 0.0
    %2732 = vmatprep.subr.mxu0 0.0
    %2733 = vmatpush2.msra.mxu0 0.0
    %2734 = vmatprep.subr.mxu0 0.0
    %2735 = vmatpush2.msra.mxu0 0.0
    %2736 = vmatprep.mubr.f32.mxu0 0.0
    %2737 = vmatmul.mubr.f32.gmra.mxu0 %v2244
    %v2738 = vpop.f32.mrf.mxu0
    %v2739 = vadd.f32 %v1023, %v2738
    %v2740 = vpop.f32.mrf.mxu0
    %2741 = vdwg.mxu0
    %2742 = vmatprep.subr.mxu0 0.0
    %2743 = vmatpush1.msra.mxu0 0.0
    %2744 = vmatprep.subr.mxu0 0.0
    %2745 = vmatpush1.msra.mxu0 0.0
    %2746 = vmatprep.subr.mxu0 0.0
    %2747 = vmatpush1.msra.mxu0 0.0
    %2748 = vmatprep.subr.mxu0 0.0
    %2749 = vmatpush1.msra.mxu0 0.0
    %2750 = vmatprep.subr.mxu0 0.0
    %2751 = vmatpush1.msra.mxu0 0.0
    %2752 = vmatprep.subr.mxu0 0.0
    %2753 = vmatpush1.msra.mxu0 0.0
    %2754 = vmatprep.subr.mxu0 0.0
    %2755 = vmatpush1.msra.mxu0 0.0
    %2756 = vmatprep.subr.mxu0 0.0
    %2757 = vmatpush1.msra.mxu0 0.0
    %2758 = vmatprep.subr.mxu0 0.0
    %2759 = vmatpush1.msra.mxu0 0.0
    %2760 = vmatprep.subr.mxu0 0.0
    %2761 = vmatpush1.msra.mxu0 0.0
    %2762 = vmatprep.subr.mxu0 0.0
    %2763 = vmatpush1.msra.mxu0 0.0
    %2764 = vmatprep.subr.mxu0 0.0
    %2765 = vmatpush1.msra.mxu0 0.0
    %2766 = vmatprep.subr.mxu0 0.0
    %2767 = vmatpush1.msra.mxu0 %v996
    %2768 = vmatprep.subr.mxu0 0.0
    %2769 = vmatpush1.msra.mxu0 %v995
    %2770 = vmatprep.subr.mxu0 0.0
    %2771 = vmatpush1.msra.mxu0 %v994
    %2772 = vmatprep.subr.mxu0 0.0
    %2773 = vmatpush1.msra.mxu0 %v993
    %2774 = vmatprep.subr.mxu0 0.0
    %2775 = vmatpush2.msra.mxu0 0.0
    %2776 = vmatprep.subr.mxu0 0.0
    %2777 = vmatpush2.msra.mxu0 0.0
    %2778 = vmatprep.subr.mxu0 0.0
    %2779 = vmatpush2.msra.mxu0 0.0
    %2780 = vmatprep.subr.mxu0 0.0
    %2781 = vmatpush2.msra.mxu0 0.0
    %2782 = vmatprep.subr.mxu0 0.0
    %2783 = vmatpush2.msra.mxu0 0.0
    %2784 = vmatprep.subr.mxu0 0.0
    %2785 = vmatpush2.msra.mxu0 0.0
    %2786 = vmatprep.subr.mxu0 0.0
    %2787 = vmatpush2.msra.mxu0 0.0
    %2788 = vmatprep.subr.mxu0 0.0
    %2789 = vmatpush2.msra.mxu0 0.0
    %2790 = vmatprep.subr.mxu0 0.0
    %2791 = vmatpush2.msra.mxu0 0.0
    %2792 = vmatprep.subr.mxu0 0.0
    %2793 = vmatpush2.msra.mxu0 0.0
    %2794 = vmatprep.subr.mxu0 0.0
    %2795 = vmatpush2.msra.mxu0 0.0
    %2796 = vmatprep.subr.mxu0 0.0
    %2797 = vmatpush2.msra.mxu0 0.0
    %2798 = vmatprep.subr.mxu0 0.0
    %2799 = vmatpush2.msra.mxu0 0.0
    %2800 = vmatprep.subr.mxu0 0.0
    %2801 = vmatpush2.msra.mxu0 0.0
    %2802 = vmatprep.subr.mxu0 0.0
    %2803 = vmatpush2.msra.mxu0 0.0
    %2804 = vmatprep.subr.mxu0 0.0
    %2805 = vmatpush2.msra.mxu0 0.0
    %2806 = vmatprep.mubr.f32.mxu0 0.0
    %2807 = vmatmul.mubr.f32.gmra.mxu0 %v2317
    %v2808 = vpop.f32.mrf.mxu0
    %v2809 = vadd.f32 0.0, %v2808
    %v2810 = vpop.f32.mrf.mxu0
    %2811 = vdwg.mxu0
    %v2812 = vadd.f32 %v2739, %v2809
    %v2813 = vxor.u32 %v2389, 2147483648
    %v2814 = vmul.f32 %v2813, 1.442695
    %v2815 = vpow.pop %v2814
    %v2816 = vadd.f32 %v2815, 1.0
    %v2817 = vrcp.pop %v2816
    %v2818 = vmul.f32 1.0, %v2817
    %v2819 = vxor.u32 %v2530, 2147483648
    %v2820 = vmul.f32 %v2819, 1.442695
    %v2821 = vpow.pop %v2820
    %v2822 = vadd.f32 %v2821, 1.0
    %v2823 = vrcp.pop %v2822
    %v2824 = vmul.f32 1.0, %v2823
    %v2825 = vtanh.pop %v2671
    %v2826 = vxor.u32 %v2812, 2147483648
    %v2827 = vmul.f32 %v2826, 1.442695
    %v2828 = vpow.pop %v2827
    %v2829 = vadd.f32 %v2828, 1.0
    %v2830 = vrcp.pop %v2829
    %v2831 = vmul.f32 1.0, %v2830
    %v2832 = vmul.f32 %v2824, %v1928
    %v2833 = vmul.f32 %v2818, %v2825
    %v2834 = vadd.f32 %v2832, %v2833
    %v2835 = vtanh.pop %v2834
    %v2836 = vmul.f32 %v2831, %v2835
    %v2837 = vld [vmem:[#allocation2 + $0x10] sm:$0xff]
    %2838 = vmatprep.subr.mxu0 0.0
    %2839 = vmatpush1.msra.mxu0 0.0
    %2840 = vmatprep.subr.mxu0 0.0
    %2841 = vmatpush1.msra.mxu0 0.0
    %2842 = vmatprep.subr.mxu0 0.0
    %2843 = vmatpush1.msra.mxu0 0.0
    %2844 = vmatprep.subr.mxu0 0.0
    %2845 = vmatpush1.msra.mxu0 0.0
    %2846 = vmatprep.subr.mxu0 0.0
    %2847 = vmatpush1.msra.mxu0 0.0
    %2848 = vmatprep.subr.mxu0 0.0
    %2849 = vmatpush1.msra.mxu0 0.0
    %2850 = vmatprep.subr.mxu0 0.0
    %2851 = vmatpush1.msra.mxu0 0.0
    %2852 = vmatprep.subr.mxu0 0.0
    %2853 = vmatpush1.msra.mxu0 0.0
    %2854 = vmatprep.subr.mxu0 0.0
    %2855 = vmatpush1.msra.mxu0 0.0
    %2856 = vmatprep.subr.mxu0 0.0
    %2857 = vmatpush1.msra.mxu0 0.0
    %2858 = vmatprep.subr.mxu0 0.0
    %2859 = vmatpush1.msra.mxu0 0.0
    %2860 = vmatprep.subr.mxu0 0.0
    %2861 = vmatpush1.msra.mxu0 0.0
    %2862 = vmatprep.subr.mxu0 0.0
    %2863 = vmatpush1.msra.mxu0 %v425
    %2864 = vmatprep.subr.mxu0 0.0
    %2865 = vmatpush1.msra.mxu0 %v424
    %2866 = vmatprep.subr.mxu0 0.0
    %2867 = vmatpush1.msra.mxu0 %v423
    %2868 = vmatprep.subr.mxu0 0.0
    %2869 = vmatpush1.msra.mxu0 %v422
    %2870 = vmatprep.subr.mxu0 0.0
    %2871 = vmatpush2.msra.mxu0 0.0
    %2872 = vmatprep.subr.mxu0 0.0
    %2873 = vmatpush2.msra.mxu0 0.0
    %2874 = vmatprep.subr.mxu0 0.0
    %2875 = vmatpush2.msra.mxu0 0.0
    %2876 = vmatprep.subr.mxu0 0.0
    %2877 = vmatpush2.msra.mxu0 0.0
    %2878 = vmatprep.subr.mxu0 0.0
    %2879 = vmatpush2.msra.mxu0 0.0
    %2880 = vmatprep.subr.mxu0 0.0
    %2881 = vmatpush2.msra.mxu0 0.0
    %2882 = vmatprep.subr.mxu0 0.0
    %2883 = vmatpush2.msra.mxu0 0.0
    %2884 = vmatprep.subr.mxu0 0.0
    %2885 = vmatpush2.msra.mxu0 0.0
    %2886 = vmatprep.subr.mxu0 0.0
    %2887 = vmatpush2.msra.mxu0 0.0
    %2888 = vmatprep.subr.mxu0 0.0
    %2889 = vmatpush2.msra.mxu0 0.0
    %2890 = vmatprep.subr.mxu0 0.0
    %2891 = vmatpush2.msra.mxu0 0.0
    %2892 = vmatprep.subr.mxu0 0.0
    %2893 = vmatpush2.msra.mxu0 0.0
    %2894 = vmatprep.subr.mxu0 0.0
    %2895 = vmatpush2.msra.mxu0 0.0
    %2896 = vmatprep.subr.mxu0 0.0
    %2897 = vmatpush2.msra.mxu0 0.0
    %2898 = vmatprep.subr.mxu0 0.0
    %2899 = vmatpush2.msra.mxu0 0.0
    %2900 = vmatprep.subr.mxu0 0.0
    %2901 = vmatpush2.msra.mxu0 0.0
    %2902 = vmatprep.mubr.f32.mxu0 0.0
    %2903 = vmatmul.mubr.f32.gmra.mxu0 %v2244
    %v2904 = vpop.f32.mrf.mxu0
    %v2905 = vadd.f32 0.0, %v2904
    %v2906 = vpop.f32.mrf.mxu0
    %2907 = vdwg.mxu0
    %v2908 = vadd.f32 %v2837, %v2905
    %v2909 = vld [vmem:[#allocation3 + $0x10] sm:$0xff]
    %2910 = vmatprep.subr.mxu0 0.0
    %2911 = vmatpush1.msra.mxu0 0.0
    %2912 = vmatprep.subr.mxu0 0.0
    %2913 = vmatpush1.msra.mxu0 0.0
    %2914 = vmatprep.subr.mxu0 0.0
    %2915 = vmatpush1.msra.mxu0 0.0
    %2916 = vmatprep.subr.mxu0 0.0
    %2917 = vmatpush1.msra.mxu0 0.0
    %2918 = vmatprep.subr.mxu0 0.0
    %2919 = vmatpush1.msra.mxu0 0.0
    %2920 = vmatprep.subr.mxu0 0.0
    %2921 = vmatpush1.msra.mxu0 0.0
    %2922 = vmatprep.subr.mxu0 0.0
    %2923 = vmatpush1.msra.mxu0 0.0
    %2924 = vmatprep.subr.mxu0 0.0
    %2925 = vmatpush1.msra.mxu0 0.0
    %2926 = vmatprep.subr.mxu0 0.0
    %2927 = vmatpush1.msra.mxu0 0.0
    %2928 = vmatprep.subr.mxu0 0.0
    %2929 = vmatpush1.msra.mxu0 0.0
    %2930 = vmatprep.subr.mxu0 0.0
    %2931 = vmatpush1.msra.mxu0 0.0
    %2932 = vmatprep.subr.mxu0 0.0
    %2933 = vmatpush1.msra.mxu0 0.0
    %2934 = vmatprep.subr.mxu0 0.0
    %2935 = vmatpush1.msra.mxu0 %v429
    %2936 = vmatprep.subr.mxu0 0.0
    %2937 = vmatpush1.msra.mxu0 %v428
    %2938 = vmatprep.subr.mxu0 0.0
    %2939 = vmatpush1.msra.mxu0 %v427
    %2940 = vmatprep.subr.mxu0 0.0
    %2941 = vmatpush1.msra.mxu0 %v426
    %2942 = vmatprep.subr.mxu0 0.0
    %2943 = vmatpush2.msra.mxu0 0.0
    %2944 = vmatprep.subr.mxu0 0.0
    %2945 = vmatpush2.msra.mxu0 0.0
    %2946 = vmatprep.subr.mxu0 0.0
    %2947 = vmatpush2.msra.mxu0 0.0
    %2948 = vmatprep.subr.mxu0 0.0
    %2949 = vmatpush2.msra.mxu0 0.0
    %2950 = vmatprep.subr.mxu0 0.0
    %2951 = vmatpush2.msra.mxu0 0.0
    %2952 = vmatprep.subr.mxu0 0.0
    %2953 = vmatpush2.msra.mxu0 0.0
    %2954 = vmatprep.subr.mxu0 0.0
    %2955 = vmatpush2.msra.mxu0 0.0
    %2956 = vmatprep.subr.mxu0 0.0
    %2957 = vmatpush2.msra.mxu0 0.0
    %2958 = vmatprep.subr.mxu0 0.0
    %2959 = vmatpush2.msra.mxu0 0.0
    %2960 = vmatprep.subr.mxu0 0.0
    %2961 = vmatpush2.msra.mxu0 0.0
    %2962 = vmatprep.subr.mxu0 0.0
    %2963 = vmatpush2.msra.mxu0 0.0
    %2964 = vmatprep.subr.mxu0 0.0
    %2965 = vmatpush2.msra.mxu0 0.0
    %2966 = vmatprep.subr.mxu0 0.0
    %2967 = vmatpush2.msra.mxu0 0.0
    %2968 = vmatprep.subr.mxu0 0.0
    %2969 = vmatpush2.msra.mxu0 0.0
    %2970 = vmatprep.subr.mxu0 0.0
    %2971 = vmatpush2.msra.mxu0 0.0
    %2972 = vmatprep.subr.mxu0 0.0
    %2973 = vmatpush2.msra.mxu0 0.0
    %2974 = vmatprep.mubr.f32.mxu0 0.0
    %2975 = vmatmul.mubr.f32.gmra.mxu0 %v2244
    %v2976 = vpop.f32.mrf.mxu0
    %v2977 = vadd.f32 0.0, %v2976
    %v2978 = vpop.f32.mrf.mxu0
    %2979 = vdwg.mxu0
    %v2980 = vadd.f32 %v2909, %v2977
    %v2981 = vld [vmem:[#allocation4 + $0x10] sm:$0xff]
    %2982 = vmatprep.subr.mxu0 0.0
    %2983 = vmatpush1.msra.mxu0 0.0
    %2984 = vmatprep.subr.mxu0 0.0
    %2985 = vmatpush1.msra.mxu0 0.0
    %2986 = vmatprep.subr.mxu0 0.0
    %2987 = vmatpush1.msra.mxu0 0.0
    %2988 = vmatprep.subr.mxu0 0.0
    %2989 = vmatpush1.msra.mxu0 0.0
    %2990 = vmatprep.subr.mxu0 0.0
    %2991 = vmatpush1.msra.mxu0 0.0
    %2992 = vmatprep.subr.mxu0 0.0
    %2993 = vmatpush1.msra.mxu0 0.0
    %2994 = vmatprep.subr.mxu0 0.0
    %2995 = vmatpush1.msra.mxu0 0.0
    %2996 = vmatprep.subr.mxu0 0.0
    %2997 = vmatpush1.msra.mxu0 0.0
    %2998 = vmatprep.subr.mxu0 0.0
    %2999 = vmatpush1.msra.mxu0 0.0
    %3000 = vmatprep.subr.mxu0 0.0
    %3001 = vmatpush1.msra.mxu0 0.0
    %3002 = vmatprep.subr.mxu0 0.0
    %3003 = vmatpush1.msra.mxu0 0.0
    %3004 = vmatprep.subr.mxu0 0.0
    %3005 = vmatpush1.msra.mxu0 0.0
    %3006 = vmatprep.subr.mxu0 0.0
    %3007 = vmatpush1.msra.mxu0 %v433
    %3008 = vmatprep.subr.mxu0 0.0
    %3009 = vmatpush1.msra.mxu0 %v432
    %3010 = vmatprep.subr.mxu0 0.0
    %3011 = vmatpush1.msra.mxu0 %v431
    %3012 = vmatprep.subr.mxu0 0.0
    %3013 = vmatpush1.msra.mxu0 %v430
    %3014 = vmatprep.subr.mxu0 0.0
    %3015 = vmatpush2.msra.mxu0 0.0
    %3016 = vmatprep.subr.mxu0 0.0
    %3017 = vmatpush2.msra.mxu0 0.0
    %3018 = vmatprep.subr.mxu0 0.0
    %3019 = vmatpush2.msra.mxu0 0.0
    %3020 = vmatprep.subr.mxu0 0.0
    %3021 = vmatpush2.msra.mxu0 0.0
    %3022 = vmatprep.subr.mxu0 0.0
    %3023 = vmatpush2.msra.mxu0 0.0
    %3024 = vmatprep.subr.mxu0 0.0
    %3025 = vmatpush2.msra.mxu0 0.0
    %3026 = vmatprep.subr.mxu0 0.0
    %3027 = vmatpush2.msra.mxu0 0.0
    %3028 = vmatprep.subr.mxu0 0.0
    %3029 = vmatpush2.msra.mxu0 0.0
    %3030 = vmatprep.subr.mxu0 0.0
    %3031 = vmatpush2.msra.mxu0 0.0
    %3032 = vmatprep.subr.mxu0 0.0
    %3033 = vmatpush2.msra.mxu0 0.0
    %3034 = vmatprep.subr.mxu0 0.0
    %3035 = vmatpush2.msra.mxu0 0.0
    %3036 = vmatprep.subr.mxu0 0.0
    %3037 = vmatpush2.msra.mxu0 0.0
    %3038 = vmatprep.subr.mxu0 0.0
    %3039 = vmatpush2.msra.mxu0 0.0
    %3040 = vmatprep.subr.mxu0 0.0
    %3041 = vmatpush2.msra.mxu0 0.0
    %3042 = vmatprep.subr.mxu0 0.0
    %3043 = vmatpush2.msra.mxu0 0.0
    %3044 = vmatprep.subr.mxu0 0.0
    %3045 = vmatpush2.msra.mxu0 0.0
    %3046 = vmatprep.mubr.f32.mxu0 0.0
    %3047 = vmatmul.mubr.f32.gmra.mxu0 %v2244
    %v3048 = vpop.f32.mrf.mxu0
    %v3049 = vadd.f32 0.0, %v3048
    %v3050 = vpop.f32.mrf.mxu0
    %3051 = vdwg.mxu0
    %v3052 = vadd.f32 %v2981, %v3049
    %v3053 = vld [vmem:[#allocation5 + $0x10] sm:$0xff]
    %3054 = vmatprep.subr.mxu0 0.0
    %3055 = vmatpush1.msra.mxu0 0.0
    %3056 = vmatprep.subr.mxu0 0.0
    %3057 = vmatpush1.msra.mxu0 0.0
    %3058 = vmatprep.subr.mxu0 0.0
    %3059 = vmatpush1.msra.mxu0 0.0
    %3060 = vmatprep.subr.mxu0 0.0
    %3061 = vmatpush1.msra.mxu0 0.0
    %3062 = vmatprep.subr.mxu0 0.0
    %3063 = vmatpush1.msra.mxu0 0.0
    %3064 = vmatprep.subr.mxu0 0.0
    %3065 = vmatpush1.msra.mxu0 0.0
    %3066 = vmatprep.subr.mxu0 0.0
    %3067 = vmatpush1.msra.mxu0 0.0
    %3068 = vmatprep.subr.mxu0 0.0
    %3069 = vmatpush1.msra.mxu0 0.0
    %3070 = vmatprep.subr.mxu0 0.0
    %3071 = vmatpush1.msra.mxu0 0.0
    %3072 = vmatprep.subr.mxu0 0.0
    %3073 = vmatpush1.msra.mxu0 0.0
    %3074 = vmatprep.subr.mxu0 0.0
    %3075 = vmatpush1.msra.mxu0 0.0
    %3076 = vmatprep.subr.mxu0 0.0
    %3077 = vmatpush1.msra.mxu0 0.0
    %3078 = vmatprep.subr.mxu0 0.0
    %3079 = vmatpush1.msra.mxu0 %v437
    %3080 = vmatprep.subr.mxu0 0.0
    %3081 = vmatpush1.msra.mxu0 %v436
    %3082 = vmatprep.subr.mxu0 0.0
    %3083 = vmatpush1.msra.mxu0 %v435
    %3084 = vmatprep.subr.mxu0 0.0
    %3085 = vmatpush1.msra.mxu0 %v434
    %3086 = vmatprep.subr.mxu0 0.0
    %3087 = vmatpush2.msra.mxu0 0.0
    %3088 = vmatprep.subr.mxu0 0.0
    %3089 = vmatpush2.msra.mxu0 0.0
    %3090 = vmatprep.subr.mxu0 0.0
    %3091 = vmatpush2.msra.mxu0 0.0
    %3092 = vmatprep.subr.mxu0 0.0
    %3093 = vmatpush2.msra.mxu0 0.0
    %3094 = vmatprep.subr.mxu0 0.0
    %3095 = vmatpush2.msra.mxu0 0.0
    %3096 = vmatprep.subr.mxu0 0.0
    %3097 = vmatpush2.msra.mxu0 0.0
    %3098 = vmatprep.subr.mxu0 0.0
    %3099 = vmatpush2.msra.mxu0 0.0
    %3100 = vmatprep.subr.mxu0 0.0
    %3101 = vmatpush2.msra.mxu0 0.0
    %3102 = vmatprep.subr.mxu0 0.0
    %3103 = vmatpush2.msra.mxu0 0.0
    %3104 = vmatprep.subr.mxu0 0.0
    %3105 = vmatpush2.msra.mxu0 0.0
    %3106 = vmatprep.subr.mxu0 0.0
    %3107 = vmatpush2.msra.mxu0 0.0
    %3108 = vmatprep.subr.mxu0 0.0
    %3109 = vmatpush2.msra.mxu0 0.0
    %3110 = vmatprep.subr.mxu0 0.0
    %3111 = vmatpush2.msra.mxu0 0.0
    %3112 = vmatprep.subr.mxu0 0.0
    %3113 = vmatpush2.msra.mxu0 0.0
    %3114 = vmatprep.subr.mxu0 0.0
    %3115 = vmatpush2.msra.mxu0 0.0
    %3116 = vmatprep.subr.mxu0 0.0
    %3117 = vmatpush2.msra.mxu0 0.0
    %3118 = vmatprep.mubr.f32.mxu0 0.0
    %3119 = vmatmul.mubr.f32.gmra.mxu0 %v2244
    %v3120 = vpop.f32.mrf.mxu0
    %v3121 = vadd.f32 0.0, %v3120
    %v3122 = vpop.f32.mrf.mxu0
    %3123 = vdwg.mxu0
    %v3124 = vadd.f32 %v3053, %v3121
    %v3125 = vxor.u32 %v2908, 2147483648
    %v3126 = vmul.f32 %v3125, 1.442695
    %v3127 = vpow.pop %v3126
    %v3128 = vadd.f32 %v3127, 1.0
    %v3129 = vrcp.pop %v3128
    %v3130 = vmul.f32 1.0, %v3129
    %v3131 = vxor.u32 %v2980, 2147483648
    %v3132 = vmul.f32 %v3131, 1.442695
    %v3133 = vpow.pop %v3132
    %v3134 = vadd.f32 %v3133, 1.0
    %v3135 = vrcp.pop %v3134
    %v3136 = vmul.f32 1.0, %v3135
    %v3137 = vtanh.pop %v3052
    %v3138 = vxor.u32 %v3124, 2147483648
    %v3139 = vmul.f32 %v3138, 1.442695
    %v3140 = vpow.pop %v3139
    %v3141 = vadd.f32 %v3140, 1.0
    %v3142 = vrcp.pop %v3141
    %v3143 = vmul.f32 1.0, %v3142
    %v3144 = vmul.f32 %v3136, %v2240
    %v3145 = vmul.f32 %v3130, %v3137
    %v3146 = vadd.f32 %v3144, %v3145
    %v3147 = vtanh.pop %v3146
    %v3148 = vmul.f32 %v3143, %v3147
    %v3150 = vsel %vm590, %v3148, 0
    %3152 = vmatprep.subr.mxu0 0.0
    %3153 = vmatpush1.msra.mxu0 0.0
    %3154 = vmatprep.subr.mxu0 0.0
    %3155 = vmatpush1.msra.mxu0 0.0
    %3156 = vmatprep.subr.mxu0 0.0
    %3157 = vmatpush1.msra.mxu0 0.0
    %3158 = vmatprep.subr.mxu0 0.0
    %3159 = vmatpush1.msra.mxu0 0.0
    %3160 = vmatprep.subr.mxu0 0.0
    %3161 = vmatpush1.msra.mxu0 0.0
    %3162 = vmatprep.subr.mxu0 0.0
    %3163 = vmatpush1.msra.mxu0 0.0
    %3164 = vmatprep.subr.mxu0 0.0
    %3165 = vmatpush1.msra.mxu0 0.0
    %3166 = vmatprep.subr.mxu0 0.0
    %3167 = vmatpush1.msra.mxu0 0.0
    %3168 = vmatprep.subr.mxu0 0.0
    %3169 = vmatpush1.msra.mxu0 0.0
    %3170 = vmatprep.subr.mxu0 0.0
    %3171 = vmatpush1.msra.mxu0 0.0
    %3172 = vmatprep.subr.mxu0 0.0
    %3173 = vmatpush1.msra.mxu0 0.0
    %3174 = vmatprep.subr.mxu0 0.0
    %3175 = vmatpush1.msra.mxu0 0.0
    %3176 = vmatprep.subr.mxu0 0.0
    %3177 = vmatpush1.msra.mxu0 %v968
    %3178 = vmatprep.subr.mxu0 0.0
    %3179 = vmatpush1.msra.mxu0 %v967
    %3180 = vmatprep.subr.mxu0 0.0
    %3181 = vmatpush1.msra.mxu0 %v966
    %3182 = vmatprep.subr.mxu0 0.0
    %3183 = vmatpush1.msra.mxu0 %v965
    %3184 = vmatprep.subr.mxu0 0.0
    %3185 = vmatpush2.msra.mxu0 0.0
    %3186 = vmatprep.subr.mxu0 0.0
    %3187 = vmatpush2.msra.mxu0 0.0
    %3188 = vmatprep.subr.mxu0 0.0
    %3189 = vmatpush2.msra.mxu0 0.0
    %3190 = vmatprep.subr.mxu0 0.0
    %3191 = vmatpush2.msra.mxu0 0.0
    %3192 = vmatprep.subr.mxu0 0.0
    %3193 = vmatpush2.msra.mxu0 0.0
    %3194 = vmatprep.subr.mxu0 0.0
    %3195 = vmatpush2.msra.mxu0 0.0
    %3196 = vmatprep.subr.mxu0 0.0
    %3197 = vmatpush2.msra.mxu0 0.0
    %3198 = vmatprep.subr.mxu0 0.0
    %3199 = vmatpush2.msra.mxu0 0.0
    %3200 = vmatprep.subr.mxu0 0.0
    %3201 = vmatpush2.msra.mxu0 0.0
    %3202 = vmatprep.subr.mxu0 0.0
    %3203 = vmatpush2.msra.mxu0 0.0
    %3204 = vmatprep.subr.mxu0 0.0
    %3205 = vmatpush2.msra.mxu0 0.0
    %3206 = vmatprep.subr.mxu0 0.0
    %3207 = vmatpush2.msra.mxu0 0.0
    %3208 = vmatprep.subr.mxu0 0.0
    %3209 = vmatpush2.msra.mxu0 0.0
    %3210 = vmatprep.subr.mxu0 0.0
    %3211 = vmatpush2.msra.mxu0 0.0
    %3212 = vmatprep.subr.mxu0 0.0
    %3213 = vmatpush2.msra.mxu0 0.0
    %3214 = vmatprep.subr.mxu0 0.0
    %3215 = vmatpush2.msra.mxu0 0.0
    %3216 = vmatprep.mubr.f32.mxu0 0.0
    %3217 = vmatmul.mubr.f32.gmra.mxu0 %v3150
    %v3218 = vpop.f32.mrf.mxu0
    %v3219 = vadd.f32 %v1005, %v3218
    %v3220 = vpop.f32.mrf.mxu0
    %3221 = vdwg.mxu0
    %v3223 = vsel %vm590, %v2836, 0
    %3225 = vmatprep.subr.mxu0 0.0
    %3226 = vmatpush1.msra.mxu0 0.0
    %3227 = vmatprep.subr.mxu0 0.0
    %3228 = vmatpush1.msra.mxu0 0.0
    %3229 = vmatprep.subr.mxu0 0.0
    %3230 = vmatpush1.msra.mxu0 0.0
    %3231 = vmatprep.subr.mxu0 0.0
    %3232 = vmatpush1.msra.mxu0 0.0
    %3233 = vmatprep.subr.mxu0 0.0
    %3234 = vmatpush1.msra.mxu0 0.0
    %3235 = vmatprep.subr.mxu0 0.0
    %3236 = vmatpush1.msra.mxu0 0.0
    %3237 = vmatprep.subr.mxu0 0.0
    %3238 = vmatpush1.msra.mxu0 0.0
    %3239 = vmatprep.subr.mxu0 0.0
    %3240 = vmatpush1.msra.mxu0 0.0
    %3241 = vmatprep.subr.mxu0 0.0
    %3242 = vmatpush1.msra.mxu0 0.0
    %3243 = vmatprep.subr.mxu0 0.0
    %3244 = vmatpush1.msra.mxu0 0.0
    %3245 = vmatprep.subr.mxu0 0.0
    %3246 = vmatpush1.msra.mxu0 0.0
    %3247 = vmatprep.subr.mxu0 0.0
    %3248 = vmatpush1.msra.mxu0 0.0
    %3249 = vmatprep.subr.mxu0 0.0
    %3250 = vmatpush1.msra.mxu0 %v984
    %3251 = vmatprep.subr.mxu0 0.0
    %3252 = vmatpush1.msra.mxu0 %v983
    %3253 = vmatprep.subr.mxu0 0.0
    %3254 = vmatpush1.msra.mxu0 %v982
    %3255 = vmatprep.subr.mxu0 0.0
    %3256 = vmatpush1.msra.mxu0 %v981
    %3257 = vmatprep.subr.mxu0 0.0
    %3258 = vmatpush2.msra.mxu0 0.0
    %3259 = vmatprep.subr.mxu0 0.0
    %3260 = vmatpush2.msra.mxu0 0.0
    %3261 = vmatprep.subr.mxu0 0.0
    %3262 = vmatpush2.msra.mxu0 0.0
    %3263 = vmatprep.subr.mxu0 0.0
    %3264 = vmatpush2.msra.mxu0 0.0
    %3265 = vmatprep.subr.mxu0 0.0
    %3266 = vmatpush2.msra.mxu0 0.0
    %3267 = vmatprep.subr.mxu0 0.0
    %3268 = vmatpush2.msra.mxu0 0.0
    %3269 = vmatprep.subr.mxu0 0.0
    %3270 = vmatpush2.msra.mxu0 0.0
    %3271 = vmatprep.subr.mxu0 0.0
    %3272 = vmatpush2.msra.mxu0 0.0
    %3273 = vmatprep.subr.mxu0 0.0
    %3274 = vmatpush2.msra.mxu0 0.0
    %3275 = vmatprep.subr.mxu0 0.0
    %3276 = vmatpush2.msra.mxu0 0.0
    %3277 = vmatprep.subr.mxu0 0.0
    %3278 = vmatpush2.msra.mxu0 0.0
    %3279 = vmatprep.subr.mxu0 0.0
    %3280 = vmatpush2.msra.mxu0 0.0
    %3281 = vmatprep.subr.mxu0 0.0
    %3282 = vmatpush2.msra.mxu0 0.0
    %3283 = vmatprep.subr.mxu0 0.0
    %3284 = vmatpush2.msra.mxu0 0.0
    %3285 = vmatprep.subr.mxu0 0.0
    %3286 = vmatpush2.msra.mxu0 0.0
    %3287 = vmatprep.subr.mxu0 0.0
    %3288 = vmatpush2.msra.mxu0 0.0
    %3289 = vmatprep.mubr.f32.mxu0 0.0
    %3290 = vmatmul.mubr.f32.gmra.mxu0 %v3223
    %v3291 = vpop.f32.mrf.mxu0
    %v3292 = vadd.f32 0.0, %v3291
    %v3293 = vpop.f32.mrf.mxu0
    %3294 = vdwg.mxu0
    %v3295 = vadd.f32 %v3219, %v3292
    %3296 = vmatprep.subr.mxu0 0.0
    %3297 = vmatpush1.msra.mxu0 0.0
    %3298 = vmatprep.subr.mxu0 0.0
    %3299 = vmatpush1.msra.mxu0 0.0
    %3300 = vmatprep.subr.mxu0 0.0
    %3301 = vmatpush1.msra.mxu0 0.0
    %3302 = vmatprep.subr.mxu0 0.0
    %3303 = vmatpush1.msra.mxu0 0.0
    %3304 = vmatprep.subr.mxu0 0.0
    %3305 = vmatpush1.msra.mxu0 0.0
    %3306 = vmatprep.subr.mxu0 0.0
    %3307 = vmatpush1.msra.mxu0 0.0
    %3308 = vmatprep.subr.mxu0 0.0
    %3309 = vmatpush1.msra.mxu0 0.0
    %3310 = vmatprep.subr.mxu0 0.0
    %3311 = vmatpush1.msra.mxu0 0.0
    %3312 = vmatprep.subr.mxu0 0.0
    %3313 = vmatpush1.msra.mxu0 0.0
    %3314 = vmatprep.subr.mxu0 0.0
    %3315 = vmatpush1.msra.mxu0 0.0
    %3316 = vmatprep.subr.mxu0 0.0
    %3317 = vmatpush1.msra.mxu0 0.0
    %3318 = vmatprep.subr.mxu0 0.0
    %3319 = vmatpush1.msra.mxu0 0.0
    %3320 = vmatprep.subr.mxu0 0.0
    %3321 = vmatpush1.msra.mxu0 %v972
    %3322 = vmatprep.subr.mxu0 0.0
    %3323 = vmatpush1.msra.mxu0 %v971
    %3324 = vmatprep.subr.mxu0 0.0
    %3325 = vmatpush1.msra.mxu0 %v970
    %3326 = vmatprep.subr.mxu0 0.0
    %3327 = vmatpush1.msra.mxu0 %v969
    %3328 = vmatprep.subr.mxu0 0.0
    %3329 = vmatpush2.msra.mxu0 0.0
    %3330 = vmatprep.subr.mxu0 0.0
    %3331 = vmatpush2.msra.mxu0 0.0
    %3332 = vmatprep.subr.mxu0 0.0
    %3333 = vmatpush2.msra.mxu0 0.0
    %3334 = vmatprep.subr.mxu0 0.0
    %3335 = vmatpush2.msra.mxu0 0.0
    %3336 = vmatprep.subr.mxu0 0.0
    %3337 = vmatpush2.msra.mxu0 0.0
    %3338 = vmatprep.subr.mxu0 0.0
    %3339 = vmatpush2.msra.mxu0 0.0
    %3340 = vmatprep.subr.mxu0 0.0
    %3341 = vmatpush2.msra.mxu0 0.0
    %3342 = vmatprep.subr.mxu0 0.0
    %3343 = vmatpush2.msra.mxu0 0.0
    %3344 = vmatprep.subr.mxu0 0.0
    %3345 = vmatpush2.msra.mxu0 0.0
    %3346 = vmatprep.subr.mxu0 0.0
    %3347 = vmatpush2.msra.mxu0 0.0
    %3348 = vmatprep.subr.mxu0 0.0
    %3349 = vmatpush2.msra.mxu0 0.0
    %3350 = vmatprep.subr.mxu0 0.0
    %3351 = vmatpush2.msra.mxu0 0.0
    %3352 = vmatprep.subr.mxu0 0.0
    %3353 = vmatpush2.msra.mxu0 0.0
    %3354 = vmatprep.subr.mxu0 0.0
    %3355 = vmatpush2.msra.mxu0 0.0
    %3356 = vmatprep.subr.mxu0 0.0
    %3357 = vmatpush2.msra.mxu0 0.0
    %3358 = vmatprep.subr.mxu0 0.0
    %3359 = vmatpush2.msra.mxu0 0.0
    %3360 = vmatprep.mubr.f32.mxu0 0.0
    %3361 = vmatmul.mubr.f32.gmra.mxu0 %v3150
    %v3362 = vpop.f32.mrf.mxu0
    %v3363 = vadd.f32 %v1011, %v3362
    %v3364 = vpop.f32.mrf.mxu0
    %3365 = vdwg.mxu0
    %3366 = vmatprep.subr.mxu0 0.0
    %3367 = vmatpush1.msra.mxu0 0.0
    %3368 = vmatprep.subr.mxu0 0.0
    %3369 = vmatpush1.msra.mxu0 0.0
    %3370 = vmatprep.subr.mxu0 0.0
    %3371 = vmatpush1.msra.mxu0 0.0
    %3372 = vmatprep.subr.mxu0 0.0
    %3373 = vmatpush1.msra.mxu0 0.0
    %3374 = vmatprep.subr.mxu0 0.0
    %3375 = vmatpush1.msra.mxu0 0.0
    %3376 = vmatprep.subr.mxu0 0.0
    %3377 = vmatpush1.msra.mxu0 0.0
    %3378 = vmatprep.subr.mxu0 0.0
    %3379 = vmatpush1.msra.mxu0 0.0
    %3380 = vmatprep.subr.mxu0 0.0
    %3381 = vmatpush1.msra.mxu0 0.0
    %3382 = vmatprep.subr.mxu0 0.0
    %3383 = vmatpush1.msra.mxu0 0.0
    %3384 = vmatprep.subr.mxu0 0.0
    %3385 = vmatpush1.msra.mxu0 0.0
    %3386 = vmatprep.subr.mxu0 0.0
    %3387 = vmatpush1.msra.mxu0 0.0
    %3388 = vmatprep.subr.mxu0 0.0
    %3389 = vmatpush1.msra.mxu0 0.0
    %3390 = vmatprep.subr.mxu0 0.0
    %3391 = vmatpush1.msra.mxu0 %v988
    %3392 = vmatprep.subr.mxu0 0.0
    %3393 = vmatpush1.msra.mxu0 %v987
    %3394 = vmatprep.subr.mxu0 0.0
    %3395 = vmatpush1.msra.mxu0 %v986
    %3396 = vmatprep.subr.mxu0 0.0
    %3397 = vmatpush1.msra.mxu0 %v985
    %3398 = vmatprep.subr.mxu0 0.0
    %3399 = vmatpush2.msra.mxu0 0.0
    %3400 = vmatprep.subr.mxu0 0.0
    %3401 = vmatpush2.msra.mxu0 0.0
    %3402 = vmatprep.subr.mxu0 0.0
    %3403 = vmatpush2.msra.mxu0 0.0
    %3404 = vmatprep.subr.mxu0 0.0
    %3405 = vmatpush2.msra.mxu0 0.0
    %3406 = vmatprep.subr.mxu0 0.0
    %3407 = vmatpush2.msra.mxu0 0.0
    %3408 = vmatprep.subr.mxu0 0.0
    %3409 = vmatpush2.msra.mxu0 0.0
    %3410 = vmatprep.subr.mxu0 0.0
    %3411 = vmatpush2.msra.mxu0 0.0
    %3412 = vmatprep.subr.mxu0 0.0
    %3413 = vmatpush2.msra.mxu0 0.0
    %3414 = vmatprep.subr.mxu0 0.0
    %3415 = vmatpush2.msra.mxu0 0.0
    %3416 = vmatprep.subr.mxu0 0.0
    %3417 = vmatpush2.msra.mxu0 0.0
    %3418 = vmatprep.subr.mxu0 0.0
    %3419 = vmatpush2.msra.mxu0 0.0
    %3420 = vmatprep.subr.mxu0 0.0
    %3421 = vmatpush2.msra.mxu0 0.0
    %3422 = vmatprep.subr.mxu0 0.0
    %3423 = vmatpush2.msra.mxu0 0.0
    %3424 = vmatprep.subr.mxu0 0.0
    %3425 = vmatpush2.msra.mxu0 0.0
    %3426 = vmatprep.subr.mxu0 0.0
    %3427 = vmatpush2.msra.mxu0 0.0
    %3428 = vmatprep.subr.mxu0 0.0
    %3429 = vmatpush2.msra.mxu0 0.0
    %3430 = vmatprep.mubr.f32.mxu0 0.0
    %3431 = vmatmul.mubr.f32.gmra.mxu0 %v3223
    %v3432 = vpop.f32.mrf.mxu0
    %v3433 = vadd.f32 0.0, %v3432
    %v3434 = vpop.f32.mrf.mxu0
    %3435 = vdwg.mxu0
    %v3436 = vadd.f32 %v3363, %v3433
    %3437 = vmatprep.subr.mxu0 0.0
    %3438 = vmatpush1.msra.mxu0 0.0
    %3439 = vmatprep.subr.mxu0 0.0
    %3440 = vmatpush1.msra.mxu0 0.0
    %3441 = vmatprep.subr.mxu0 0.0
    %3442 = vmatpush1.msra.mxu0 0.0
    %3443 = vmatprep.subr.mxu0 0.0
    %3444 = vmatpush1.msra.mxu0 0.0
    %3445 = vmatprep.subr.mxu0 0.0
    %3446 = vmatpush1.msra.mxu0 0.0
    %3447 = vmatprep.subr.mxu0 0.0
    %3448 = vmatpush1.msra.mxu0 0.0
    %3449 = vmatprep.subr.mxu0 0.0
    %3450 = vmatpush1.msra.mxu0 0.0
    %3451 = vmatprep.subr.mxu0 0.0
    %3452 = vmatpush1.msra.mxu0 0.0
    %3453 = vmatprep.subr.mxu0 0.0
    %3454 = vmatpush1.msra.mxu0 0.0
    %3455 = vmatprep.subr.mxu0 0.0
    %3456 = vmatpush1.msra.mxu0 0.0
    %3457 = vmatprep.subr.mxu0 0.0
    %3458 = vmatpush1.msra.mxu0 0.0
    %3459 = vmatprep.subr.mxu0 0.0
    %3460 = vmatpush1.msra.mxu0 0.0
    %3461 = vmatprep.subr.mxu0 0.0
    %3462 = vmatpush1.msra.mxu0 %v976
    %3463 = vmatprep.subr.mxu0 0.0
    %3464 = vmatpush1.msra.mxu0 %v975
    %3465 = vmatprep.subr.mxu0 0.0
    %3466 = vmatpush1.msra.mxu0 %v974
    %3467 = vmatprep.subr.mxu0 0.0
    %3468 = vmatpush1.msra.mxu0 %v973
    %3469 = vmatprep.subr.mxu0 0.0
    %3470 = vmatpush2.msra.mxu0 0.0
    %3471 = vmatprep.subr.mxu0 0.0
    %3472 = vmatpush2.msra.mxu0 0.0
    %3473 = vmatprep.subr.mxu0 0.0
    %3474 = vmatpush2.msra.mxu0 0.0
    %3475 = vmatprep.subr.mxu0 0.0
    %3476 = vmatpush2.msra.mxu0 0.0
    %3477 = vmatprep.subr.mxu0 0.0
    %3478 = vmatpush2.msra.mxu0 0.0
    %3479 = vmatprep.subr.mxu0 0.0
    %3480 = vmatpush2.msra.mxu0 0.0
    %3481 = vmatprep.subr.mxu0 0.0
    %3482 = vmatpush2.msra.mxu0 0.0
    %3483 = vmatprep.subr.mxu0 0.0
    %3484 = vmatpush2.msra.mxu0 0.0
    %3485 = vmatprep.subr.mxu0 0.0
    %3486 = vmatpush2.msra.mxu0 0.0
    %3487 = vmatprep.subr.mxu0 0.0
    %3488 = vmatpush2.msra.mxu0 0.0
    %3489 = vmatprep.subr.mxu0 0.0
    %3490 = vmatpush2.msra.mxu0 0.0
    %3491 = vmatprep.subr.mxu0 0.0
    %3492 = vmatpush2.msra.mxu0 0.0
    %3493 = vmatprep.subr.mxu0 0.0
    %3494 = vmatpush2.msra.mxu0 0.0
    %3495 = vmatprep.subr.mxu0 0.0
    %3496 = vmatpush2.msra.mxu0 0.0
    %3497 = vmatprep.subr.mxu0 0.0
    %3498 = vmatpush2.msra.mxu0 0.0
    %3499 = vmatprep.subr.mxu0 0.0
    %3500 = vmatpush2.msra.mxu0 0.0
    %3501 = vmatprep.mubr.f32.mxu0 0.0
    %3502 = vmatmul.mubr.f32.gmra.mxu0 %v3150
    %v3503 = vpop.f32.mrf.mxu0
    %v3504 = vadd.f32 %v1017, %v3503
    %v3505 = vpop.f32.mrf.mxu0
    %3506 = vdwg.mxu0
    %3507 = vmatprep.subr.mxu0 0.0
    %3508 = vmatpush1.msra.mxu0 0.0
    %3509 = vmatprep.subr.mxu0 0.0
    %3510 = vmatpush1.msra.mxu0 0.0
    %3511 = vmatprep.subr.mxu0 0.0
    %3512 = vmatpush1.msra.mxu0 0.0
    %3513 = vmatprep.subr.mxu0 0.0
    %3514 = vmatpush1.msra.mxu0 0.0
    %3515 = vmatprep.subr.mxu0 0.0
    %3516 = vmatpush1.msra.mxu0 0.0
    %3517 = vmatprep.subr.mxu0 0.0
    %3518 = vmatpush1.msra.mxu0 0.0
    %3519 = vmatprep.subr.mxu0 0.0
    %3520 = vmatpush1.msra.mxu0 0.0
    %3521 = vmatprep.subr.mxu0 0.0
    %3522 = vmatpush1.msra.mxu0 0.0
    %3523 = vmatprep.subr.mxu0 0.0
    %3524 = vmatpush1.msra.mxu0 0.0
    %3525 = vmatprep.subr.mxu0 0.0
    %3526 = vmatpush1.msra.mxu0 0.0
    %3527 = vmatprep.subr.mxu0 0.0
    %3528 = vmatpush1.msra.mxu0 0.0
    %3529 = vmatprep.subr.mxu0 0.0
    %3530 = vmatpush1.msra.mxu0 0.0
    %3531 = vmatprep.subr.mxu0 0.0
    %3532 = vmatpush1.msra.mxu0 %v992
    %3533 = vmatprep.subr.mxu0 0.0
    %3534 = vmatpush1.msra.mxu0 %v991
    %3535 = vmatprep.subr.mxu0 0.0
    %3536 = vmatpush1.msra.mxu0 %v990
    %3537 = vmatprep.subr.mxu0 0.0
    %3538 = vmatpush1.msra.mxu0 %v989
    %3539 = vmatprep.subr.mxu0 0.0
    %3540 = vmatpush2.msra.mxu0 0.0
    %3541 = vmatprep.subr.mxu0 0.0
    %3542 = vmatpush2.msra.mxu0 0.0
    %3543 = vmatprep.subr.mxu0 0.0
    %3544 = vmatpush2.msra.mxu0 0.0
    %3545 = vmatprep.subr.mxu0 0.0
    %3546 = vmatpush2.msra.mxu0 0.0
    %3547 = vmatprep.subr.mxu0 0.0
    %3548 = vmatpush2.msra.mxu0 0.0
    %3549 = vmatprep.subr.mxu0 0.0
    %3550 = vmatpush2.msra.mxu0 0.0
    %3551 = vmatprep.subr.mxu0 0.0
    %3552 = vmatpush2.msra.mxu0 0.0
    %3553 = vmatprep.subr.mxu0 0.0
    %3554 = vmatpush2.msra.mxu0 0.0
    %3555 = vmatprep.subr.mxu0 0.0
    %3556 = vmatpush2.msra.mxu0 0.0
    %3557 = vmatprep.subr.mxu0 0.0
    %3558 = vmatpush2.msra.mxu0 0.0
    %3559 = vmatprep.subr.mxu0 0.0
    %3560 = vmatpush2.msra.mxu0 0.0
    %3561 = vmatprep.subr.mxu0 0.0
    %3562 = vmatpush2.msra.mxu0 0.0
    %3563 = vmatprep.subr.mxu0 0.0
    %3564 = vmatpush2.msra.mxu0 0.0
    %3565 = vmatprep.subr.mxu0 0.0
    %3566 = vmatpush2.msra.mxu0 0.0
    %3567 = vmatprep.subr.mxu0 0.0
    %3568 = vmatpush2.msra.mxu0 0.0
    %3569 = vmatprep.subr.mxu0 0.0
    %3570 = vmatpush2.msra.mxu0 0.0
    %3571 = vmatprep.mubr.f32.mxu0 0.0
    %3572 = vmatmul.mubr.f32.gmra.mxu0 %v3223
    %v3573 = vpop.f32.mrf.mxu0
    %v3574 = vadd.f32 0.0, %v3573
    %v3575 = vpop.f32.mrf.mxu0
    %3576 = vdwg.mxu0
    %v3577 = vadd.f32 %v3504, %v3574
    %3578 = vmatprep.subr.mxu0 0.0
    %3579 = vmatpush1.msra.mxu0 0.0
    %3580 = vmatprep.subr.mxu0 0.0
    %3581 = vmatpush1.msra.mxu0 0.0
    %3582 = vmatprep.subr.mxu0 0.0
    %3583 = vmatpush1.msra.mxu0 0.0
    %3584 = vmatprep.subr.mxu0 0.0
    %3585 = vmatpush1.msra.mxu0 0.0
    %3586 = vmatprep.subr.mxu0 0.0
    %3587 = vmatpush1.msra.mxu0 0.0
    %3588 = vmatprep.subr.mxu0 0.0
    %3589 = vmatpush1.msra.mxu0 0.0
    %3590 = vmatprep.subr.mxu0 0.0
    %3591 = vmatpush1.msra.mxu0 0.0
    %3592 = vmatprep.subr.mxu0 0.0
    %3593 = vmatpush1.msra.mxu0 0.0
    %3594 = vmatprep.subr.mxu0 0.0
    %3595 = vmatpush1.msra.mxu0 0.0
    %3596 = vmatprep.subr.mxu0 0.0
    %3597 = vmatpush1.msra.mxu0 0.0
    %3598 = vmatprep.subr.mxu0 0.0
    %3599 = vmatpush1.msra.mxu0 0.0
    %3600 = vmatprep.subr.mxu0 0.0
    %3601 = vmatpush1.msra.mxu0 0.0
    %3602 = vmatprep.subr.mxu0 0.0
    %3603 = vmatpush1.msra.mxu0 %v980
    %3604 = vmatprep.subr.mxu0 0.0
    %3605 = vmatpush1.msra.mxu0 %v979
    %3606 = vmatprep.subr.mxu0 0.0
    %3607 = vmatpush1.msra.mxu0 %v978
    %3608 = vmatprep.subr.mxu0 0.0
    %3609 = vmatpush1.msra.mxu0 %v977
    %3610 = vmatprep.subr.mxu0 0.0
    %3611 = vmatpush2.msra.mxu0 0.0
    %3612 = vmatprep.subr.mxu0 0.0
    %3613 = vmatpush2.msra.mxu0 0.0
    %3614 = vmatprep.subr.mxu0 0.0
    %3615 = vmatpush2.msra.mxu0 0.0
    %3616 = vmatprep.subr.mxu0 0.0
    %3617 = vmatpush2.msra.mxu0 0.0
    %3618 = vmatprep.subr.mxu0 0.0
    %3619 = vmatpush2.msra.mxu0 0.0
    %3620 = vmatprep.subr.mxu0 0.0
    %3621 = vmatpush2.msra.mxu0 0.0
    %3622 = vmatprep.subr.mxu0 0.0
    %3623 = vmatpush2.msra.mxu0 0.0
    %3624 = vmatprep.subr.mxu0 0.0
    %3625 = vmatpush2.msra.mxu0 0.0
    %3626 = vmatprep.subr.mxu0 0.0
    %3627 = vmatpush2.msra.mxu0 0.0
    %3628 = vmatprep.subr.mxu0 0.0
    %3629 = vmatpush2.msra.mxu0 0.0
    %3630 = vmatprep.subr.mxu0 0.0
    %3631 = vmatpush2.msra.mxu0 0.0
    %3632 = vmatprep.subr.mxu0 0.0
    %3633 = vmatpush2.msra.mxu0 0.0
    %3634 = vmatprep.subr.mxu0 0.0
    %3635 = vmatpush2.msra.mxu0 0.0
    %3636 = vmatprep.subr.mxu0 0.0
    %3637 = vmatpush2.msra.mxu0 0.0
    %3638 = vmatprep.subr.mxu0 0.0
    %3639 = vmatpush2.msra.mxu0 0.0
    %3640 = vmatprep.subr.mxu0 0.0
    %3641 = vmatpush2.msra.mxu0 0.0
    %3642 = vmatprep.mubr.f32.mxu0 0.0
    %3643 = vmatmul.mubr.f32.gmra.mxu0 %v3150
    %v3644 = vpop.f32.mrf.mxu0
    %v3645 = vadd.f32 %v1023, %v3644
    %v3646 = vpop.f32.mrf.mxu0
    %3647 = vdwg.mxu0
    %3648 = vmatprep.subr.mxu0 0.0
    %3649 = vmatpush1.msra.mxu0 0.0
    %3650 = vmatprep.subr.mxu0 0.0
    %3651 = vmatpush1.msra.mxu0 0.0
    %3652 = vmatprep.subr.mxu0 0.0
    %3653 = vmatpush1.msra.mxu0 0.0
    %3654 = vmatprep.subr.mxu0 0.0
    %3655 = vmatpush1.msra.mxu0 0.0
    %3656 = vmatprep.subr.mxu0 0.0
    %3657 = vmatpush1.msra.mxu0 0.0
    %3658 = vmatprep.subr.mxu0 0.0
    %3659 = vmatpush1.msra.mxu0 0.0
    %3660 = vmatprep.subr.mxu0 0.0
    %3661 = vmatpush1.msra.mxu0 0.0
    %3662 = vmatprep.subr.mxu0 0.0
    %3663 = vmatpush1.msra.mxu0 0.0
    %3664 = vmatprep.subr.mxu0 0.0
    %3665 = vmatpush1.msra.mxu0 0.0
    %3666 = vmatprep.subr.mxu0 0.0
    %3667 = vmatpush1.msra.mxu0 0.0
    %3668 = vmatprep.subr.mxu0 0.0
    %3669 = vmatpush1.msra.mxu0 0.0
    %3670 = vmatprep.subr.mxu0 0.0
    %3671 = vmatpush1.msra.mxu0 0.0
    %3672 = vmatprep.subr.mxu0 0.0
    %3673 = vmatpush1.msra.mxu0 %v996
    %3674 = vmatprep.subr.mxu0 0.0
    %3675 = vmatpush1.msra.mxu0 %v995
    %3676 = vmatprep.subr.mxu0 0.0
    %3677 = vmatpush1.msra.mxu0 %v994
    %3678 = vmatprep.subr.mxu0 0.0
    %3679 = vmatpush1.msra.mxu0 %v993
    %3680 = vmatprep.subr.mxu0 0.0
    %3681 = vmatpush2.msra.mxu0 0.0
    %3682 = vmatprep.subr.mxu0 0.0
    %3683 = vmatpush2.msra.mxu0 0.0
    %3684 = vmatprep.subr.mxu0 0.0
    %3685 = vmatpush2.msra.mxu0 0.0
    %3686 = vmatprep.subr.mxu0 0.0
    %3687 = vmatpush2.msra.mxu0 0.0
    %3688 = vmatprep.subr.mxu0 0.0
    %3689 = vmatpush2.msra.mxu0 0.0
    %3690 = vmatprep.subr.mxu0 0.0
    %3691 = vmatpush2.msra.mxu0 0.0
    %3692 = vmatprep.subr.mxu0 0.0
    %3693 = vmatpush2.msra.mxu0 0.0
    %3694 = vmatprep.subr.mxu0 0.0
    %3695 = vmatpush2.msra.mxu0 0.0
    %3696 = vmatprep.subr.mxu0 0.0
    %3697 = vmatpush2.msra.mxu0 0.0
    %3698 = vmatprep.subr.mxu0 0.0
    %3699 = vmatpush2.msra.mxu0 0.0
    %3700 = vmatprep.subr.mxu0 0.0
    %3701 = vmatpush2.msra.mxu0 0.0
    %3702 = vmatprep.subr.mxu0 0.0
    %3703 = vmatpush2.msra.mxu0 0.0
    %3704 = vmatprep.subr.mxu0 0.0
    %3705 = vmatpush2.msra.mxu0 0.0
    %3706 = vmatprep.subr.mxu0 0.0
    %3707 = vmatpush2.msra.mxu0 0.0
    %3708 = vmatprep.subr.mxu0 0.0
    %3709 = vmatpush2.msra.mxu0 0.0
    %3710 = vmatprep.subr.mxu0 0.0
    %3711 = vmatpush2.msra.mxu0 0.0
    %3712 = vmatprep.mubr.f32.mxu0 0.0
    %3713 = vmatmul.mubr.f32.gmra.mxu0 %v3223
    %v3714 = vpop.f32.mrf.mxu0
    %v3715 = vadd.f32 0.0, %v3714
    %v3716 = vpop.f32.mrf.mxu0
    %3717 = vdwg.mxu0
    %v3718 = vadd.f32 %v3645, %v3715
    %v3719 = vxor.u32 %v3295, 2147483648
    %v3720 = vmul.f32 %v3719, 1.442695
    %v3721 = vpow.pop %v3720
    %v3722 = vadd.f32 %v3721, 1.0
    %v3723 = vrcp.pop %v3722
    %v3724 = vmul.f32 1.0, %v3723
    %v3725 = vxor.u32 %v3436, 2147483648
    %v3726 = vmul.f32 %v3725, 1.442695
    %v3727 = vpow.pop %v3726
    %v3728 = vadd.f32 %v3727, 1.0
    %v3729 = vrcp.pop %v3728
    %v3730 = vmul.f32 1.0, %v3729
    %v3731 = vtanh.pop %v3577
    %v3732 = vxor.u32 %v3718, 2147483648
    %v3733 = vmul.f32 %v3732, 1.442695
    %v3734 = vpow.pop %v3733
    %v3735 = vadd.f32 %v3734, 1.0
    %v3736 = vrcp.pop %v3735
    %v3737 = vmul.f32 1.0, %v3736
    %v3738 = vmul.f32 %v3730, %v2834
    %v3739 = vmul.f32 %v3724, %v3731
    %v3740 = vadd.f32 %v3738, %v3739
    %v3741 = vtanh.pop %v3740
    %v3742 = vmul.f32 %v3737, %v3741
    %v3743 = vld [vmem:[#allocation2 + $0x18] sm:$0xff]
    %3744 = vmatprep.subr.mxu0 0.0
    %3745 = vmatpush1.msra.mxu0 0.0
    %3746 = vmatprep.subr.mxu0 0.0
    %3747 = vmatpush1.msra.mxu0 0.0
    %3748 = vmatprep.subr.mxu0 0.0
    %3749 = vmatpush1.msra.mxu0 0.0
    %3750 = vmatprep.subr.mxu0 0.0
    %3751 = vmatpush1.msra.mxu0 0.0
    %3752 = vmatprep.subr.mxu0 0.0
    %3753 = vmatpush1.msra.mxu0 0.0
    %3754 = vmatprep.subr.mxu0 0.0
    %3755 = vmatpush1.msra.mxu0 0.0
    %3756 = vmatprep.subr.mxu0 0.0
    %3757 = vmatpush1.msra.mxu0 0.0
    %3758 = vmatprep.subr.mxu0 0.0
    %3759 = vmatpush1.msra.mxu0 0.0
    %3760 = vmatprep.subr.mxu0 0.0
    %3761 = vmatpush1.msra.mxu0 0.0
    %3762 = vmatprep.subr.mxu0 0.0
    %3763 = vmatpush1.msra.mxu0 0.0
    %3764 = vmatprep.subr.mxu0 0.0
    %3765 = vmatpush1.msra.mxu0 0.0
    %3766 = vmatprep.subr.mxu0 0.0
    %3767 = vmatpush1.msra.mxu0 0.0
    %3768 = vmatprep.subr.mxu0 0.0
    %3769 = vmatpush1.msra.mxu0 %v425
    %3770 = vmatprep.subr.mxu0 0.0
    %3771 = vmatpush1.msra.mxu0 %v424
    %3772 = vmatprep.subr.mxu0 0.0
    %3773 = vmatpush1.msra.mxu0 %v423
    %3774 = vmatprep.subr.mxu0 0.0
    %3775 = vmatpush1.msra.mxu0 %v422
    %3776 = vmatprep.subr.mxu0 0.0
    %3777 = vmatpush2.msra.mxu0 0.0
    %3778 = vmatprep.subr.mxu0 0.0
    %3779 = vmatpush2.msra.mxu0 0.0
    %3780 = vmatprep.subr.mxu0 0.0
    %3781 = vmatpush2.msra.mxu0 0.0
    %3782 = vmatprep.subr.mxu0 0.0
    %3783 = vmatpush2.msra.mxu0 0.0
    %3784 = vmatprep.subr.mxu0 0.0
    %3785 = vmatpush2.msra.mxu0 0.0
    %3786 = vmatprep.subr.mxu0 0.0
    %3787 = vmatpush2.msra.mxu0 0.0
    %3788 = vmatprep.subr.mxu0 0.0
    %3789 = vmatpush2.msra.mxu0 0.0
    %3790 = vmatprep.subr.mxu0 0.0
    %3791 = vmatpush2.msra.mxu0 0.0
    %3792 = vmatprep.subr.mxu0 0.0
    %3793 = vmatpush2.msra.mxu0 0.0
    %3794 = vmatprep.subr.mxu0 0.0
    %3795 = vmatpush2.msra.mxu0 0.0
    %3796 = vmatprep.subr.mxu0 0.0
    %3797 = vmatpush2.msra.mxu0 0.0
    %3798 = vmatprep.subr.mxu0 0.0
    %3799 = vmatpush2.msra.mxu0 0.0
    %3800 = vmatprep.subr.mxu0 0.0
    %3801 = vmatpush2.msra.mxu0 0.0
    %3802 = vmatprep.subr.mxu0 0.0
    %3803 = vmatpush2.msra.mxu0 0.0
    %3804 = vmatprep.subr.mxu0 0.0
    %3805 = vmatpush2.msra.mxu0 0.0
    %3806 = vmatprep.subr.mxu0 0.0
    %3807 = vmatpush2.msra.mxu0 0.0
    %3808 = vmatprep.mubr.f32.mxu0 0.0
    %3809 = vmatmul.mubr.f32.gmra.mxu0 %v3150
    %v3810 = vpop.f32.mrf.mxu0
    %v3811 = vadd.f32 0.0, %v3810
    %v3812 = vpop.f32.mrf.mxu0
    %3813 = vdwg.mxu0
    %v3814 = vadd.f32 %v3743, %v3811
    %v3815 = vld [vmem:[#allocation3 + $0x18] sm:$0xff]
    %3816 = vmatprep.subr.mxu0 0.0
    %3817 = vmatpush1.msra.mxu0 0.0
    %3818 = vmatprep.subr.mxu0 0.0
    %3819 = vmatpush1.msra.mxu0 0.0
    %3820 = vmatprep.subr.mxu0 0.0
    %3821 = vmatpush1.msra.mxu0 0.0
    %3822 = vmatprep.subr.mxu0 0.0
    %3823 = vmatpush1.msra.mxu0 0.0
    %3824 = vmatprep.subr.mxu0 0.0
    %3825 = vmatpush1.msra.mxu0 0.0
    %3826 = vmatprep.subr.mxu0 0.0
    %3827 = vmatpush1.msra.mxu0 0.0
    %3828 = vmatprep.subr.mxu0 0.0
    %3829 = vmatpush1.msra.mxu0 0.0
    %3830 = vmatprep.subr.mxu0 0.0
    %3831 = vmatpush1.msra.mxu0 0.0
    %3832 = vmatprep.subr.mxu0 0.0
    %3833 = vmatpush1.msra.mxu0 0.0
    %3834 = vmatprep.subr.mxu0 0.0
    %3835 = vmatpush1.msra.mxu0 0.0
    %3836 = vmatprep.subr.mxu0 0.0
    %3837 = vmatpush1.msra.mxu0 0.0
    %3838 = vmatprep.subr.mxu0 0.0
    %3839 = vmatpush1.msra.mxu0 0.0
    %3840 = vmatprep.subr.mxu0 0.0
    %3841 = vmatpush1.msra.mxu0 %v429
    %3842 = vmatprep.subr.mxu0 0.0
    %3843 = vmatpush1.msra.mxu0 %v428
    %3844 = vmatprep.subr.mxu0 0.0
    %3845 = vmatpush1.msra.mxu0 %v427
    %3846 = vmatprep.subr.mxu0 0.0
    %3847 = vmatpush1.msra.mxu0 %v426
    %3848 = vmatprep.subr.mxu0 0.0
    %3849 = vmatpush2.msra.mxu0 0.0
    %3850 = vmatprep.subr.mxu0 0.0
    %3851 = vmatpush2.msra.mxu0 0.0
    %3852 = vmatprep.subr.mxu0 0.0
    %3853 = vmatpush2.msra.mxu0 0.0
    %3854 = vmatprep.subr.mxu0 0.0
    %3855 = vmatpush2.msra.mxu0 0.0
    %3856 = vmatprep.subr.mxu0 0.0
    %3857 = vmatpush2.msra.mxu0 0.0
    %3858 = vmatprep.subr.mxu0 0.0
    %3859 = vmatpush2.msra.mxu0 0.0
    %3860 = vmatprep.subr.mxu0 0.0
    %3861 = vmatpush2.msra.mxu0 0.0
    %3862 = vmatprep.subr.mxu0 0.0
    %3863 = vmatpush2.msra.mxu0 0.0
    %3864 = vmatprep.subr.mxu0 0.0
    %3865 = vmatpush2.msra.mxu0 0.0
    %3866 = vmatprep.subr.mxu0 0.0
    %3867 = vmatpush2.msra.mxu0 0.0
    %3868 = vmatprep.subr.mxu0 0.0
    %3869 = vmatpush2.msra.mxu0 0.0
    %3870 = vmatprep.subr.mxu0 0.0
    %3871 = vmatpush2.msra.mxu0 0.0
    %3872 = vmatprep.subr.mxu0 0.0
    %3873 = vmatpush2.msra.mxu0 0.0
    %3874 = vmatprep.subr.mxu0 0.0
    %3875 = vmatpush2.msra.mxu0 0.0
    %3876 = vmatprep.subr.mxu0 0.0
    %3877 = vmatpush2.msra.mxu0 0.0
    %3878 = vmatprep.subr.mxu0 0.0
    %3879 = vmatpush2.msra.mxu0 0.0
    %3880 = vmatprep.mubr.f32.mxu0 0.0
    %3881 = vmatmul.mubr.f32.gmra.mxu0 %v3150
    %v3882 = vpop.f32.mrf.mxu0
    %v3883 = vadd.f32 0.0, %v3882
    %v3884 = vpop.f32.mrf.mxu0
    %3885 = vdwg.mxu0
    %v3886 = vadd.f32 %v3815, %v3883
    %v3887 = vld [vmem:[#allocation4 + $0x18] sm:$0xff]
    %3888 = vmatprep.subr.mxu0 0.0
    %3889 = vmatpush1.msra.mxu0 0.0
    %3890 = vmatprep.subr.mxu0 0.0
    %3891 = vmatpush1.msra.mxu0 0.0
    %3892 = vmatprep.subr.mxu0 0.0
    %3893 = vmatpush1.msra.mxu0 0.0
    %3894 = vmatprep.subr.mxu0 0.0
    %3895 = vmatpush1.msra.mxu0 0.0
    %3896 = vmatprep.subr.mxu0 0.0
    %3897 = vmatpush1.msra.mxu0 0.0
    %3898 = vmatprep.subr.mxu0 0.0
    %3899 = vmatpush1.msra.mxu0 0.0
    %3900 = vmatprep.subr.mxu0 0.0
    %3901 = vmatpush1.msra.mxu0 0.0
    %3902 = vmatprep.subr.mxu0 0.0
    %3903 = vmatpush1.msra.mxu0 0.0
    %3904 = vmatprep.subr.mxu0 0.0
    %3905 = vmatpush1.msra.mxu0 0.0
    %3906 = vmatprep.subr.mxu0 0.0
    %3907 = vmatpush1.msra.mxu0 0.0
    %3908 = vmatprep.subr.mxu0 0.0
    %3909 = vmatpush1.msra.mxu0 0.0
    %3910 = vmatprep.subr.mxu0 0.0
    %3911 = vmatpush1.msra.mxu0 0.0
    %3912 = vmatprep.subr.mxu0 0.0
    %3913 = vmatpush1.msra.mxu0 %v433
    %3914 = vmatprep.subr.mxu0 0.0
    %3915 = vmatpush1.msra.mxu0 %v432
    %3916 = vmatprep.subr.mxu0 0.0
    %3917 = vmatpush1.msra.mxu0 %v431
    %3918 = vmatprep.subr.mxu0 0.0
    %3919 = vmatpush1.msra.mxu0 %v430
    %3920 = vmatprep.subr.mxu0 0.0
    %3921 = vmatpush2.msra.mxu0 0.0
    %3922 = vmatprep.subr.mxu0 0.0
    %3923 = vmatpush2.msra.mxu0 0.0
    %3924 = vmatprep.subr.mxu0 0.0
    %3925 = vmatpush2.msra.mxu0 0.0
    %3926 = vmatprep.subr.mxu0 0.0
    %3927 = vmatpush2.msra.mxu0 0.0
    %3928 = vmatprep.subr.mxu0 0.0
    %3929 = vmatpush2.msra.mxu0 0.0
    %3930 = vmatprep.subr.mxu0 0.0
    %3931 = vmatpush2.msra.mxu0 0.0
    %3932 = vmatprep.subr.mxu0 0.0
    %3933 = vmatpush2.msra.mxu0 0.0
    %3934 = vmatprep.subr.mxu0 0.0
    %3935 = vmatpush2.msra.mxu0 0.0
    %3936 = vmatprep.subr.mxu0 0.0
    %3937 = vmatpush2.msra.mxu0 0.0
    %3938 = vmatprep.subr.mxu0 0.0
    %3939 = vmatpush2.msra.mxu0 0.0
    %3940 = vmatprep.subr.mxu0 0.0
    %3941 = vmatpush2.msra.mxu0 0.0
    %3942 = vmatprep.subr.mxu0 0.0
    %3943 = vmatpush2.msra.mxu0 0.0
    %3944 = vmatprep.subr.mxu0 0.0
    %3945 = vmatpush2.msra.mxu0 0.0
    %3946 = vmatprep.subr.mxu0 0.0
    %3947 = vmatpush2.msra.mxu0 0.0
    %3948 = vmatprep.subr.mxu0 0.0
    %3949 = vmatpush2.msra.mxu0 0.0
    %3950 = vmatprep.subr.mxu0 0.0
    %3951 = vmatpush2.msra.mxu0 0.0
    %3952 = vmatprep.mubr.f32.mxu0 0.0
    %3953 = vmatmul.mubr.f32.gmra.mxu0 %v3150
    %v3954 = vpop.f32.mrf.mxu0
    %v3955 = vadd.f32 0.0, %v3954
    %v3956 = vpop.f32.mrf.mxu0
    %3957 = vdwg.mxu0
    %v3958 = vadd.f32 %v3887, %v3955
    %v3959 = vld [vmem:[#allocation5 + $0x18] sm:$0xff]
    %3960 = vmatprep.subr.mxu0 0.0
    %3961 = vmatpush1.msra.mxu0 0.0
    %3962 = vmatprep.subr.mxu0 0.0
    %3963 = vmatpush1.msra.mxu0 0.0
    %3964 = vmatprep.subr.mxu0 0.0
    %3965 = vmatpush1.msra.mxu0 0.0
    %3966 = vmatprep.subr.mxu0 0.0
    %3967 = vmatpush1.msra.mxu0 0.0
    %3968 = vmatprep.subr.mxu0 0.0
    %3969 = vmatpush1.msra.mxu0 0.0
    %3970 = vmatprep.subr.mxu0 0.0
    %3971 = vmatpush1.msra.mxu0 0.0
    %3972 = vmatprep.subr.mxu0 0.0
    %3973 = vmatpush1.msra.mxu0 0.0
    %3974 = vmatprep.subr.mxu0 0.0
    %3975 = vmatpush1.msra.mxu0 0.0
    %3976 = vmatprep.subr.mxu0 0.0
    %3977 = vmatpush1.msra.mxu0 0.0
    %3978 = vmatprep.subr.mxu0 0.0
    %3979 = vmatpush1.msra.mxu0 0.0
    %3980 = vmatprep.subr.mxu0 0.0
    %3981 = vmatpush1.msra.mxu0 0.0
    %3982 = vmatprep.subr.mxu0 0.0
    %3983 = vmatpush1.msra.mxu0 0.0
    %3984 = vmatprep.subr.mxu0 0.0
    %3985 = vmatpush1.msra.mxu0 %v437
    %3986 = vmatprep.subr.mxu0 0.0
    %3987 = vmatpush1.msra.mxu0 %v436
    %3988 = vmatprep.subr.mxu0 0.0
    %3989 = vmatpush1.msra.mxu0 %v435
    %3990 = vmatprep.subr.mxu0 0.0
    %3991 = vmatpush1.msra.mxu0 %v434
    %3992 = vmatprep.subr.mxu0 0.0
    %3993 = vmatpush2.msra.mxu0 0.0
    %3994 = vmatprep.subr.mxu0 0.0
    %3995 = vmatpush2.msra.mxu0 0.0
    %3996 = vmatprep.subr.mxu0 0.0
    %3997 = vmatpush2.msra.mxu0 0.0
    %3998 = vmatprep.subr.mxu0 0.0
    %3999 = vmatpush2.msra.mxu0 0.0
    %4000 = vmatprep.subr.mxu0 0.0
    %4001 = vmatpush2.msra.mxu0 0.0
    %4002 = vmatprep.subr.mxu0 0.0
    %4003 = vmatpush2.msra.mxu0 0.0
    %4004 = vmatprep.subr.mxu0 0.0
    %4005 = vmatpush2.msra.mxu0 0.0
    %4006 = vmatprep.subr.mxu0 0.0
    %4007 = vmatpush2.msra.mxu0 0.0
    %4008 = vmatprep.subr.mxu0 0.0
    %4009 = vmatpush2.msra.mxu0 0.0
    %4010 = vmatprep.subr.mxu0 0.0
    %4011 = vmatpush2.msra.mxu0 0.0
    %4012 = vmatprep.subr.mxu0 0.0
    %4013 = vmatpush2.msra.mxu0 0.0
    %4014 = vmatprep.subr.mxu0 0.0
    %4015 = vmatpush2.msra.mxu0 0.0
    %4016 = vmatprep.subr.mxu0 0.0
    %4017 = vmatpush2.msra.mxu0 0.0
    %4018 = vmatprep.subr.mxu0 0.0
    %4019 = vmatpush2.msra.mxu0 0.0
    %4020 = vmatprep.subr.mxu0 0.0
    %4021 = vmatpush2.msra.mxu0 0.0
    %4022 = vmatprep.subr.mxu0 0.0
    %4023 = vmatpush2.msra.mxu0 0.0
    %4024 = vmatprep.mubr.f32.mxu0 0.0
    %4025 = vmatmul.mubr.f32.gmra.mxu0 %v3150
    %v4026 = vpop.f32.mrf.mxu0
    %v4027 = vadd.f32 0.0, %v4026
    %v4028 = vpop.f32.mrf.mxu0
    %4029 = vdwg.mxu0
    %v4030 = vadd.f32 %v3959, %v4027
    %v4031 = vxor.u32 %v3814, 2147483648
    %v4032 = vmul.f32 %v4031, 1.442695
    %v4033 = vpow.pop %v4032
    %v4034 = vadd.f32 %v4033, 1.0
    %v4035 = vrcp.pop %v4034
    %v4036 = vmul.f32 1.0, %v4035
    %v4037 = vxor.u32 %v3886, 2147483648
    %v4038 = vmul.f32 %v4037, 1.442695
    %v4039 = vpow.pop %v4038
    %v4040 = vadd.f32 %v4039, 1.0
    %v4041 = vrcp.pop %v4040
    %v4042 = vmul.f32 1.0, %v4041
    %v4043 = vtanh.pop %v3958
    %v4044 = vxor.u32 %v4030, 2147483648
    %v4045 = vmul.f32 %v4044, 1.442695
    %v4046 = vpow.pop %v4045
    %v4047 = vadd.f32 %v4046, 1.0
    %v4048 = vrcp.pop %v4047
    %v4049 = vmul.f32 1.0, %v4048
    %v4050 = vmul.f32 %v4042, %v3146
    %v4051 = vmul.f32 %v4036, %v4043
    %v4052 = vadd.f32 %v4050, %v4051
    %v4053 = vtanh.pop %v4052
    %v4054 = vmul.f32 %v4049, %v4053
    %v4056 = vsel %vm590, %v4054, 0
    %4058 = vmatprep.subr.mxu0 0.0
    %4059 = vmatpush1.msra.mxu0 0.0
    %4060 = vmatprep.subr.mxu0 0.0
    %4061 = vmatpush1.msra.mxu0 0.0
    %4062 = vmatprep.subr.mxu0 0.0
    %4063 = vmatpush1.msra.mxu0 0.0
    %4064 = vmatprep.subr.mxu0 0.0
    %4065 = vmatpush1.msra.mxu0 0.0
    %4066 = vmatprep.subr.mxu0 0.0
    %4067 = vmatpush1.msra.mxu0 0.0
    %4068 = vmatprep.subr.mxu0 0.0
    %4069 = vmatpush1.msra.mxu0 0.0
    %4070 = vmatprep.subr.mxu0 0.0
    %4071 = vmatpush1.msra.mxu0 0.0
    %4072 = vmatprep.subr.mxu0 0.0
    %4073 = vmatpush1.msra.mxu0 0.0
    %4074 = vmatprep.subr.mxu0 0.0
    %4075 = vmatpush1.msra.mxu0 0.0
    %4076 = vmatprep.subr.mxu0 0.0
    %4077 = vmatpush1.msra.mxu0 0.0
    %4078 = vmatprep.subr.mxu0 0.0
    %4079 = vmatpush1.msra.mxu0 0.0
    %4080 = vmatprep.subr.mxu0 0.0
    %4081 = vmatpush1.msra.mxu0 0.0
    %4082 = vmatprep.subr.mxu0 0.0
    %4083 = vmatpush1.msra.mxu0 %v968
    %4084 = vmatprep.subr.mxu0 0.0
    %4085 = vmatpush1.msra.mxu0 %v967
    %4086 = vmatprep.subr.mxu0 0.0
    %4087 = vmatpush1.msra.mxu0 %v966
    %4088 = vmatprep.subr.mxu0 0.0
    %4089 = vmatpush1.msra.mxu0 %v965
    %4090 = vmatprep.subr.mxu0 0.0
    %4091 = vmatpush2.msra.mxu0 0.0
    %4092 = vmatprep.subr.mxu0 0.0
    %4093 = vmatpush2.msra.mxu0 0.0
    %4094 = vmatprep.subr.mxu0 0.0
    %4095 = vmatpush2.msra.mxu0 0.0
    %4096 = vmatprep.subr.mxu0 0.0
    %4097 = vmatpush2.msra.mxu0 0.0
    %4098 = vmatprep.subr.mxu0 0.0
    %4099 = vmatpush2.msra.mxu0 0.0
    %4100 = vmatprep.subr.mxu0 0.0
    %4101 = vmatpush2.msra.mxu0 0.0
    %4102 = vmatprep.subr.mxu0 0.0
    %4103 = vmatpush2.msra.mxu0 0.0
    %4104 = vmatprep.subr.mxu0 0.0
    %4105 = vmatpush2.msra.mxu0 0.0
    %4106 = vmatprep.subr.mxu0 0.0
    %4107 = vmatpush2.msra.mxu0 0.0
    %4108 = vmatprep.subr.mxu0 0.0
    %4109 = vmatpush2.msra.mxu0 0.0
    %4110 = vmatprep.subr.mxu0 0.0
    %4111 = vmatpush2.msra.mxu0 0.0
    %4112 = vmatprep.subr.mxu0 0.0
    %4113 = vmatpush2.msra.mxu0 0.0
    %4114 = vmatprep.subr.mxu0 0.0
    %4115 = vmatpush2.msra.mxu0 0.0
    %4116 = vmatprep.subr.mxu0 0.0
    %4117 = vmatpush2.msra.mxu0 0.0
    %4118 = vmatprep.subr.mxu0 0.0
    %4119 = vmatpush2.msra.mxu0 0.0
    %4120 = vmatprep.subr.mxu0 0.0
    %4121 = vmatpush2.msra.mxu0 0.0
    %4122 = vmatprep.mubr.f32.mxu0 0.0
    %4123 = vmatmul.mubr.f32.gmra.mxu0 %v4056
    %v4124 = vpop.f32.mrf.mxu0
    %v4125 = vadd.f32 %v1005, %v4124
    %v4126 = vpop.f32.mrf.mxu0
    %4127 = vdwg.mxu0
    %v4129 = vsel %vm590, %v3742, 0
    %4131 = vmatprep.subr.mxu0 0.0
    %4132 = vmatpush1.msra.mxu0 0.0
    %4133 = vmatprep.subr.mxu0 0.0
    %4134 = vmatpush1.msra.mxu0 0.0
    %4135 = vmatprep.subr.mxu0 0.0
    %4136 = vmatpush1.msra.mxu0 0.0
    %4137 = vmatprep.subr.mxu0 0.0
    %4138 = vmatpush1.msra.mxu0 0.0
    %4139 = vmatprep.subr.mxu0 0.0
    %4140 = vmatpush1.msra.mxu0 0.0
    %4141 = vmatprep.subr.mxu0 0.0
    %4142 = vmatpush1.msra.mxu0 0.0
    %4143 = vmatprep.subr.mxu0 0.0
    %4144 = vmatpush1.msra.mxu0 0.0
    %4145 = vmatprep.subr.mxu0 0.0
    %4146 = vmatpush1.msra.mxu0 0.0
    %4147 = vmatprep.subr.mxu0 0.0
    %4148 = vmatpush1.msra.mxu0 0.0
    %4149 = vmatprep.subr.mxu0 0.0
    %4150 = vmatpush1.msra.mxu0 0.0
    %4151 = vmatprep.subr.mxu0 0.0
    %4152 = vmatpush1.msra.mxu0 0.0
    %4153 = vmatprep.subr.mxu0 0.0
    %4154 = vmatpush1.msra.mxu0 0.0
    %4155 = vmatprep.subr.mxu0 0.0
    %4156 = vmatpush1.msra.mxu0 %v984
    %4157 = vmatprep.subr.mxu0 0.0
    %4158 = vmatpush1.msra.mxu0 %v983
    %4159 = vmatprep.subr.mxu0 0.0
    %4160 = vmatpush1.msra.mxu0 %v982
    %4161 = vmatprep.subr.mxu0 0.0
    %4162 = vmatpush1.msra.mxu0 %v981
    %4163 = vmatprep.subr.mxu0 0.0
    %4164 = vmatpush2.msra.mxu0 0.0
    %4165 = vmatprep.subr.mxu0 0.0
    %4166 = vmatpush2.msra.mxu0 0.0
    %4167 = vmatprep.subr.mxu0 0.0
    %4168 = vmatpush2.msra.mxu0 0.0
    %4169 = vmatprep.subr.mxu0 0.0
    %4170 = vmatpush2.msra.mxu0 0.0
    %4171 = vmatprep.subr.mxu0 0.0
    %4172 = vmatpush2.msra.mxu0 0.0
    %4173 = vmatprep.subr.mxu0 0.0
    %4174 = vmatpush2.msra.mxu0 0.0
    %4175 = vmatprep.subr.mxu0 0.0
    %4176 = vmatpush2.msra.mxu0 0.0
    %4177 = vmatprep.subr.mxu0 0.0
    %4178 = vmatpush2.msra.mxu0 0.0
    %4179 = vmatprep.subr.mxu0 0.0
    %4180 = vmatpush2.msra.mxu0 0.0
    %4181 = vmatprep.subr.mxu0 0.0
    %4182 = vmatpush2.msra.mxu0 0.0
    %4183 = vmatprep.subr.mxu0 0.0
    %4184 = vmatpush2.msra.mxu0 0.0
    %4185 = vmatprep.subr.mxu0 0.0
    %4186 = vmatpush2.msra.mxu0 0.0
    %4187 = vmatprep.subr.mxu0 0.0
    %4188 = vmatpush2.msra.mxu0 0.0
    %4189 = vmatprep.subr.mxu0 0.0
    %4190 = vmatpush2.msra.mxu0 0.0
    %4191 = vmatprep.subr.mxu0 0.0
    %4192 = vmatpush2.msra.mxu0 0.0
    %4193 = vmatprep.subr.mxu0 0.0
    %4194 = vmatpush2.msra.mxu0 0.0
    %4195 = vmatprep.mubr.f32.mxu0 0.0
    %4196 = vmatmul.mubr.f32.gmra.mxu0 %v4129
    %v4197 = vpop.f32.mrf.mxu0
    %v4198 = vadd.f32 0.0, %v4197
    %v4199 = vpop.f32.mrf.mxu0
    %4200 = vdwg.mxu0
    %v4201 = vadd.f32 %v4125, %v4198
    %4202 = vmatprep.subr.mxu0 0.0
    %4203 = vmatpush1.msra.mxu0 0.0
    %4204 = vmatprep.subr.mxu0 0.0
    %4205 = vmatpush1.msra.mxu0 0.0
    %4206 = vmatprep.subr.mxu0 0.0
    %4207 = vmatpush1.msra.mxu0 0.0
    %4208 = vmatprep.subr.mxu0 0.0
    %4209 = vmatpush1.msra.mxu0 0.0
    %4210 = vmatprep.subr.mxu0 0.0
    %4211 = vmatpush1.msra.mxu0 0.0
    %4212 = vmatprep.subr.mxu0 0.0
    %4213 = vmatpush1.msra.mxu0 0.0
    %4214 = vmatprep.subr.mxu0 0.0
    %4215 = vmatpush1.msra.mxu0 0.0
    %4216 = vmatprep.subr.mxu0 0.0
    %4217 = vmatpush1.msra.mxu0 0.0
    %4218 = vmatprep.subr.mxu0 0.0
    %4219 = vmatpush1.msra.mxu0 0.0
    %4220 = vmatprep.subr.mxu0 0.0
    %4221 = vmatpush1.msra.mxu0 0.0
    %4222 = vmatprep.subr.mxu0 0.0
    %4223 = vmatpush1.msra.mxu0 0.0
    %4224 = vmatprep.subr.mxu0 0.0
    %4225 = vmatpush1.msra.mxu0 0.0
    %4226 = vmatprep.subr.mxu0 0.0
    %4227 = vmatpush1.msra.mxu0 %v972
    %4228 = vmatprep.subr.mxu0 0.0
    %4229 = vmatpush1.msra.mxu0 %v971
    %4230 = vmatprep.subr.mxu0 0.0
    %4231 = vmatpush1.msra.mxu0 %v970
    %4232 = vmatprep.subr.mxu0 0.0
    %4233 = vmatpush1.msra.mxu0 %v969
    %4234 = vmatprep.subr.mxu0 0.0
    %4235 = vmatpush2.msra.mxu0 0.0
    %4236 = vmatprep.subr.mxu0 0.0
    %4237 = vmatpush2.msra.mxu0 0.0
    %4238 = vmatprep.subr.mxu0 0.0
    %4239 = vmatpush2.msra.mxu0 0.0
    %4240 = vmatprep.subr.mxu0 0.0
    %4241 = vmatpush2.msra.mxu0 0.0
    %4242 = vmatprep.subr.mxu0 0.0
    %4243 = vmatpush2.msra.mxu0 0.0
    %4244 = vmatprep.subr.mxu0 0.0
    %4245 = vmatpush2.msra.mxu0 0.0
    %4246 = vmatprep.subr.mxu0 0.0
    %4247 = vmatpush2.msra.mxu0 0.0
    %4248 = vmatprep.subr.mxu0 0.0
    %4249 = vmatpush2.msra.mxu0 0.0
    %4250 = vmatprep.subr.mxu0 0.0
    %4251 = vmatpush2.msra.mxu0 0.0
    %4252 = vmatprep.subr.mxu0 0.0
    %4253 = vmatpush2.msra.mxu0 0.0
    %4254 = vmatprep.subr.mxu0 0.0
    %4255 = vmatpush2.msra.mxu0 0.0
    %4256 = vmatprep.subr.mxu0 0.0
    %4257 = vmatpush2.msra.mxu0 0.0
    %4258 = vmatprep.subr.mxu0 0.0
    %4259 = vmatpush2.msra.mxu0 0.0
    %4260 = vmatprep.subr.mxu0 0.0
    %4261 = vmatpush2.msra.mxu0 0.0
    %4262 = vmatprep.subr.mxu0 0.0
    %4263 = vmatpush2.msra.mxu0 0.0
    %4264 = vmatprep.subr.mxu0 0.0
    %4265 = vmatpush2.msra.mxu0 0.0
    %4266 = vmatprep.mubr.f32.mxu0 0.0
    %4267 = vmatmul.mubr.f32.gmra.mxu0 %v4056
    %v4268 = vpop.f32.mrf.mxu0
    %v4269 = vadd.f32 %v1011, %v4268
    %v4270 = vpop.f32.mrf.mxu0
    %4271 = vdwg.mxu0
    %4272 = vmatprep.subr.mxu0 0.0
    %4273 = vmatpush1.msra.mxu0 0.0
    %4274 = vmatprep.subr.mxu0 0.0
    %4275 = vmatpush1.msra.mxu0 0.0
    %4276 = vmatprep.subr.mxu0 0.0
    %4277 = vmatpush1.msra.mxu0 0.0
    %4278 = vmatprep.subr.mxu0 0.0
    %4279 = vmatpush1.msra.mxu0 0.0
    %4280 = vmatprep.subr.mxu0 0.0
    %4281 = vmatpush1.msra.mxu0 0.0
    %4282 = vmatprep.subr.mxu0 0.0
    %4283 = vmatpush1.msra.mxu0 0.0
    %4284 = vmatprep.subr.mxu0 0.0
    %4285 = vmatpush1.msra.mxu0 0.0
    %4286 = vmatprep.subr.mxu0 0.0
    %4287 = vmatpush1.msra.mxu0 0.0
    %4288 = vmatprep.subr.mxu0 0.0
    %4289 = vmatpush1.msra.mxu0 0.0
    %4290 = vmatprep.subr.mxu0 0.0
    %4291 = vmatpush1.msra.mxu0 0.0
    %4292 = vmatprep.subr.mxu0 0.0
    %4293 = vmatpush1.msra.mxu0 0.0
    %4294 = vmatprep.subr.mxu0 0.0
    %4295 = vmatpush1.msra.mxu0 0.0
    %4296 = vmatprep.subr.mxu0 0.0
    %4297 = vmatpush1.msra.mxu0 %v988
    %4298 = vmatprep.subr.mxu0 0.0
    %4299 = vmatpush1.msra.mxu0 %v987
    %4300 = vmatprep.subr.mxu0 0.0
    %4301 = vmatpush1.msra.mxu0 %v986
    %4302 = vmatprep.subr.mxu0 0.0
    %4303 = vmatpush1.msra.mxu0 %v985
    %4304 = vmatprep.subr.mxu0 0.0
    %4305 = vmatpush2.msra.mxu0 0.0
    %4306 = vmatprep.subr.mxu0 0.0
    %4307 = vmatpush2.msra.mxu0 0.0
    %4308 = vmatprep.subr.mxu0 0.0
    %4309 = vmatpush2.msra.mxu0 0.0
    %4310 = vmatprep.subr.mxu0 0.0
    %4311 = vmatpush2.msra.mxu0 0.0
    %4312 = vmatprep.subr.mxu0 0.0
    %4313 = vmatpush2.msra.mxu0 0.0
    %4314 = vmatprep.subr.mxu0 0.0
    %4315 = vmatpush2.msra.mxu0 0.0
    %4316 = vmatprep.subr.mxu0 0.0
    %4317 = vmatpush2.msra.mxu0 0.0
    %4318 = vmatprep.subr.mxu0 0.0
    %4319 = vmatpush2.msra.mxu0 0.0
    %4320 = vmatprep.subr.mxu0 0.0
    %4321 = vmatpush2.msra.mxu0 0.0
    %4322 = vmatprep.subr.mxu0 0.0
    %4323 = vmatpush2.msra.mxu0 0.0
    %4324 = vmatprep.subr.mxu0 0.0
    %4325 = vmatpush2.msra.mxu0 0.0
    %4326 = vmatprep.subr.mxu0 0.0
    %4327 = vmatpush2.msra.mxu0 0.0
    %4328 = vmatprep.subr.mxu0 0.0
    %4329 = vmatpush2.msra.mxu0 0.0
    %4330 = vmatprep.subr.mxu0 0.0
    %4331 = vmatpush2.msra.mxu0 0.0
    %4332 = vmatprep.subr.mxu0 0.0
    %4333 = vmatpush2.msra.mxu0 0.0
    %4334 = vmatprep.subr.mxu0 0.0
    %4335 = vmatpush2.msra.mxu0 0.0
    %4336 = vmatprep.mubr.f32.mxu0 0.0
    %4337 = vmatmul.mubr.f32.gmra.mxu0 %v4129
    %v4338 = vpop.f32.mrf.mxu0
    %v4339 = vadd.f32 0.0, %v4338
    %v4340 = vpop.f32.mrf.mxu0
    %4341 = vdwg.mxu0
    %v4342 = vadd.f32 %v4269, %v4339
    %4343 = vmatprep.subr.mxu0 0.0
    %4344 = vmatpush1.msra.mxu0 0.0
    %4345 = vmatprep.subr.mxu0 0.0
    %4346 = vmatpush1.msra.mxu0 0.0
    %4347 = vmatprep.subr.mxu0 0.0
    %4348 = vmatpush1.msra.mxu0 0.0
    %4349 = vmatprep.subr.mxu0 0.0
    %4350 = vmatpush1.msra.mxu0 0.0
    %4351 = vmatprep.subr.mxu0 0.0
    %4352 = vmatpush1.msra.mxu0 0.0
    %4353 = vmatprep.subr.mxu0 0.0
    %4354 = vmatpush1.msra.mxu0 0.0
    %4355 = vmatprep.subr.mxu0 0.0
    %4356 = vmatpush1.msra.mxu0 0.0
    %4357 = vmatprep.subr.mxu0 0.0
    %4358 = vmatpush1.msra.mxu0 0.0
    %4359 = vmatprep.subr.mxu0 0.0
    %4360 = vmatpush1.msra.mxu0 0.0
    %4361 = vmatprep.subr.mxu0 0.0
    %4362 = vmatpush1.msra.mxu0 0.0
    %4363 = vmatprep.subr.mxu0 0.0
    %4364 = vmatpush1.msra.mxu0 0.0
    %4365 = vmatprep.subr.mxu0 0.0
    %4366 = vmatpush1.msra.mxu0 0.0
    %4367 = vmatprep.subr.mxu0 0.0
    %4368 = vmatpush1.msra.mxu0 %v976
    %4369 = vmatprep.subr.mxu0 0.0
    %4370 = vmatpush1.msra.mxu0 %v975
    %4371 = vmatprep.subr.mxu0 0.0
    %4372 = vmatpush1.msra.mxu0 %v974
    %4373 = vmatprep.subr.mxu0 0.0
    %4374 = vmatpush1.msra.mxu0 %v973
    %4375 = vmatprep.subr.mxu0 0.0
    %4376 = vmatpush2.msra.mxu0 0.0
    %4377 = vmatprep.subr.mxu0 0.0
    %4378 = vmatpush2.msra.mxu0 0.0
    %4379 = vmatprep.subr.mxu0 0.0
    %4380 = vmatpush2.msra.mxu0 0.0
    %4381 = vmatprep.subr.mxu0 0.0
    %4382 = vmatpush2.msra.mxu0 0.0
    %4383 = vmatprep.subr.mxu0 0.0
    %4384 = vmatpush2.msra.mxu0 0.0
    %4385 = vmatprep.subr.mxu0 0.0
    %4386 = vmatpush2.msra.mxu0 0.0
    %4387 = vmatprep.subr.mxu0 0.0
    %4388 = vmatpush2.msra.mxu0 0.0
    %4389 = vmatprep.subr.mxu0 0.0
    %4390 = vmatpush2.msra.mxu0 0.0
    %4391 = vmatprep.subr.mxu0 0.0
    %4392 = vmatpush2.msra.mxu0 0.0
    %4393 = vmatprep.subr.mxu0 0.0
    %4394 = vmatpush2.msra.mxu0 0.0
    %4395 = vmatprep.subr.mxu0 0.0
    %4396 = vmatpush2.msra.mxu0 0.0
    %4397 = vmatprep.subr.mxu0 0.0
    %4398 = vmatpush2.msra.mxu0 0.0
    %4399 = vmatprep.subr.mxu0 0.0
    %4400 = vmatpush2.msra.mxu0 0.0
    %4401 = vmatprep.subr.mxu0 0.0
    %4402 = vmatpush2.msra.mxu0 0.0
    %4403 = vmatprep.subr.mxu0 0.0
    %4404 = vmatpush2.msra.mxu0 0.0
    %4405 = vmatprep.subr.mxu0 0.0
    %4406 = vmatpush2.msra.mxu0 0.0
    %4407 = vmatprep.mubr.f32.mxu0 0.0
    %4408 = vmatmul.mubr.f32.gmra.mxu0 %v4056
    %v4409 = vpop.f32.mrf.mxu0
    %v4410 = vadd.f32 %v1017, %v4409
    %v4411 = vpop.f32.mrf.mxu0
    %4412 = vdwg.mxu0
    %4413 = vmatprep.subr.mxu0 0.0
    %4414 = vmatpush1.msra.mxu0 0.0
    %4415 = vmatprep.subr.mxu0 0.0
    %4416 = vmatpush1.msra.mxu0 0.0
    %4417 = vmatprep.subr.mxu0 0.0
    %4418 = vmatpush1.msra.mxu0 0.0
    %4419 = vmatprep.subr.mxu0 0.0
    %4420 = vmatpush1.msra.mxu0 0.0
    %4421 = vmatprep.subr.mxu0 0.0
    %4422 = vmatpush1.msra.mxu0 0.0
    %4423 = vmatprep.subr.mxu0 0.0
    %4424 = vmatpush1.msra.mxu0 0.0
    %4425 = vmatprep.subr.mxu0 0.0
    %4426 = vmatpush1.msra.mxu0 0.0
    %4427 = vmatprep.subr.mxu0 0.0
    %4428 = vmatpush1.msra.mxu0 0.0
    %4429 = vmatprep.subr.mxu0 0.0
    %4430 = vmatpush1.msra.mxu0 0.0
    %4431 = vmatprep.subr.mxu0 0.0
    %4432 = vmatpush1.msra.mxu0 0.0
    %4433 = vmatprep.subr.mxu0 0.0
    %4434 = vmatpush1.msra.mxu0 0.0
    %4435 = vmatprep.subr.mxu0 0.0
    %4436 = vmatpush1.msra.mxu0 0.0
    %4437 = vmatprep.subr.mxu0 0.0
    %4438 = vmatpush1.msra.mxu0 %v992
    %4439 = vmatprep.subr.mxu0 0.0
    %4440 = vmatpush1.msra.mxu0 %v991
    %4441 = vmatprep.subr.mxu0 0.0
    %4442 = vmatpush1.msra.mxu0 %v990
    %4443 = vmatprep.subr.mxu0 0.0
    %4444 = vmatpush1.msra.mxu0 %v989
    %4445 = vmatprep.subr.mxu0 0.0
    %4446 = vmatpush2.msra.mxu0 0.0
    %4447 = vmatprep.subr.mxu0 0.0
    %4448 = vmatpush2.msra.mxu0 0.0
    %4449 = vmatprep.subr.mxu0 0.0
    %4450 = vmatpush2.msra.mxu0 0.0
    %4451 = vmatprep.subr.mxu0 0.0
    %4452 = vmatpush2.msra.mxu0 0.0
    %4453 = vmatprep.subr.mxu0 0.0
    %4454 = vmatpush2.msra.mxu0 0.0
    %4455 = vmatprep.subr.mxu0 0.0
    %4456 = vmatpush2.msra.mxu0 0.0
    %4457 = vmatprep.subr.mxu0 0.0
    %4458 = vmatpush2.msra.mxu0 0.0
    %4459 = vmatprep.subr.mxu0 0.0
    %4460 = vmatpush2.msra.mxu0 0.0
    %4461 = vmatprep.subr.mxu0 0.0
    %4462 = vmatpush2.msra.mxu0 0.0
    %4463 = vmatprep.subr.mxu0 0.0
    %4464 = vmatpush2.msra.mxu0 0.0
    %4465 = vmatprep.subr.mxu0 0.0
    %4466 = vmatpush2.msra.mxu0 0.0
    %4467 = vmatprep.subr.mxu0 0.0
    %4468 = vmatpush2.msra.mxu0 0.0
    %4469 = vmatprep.subr.mxu0 0.0
    %4470 = vmatpush2.msra.mxu0 0.0
    %4471 = vmatprep.subr.mxu0 0.0
    %4472 = vmatpush2.msra.mxu0 0.0
    %4473 = vmatprep.subr.mxu0 0.0
    %4474 = vmatpush2.msra.mxu0 0.0
    %4475 = vmatprep.subr.mxu0 0.0
    %4476 = vmatpush2.msra.mxu0 0.0
    %4477 = vmatprep.mubr.f32.mxu0 0.0
    %4478 = vmatmul.mubr.f32.gmra.mxu0 %v4129
    %v4479 = vpop.f32.mrf.mxu0
    %v4480 = vadd.f32 0.0, %v4479
    %v4481 = vpop.f32.mrf.mxu0
    %4482 = vdwg.mxu0
    %v4483 = vadd.f32 %v4410, %v4480
    %4484 = vmatprep.subr.mxu0 0.0
    %4485 = vmatpush1.msra.mxu0 0.0
    %4486 = vmatprep.subr.mxu0 0.0
    %4487 = vmatpush1.msra.mxu0 0.0
    %4488 = vmatprep.subr.mxu0 0.0
    %4489 = vmatpush1.msra.mxu0 0.0
    %4490 = vmatprep.subr.mxu0 0.0
    %4491 = vmatpush1.msra.mxu0 0.0
    %4492 = vmatprep.subr.mxu0 0.0
    %4493 = vmatpush1.msra.mxu0 0.0
    %4494 = vmatprep.subr.mxu0 0.0
    %4495 = vmatpush1.msra.mxu0 0.0
    %4496 = vmatprep.subr.mxu0 0.0
    %4497 = vmatpush1.msra.mxu0 0.0
    %4498 = vmatprep.subr.mxu0 0.0
    %4499 = vmatpush1.msra.mxu0 0.0
    %4500 = vmatprep.subr.mxu0 0.0
    %4501 = vmatpush1.msra.mxu0 0.0
    %4502 = vmatprep.subr.mxu0 0.0
    %4503 = vmatpush1.msra.mxu0 0.0
    %4504 = vmatprep.subr.mxu0 0.0
    %4505 = vmatpush1.msra.mxu0 0.0
    %4506 = vmatprep.subr.mxu0 0.0
    %4507 = vmatpush1.msra.mxu0 0.0
    %4508 = vmatprep.subr.mxu0 0.0
    %4509 = vmatpush1.msra.mxu0 %v980
    %4510 = vmatprep.subr.mxu0 0.0
    %4511 = vmatpush1.msra.mxu0 %v979
    %4512 = vmatprep.subr.mxu0 0.0
    %4513 = vmatpush1.msra.mxu0 %v978
    %4514 = vmatprep.subr.mxu0 0.0
    %4515 = vmatpush1.msra.mxu0 %v977
    %4516 = vmatprep.subr.mxu0 0.0
    %4517 = vmatpush2.msra.mxu0 0.0
    %4518 = vmatprep.subr.mxu0 0.0
    %4519 = vmatpush2.msra.mxu0 0.0
    %4520 = vmatprep.subr.mxu0 0.0
    %4521 = vmatpush2.msra.mxu0 0.0
    %4522 = vmatprep.subr.mxu0 0.0
    %4523 = vmatpush2.msra.mxu0 0.0
    %4524 = vmatprep.subr.mxu0 0.0
    %4525 = vmatpush2.msra.mxu0 0.0
    %4526 = vmatprep.subr.mxu0 0.0
    %4527 = vmatpush2.msra.mxu0 0.0
    %4528 = vmatprep.subr.mxu0 0.0
    %4529 = vmatpush2.msra.mxu0 0.0
    %4530 = vmatprep.subr.mxu0 0.0
    %4531 = vmatpush2.msra.mxu0 0.0
    %4532 = vmatprep.subr.mxu0 0.0
    %4533 = vmatpush2.msra.mxu0 0.0
    %4534 = vmatprep.subr.mxu0 0.0
    %4535 = vmatpush2.msra.mxu0 0.0
    %4536 = vmatprep.subr.mxu0 0.0
    %4537 = vmatpush2.msra.mxu0 0.0
    %4538 = vmatprep.subr.mxu0 0.0
    %4539 = vmatpush2.msra.mxu0 0.0
    %4540 = vmatprep.subr.mxu0 0.0
    %4541 = vmatpush2.msra.mxu0 0.0
    %4542 = vmatprep.subr.mxu0 0.0
    %4543 = vmatpush2.msra.mxu0 0.0
    %4544 = vmatprep.subr.mxu0 0.0
    %4545 = vmatpush2.msra.mxu0 0.0
    %4546 = vmatprep.subr.mxu0 0.0
    %4547 = vmatpush2.msra.mxu0 0.0
    %4548 = vmatprep.mubr.f32.mxu0 0.0
    %4549 = vmatmul.mubr.f32.gmra.mxu0 %v4056
    %v4550 = vpop.f32.mrf.mxu0
    %v4551 = vadd.f32 %v1023, %v4550
    %v4552 = vpop.f32.mrf.mxu0
    %4553 = vdwg.mxu0
    %4554 = vmatprep.subr.mxu0 0.0
    %4555 = vmatpush1.msra.mxu0 0.0
    %4556 = vmatprep.subr.mxu0 0.0
    %4557 = vmatpush1.msra.mxu0 0.0
    %4558 = vmatprep.subr.mxu0 0.0
    %4559 = vmatpush1.msra.mxu0 0.0
    %4560 = vmatprep.subr.mxu0 0.0
    %4561 = vmatpush1.msra.mxu0 0.0
    %4562 = vmatprep.subr.mxu0 0.0
    %4563 = vmatpush1.msra.mxu0 0.0
    %4564 = vmatprep.subr.mxu0 0.0
    %4565 = vmatpush1.msra.mxu0 0.0
    %4566 = vmatprep.subr.mxu0 0.0
    %4567 = vmatpush1.msra.mxu0 0.0
    %4568 = vmatprep.subr.mxu0 0.0
    %4569 = vmatpush1.msra.mxu0 0.0
    %4570 = vmatprep.subr.mxu0 0.0
    %4571 = vmatpush1.msra.mxu0 0.0
    %4572 = vmatprep.subr.mxu0 0.0
    %4573 = vmatpush1.msra.mxu0 0.0
    %4574 = vmatprep.subr.mxu0 0.0
    %4575 = vmatpush1.msra.mxu0 0.0
    %4576 = vmatprep.subr.mxu0 0.0
    %4577 = vmatpush1.msra.mxu0 0.0
    %4578 = vmatprep.subr.mxu0 0.0
    %4579 = vmatpush1.msra.mxu0 %v996
    %4580 = vmatprep.subr.mxu0 0.0
    %4581 = vmatpush1.msra.mxu0 %v995
    %4582 = vmatprep.subr.mxu0 0.0
    %4583 = vmatpush1.msra.mxu0 %v994
    %4584 = vmatprep.subr.mxu0 0.0
    %4585 = vmatpush1.msra.mxu0 %v993
    %4586 = vmatprep.subr.mxu0 0.0
    %4587 = vmatpush2.msra.mxu0 0.0
    %4588 = vmatprep.subr.mxu0 0.0
    %4589 = vmatpush2.msra.mxu0 0.0
    %4590 = vmatprep.subr.mxu0 0.0
    %4591 = vmatpush2.msra.mxu0 0.0
    %4592 = vmatprep.subr.mxu0 0.0
    %4593 = vmatpush2.msra.mxu0 0.0
    %4594 = vmatprep.subr.mxu0 0.0
    %4595 = vmatpush2.msra.mxu0 0.0
    %4596 = vmatprep.subr.mxu0 0.0
    %4597 = vmatpush2.msra.mxu0 0.0
    %4598 = vmatprep.subr.mxu0 0.0
    %4599 = vmatpush2.msra.mxu0 0.0
    %4600 = vmatprep.subr.mxu0 0.0
    %4601 = vmatpush2.msra.mxu0 0.0
    %4602 = vmatprep.subr.mxu0 0.0
    %4603 = vmatpush2.msra.mxu0 0.0
    %4604 = vmatprep.subr.mxu0 0.0
    %4605 = vmatpush2.msra.mxu0 0.0
    %4606 = vmatprep.subr.mxu0 0.0
    %4607 = vmatpush2.msra.mxu0 0.0
    %4608 = vmatprep.subr.mxu0 0.0
    %4609 = vmatpush2.msra.mxu0 0.0
    %4610 = vmatprep.subr.mxu0 0.0
    %4611 = vmatpush2.msra.mxu0 0.0
    %4612 = vmatprep.subr.mxu0 0.0
    %4613 = vmatpush2.msra.mxu0 0.0
    %4614 = vmatprep.subr.mxu0 0.0
    %4615 = vmatpush2.msra.mxu0 0.0
    %4616 = vmatprep.subr.mxu0 0.0
    %4617 = vmatpush2.msra.mxu0 0.0
    %4618 = vmatprep.mubr.f32.mxu0 0.0
    %4619 = vmatmul.mubr.f32.gmra.mxu0 %v4129
    %v4620 = vpop.f32.mrf.mxu0
    %v4621 = vadd.f32 0.0, %v4620
    %v4622 = vpop.f32.mrf.mxu0
    %4623 = vdwg.mxu0
    %v4624 = vadd.f32 %v4551, %v4621
    %v4625 = vxor.u32 %v4201, 2147483648
    %v4626 = vmul.f32 %v4625, 1.442695
    %v4627 = vpow.pop %v4626
    %v4628 = vadd.f32 %v4627, 1.0
    %v4629 = vrcp.pop %v4628
    %v4630 = vmul.f32 1.0, %v4629
    %v4631 = vxor.u32 %v4342, 2147483648
    %v4632 = vmul.f32 %v4631, 1.442695
    %v4633 = vpow.pop %v4632
    %v4634 = vadd.f32 %v4633, 1.0
    %v4635 = vrcp.pop %v4634
    %v4636 = vmul.f32 1.0, %v4635
    %v4637 = vtanh.pop %v4483
    %v4638 = vxor.u32 %v4624, 2147483648
    %v4639 = vmul.f32 %v4638, 1.442695
    %v4640 = vpow.pop %v4639
    %v4641 = vadd.f32 %v4640, 1.0
    %v4642 = vrcp.pop %v4641
    %v4643 = vmul.f32 1.0, %v4642
    %v4644 = vmul.f32 %v4636, %v3740
    %v4645 = vmul.f32 %v4630, %v4637
    %v4646 = vadd.f32 %v4644, %v4645
    %v4647 = vtanh.pop %v4646
    %v4648 = vmul.f32 %v4643, %v4647
    %v4649 = vld [vmem:[#allocation2 + $0x20] sm:$0xff]
    %4650 = vmatprep.subr.mxu0 0.0
    %4651 = vmatpush1.msra.mxu0 0.0
    %4652 = vmatprep.subr.mxu0 0.0
    %4653 = vmatpush1.msra.mxu0 0.0
    %4654 = vmatprep.subr.mxu0 0.0
    %4655 = vmatpush1.msra.mxu0 0.0
    %4656 = vmatprep.subr.mxu0 0.0
    %4657 = vmatpush1.msra.mxu0 0.0
    %4658 = vmatprep.subr.mxu0 0.0
    %4659 = vmatpush1.msra.mxu0 0.0
    %4660 = vmatprep.subr.mxu0 0.0
    %4661 = vmatpush1.msra.mxu0 0.0
    %4662 = vmatprep.subr.mxu0 0.0
    %4663 = vmatpush1.msra.mxu0 0.0
    %4664 = vmatprep.subr.mxu0 0.0
    %4665 = vmatpush1.msra.mxu0 0.0
    %4666 = vmatprep.subr.mxu0 0.0
    %4667 = vmatpush1.msra.mxu0 0.0
    %4668 = vmatprep.subr.mxu0 0.0
    %4669 = vmatpush1.msra.mxu0 0.0
    %4670 = vmatprep.subr.mxu0 0.0
    %4671 = vmatpush1.msra.mxu0 0.0
    %4672 = vmatprep.subr.mxu0 0.0
    %4673 = vmatpush1.msra.mxu0 0.0
    %4674 = vmatprep.subr.mxu0 0.0
    %4675 = vmatpush1.msra.mxu0 %v425
    %4676 = vmatprep.subr.mxu0 0.0
    %4677 = vmatpush1.msra.mxu0 %v424
    %4678 = vmatprep.subr.mxu0 0.0
    %4679 = vmatpush1.msra.mxu0 %v423
    %4680 = vmatprep.subr.mxu0 0.0
    %4681 = vmatpush1.msra.mxu0 %v422
    %4682 = vmatprep.subr.mxu0 0.0
    %4683 = vmatpush2.msra.mxu0 0.0
    %4684 = vmatprep.subr.mxu0 0.0
    %4685 = vmatpush2.msra.mxu0 0.0
    %4686 = vmatprep.subr.mxu0 0.0
    %4687 = vmatpush2.msra.mxu0 0.0
    %4688 = vmatprep.subr.mxu0 0.0
    %4689 = vmatpush2.msra.mxu0 0.0
    %4690 = vmatprep.subr.mxu0 0.0
    %4691 = vmatpush2.msra.mxu0 0.0
    %4692 = vmatprep.subr.mxu0 0.0
    %4693 = vmatpush2.msra.mxu0 0.0
    %4694 = vmatprep.subr.mxu0 0.0
    %4695 = vmatpush2.msra.mxu0 0.0
    %4696 = vmatprep.subr.mxu0 0.0
    %4697 = vmatpush2.msra.mxu0 0.0
    %4698 = vmatprep.subr.mxu0 0.0
    %4699 = vmatpush2.msra.mxu0 0.0
    %4700 = vmatprep.subr.mxu0 0.0
    %4701 = vmatpush2.msra.mxu0 0.0
    %4702 = vmatprep.subr.mxu0 0.0
    %4703 = vmatpush2.msra.mxu0 0.0
    %4704 = vmatprep.subr.mxu0 0.0
    %4705 = vmatpush2.msra.mxu0 0.0
    %4706 = vmatprep.subr.mxu0 0.0
    %4707 = vmatpush2.msra.mxu0 0.0
    %4708 = vmatprep.subr.mxu0 0.0
    %4709 = vmatpush2.msra.mxu0 0.0
    %4710 = vmatprep.subr.mxu0 0.0
    %4711 = vmatpush2.msra.mxu0 0.0
    %4712 = vmatprep.subr.mxu0 0.0
    %4713 = vmatpush2.msra.mxu0 0.0
    %4714 = vmatprep.mubr.f32.mxu0 0.0
    %4715 = vmatmul.mubr.f32.gmra.mxu0 %v4056
    %v4716 = vpop.f32.mrf.mxu0
    %v4717 = vadd.f32 0.0, %v4716
    %v4718 = vpop.f32.mrf.mxu0
    %4719 = vdwg.mxu0
    %v4720 = vadd.f32 %v4649, %v4717
    %v4721 = vld [vmem:[#allocation3 + $0x20] sm:$0xff]
    %4722 = vmatprep.subr.mxu0 0.0
    %4723 = vmatpush1.msra.mxu0 0.0
    %4724 = vmatprep.subr.mxu0 0.0
    %4725 = vmatpush1.msra.mxu0 0.0
    %4726 = vmatprep.subr.mxu0 0.0
    %4727 = vmatpush1.msra.mxu0 0.0
    %4728 = vmatprep.subr.mxu0 0.0
    %4729 = vmatpush1.msra.mxu0 0.0
    %4730 = vmatprep.subr.mxu0 0.0
    %4731 = vmatpush1.msra.mxu0 0.0
    %4732 = vmatprep.subr.mxu0 0.0
    %4733 = vmatpush1.msra.mxu0 0.0
    %4734 = vmatprep.subr.mxu0 0.0
    %4735 = vmatpush1.msra.mxu0 0.0
    %4736 = vmatprep.subr.mxu0 0.0
    %4737 = vmatpush1.msra.mxu0 0.0
    %4738 = vmatprep.subr.mxu0 0.0
    %4739 = vmatpush1.msra.mxu0 0.0
    %4740 = vmatprep.subr.mxu0 0.0
    %4741 = vmatpush1.msra.mxu0 0.0
    %4742 = vmatprep.subr.mxu0 0.0
    %4743 = vmatpush1.msra.mxu0 0.0
    %4744 = vmatprep.subr.mxu0 0.0
    %4745 = vmatpush1.msra.mxu0 0.0
    %4746 = vmatprep.subr.mxu0 0.0
    %4747 = vmatpush1.msra.mxu0 %v429
    %4748 = vmatprep.subr.mxu0 0.0
    %4749 = vmatpush1.msra.mxu0 %v428
    %4750 = vmatprep.subr.mxu0 0.0
    %4751 = vmatpush1.msra.mxu0 %v427
    %4752 = vmatprep.subr.mxu0 0.0
    %4753 = vmatpush1.msra.mxu0 %v426
    %4754 = vmatprep.subr.mxu0 0.0
    %4755 = vmatpush2.msra.mxu0 0.0
    %4756 = vmatprep.subr.mxu0 0.0
    %4757 = vmatpush2.msra.mxu0 0.0
    %4758 = vmatprep.subr.mxu0 0.0
    %4759 = vmatpush2.msra.mxu0 0.0
    %4760 = vmatprep.subr.mxu0 0.0
    %4761 = vmatpush2.msra.mxu0 0.0
    %4762 = vmatprep.subr.mxu0 0.0
    %4763 = vmatpush2.msra.mxu0 0.0
    %4764 = vmatprep.subr.mxu0 0.0
    %4765 = vmatpush2.msra.mxu0 0.0
    %4766 = vmatprep.subr.mxu0 0.0
    %4767 = vmatpush2.msra.mxu0 0.0
    %4768 = vmatprep.subr.mxu0 0.0
    %4769 = vmatpush2.msra.mxu0 0.0
    %4770 = vmatprep.subr.mxu0 0.0
    %4771 = vmatpush2.msra.mxu0 0.0
    %4772 = vmatprep.subr.mxu0 0.0
    %4773 = vmatpush2.msra.mxu0 0.0
    %4774 = vmatprep.subr.mxu0 0.0
    %4775 = vmatpush2.msra.mxu0 0.0
    %4776 = vmatprep.subr.mxu0 0.0
    %4777 = vmatpush2.msra.mxu0 0.0
    %4778 = vmatprep.subr.mxu0 0.0
    %4779 = vmatpush2.msra.mxu0 0.0
    %4780 = vmatprep.subr.mxu0 0.0
    %4781 = vmatpush2.msra.mxu0 0.0
    %4782 = vmatprep.subr.mxu0 0.0
    %4783 = vmatpush2.msra.mxu0 0.0
    %4784 = vmatprep.subr.mxu0 0.0
    %4785 = vmatpush2.msra.mxu0 0.0
    %4786 = vmatprep.mubr.f32.mxu0 0.0
    %4787 = vmatmul.mubr.f32.gmra.mxu0 %v4056
    %v4788 = vpop.f32.mrf.mxu0
    %v4789 = vadd.f32 0.0, %v4788
    %v4790 = vpop.f32.mrf.mxu0
    %4791 = vdwg.mxu0
    %v4792 = vadd.f32 %v4721, %v4789
    %v4793 = vld [vmem:[#allocation4 + $0x20] sm:$0xff]
    %4794 = vmatprep.subr.mxu0 0.0
    %4795 = vmatpush1.msra.mxu0 0.0
    %4796 = vmatprep.subr.mxu0 0.0
    %4797 = vmatpush1.msra.mxu0 0.0
    %4798 = vmatprep.subr.mxu0 0.0
    %4799 = vmatpush1.msra.mxu0 0.0
    %4800 = vmatprep.subr.mxu0 0.0
    %4801 = vmatpush1.msra.mxu0 0.0
    %4802 = vmatprep.subr.mxu0 0.0
    %4803 = vmatpush1.msra.mxu0 0.0
    %4804 = vmatprep.subr.mxu0 0.0
    %4805 = vmatpush1.msra.mxu0 0.0
    %4806 = vmatprep.subr.mxu0 0.0
    %4807 = vmatpush1.msra.mxu0 0.0
    %4808 = vmatprep.subr.mxu0 0.0
    %4809 = vmatpush1.msra.mxu0 0.0
    %4810 = vmatprep.subr.mxu0 0.0
    %4811 = vmatpush1.msra.mxu0 0.0
    %4812 = vmatprep.subr.mxu0 0.0
    %4813 = vmatpush1.msra.mxu0 0.0
    %4814 = vmatprep.subr.mxu0 0.0
    %4815 = vmatpush1.msra.mxu0 0.0
    %4816 = vmatprep.subr.mxu0 0.0
    %4817 = vmatpush1.msra.mxu0 0.0
    %4818 = vmatprep.subr.mxu0 0.0
    %4819 = vmatpush1.msra.mxu0 %v433
    %4820 = vmatprep.subr.mxu0 0.0
    %4821 = vmatpush1.msra.mxu0 %v432
    %4822 = vmatprep.subr.mxu0 0.0
    %4823 = vmatpush1.msra.mxu0 %v431
    %4824 = vmatprep.subr.mxu0 0.0
    %4825 = vmatpush1.msra.mxu0 %v430
    %4826 = vmatprep.subr.mxu0 0.0
    %4827 = vmatpush2.msra.mxu0 0.0
    %4828 = vmatprep.subr.mxu0 0.0
    %4829 = vmatpush2.msra.mxu0 0.0
    %4830 = vmatprep.subr.mxu0 0.0
    %4831 = vmatpush2.msra.mxu0 0.0
    %4832 = vmatprep.subr.mxu0 0.0
    %4833 = vmatpush2.msra.mxu0 0.0
    %4834 = vmatprep.subr.mxu0 0.0
    %4835 = vmatpush2.msra.mxu0 0.0
    %4836 = vmatprep.subr.mxu0 0.0
    %4837 = vmatpush2.msra.mxu0 0.0
    %4838 = vmatprep.subr.mxu0 0.0
    %4839 = vmatpush2.msra.mxu0 0.0
    %4840 = vmatprep.subr.mxu0 0.0
    %4841 = vmatpush2.msra.mxu0 0.0
    %4842 = vmatprep.subr.mxu0 0.0
    %4843 = vmatpush2.msra.mxu0 0.0
    %4844 = vmatprep.subr.mxu0 0.0
    %4845 = vmatpush2.msra.mxu0 0.0
    %4846 = vmatprep.subr.mxu0 0.0
    %4847 = vmatpush2.msra.mxu0 0.0
    %4848 = vmatprep.subr.mxu0 0.0
    %4849 = vmatpush2.msra.mxu0 0.0
    %4850 = vmatprep.subr.mxu0 0.0
    %4851 = vmatpush2.msra.mxu0 0.0
    %4852 = vmatprep.subr.mxu0 0.0
    %4853 = vmatpush2.msra.mxu0 0.0
    %4854 = vmatprep.subr.mxu0 0.0
    %4855 = vmatpush2.msra.mxu0 0.0
    %4856 = vmatprep.subr.mxu0 0.0
    %4857 = vmatpush2.msra.mxu0 0.0
    %4858 = vmatprep.mubr.f32.mxu0 0.0
    %4859 = vmatmul.mubr.f32.gmra.mxu0 %v4056
    %v4860 = vpop.f32.mrf.mxu0
    %v4861 = vadd.f32 0.0, %v4860
    %v4862 = vpop.f32.mrf.mxu0
    %4863 = vdwg.mxu0
    %v4864 = vadd.f32 %v4793, %v4861
    %v4865 = vld [vmem:[#allocation5 + $0x20] sm:$0xff]
    %4866 = vmatprep.subr.mxu0 0.0
    %4867 = vmatpush1.msra.mxu0 0.0
    %4868 = vmatprep.subr.mxu0 0.0
    %4869 = vmatpush1.msra.mxu0 0.0
    %4870 = vmatprep.subr.mxu0 0.0
    %4871 = vmatpush1.msra.mxu0 0.0
    %4872 = vmatprep.subr.mxu0 0.0
    %4873 = vmatpush1.msra.mxu0 0.0
    %4874 = vmatprep.subr.mxu0 0.0
    %4875 = vmatpush1.msra.mxu0 0.0
    %4876 = vmatprep.subr.mxu0 0.0
    %4877 = vmatpush1.msra.mxu0 0.0
    %4878 = vmatprep.subr.mxu0 0.0
    %4879 = vmatpush1.msra.mxu0 0.0
    %4880 = vmatprep.subr.mxu0 0.0
    %4881 = vmatpush1.msra.mxu0 0.0
    %4882 = vmatprep.subr.mxu0 0.0
    %4883 = vmatpush1.msra.mxu0 0.0
    %4884 = vmatprep.subr.mxu0 0.0
    %4885 = vmatpush1.msra.mxu0 0.0
    %4886 = vmatprep.subr.mxu0 0.0
    %4887 = vmatpush1.msra.mxu0 0.0
    %4888 = vmatprep.subr.mxu0 0.0
    %4889 = vmatpush1.msra.mxu0 0.0
    %4890 = vmatprep.subr.mxu0 0.0
    %4891 = vmatpush1.msra.mxu0 %v437
    %4892 = vmatprep.subr.mxu0 0.0
    %4893 = vmatpush1.msra.mxu0 %v436
    %4894 = vmatprep.subr.mxu0 0.0
    %4895 = vmatpush1.msra.mxu0 %v435
    %4896 = vmatprep.subr.mxu0 0.0
    %4897 = vmatpush1.msra.mxu0 %v434
    %4898 = vmatprep.subr.mxu0 0.0
    %4899 = vmatpush2.msra.mxu0 0.0
    %4900 = vmatprep.subr.mxu0 0.0
    %4901 = vmatpush2.msra.mxu0 0.0
    %4902 = vmatprep.subr.mxu0 0.0
    %4903 = vmatpush2.msra.mxu0 0.0
    %4904 = vmatprep.subr.mxu0 0.0
    %4905 = vmatpush2.msra.mxu0 0.0
    %4906 = vmatprep.subr.mxu0 0.0
    %4907 = vmatpush2.msra.mxu0 0.0
    %4908 = vmatprep.subr.mxu0 0.0
    %4909 = vmatpush2.msra.mxu0 0.0
    %4910 = vmatprep.subr.mxu0 0.0
    %4911 = vmatpush2.msra.mxu0 0.0
    %4912 = vmatprep.subr.mxu0 0.0
    %4913 = vmatpush2.msra.mxu0 0.0
    %4914 = vmatprep.subr.mxu0 0.0
    %4915 = vmatpush2.msra.mxu0 0.0
    %4916 = vmatprep.subr.mxu0 0.0
    %4917 = vmatpush2.msra.mxu0 0.0
    %4918 = vmatprep.subr.mxu0 0.0
    %4919 = vmatpush2.msra.mxu0 0.0
    %4920 = vmatprep.subr.mxu0 0.0
    %4921 = vmatpush2.msra.mxu0 0.0
    %4922 = vmatprep.subr.mxu0 0.0
    %4923 = vmatpush2.msra.mxu0 0.0
    %4924 = vmatprep.subr.mxu0 0.0
    %4925 = vmatpush2.msra.mxu0 0.0
    %4926 = vmatprep.subr.mxu0 0.0
    %4927 = vmatpush2.msra.mxu0 0.0
    %4928 = vmatprep.subr.mxu0 0.0
    %4929 = vmatpush2.msra.mxu0 0.0
    %4930 = vmatprep.mubr.f32.mxu0 0.0
    %4931 = vmatmul.mubr.f32.gmra.mxu0 %v4056
    %v4932 = vpop.f32.mrf.mxu0
    %v4933 = vadd.f32 0.0, %v4932
    %v4934 = vpop.f32.mrf.mxu0
    %4935 = vdwg.mxu0
    %v4936 = vadd.f32 %v4865, %v4933
    %v4937 = vxor.u32 %v4720, 2147483648
    %v4938 = vmul.f32 %v4937, 1.442695
    %v4939 = vpow.pop %v4938
    %v4940 = vadd.f32 %v4939, 1.0
    %v4941 = vrcp.pop %v4940
    %v4942 = vmul.f32 1.0, %v4941
    %v4943 = vxor.u32 %v4792, 2147483648
    %v4944 = vmul.f32 %v4943, 1.442695
    %v4945 = vpow.pop %v4944
    %v4946 = vadd.f32 %v4945, 1.0
    %v4947 = vrcp.pop %v4946
    %v4948 = vmul.f32 1.0, %v4947
    %v4949 = vtanh.pop %v4864
    %v4950 = vxor.u32 %v4936, 2147483648
    %v4951 = vmul.f32 %v4950, 1.442695
    %v4952 = vpow.pop %v4951
    %v4953 = vadd.f32 %v4952, 1.0
    %v4954 = vrcp.pop %v4953
    %v4955 = vmul.f32 1.0, %v4954
    %v4956 = vmul.f32 %v4948, %v4052
    %v4957 = vmul.f32 %v4942, %v4949
    %v4958 = vadd.f32 %v4956, %v4957
    %v4959 = vtanh.pop %v4958
    %v4960 = vmul.f32 %v4955, %v4959
    %v4962 = vsel %vm590, %v4960, 0
    %4964 = vmatprep.subr.mxu0 0.0
    %4965 = vmatpush1.msra.mxu0 0.0
    %4966 = vmatprep.subr.mxu0 0.0
    %4967 = vmatpush1.msra.mxu0 0.0
    %4968 = vmatprep.subr.mxu0 0.0
    %4969 = vmatpush1.msra.mxu0 0.0
    %4970 = vmatprep.subr.mxu0 0.0
    %4971 = vmatpush1.msra.mxu0 0.0
    %4972 = vmatprep.subr.mxu0 0.0
    %4973 = vmatpush1.msra.mxu0 0.0
    %4974 = vmatprep.subr.mxu0 0.0
    %4975 = vmatpush1.msra.mxu0 0.0
    %4976 = vmatprep.subr.mxu0 0.0
    %4977 = vmatpush1.msra.mxu0 0.0
    %4978 = vmatprep.subr.mxu0 0.0
    %4979 = vmatpush1.msra.mxu0 0.0
    %4980 = vmatprep.subr.mxu0 0.0
    %4981 = vmatpush1.msra.mxu0 0.0
    %4982 = vmatprep.subr.mxu0 0.0
    %4983 = vmatpush1.msra.mxu0 0.0
    %4984 = vmatprep.subr.mxu0 0.0
    %4985 = vmatpush1.msra.mxu0 0.0
    %4986 = vmatprep.subr.mxu0 0.0
    %4987 = vmatpush1.msra.mxu0 0.0
    %4988 = vmatprep.subr.mxu0 0.0
    %4989 = vmatpush1.msra.mxu0 %v968
    %4990 = vmatprep.subr.mxu0 0.0
    %4991 = vmatpush1.msra.mxu0 %v967
    %4992 = vmatprep.subr.mxu0 0.0
    %4993 = vmatpush1.msra.mxu0 %v966
    %4994 = vmatprep.subr.mxu0 0.0
    %4995 = vmatpush1.msra.mxu0 %v965
    %4996 = vmatprep.subr.mxu0 0.0
    %4997 = vmatpush2.msra.mxu0 0.0
    %4998 = vmatprep.subr.mxu0 0.0
    %4999 = vmatpush2.msra.mxu0 0.0
    %5000 = vmatprep.subr.mxu0 0.0
    %5001 = vmatpush2.msra.mxu0 0.0
    %5002 = vmatprep.subr.mxu0 0.0
    %5003 = vmatpush2.msra.mxu0 0.0
    %5004 = vmatprep.subr.mxu0 0.0
    %5005 = vmatpush2.msra.mxu0 0.0
    %5006 = vmatprep.subr.mxu0 0.0
    %5007 = vmatpush2.msra.mxu0 0.0
    %5008 = vmatprep.subr.mxu0 0.0
    %5009 = vmatpush2.msra.mxu0 0.0
    %5010 = vmatprep.subr.mxu0 0.0
    %5011 = vmatpush2.msra.mxu0 0.0
    %5012 = vmatprep.subr.mxu0 0.0
    %5013 = vmatpush2.msra.mxu0 0.0
    %5014 = vmatprep.subr.mxu0 0.0
    %5015 = vmatpush2.msra.mxu0 0.0
    %5016 = vmatprep.subr.mxu0 0.0
    %5017 = vmatpush2.msra.mxu0 0.0
    %5018 = vmatprep.subr.mxu0 0.0
    %5019 = vmatpush2.msra.mxu0 0.0
    %5020 = vmatprep.subr.mxu0 0.0
    %5021 = vmatpush2.msra.mxu0 0.0
    %5022 = vmatprep.subr.mxu0 0.0
    %5023 = vmatpush2.msra.mxu0 0.0
    %5024 = vmatprep.subr.mxu0 0.0
    %5025 = vmatpush2.msra.mxu0 0.0
    %5026 = vmatprep.subr.mxu0 0.0
    %5027 = vmatpush2.msra.mxu0 0.0
    %5028 = vmatprep.mubr.f32.mxu0 0.0
    %5029 = vmatmul.mubr.f32.gmra.mxu0 %v4962
    %v5030 = vpop.f32.mrf.mxu0
    %v5031 = vadd.f32 %v1005, %v5030
    %v5032 = vpop.f32.mrf.mxu0
    %5033 = vdwg.mxu0
    %v5035 = vsel %vm590, %v4648, 0
    %5037 = vmatprep.subr.mxu0 0.0
    %5038 = vmatpush1.msra.mxu0 0.0
    %5039 = vmatprep.subr.mxu0 0.0
    %5040 = vmatpush1.msra.mxu0 0.0
    %5041 = vmatprep.subr.mxu0 0.0
    %5042 = vmatpush1.msra.mxu0 0.0
    %5043 = vmatprep.subr.mxu0 0.0
    %5044 = vmatpush1.msra.mxu0 0.0
    %5045 = vmatprep.subr.mxu0 0.0
    %5046 = vmatpush1.msra.mxu0 0.0
    %5047 = vmatprep.subr.mxu0 0.0
    %5048 = vmatpush1.msra.mxu0 0.0
    %5049 = vmatprep.subr.mxu0 0.0
    %5050 = vmatpush1.msra.mxu0 0.0
    %5051 = vmatprep.subr.mxu0 0.0
    %5052 = vmatpush1.msra.mxu0 0.0
    %5053 = vmatprep.subr.mxu0 0.0
    %5054 = vmatpush1.msra.mxu0 0.0
    %5055 = vmatprep.subr.mxu0 0.0
    %5056 = vmatpush1.msra.mxu0 0.0
    %5057 = vmatprep.subr.mxu0 0.0
    %5058 = vmatpush1.msra.mxu0 0.0
    %5059 = vmatprep.subr.mxu0 0.0
    %5060 = vmatpush1.msra.mxu0 0.0
    %5061 = vmatprep.subr.mxu0 0.0
    %5062 = vmatpush1.msra.mxu0 %v984
    %5063 = vmatprep.subr.mxu0 0.0
    %5064 = vmatpush1.msra.mxu0 %v983
    %5065 = vmatprep.subr.mxu0 0.0
    %5066 = vmatpush1.msra.mxu0 %v982
    %5067 = vmatprep.subr.mxu0 0.0
    %5068 = vmatpush1.msra.mxu0 %v981
    %5069 = vmatprep.subr.mxu0 0.0
    %5070 = vmatpush2.msra.mxu0 0.0
    %5071 = vmatprep.subr.mxu0 0.0
    %5072 = vmatpush2.msra.mxu0 0.0
    %5073 = vmatprep.subr.mxu0 0.0
    %5074 = vmatpush2.msra.mxu0 0.0
    %5075 = vmatprep.subr.mxu0 0.0
    %5076 = vmatpush2.msra.mxu0 0.0
    %5077 = vmatprep.subr.mxu0 0.0
    %5078 = vmatpush2.msra.mxu0 0.0
    %5079 = vmatprep.subr.mxu0 0.0
    %5080 = vmatpush2.msra.mxu0 0.0
    %5081 = vmatprep.subr.mxu0 0.0
    %5082 = vmatpush2.msra.mxu0 0.0
    %5083 = vmatprep.subr.mxu0 0.0
    %5084 = vmatpush2.msra.mxu0 0.0
    %5085 = vmatprep.subr.mxu0 0.0
    %5086 = vmatpush2.msra.mxu0 0.0
    %5087 = vmatprep.subr.mxu0 0.0
    %5088 = vmatpush2.msra.mxu0 0.0
    %5089 = vmatprep.subr.mxu0 0.0
    %5090 = vmatpush2.msra.mxu0 0.0
    %5091 = vmatprep.subr.mxu0 0.0
    %5092 = vmatpush2.msra.mxu0 0.0
    %5093 = vmatprep.subr.mxu0 0.0
    %5094 = vmatpush2.msra.mxu0 0.0
    %5095 = vmatprep.subr.mxu0 0.0
    %5096 = vmatpush2.msra.mxu0 0.0
    %5097 = vmatprep.subr.mxu0 0.0
    %5098 = vmatpush2.msra.mxu0 0.0
    %5099 = vmatprep.subr.mxu0 0.0
    %5100 = vmatpush2.msra.mxu0 0.0
    %5101 = vmatprep.mubr.f32.mxu0 0.0
    %5102 = vmatmul.mubr.f32.gmra.mxu0 %v5035
    %v5103 = vpop.f32.mrf.mxu0
    %v5104 = vadd.f32 0.0, %v5103
    %v5105 = vpop.f32.mrf.mxu0
    %5106 = vdwg.mxu0
    %v5107 = vadd.f32 %v5031, %v5104
    %5108 = vmatprep.subr.mxu0 0.0
    %5109 = vmatpush1.msra.mxu0 0.0
    %5110 = vmatprep.subr.mxu0 0.0
    %5111 = vmatpush1.msra.mxu0 0.0
    %5112 = vmatprep.subr.mxu0 0.0
    %5113 = vmatpush1.msra.mxu0 0.0
    %5114 = vmatprep.subr.mxu0 0.0
    %5115 = vmatpush1.msra.mxu0 0.0
    %5116 = vmatprep.subr.mxu0 0.0
    %5117 = vmatpush1.msra.mxu0 0.0
    %5118 = vmatprep.subr.mxu0 0.0
    %5119 = vmatpush1.msra.mxu0 0.0
    %5120 = vmatprep.subr.mxu0 0.0
    %5121 = vmatpush1.msra.mxu0 0.0
    %5122 = vmatprep.subr.mxu0 0.0
    %5123 = vmatpush1.msra.mxu0 0.0
    %5124 = vmatprep.subr.mxu0 0.0
    %5125 = vmatpush1.msra.mxu0 0.0
    %5126 = vmatprep.subr.mxu0 0.0
    %5127 = vmatpush1.msra.mxu0 0.0
    %5128 = vmatprep.subr.mxu0 0.0
    %5129 = vmatpush1.msra.mxu0 0.0
    %5130 = vmatprep.subr.mxu0 0.0
    %5131 = vmatpush1.msra.mxu0 0.0
    %5132 = vmatprep.subr.mxu0 0.0
    %5133 = vmatpush1.msra.mxu0 %v972
    %5134 = vmatprep.subr.mxu0 0.0
    %5135 = vmatpush1.msra.mxu0 %v971
    %5136 = vmatprep.subr.mxu0 0.0
    %5137 = vmatpush1.msra.mxu0 %v970
    %5138 = vmatprep.subr.mxu0 0.0
    %5139 = vmatpush1.msra.mxu0 %v969
    %5140 = vmatprep.subr.mxu0 0.0
    %5141 = vmatpush2.msra.mxu0 0.0
    %5142 = vmatprep.subr.mxu0 0.0
    %5143 = vmatpush2.msra.mxu0 0.0
    %5144 = vmatprep.subr.mxu0 0.0
    %5145 = vmatpush2.msra.mxu0 0.0
    %5146 = vmatprep.subr.mxu0 0.0
    %5147 = vmatpush2.msra.mxu0 0.0
    %5148 = vmatprep.subr.mxu0 0.0
    %5149 = vmatpush2.msra.mxu0 0.0
    %5150 = vmatprep.subr.mxu0 0.0
    %5151 = vmatpush2.msra.mxu0 0.0
    %5152 = vmatprep.subr.mxu0 0.0
    %5153 = vmatpush2.msra.mxu0 0.0
    %5154 = vmatprep.subr.mxu0 0.0
    %5155 = vmatpush2.msra.mxu0 0.0
    %5156 = vmatprep.subr.mxu0 0.0
    %5157 = vmatpush2.msra.mxu0 0.0
    %5158 = vmatprep.subr.mxu0 0.0
    %5159 = vmatpush2.msra.mxu0 0.0
    %5160 = vmatprep.subr.mxu0 0.0
    %5161 = vmatpush2.msra.mxu0 0.0
    %5162 = vmatprep.subr.mxu0 0.0
    %5163 = vmatpush2.msra.mxu0 0.0
    %5164 = vmatprep.subr.mxu0 0.0
    %5165 = vmatpush2.msra.mxu0 0.0
    %5166 = vmatprep.subr.mxu0 0.0
    %5167 = vmatpush2.msra.mxu0 0.0
    %5168 = vmatprep.subr.mxu0 0.0
    %5169 = vmatpush2.msra.mxu0 0.0
    %5170 = vmatprep.subr.mxu0 0.0
    %5171 = vmatpush2.msra.mxu0 0.0
    %5172 = vmatprep.mubr.f32.mxu0 0.0
    %5173 = vmatmul.mubr.f32.gmra.mxu0 %v4962
    %v5174 = vpop.f32.mrf.mxu0
    %v5175 = vadd.f32 %v1011, %v5174
    %v5176 = vpop.f32.mrf.mxu0
    %5177 = vdwg.mxu0
    %5178 = vmatprep.subr.mxu0 0.0
    %5179 = vmatpush1.msra.mxu0 0.0
    %5180 = vmatprep.subr.mxu0 0.0
    %5181 = vmatpush1.msra.mxu0 0.0
    %5182 = vmatprep.subr.mxu0 0.0
    %5183 = vmatpush1.msra.mxu0 0.0
    %5184 = vmatprep.subr.mxu0 0.0
    %5185 = vmatpush1.msra.mxu0 0.0
    %5186 = vmatprep.subr.mxu0 0.0
    %5187 = vmatpush1.msra.mxu0 0.0
    %5188 = vmatprep.subr.mxu0 0.0
    %5189 = vmatpush1.msra.mxu0 0.0
    %5190 = vmatprep.subr.mxu0 0.0
    %5191 = vmatpush1.msra.mxu0 0.0
    %5192 = vmatprep.subr.mxu0 0.0
    %5193 = vmatpush1.msra.mxu0 0.0
    %5194 = vmatprep.subr.mxu0 0.0
    %5195 = vmatpush1.msra.mxu0 0.0
    %5196 = vmatprep.subr.mxu0 0.0
    %5197 = vmatpush1.msra.mxu0 0.0
    %5198 = vmatprep.subr.mxu0 0.0
    %5199 = vmatpush1.msra.mxu0 0.0
    %5200 = vmatprep.subr.mxu0 0.0
    %5201 = vmatpush1.msra.mxu0 0.0
    %5202 = vmatprep.subr.mxu0 0.0
    %5203 = vmatpush1.msra.mxu0 %v988
    %5204 = vmatprep.subr.mxu0 0.0
    %5205 = vmatpush1.msra.mxu0 %v987
    %5206 = vmatprep.subr.mxu0 0.0
    %5207 = vmatpush1.msra.mxu0 %v986
    %5208 = vmatprep.subr.mxu0 0.0
    %5209 = vmatpush1.msra.mxu0 %v985
    %5210 = vmatprep.subr.mxu0 0.0
    %5211 = vmatpush2.msra.mxu0 0.0
    %5212 = vmatprep.subr.mxu0 0.0
    %5213 = vmatpush2.msra.mxu0 0.0
    %5214 = vmatprep.subr.mxu0 0.0
    %5215 = vmatpush2.msra.mxu0 0.0
    %5216 = vmatprep.subr.mxu0 0.0
    %5217 = vmatpush2.msra.mxu0 0.0
    %5218 = vmatprep.subr.mxu0 0.0
    %5219 = vmatpush2.msra.mxu0 0.0
    %5220 = vmatprep.subr.mxu0 0.0
    %5221 = vmatpush2.msra.mxu0 0.0
    %5222 = vmatprep.subr.mxu0 0.0
    %5223 = vmatpush2.msra.mxu0 0.0
    %5224 = vmatprep.subr.mxu0 0.0
    %5225 = vmatpush2.msra.mxu0 0.0
    %5226 = vmatprep.subr.mxu0 0.0
    %5227 = vmatpush2.msra.mxu0 0.0
    %5228 = vmatprep.subr.mxu0 0.0
    %5229 = vmatpush2.msra.mxu0 0.0
    %5230 = vmatprep.subr.mxu0 0.0
    %5231 = vmatpush2.msra.mxu0 0.0
    %5232 = vmatprep.subr.mxu0 0.0
    %5233 = vmatpush2.msra.mxu0 0.0
    %5234 = vmatprep.subr.mxu0 0.0
    %5235 = vmatpush2.msra.mxu0 0.0
    %5236 = vmatprep.subr.mxu0 0.0
    %5237 = vmatpush2.msra.mxu0 0.0
    %5238 = vmatprep.subr.mxu0 0.0
    %5239 = vmatpush2.msra.mxu0 0.0
    %5240 = vmatprep.subr.mxu0 0.0
    %5241 = vmatpush2.msra.mxu0 0.0
    %5242 = vmatprep.mubr.f32.mxu0 0.0
    %5243 = vmatmul.mubr.f32.gmra.mxu0 %v5035
    %v5244 = vpop.f32.mrf.mxu0
    %v5245 = vadd.f32 0.0, %v5244
    %v5246 = vpop.f32.mrf.mxu0
    %5247 = vdwg.mxu0
    %v5248 = vadd.f32 %v5175, %v5245
    %5249 = vmatprep.subr.mxu0 0.0
    %5250 = vmatpush1.msra.mxu0 0.0
    %5251 = vmatprep.subr.mxu0 0.0
    %5252 = vmatpush1.msra.mxu0 0.0
    %5253 = vmatprep.subr.mxu0 0.0
    %5254 = vmatpush1.msra.mxu0 0.0
    %5255 = vmatprep.subr.mxu0 0.0
    %5256 = vmatpush1.msra.mxu0 0.0
    %5257 = vmatprep.subr.mxu0 0.0
    %5258 = vmatpush1.msra.mxu0 0.0
    %5259 = vmatprep.subr.mxu0 0.0
    %5260 = vmatpush1.msra.mxu0 0.0
    %5261 = vmatprep.subr.mxu0 0.0
    %5262 = vmatpush1.msra.mxu0 0.0
    %5263 = vmatprep.subr.mxu0 0.0
    %5264 = vmatpush1.msra.mxu0 0.0
    %5265 = vmatprep.subr.mxu0 0.0
    %5266 = vmatpush1.msra.mxu0 0.0
    %5267 = vmatprep.subr.mxu0 0.0
    %5268 = vmatpush1.msra.mxu0 0.0
    %5269 = vmatprep.subr.mxu0 0.0
    %5270 = vmatpush1.msra.mxu0 0.0
    %5271 = vmatprep.subr.mxu0 0.0
    %5272 = vmatpush1.msra.mxu0 0.0
    %5273 = vmatprep.subr.mxu0 0.0
    %5274 = vmatpush1.msra.mxu0 %v976
    %5275 = vmatprep.subr.mxu0 0.0
    %5276 = vmatpush1.msra.mxu0 %v975
    %5277 = vmatprep.subr.mxu0 0.0
    %5278 = vmatpush1.msra.mxu0 %v974
    %5279 = vmatprep.subr.mxu0 0.0
    %5280 = vmatpush1.msra.mxu0 %v973
    %5281 = vmatprep.subr.mxu0 0.0
    %5282 = vmatpush2.msra.mxu0 0.0
    %5283 = vmatprep.subr.mxu0 0.0
    %5284 = vmatpush2.msra.mxu0 0.0
    %5285 = vmatprep.subr.mxu0 0.0
    %5286 = vmatpush2.msra.mxu0 0.0
    %5287 = vmatprep.subr.mxu0 0.0
    %5288 = vmatpush2.msra.mxu0 0.0
    %5289 = vmatprep.subr.mxu0 0.0
    %5290 = vmatpush2.msra.mxu0 0.0
    %5291 = vmatprep.subr.mxu0 0.0
    %5292 = vmatpush2.msra.mxu0 0.0
    %5293 = vmatprep.subr.mxu0 0.0
    %5294 = vmatpush2.msra.mxu0 0.0
    %5295 = vmatprep.subr.mxu0 0.0
    %5296 = vmatpush2.msra.mxu0 0.0
    %5297 = vmatprep.subr.mxu0 0.0
    %5298 = vmatpush2.msra.mxu0 0.0
    %5299 = vmatprep.subr.mxu0 0.0
    %5300 = vmatpush2.msra.mxu0 0.0
    %5301 = vmatprep.subr.mxu0 0.0
    %5302 = vmatpush2.msra.mxu0 0.0
    %5303 = vmatprep.subr.mxu0 0.0
    %5304 = vmatpush2.msra.mxu0 0.0
    %5305 = vmatprep.subr.mxu0 0.0
    %5306 = vmatpush2.msra.mxu0 0.0
    %5307 = vmatprep.subr.mxu0 0.0
    %5308 = vmatpush2.msra.mxu0 0.0
    %5309 = vmatprep.subr.mxu0 0.0
    %5310 = vmatpush2.msra.mxu0 0.0
    %5311 = vmatprep.subr.mxu0 0.0
    %5312 = vmatpush2.msra.mxu0 0.0
    %5313 = vmatprep.mubr.f32.mxu0 0.0
    %5314 = vmatmul.mubr.f32.gmra.mxu0 %v4962
    %v5315 = vpop.f32.mrf.mxu0
    %v5316 = vadd.f32 %v1017, %v5315
    %v5317 = vpop.f32.mrf.mxu0
    %5318 = vdwg.mxu0
    %5319 = vmatprep.subr.mxu0 0.0
    %5320 = vmatpush1.msra.mxu0 0.0
    %5321 = vmatprep.subr.mxu0 0.0
    %5322 = vmatpush1.msra.mxu0 0.0
    %5323 = vmatprep.subr.mxu0 0.0
    %5324 = vmatpush1.msra.mxu0 0.0
    %5325 = vmatprep.subr.mxu0 0.0
    %5326 = vmatpush1.msra.mxu0 0.0
    %5327 = vmatprep.subr.mxu0 0.0
    %5328 = vmatpush1.msra.mxu0 0.0
    %5329 = vmatprep.subr.mxu0 0.0
    %5330 = vmatpush1.msra.mxu0 0.0
    %5331 = vmatprep.subr.mxu0 0.0
    %5332 = vmatpush1.msra.mxu0 0.0
    %5333 = vmatprep.subr.mxu0 0.0
    %5334 = vmatpush1.msra.mxu0 0.0
    %5335 = vmatprep.subr.mxu0 0.0
    %5336 = vmatpush1.msra.mxu0 0.0
    %5337 = vmatprep.subr.mxu0 0.0
    %5338 = vmatpush1.msra.mxu0 0.0
    %5339 = vmatprep.subr.mxu0 0.0
    %5340 = vmatpush1.msra.mxu0 0.0
    %5341 = vmatprep.subr.mxu0 0.0
    %5342 = vmatpush1.msra.mxu0 0.0
    %5343 = vmatprep.subr.mxu0 0.0
    %5344 = vmatpush1.msra.mxu0 %v992
    %5345 = vmatprep.subr.mxu0 0.0
    %5346 = vmatpush1.msra.mxu0 %v991
    %5347 = vmatprep.subr.mxu0 0.0
    %5348 = vmatpush1.msra.mxu0 %v990
    %5349 = vmatprep.subr.mxu0 0.0
    %5350 = vmatpush1.msra.mxu0 %v989
    %5351 = vmatprep.subr.mxu0 0.0
    %5352 = vmatpush2.msra.mxu0 0.0
    %5353 = vmatprep.subr.mxu0 0.0
    %5354 = vmatpush2.msra.mxu0 0.0
    %5355 = vmatprep.subr.mxu0 0.0
    %5356 = vmatpush2.msra.mxu0 0.0
    %5357 = vmatprep.subr.mxu0 0.0
    %5358 = vmatpush2.msra.mxu0 0.0
    %5359 = vmatprep.subr.mxu0 0.0
    %5360 = vmatpush2.msra.mxu0 0.0
    %5361 = vmatprep.subr.mxu0 0.0
    %5362 = vmatpush2.msra.mxu0 0.0
    %5363 = vmatprep.subr.mxu0 0.0
    %5364 = vmatpush2.msra.mxu0 0.0
    %5365 = vmatprep.subr.mxu0 0.0
    %5366 = vmatpush2.msra.mxu0 0.0
    %5367 = vmatprep.subr.mxu0 0.0
    %5368 = vmatpush2.msra.mxu0 0.0
    %5369 = vmatprep.subr.mxu0 0.0
    %5370 = vmatpush2.msra.mxu0 0.0
    %5371 = vmatprep.subr.mxu0 0.0
    %5372 = vmatpush2.msra.mxu0 0.0
    %5373 = vmatprep.subr.mxu0 0.0
    %5374 = vmatpush2.msra.mxu0 0.0
    %5375 = vmatprep.subr.mxu0 0.0
    %5376 = vmatpush2.msra.mxu0 0.0
    %5377 = vmatprep.subr.mxu0 0.0
    %5378 = vmatpush2.msra.mxu0 0.0
    %5379 = vmatprep.subr.mxu0 0.0
    %5380 = vmatpush2.msra.mxu0 0.0
    %5381 = vmatprep.subr.mxu0 0.0
    %5382 = vmatpush2.msra.mxu0 0.0
    %5383 = vmatprep.mubr.f32.mxu0 0.0
    %5384 = vmatmul.mubr.f32.gmra.mxu0 %v5035
    %v5385 = vpop.f32.mrf.mxu0
    %v5386 = vadd.f32 0.0, %v5385
    %v5387 = vpop.f32.mrf.mxu0
    %5388 = vdwg.mxu0
    %v5389 = vadd.f32 %v5316, %v5386
    %5390 = vmatprep.subr.mxu0 0.0
    %5391 = vmatpush1.msra.mxu0 0.0
    %5392 = vmatprep.subr.mxu0 0.0
    %5393 = vmatpush1.msra.mxu0 0.0
    %5394 = vmatprep.subr.mxu0 0.0
    %5395 = vmatpush1.msra.mxu0 0.0
    %5396 = vmatprep.subr.mxu0 0.0
    %5397 = vmatpush1.msra.mxu0 0.0
    %5398 = vmatprep.subr.mxu0 0.0
    %5399 = vmatpush1.msra.mxu0 0.0
    %5400 = vmatprep.subr.mxu0 0.0
    %5401 = vmatpush1.msra.mxu0 0.0
    %5402 = vmatprep.subr.mxu0 0.0
    %5403 = vmatpush1.msra.mxu0 0.0
    %5404 = vmatprep.subr.mxu0 0.0
    %5405 = vmatpush1.msra.mxu0 0.0
    %5406 = vmatprep.subr.mxu0 0.0
    %5407 = vmatpush1.msra.mxu0 0.0
    %5408 = vmatprep.subr.mxu0 0.0
    %5409 = vmatpush1.msra.mxu0 0.0
    %5410 = vmatprep.subr.mxu0 0.0
    %5411 = vmatpush1.msra.mxu0 0.0
    %5412 = vmatprep.subr.mxu0 0.0
    %5413 = vmatpush1.msra.mxu0 0.0
    %5414 = vmatprep.subr.mxu0 0.0
    %5415 = vmatpush1.msra.mxu0 %v980
    %5416 = vmatprep.subr.mxu0 0.0
    %5417 = vmatpush1.msra.mxu0 %v979
    %5418 = vmatprep.subr.mxu0 0.0
    %5419 = vmatpush1.msra.mxu0 %v978
    %5420 = vmatprep.subr.mxu0 0.0
    %5421 = vmatpush1.msra.mxu0 %v977
    %5422 = vmatprep.subr.mxu0 0.0
    %5423 = vmatpush2.msra.mxu0 0.0
    %5424 = vmatprep.subr.mxu0 0.0
    %5425 = vmatpush2.msra.mxu0 0.0
    %5426 = vmatprep.subr.mxu0 0.0
    %5427 = vmatpush2.msra.mxu0 0.0
    %5428 = vmatprep.subr.mxu0 0.0
    %5429 = vmatpush2.msra.mxu0 0.0
    %5430 = vmatprep.subr.mxu0 0.0
    %5431 = vmatpush2.msra.mxu0 0.0
    %5432 = vmatprep.subr.mxu0 0.0
    %5433 = vmatpush2.msra.mxu0 0.0
    %5434 = vmatprep.subr.mxu0 0.0
    %5435 = vmatpush2.msra.mxu0 0.0
    %5436 = vmatprep.subr.mxu0 0.0
    %5437 = vmatpush2.msra.mxu0 0.0
    %5438 = vmatprep.subr.mxu0 0.0
    %5439 = vmatpush2.msra.mxu0 0.0
    %5440 = vmatprep.subr.mxu0 0.0
    %5441 = vmatpush2.msra.mxu0 0.0
    %5442 = vmatprep.subr.mxu0 0.0
    %5443 = vmatpush2.msra.mxu0 0.0
    %5444 = vmatprep.subr.mxu0 0.0
    %5445 = vmatpush2.msra.mxu0 0.0
    %5446 = vmatprep.subr.mxu0 0.0
    %5447 = vmatpush2.msra.mxu0 0.0
    %5448 = vmatprep.subr.mxu0 0.0
    %5449 = vmatpush2.msra.mxu0 0.0
    %5450 = vmatprep.subr.mxu0 0.0
    %5451 = vmatpush2.msra.mxu0 0.0
    %5452 = vmatprep.subr.mxu0 0.0
    %5453 = vmatpush2.msra.mxu0 0.0
    %5454 = vmatprep.mubr.f32.mxu0 0.0
    %5455 = vmatmul.mubr.f32.gmra.mxu0 %v4962
    %v5456 = vpop.f32.mrf.mxu0
    %v5457 = vadd.f32 %v1023, %v5456
    %v5458 = vpop.f32.mrf.mxu0
    %5459 = vdwg.mxu0
    %5460 = vmatprep.subr.mxu0 0.0
    %5461 = vmatpush1.msra.mxu0 0.0
    %5462 = vmatprep.subr.mxu0 0.0
    %5463 = vmatpush1.msra.mxu0 0.0
    %5464 = vmatprep.subr.mxu0 0.0
    %5465 = vmatpush1.msra.mxu0 0.0
    %5466 = vmatprep.subr.mxu0 0.0
    %5467 = vmatpush1.msra.mxu0 0.0
    %5468 = vmatprep.subr.mxu0 0.0
    %5469 = vmatpush1.msra.mxu0 0.0
    %5470 = vmatprep.subr.mxu0 0.0
    %5471 = vmatpush1.msra.mxu0 0.0
    %5472 = vmatprep.subr.mxu0 0.0
    %5473 = vmatpush1.msra.mxu0 0.0
    %5474 = vmatprep.subr.mxu0 0.0
    %5475 = vmatpush1.msra.mxu0 0.0
    %5476 = vmatprep.subr.mxu0 0.0
    %5477 = vmatpush1.msra.mxu0 0.0
    %5478 = vmatprep.subr.mxu0 0.0
    %5479 = vmatpush1.msra.mxu0 0.0
    %5480 = vmatprep.subr.mxu0 0.0
    %5481 = vmatpush1.msra.mxu0 0.0
    %5482 = vmatprep.subr.mxu0 0.0
    %5483 = vmatpush1.msra.mxu0 0.0
    %5484 = vmatprep.subr.mxu0 0.0
    %5485 = vmatpush1.msra.mxu0 %v996
    %5486 = vmatprep.subr.mxu0 0.0
    %5487 = vmatpush1.msra.mxu0 %v995
    %5488 = vmatprep.subr.mxu0 0.0
    %5489 = vmatpush1.msra.mxu0 %v994
    %5490 = vmatprep.subr.mxu0 0.0
    %5491 = vmatpush1.msra.mxu0 %v993
    %5492 = vmatprep.subr.mxu0 0.0
    %5493 = vmatpush2.msra.mxu0 0.0
    %5494 = vmatprep.subr.mxu0 0.0
    %5495 = vmatpush2.msra.mxu0 0.0
    %5496 = vmatprep.subr.mxu0 0.0
    %5497 = vmatpush2.msra.mxu0 0.0
    %5498 = vmatprep.subr.mxu0 0.0
    %5499 = vmatpush2.msra.mxu0 0.0
    %5500 = vmatprep.subr.mxu0 0.0
    %5501 = vmatpush2.msra.mxu0 0.0
    %5502 = vmatprep.subr.mxu0 0.0
    %5503 = vmatpush2.msra.mxu0 0.0
    %5504 = vmatprep.subr.mxu0 0.0
    %5505 = vmatpush2.msra.mxu0 0.0
    %5506 = vmatprep.subr.mxu0 0.0
    %5507 = vmatpush2.msra.mxu0 0.0
    %5508 = vmatprep.subr.mxu0 0.0
    %5509 = vmatpush2.msra.mxu0 0.0
    %5510 = vmatprep.subr.mxu0 0.0
    %5511 = vmatpush2.msra.mxu0 0.0
    %5512 = vmatprep.subr.mxu0 0.0
    %5513 = vmatpush2.msra.mxu0 0.0
    %5514 = vmatprep.subr.mxu0 0.0
    %5515 = vmatpush2.msra.mxu0 0.0
    %5516 = vmatprep.subr.mxu0 0.0
    %5517 = vmatpush2.msra.mxu0 0.0
    %5518 = vmatprep.subr.mxu0 0.0
    %5519 = vmatpush2.msra.mxu0 0.0
    %5520 = vmatprep.subr.mxu0 0.0
    %5521 = vmatpush2.msra.mxu0 0.0
    %5522 = vmatprep.subr.mxu0 0.0
    %5523 = vmatpush2.msra.mxu0 0.0
    %5524 = vmatprep.mubr.f32.mxu0 0.0
    %5525 = vmatmul.mubr.f32.gmra.mxu0 %v5035
    %v5526 = vpop.f32.mrf.mxu0
    %v5527 = vadd.f32 0.0, %v5526
    %v5528 = vpop.f32.mrf.mxu0
    %5529 = vdwg.mxu0
    %v5530 = vadd.f32 %v5457, %v5527
    %v5531 = vxor.u32 %v5107, 2147483648
    %v5532 = vmul.f32 %v5531, 1.442695
    %v5533 = vpow.pop %v5532
    %v5534 = vadd.f32 %v5533, 1.0
    %v5535 = vrcp.pop %v5534
    %v5536 = vmul.f32 1.0, %v5535
    %v5537 = vxor.u32 %v5248, 2147483648
    %v5538 = vmul.f32 %v5537, 1.442695
    %v5539 = vpow.pop %v5538
    %v5540 = vadd.f32 %v5539, 1.0
    %v5541 = vrcp.pop %v5540
    %v5542 = vmul.f32 1.0, %v5541
    %v5543 = vtanh.pop %v5389
    %v5544 = vxor.u32 %v5530, 2147483648
    %v5545 = vmul.f32 %v5544, 1.442695
    %v5546 = vpow.pop %v5545
    %v5547 = vadd.f32 %v5546, 1.0
    %v5548 = vrcp.pop %v5547
    %v5549 = vmul.f32 1.0, %v5548
    %v5550 = vmul.f32 %v5542, %v4646
    %v5551 = vmul.f32 %v5536, %v5543
    %v5552 = vadd.f32 %v5550, %v5551
    %v5553 = vtanh.pop %v5552
    %v5554 = vmul.f32 %v5549, %v5553
    %v5555 = vld [vmem:[#allocation2 + $0x28] sm:$0xff]
    %5556 = vmatprep.subr.mxu0 0.0
    %5557 = vmatpush1.msra.mxu0 0.0
    %5558 = vmatprep.subr.mxu0 0.0
    %5559 = vmatpush1.msra.mxu0 0.0
    %5560 = vmatprep.subr.mxu0 0.0
    %5561 = vmatpush1.msra.mxu0 0.0
    %5562 = vmatprep.subr.mxu0 0.0
    %5563 = vmatpush1.msra.mxu0 0.0
    %5564 = vmatprep.subr.mxu0 0.0
    %5565 = vmatpush1.msra.mxu0 0.0
    %5566 = vmatprep.subr.mxu0 0.0
    %5567 = vmatpush1.msra.mxu0 0.0
    %5568 = vmatprep.subr.mxu0 0.0
    %5569 = vmatpush1.msra.mxu0 0.0
    %5570 = vmatprep.subr.mxu0 0.0
    %5571 = vmatpush1.msra.mxu0 0.0
    %5572 = vmatprep.subr.mxu0 0.0
    %5573 = vmatpush1.msra.mxu0 0.0
    %5574 = vmatprep.subr.mxu0 0.0
    %5575 = vmatpush1.msra.mxu0 0.0
    %5576 = vmatprep.subr.mxu0 0.0
    %5577 = vmatpush1.msra.mxu0 0.0
    %5578 = vmatprep.subr.mxu0 0.0
    %5579 = vmatpush1.msra.mxu0 0.0
    %5580 = vmatprep.subr.mxu0 0.0
    %5581 = vmatpush1.msra.mxu0 %v425
    %5582 = vmatprep.subr.mxu0 0.0
    %5583 = vmatpush1.msra.mxu0 %v424
    %5584 = vmatprep.subr.mxu0 0.0
    %5585 = vmatpush1.msra.mxu0 %v423
    %5586 = vmatprep.subr.mxu0 0.0
    %5587 = vmatpush1.msra.mxu0 %v422
    %5588 = vmatprep.subr.mxu0 0.0
    %5589 = vmatpush2.msra.mxu0 0.0
    %5590 = vmatprep.subr.mxu0 0.0
    %5591 = vmatpush2.msra.mxu0 0.0
    %5592 = vmatprep.subr.mxu0 0.0
    %5593 = vmatpush2.msra.mxu0 0.0
    %5594 = vmatprep.subr.mxu0 0.0
    %5595 = vmatpush2.msra.mxu0 0.0
    %5596 = vmatprep.subr.mxu0 0.0
    %5597 = vmatpush2.msra.mxu0 0.0
    %5598 = vmatprep.subr.mxu0 0.0
    %5599 = vmatpush2.msra.mxu0 0.0
    %5600 = vmatprep.subr.mxu0 0.0
    %5601 = vmatpush2.msra.mxu0 0.0
    %5602 = vmatprep.subr.mxu0 0.0
    %5603 = vmatpush2.msra.mxu0 0.0
    %5604 = vmatprep.subr.mxu0 0.0
    %5605 = vmatpush2.msra.mxu0 0.0
    %5606 = vmatprep.subr.mxu0 0.0
    %5607 = vmatpush2.msra.mxu0 0.0
    %5608 = vmatprep.subr.mxu0 0.0
    %5609 = vmatpush2.msra.mxu0 0.0
    %5610 = vmatprep.subr.mxu0 0.0
    %5611 = vmatpush2.msra.mxu0 0.0
    %5612 = vmatprep.subr.mxu0 0.0
    %5613 = vmatpush2.msra.mxu0 0.0
    %5614 = vmatprep.subr.mxu0 0.0
    %5615 = vmatpush2.msra.mxu0 0.0
    %5616 = vmatprep.subr.mxu0 0.0
    %5617 = vmatpush2.msra.mxu0 0.0
    %5618 = vmatprep.subr.mxu0 0.0
    %5619 = vmatpush2.msra.mxu0 0.0
    %5620 = vmatprep.mubr.f32.mxu0 0.0
    %5621 = vmatmul.mubr.f32.gmra.mxu0 %v4962
    %v5622 = vpop.f32.mrf.mxu0
    %v5623 = vadd.f32 0.0, %v5622
    %v5624 = vpop.f32.mrf.mxu0
    %5625 = vdwg.mxu0
    %v5626 = vadd.f32 %v5555, %v5623
    %v5627 = vld [vmem:[#allocation3 + $0x28] sm:$0xff]
    %5628 = vmatprep.subr.mxu0 0.0
    %5629 = vmatpush1.msra.mxu0 0.0
    %5630 = vmatprep.subr.mxu0 0.0
    %5631 = vmatpush1.msra.mxu0 0.0
    %5632 = vmatprep.subr.mxu0 0.0
    %5633 = vmatpush1.msra.mxu0 0.0
    %5634 = vmatprep.subr.mxu0 0.0
    %5635 = vmatpush1.msra.mxu0 0.0
    %5636 = vmatprep.subr.mxu0 0.0
    %5637 = vmatpush1.msra.mxu0 0.0
    %5638 = vmatprep.subr.mxu0 0.0
    %5639 = vmatpush1.msra.mxu0 0.0
    %5640 = vmatprep.subr.mxu0 0.0
    %5641 = vmatpush1.msra.mxu0 0.0
    %5642 = vmatprep.subr.mxu0 0.0
    %5643 = vmatpush1.msra.mxu0 0.0
    %5644 = vmatprep.subr.mxu0 0.0
    %5645 = vmatpush1.msra.mxu0 0.0
    %5646 = vmatprep.subr.mxu0 0.0
    %5647 = vmatpush1.msra.mxu0 0.0
    %5648 = vmatprep.subr.mxu0 0.0
    %5649 = vmatpush1.msra.mxu0 0.0
    %5650 = vmatprep.subr.mxu0 0.0
    %5651 = vmatpush1.msra.mxu0 0.0
    %5652 = vmatprep.subr.mxu0 0.0
    %5653 = vmatpush1.msra.mxu0 %v429
    %5654 = vmatprep.subr.mxu0 0.0
    %5655 = vmatpush1.msra.mxu0 %v428
    %5656 = vmatprep.subr.mxu0 0.0
    %5657 = vmatpush1.msra.mxu0 %v427
    %5658 = vmatprep.subr.mxu0 0.0
    %5659 = vmatpush1.msra.mxu0 %v426
    %5660 = vmatprep.subr.mxu0 0.0
    %5661 = vmatpush2.msra.mxu0 0.0
    %5662 = vmatprep.subr.mxu0 0.0
    %5663 = vmatpush2.msra.mxu0 0.0
    %5664 = vmatprep.subr.mxu0 0.0
    %5665 = vmatpush2.msra.mxu0 0.0
    %5666 = vmatprep.subr.mxu0 0.0
    %5667 = vmatpush2.msra.mxu0 0.0
    %5668 = vmatprep.subr.mxu0 0.0
    %5669 = vmatpush2.msra.mxu0 0.0
    %5670 = vmatprep.subr.mxu0 0.0
    %5671 = vmatpush2.msra.mxu0 0.0
    %5672 = vmatprep.subr.mxu0 0.0
    %5673 = vmatpush2.msra.mxu0 0.0
    %5674 = vmatprep.subr.mxu0 0.0
    %5675 = vmatpush2.msra.mxu0 0.0
    %5676 = vmatprep.subr.mxu0 0.0
    %5677 = vmatpush2.msra.mxu0 0.0
    %5678 = vmatprep.subr.mxu0 0.0
    %5679 = vmatpush2.msra.mxu0 0.0
    %5680 = vmatprep.subr.mxu0 0.0
    %5681 = vmatpush2.msra.mxu0 0.0
    %5682 = vmatprep.subr.mxu0 0.0
    %5683 = vmatpush2.msra.mxu0 0.0
    %5684 = vmatprep.subr.mxu0 0.0
    %5685 = vmatpush2.msra.mxu0 0.0
    %5686 = vmatprep.subr.mxu0 0.0
    %5687 = vmatpush2.msra.mxu0 0.0
    %5688 = vmatprep.subr.mxu0 0.0
    %5689 = vmatpush2.msra.mxu0 0.0
    %5690 = vmatprep.subr.mxu0 0.0
    %5691 = vmatpush2.msra.mxu0 0.0
    %5692 = vmatprep.mubr.f32.mxu0 0.0
    %5693 = vmatmul.mubr.f32.gmra.mxu0 %v4962
    %v5694 = vpop.f32.mrf.mxu0
    %v5695 = vadd.f32 0.0, %v5694
    %v5696 = vpop.f32.mrf.mxu0
    %5697 = vdwg.mxu0
    %v5698 = vadd.f32 %v5627, %v5695
    %v5699 = vld [vmem:[#allocation4 + $0x28] sm:$0xff]
    %5700 = vmatprep.subr.mxu0 0.0
    %5701 = vmatpush1.msra.mxu0 0.0
    %5702 = vmatprep.subr.mxu0 0.0
    %5703 = vmatpush1.msra.mxu0 0.0
    %5704 = vmatprep.subr.mxu0 0.0
    %5705 = vmatpush1.msra.mxu0 0.0
    %5706 = vmatprep.subr.mxu0 0.0
    %5707 = vmatpush1.msra.mxu0 0.0
    %5708 = vmatprep.subr.mxu0 0.0
    %5709 = vmatpush1.msra.mxu0 0.0
    %5710 = vmatprep.subr.mxu0 0.0
    %5711 = vmatpush1.msra.mxu0 0.0
    %5712 = vmatprep.subr.mxu0 0.0
    %5713 = vmatpush1.msra.mxu0 0.0
    %5714 = vmatprep.subr.mxu0 0.0
    %5715 = vmatpush1.msra.mxu0 0.0
    %5716 = vmatprep.subr.mxu0 0.0
    %5717 = vmatpush1.msra.mxu0 0.0
    %5718 = vmatprep.subr.mxu0 0.0
    %5719 = vmatpush1.msra.mxu0 0.0
    %5720 = vmatprep.subr.mxu0 0.0
    %5721 = vmatpush1.msra.mxu0 0.0
    %5722 = vmatprep.subr.mxu0 0.0
    %5723 = vmatpush1.msra.mxu0 0.0
    %5724 = vmatprep.subr.mxu0 0.0
    %5725 = vmatpush1.msra.mxu0 %v433
    %5726 = vmatprep.subr.mxu0 0.0
    %5727 = vmatpush1.msra.mxu0 %v432
    %5728 = vmatprep.subr.mxu0 0.0
    %5729 = vmatpush1.msra.mxu0 %v431
    %5730 = vmatprep.subr.mxu0 0.0
    %5731 = vmatpush1.msra.mxu0 %v430
    %5732 = vmatprep.subr.mxu0 0.0
    %5733 = vmatpush2.msra.mxu0 0.0
    %5734 = vmatprep.subr.mxu0 0.0
    %5735 = vmatpush2.msra.mxu0 0.0
    %5736 = vmatprep.subr.mxu0 0.0
    %5737 = vmatpush2.msra.mxu0 0.0
    %5738 = vmatprep.subr.mxu0 0.0
    %5739 = vmatpush2.msra.mxu0 0.0
    %5740 = vmatprep.subr.mxu0 0.0
    %5741 = vmatpush2.msra.mxu0 0.0
    %5742 = vmatprep.subr.mxu0 0.0
    %5743 = vmatpush2.msra.mxu0 0.0
    %5744 = vmatprep.subr.mxu0 0.0
    %5745 = vmatpush2.msra.mxu0 0.0
    %5746 = vmatprep.subr.mxu0 0.0
    %5747 = vmatpush2.msra.mxu0 0.0
    %5748 = vmatprep.subr.mxu0 0.0
    %5749 = vmatpush2.msra.mxu0 0.0
    %5750 = vmatprep.subr.mxu0 0.0
    %5751 = vmatpush2.msra.mxu0 0.0
    %5752 = vmatprep.subr.mxu0 0.0
    %5753 = vmatpush2.msra.mxu0 0.0
    %5754 = vmatprep.subr.mxu0 0.0
    %5755 = vmatpush2.msra.mxu0 0.0
    %5756 = vmatprep.subr.mxu0 0.0
    %5757 = vmatpush2.msra.mxu0 0.0
    %5758 = vmatprep.subr.mxu0 0.0
    %5759 = vmatpush2.msra.mxu0 0.0
    %5760 = vmatprep.subr.mxu0 0.0
    %5761 = vmatpush2.msra.mxu0 0.0
    %5762 = vmatprep.subr.mxu0 0.0
    %5763 = vmatpush2.msra.mxu0 0.0
    %5764 = vmatprep.mubr.f32.mxu0 0.0
    %5765 = vmatmul.mubr.f32.gmra.mxu0 %v4962
    %v5766 = vpop.f32.mrf.mxu0
    %v5767 = vadd.f32 0.0, %v5766
    %v5768 = vpop.f32.mrf.mxu0
    %5769 = vdwg.mxu0
    %v5770 = vadd.f32 %v5699, %v5767
    %v5771 = vld [vmem:[#allocation5 + $0x28] sm:$0xff]
    %5772 = vmatprep.subr.mxu0 0.0
    %5773 = vmatpush1.msra.mxu0 0.0
    %5774 = vmatprep.subr.mxu0 0.0
    %5775 = vmatpush1.msra.mxu0 0.0
    %5776 = vmatprep.subr.mxu0 0.0
    %5777 = vmatpush1.msra.mxu0 0.0
    %5778 = vmatprep.subr.mxu0 0.0
    %5779 = vmatpush1.msra.mxu0 0.0
    %5780 = vmatprep.subr.mxu0 0.0
    %5781 = vmatpush1.msra.mxu0 0.0
    %5782 = vmatprep.subr.mxu0 0.0
    %5783 = vmatpush1.msra.mxu0 0.0
    %5784 = vmatprep.subr.mxu0 0.0
    %5785 = vmatpush1.msra.mxu0 0.0
    %5786 = vmatprep.subr.mxu0 0.0
    %5787 = vmatpush1.msra.mxu0 0.0
    %5788 = vmatprep.subr.mxu0 0.0
    %5789 = vmatpush1.msra.mxu0 0.0
    %5790 = vmatprep.subr.mxu0 0.0
    %5791 = vmatpush1.msra.mxu0 0.0
    %5792 = vmatprep.subr.mxu0 0.0
    %5793 = vmatpush1.msra.mxu0 0.0
    %5794 = vmatprep.subr.mxu0 0.0
    %5795 = vmatpush1.msra.mxu0 0.0
    %5796 = vmatprep.subr.mxu0 0.0
    %5797 = vmatpush1.msra.mxu0 %v437
    %5798 = vmatprep.subr.mxu0 0.0
    %5799 = vmatpush1.msra.mxu0 %v436
    %5800 = vmatprep.subr.mxu0 0.0
    %5801 = vmatpush1.msra.mxu0 %v435
    %5802 = vmatprep.subr.mxu0 0.0
    %5803 = vmatpush1.msra.mxu0 %v434
    %5804 = vmatprep.subr.mxu0 0.0
    %5805 = vmatpush2.msra.mxu0 0.0
    %5806 = vmatprep.subr.mxu0 0.0
    %5807 = vmatpush2.msra.mxu0 0.0
    %5808 = vmatprep.subr.mxu0 0.0
    %5809 = vmatpush2.msra.mxu0 0.0
    %5810 = vmatprep.subr.mxu0 0.0
    %5811 = vmatpush2.msra.mxu0 0.0
    %5812 = vmatprep.subr.mxu0 0.0
    %5813 = vmatpush2.msra.mxu0 0.0
    %5814 = vmatprep.subr.mxu0 0.0
    %5815 = vmatpush2.msra.mxu0 0.0
    %5816 = vmatprep.subr.mxu0 0.0
    %5817 = vmatpush2.msra.mxu0 0.0
    %5818 = vmatprep.subr.mxu0 0.0
    %5819 = vmatpush2.msra.mxu0 0.0
    %5820 = vmatprep.subr.mxu0 0.0
    %5821 = vmatpush2.msra.mxu0 0.0
    %5822 = vmatprep.subr.mxu0 0.0
    %5823 = vmatpush2.msra.mxu0 0.0
    %5824 = vmatprep.subr.mxu0 0.0
    %5825 = vmatpush2.msra.mxu0 0.0
    %5826 = vmatprep.subr.mxu0 0.0
    %5827 = vmatpush2.msra.mxu0 0.0
    %5828 = vmatprep.subr.mxu0 0.0
    %5829 = vmatpush2.msra.mxu0 0.0
    %5830 = vmatprep.subr.mxu0 0.0
    %5831 = vmatpush2.msra.mxu0 0.0
    %5832 = vmatprep.subr.mxu0 0.0
    %5833 = vmatpush2.msra.mxu0 0.0
    %5834 = vmatprep.subr.mxu0 0.0
    %5835 = vmatpush2.msra.mxu0 0.0
    %5836 = vmatprep.mubr.f32.mxu0 0.0
    %5837 = vmatmul.mubr.f32.gmra.mxu0 %v4962
    %v5838 = vpop.f32.mrf.mxu0
    %v5839 = vadd.f32 0.0, %v5838
    %v5840 = vpop.f32.mrf.mxu0
    %5841 = vdwg.mxu0
    %v5842 = vadd.f32 %v5771, %v5839
    %v5843 = vxor.u32 %v5626, 2147483648
    %v5844 = vmul.f32 %v5843, 1.442695
    %v5845 = vpow.pop %v5844
    %v5846 = vadd.f32 %v5845, 1.0
    %v5847 = vrcp.pop %v5846
    %v5848 = vmul.f32 1.0, %v5847
    %v5849 = vxor.u32 %v5698, 2147483648
    %v5850 = vmul.f32 %v5849, 1.442695
    %v5851 = vpow.pop %v5850
    %v5852 = vadd.f32 %v5851, 1.0
    %v5853 = vrcp.pop %v5852
    %v5854 = vmul.f32 1.0, %v5853
    %v5855 = vtanh.pop %v5770
    %v5856 = vxor.u32 %v5842, 2147483648
    %v5857 = vmul.f32 %v5856, 1.442695
    %v5858 = vpow.pop %v5857
    %v5859 = vadd.f32 %v5858, 1.0
    %v5860 = vrcp.pop %v5859
    %v5861 = vmul.f32 1.0, %v5860
    %v5862 = vmul.f32 %v5854, %v4958
    %v5863 = vmul.f32 %v5848, %v5855
    %v5864 = vadd.f32 %v5862, %v5863
    %v5865 = vtanh.pop %v5864
    %v5866 = vmul.f32 %v5861, %v5865
    %v5868 = vsel %vm590, %v5866, 0
    %5870 = vmatprep.subr.mxu0 0.0
    %5871 = vmatpush1.msra.mxu0 0.0
    %5872 = vmatprep.subr.mxu0 0.0
    %5873 = vmatpush1.msra.mxu0 0.0
    %5874 = vmatprep.subr.mxu0 0.0
    %5875 = vmatpush1.msra.mxu0 0.0
    %5876 = vmatprep.subr.mxu0 0.0
    %5877 = vmatpush1.msra.mxu0 0.0
    %5878 = vmatprep.subr.mxu0 0.0
    %5879 = vmatpush1.msra.mxu0 0.0
    %5880 = vmatprep.subr.mxu0 0.0
    %5881 = vmatpush1.msra.mxu0 0.0
    %5882 = vmatprep.subr.mxu0 0.0
    %5883 = vmatpush1.msra.mxu0 0.0
    %5884 = vmatprep.subr.mxu0 0.0
    %5885 = vmatpush1.msra.mxu0 0.0
    %5886 = vmatprep.subr.mxu0 0.0
    %5887 = vmatpush1.msra.mxu0 0.0
    %5888 = vmatprep.subr.mxu0 0.0
    %5889 = vmatpush1.msra.mxu0 0.0
    %5890 = vmatprep.subr.mxu0 0.0
    %5891 = vmatpush1.msra.mxu0 0.0
    %5892 = vmatprep.subr.mxu0 0.0
    %5893 = vmatpush1.msra.mxu0 0.0
    %5894 = vmatprep.subr.mxu0 0.0
    %5895 = vmatpush1.msra.mxu0 %v968
    %5896 = vmatprep.subr.mxu0 0.0
    %5897 = vmatpush1.msra.mxu0 %v967
    %5898 = vmatprep.subr.mxu0 0.0
    %5899 = vmatpush1.msra.mxu0 %v966
    %5900 = vmatprep.subr.mxu0 0.0
    %5901 = vmatpush1.msra.mxu0 %v965
    %5902 = vmatprep.subr.mxu0 0.0
    %5903 = vmatpush2.msra.mxu0 0.0
    %5904 = vmatprep.subr.mxu0 0.0
    %5905 = vmatpush2.msra.mxu0 0.0
    %5906 = vmatprep.subr.mxu0 0.0
    %5907 = vmatpush2.msra.mxu0 0.0
    %5908 = vmatprep.subr.mxu0 0.0
    %5909 = vmatpush2.msra.mxu0 0.0
    %5910 = vmatprep.subr.mxu0 0.0
    %5911 = vmatpush2.msra.mxu0 0.0
    %5912 = vmatprep.subr.mxu0 0.0
    %5913 = vmatpush2.msra.mxu0 0.0
    %5914 = vmatprep.subr.mxu0 0.0
    %5915 = vmatpush2.msra.mxu0 0.0
    %5916 = vmatprep.subr.mxu0 0.0
    %5917 = vmatpush2.msra.mxu0 0.0
    %5918 = vmatprep.subr.mxu0 0.0
    %5919 = vmatpush2.msra.mxu0 0.0
    %5920 = vmatprep.subr.mxu0 0.0
    %5921 = vmatpush2.msra.mxu0 0.0
    %5922 = vmatprep.subr.mxu0 0.0
    %5923 = vmatpush2.msra.mxu0 0.0
    %5924 = vmatprep.subr.mxu0 0.0
    %5925 = vmatpush2.msra.mxu0 0.0
    %5926 = vmatprep.subr.mxu0 0.0
    %5927 = vmatpush2.msra.mxu0 0.0
    %5928 = vmatprep.subr.mxu0 0.0
    %5929 = vmatpush2.msra.mxu0 0.0
    %5930 = vmatprep.subr.mxu0 0.0
    %5931 = vmatpush2.msra.mxu0 0.0
    %5932 = vmatprep.subr.mxu0 0.0
    %5933 = vmatpush2.msra.mxu0 0.0
    %5934 = vmatprep.mubr.f32.mxu0 0.0
    %5935 = vmatmul.mubr.f32.gmra.mxu0 %v5868
    %v5936 = vpop.f32.mrf.mxu0
    %v5937 = vadd.f32 %v1005, %v5936
    %v5938 = vpop.f32.mrf.mxu0
    %5939 = vdwg.mxu0
    %v5941 = vsel %vm590, %v5554, 0
    %5943 = vmatprep.subr.mxu0 0.0
    %5944 = vmatpush1.msra.mxu0 0.0
    %5945 = vmatprep.subr.mxu0 0.0
    %5946 = vmatpush1.msra.mxu0 0.0
    %5947 = vmatprep.subr.mxu0 0.0
    %5948 = vmatpush1.msra.mxu0 0.0
    %5949 = vmatprep.subr.mxu0 0.0
    %5950 = vmatpush1.msra.mxu0 0.0
    %5951 = vmatprep.subr.mxu0 0.0
    %5952 = vmatpush1.msra.mxu0 0.0
    %5953 = vmatprep.subr.mxu0 0.0
    %5954 = vmatpush1.msra.mxu0 0.0
    %5955 = vmatprep.subr.mxu0 0.0
    %5956 = vmatpush1.msra.mxu0 0.0
    %5957 = vmatprep.subr.mxu0 0.0
    %5958 = vmatpush1.msra.mxu0 0.0
    %5959 = vmatprep.subr.mxu0 0.0
    %5960 = vmatpush1.msra.mxu0 0.0
    %5961 = vmatprep.subr.mxu0 0.0
    %5962 = vmatpush1.msra.mxu0 0.0
    %5963 = vmatprep.subr.mxu0 0.0
    %5964 = vmatpush1.msra.mxu0 0.0
    %5965 = vmatprep.subr.mxu0 0.0
    %5966 = vmatpush1.msra.mxu0 0.0
    %5967 = vmatprep.subr.mxu0 0.0
    %5968 = vmatpush1.msra.mxu0 %v984
    %5969 = vmatprep.subr.mxu0 0.0
    %5970 = vmatpush1.msra.mxu0 %v983
    %5971 = vmatprep.subr.mxu0 0.0
    %5972 = vmatpush1.msra.mxu0 %v982
    %5973 = vmatprep.subr.mxu0 0.0
    %5974 = vmatpush1.msra.mxu0 %v981
    %5975 = vmatprep.subr.mxu0 0.0
    %5976 = vmatpush2.msra.mxu0 0.0
    %5977 = vmatprep.subr.mxu0 0.0
    %5978 = vmatpush2.msra.mxu0 0.0
    %5979 = vmatprep.subr.mxu0 0.0
    %5980 = vmatpush2.msra.mxu0 0.0
    %5981 = vmatprep.subr.mxu0 0.0
    %5982 = vmatpush2.msra.mxu0 0.0
    %5983 = vmatprep.subr.mxu0 0.0
    %5984 = vmatpush2.msra.mxu0 0.0
    %5985 = vmatprep.subr.mxu0 0.0
    %5986 = vmatpush2.msra.mxu0 0.0
    %5987 = vmatprep.subr.mxu0 0.0
    %5988 = vmatpush2.msra.mxu0 0.0
    %5989 = vmatprep.subr.mxu0 0.0
    %5990 = vmatpush2.msra.mxu0 0.0
    %5991 = vmatprep.subr.mxu0 0.0
    %5992 = vmatpush2.msra.mxu0 0.0
    %5993 = vmatprep.subr.mxu0 0.0
    %5994 = vmatpush2.msra.mxu0 0.0
    %5995 = vmatprep.subr.mxu0 0.0
    %5996 = vmatpush2.msra.mxu0 0.0
    %5997 = vmatprep.subr.mxu0 0.0
    %5998 = vmatpush2.msra.mxu0 0.0
    %5999 = vmatprep.subr.mxu0 0.0
    %6000 = vmatpush2.msra.mxu0 0.0
    %6001 = vmatprep.subr.mxu0 0.0
    %6002 = vmatpush2.msra.mxu0 0.0
    %6003 = vmatprep.subr.mxu0 0.0
    %6004 = vmatpush2.msra.mxu0 0.0
    %6005 = vmatprep.subr.mxu0 0.0
    %6006 = vmatpush2.msra.mxu0 0.0
    %6007 = vmatprep.mubr.f32.mxu0 0.0
    %6008 = vmatmul.mubr.f32.gmra.mxu0 %v5941
    %v6009 = vpop.f32.mrf.mxu0
    %v6010 = vadd.f32 0.0, %v6009
    %v6011 = vpop.f32.mrf.mxu0
    %6012 = vdwg.mxu0
    %v6013 = vadd.f32 %v5937, %v6010
    %6014 = vmatprep.subr.mxu0 0.0
    %6015 = vmatpush1.msra.mxu0 0.0
    %6016 = vmatprep.subr.mxu0 0.0
    %6017 = vmatpush1.msra.mxu0 0.0
    %6018 = vmatprep.subr.mxu0 0.0
    %6019 = vmatpush1.msra.mxu0 0.0
    %6020 = vmatprep.subr.mxu0 0.0
    %6021 = vmatpush1.msra.mxu0 0.0
    %6022 = vmatprep.subr.mxu0 0.0
    %6023 = vmatpush1.msra.mxu0 0.0
    %6024 = vmatprep.subr.mxu0 0.0
    %6025 = vmatpush1.msra.mxu0 0.0
    %6026 = vmatprep.subr.mxu0 0.0
    %6027 = vmatpush1.msra.mxu0 0.0
    %6028 = vmatprep.subr.mxu0 0.0
    %6029 = vmatpush1.msra.mxu0 0.0
    %6030 = vmatprep.subr.mxu0 0.0
    %6031 = vmatpush1.msra.mxu0 0.0
    %6032 = vmatprep.subr.mxu0 0.0
    %6033 = vmatpush1.msra.mxu0 0.0
    %6034 = vmatprep.subr.mxu0 0.0
    %6035 = vmatpush1.msra.mxu0 0.0
    %6036 = vmatprep.subr.mxu0 0.0
    %6037 = vmatpush1.msra.mxu0 0.0
    %6038 = vmatprep.subr.mxu0 0.0
    %6039 = vmatpush1.msra.mxu0 %v972
    %6040 = vmatprep.subr.mxu0 0.0
    %6041 = vmatpush1.msra.mxu0 %v971
    %6042 = vmatprep.subr.mxu0 0.0
    %6043 = vmatpush1.msra.mxu0 %v970
    %6044 = vmatprep.subr.mxu0 0.0
    %6045 = vmatpush1.msra.mxu0 %v969
    %6046 = vmatprep.subr.mxu0 0.0
    %6047 = vmatpush2.msra.mxu0 0.0
    %6048 = vmatprep.subr.mxu0 0.0
    %6049 = vmatpush2.msra.mxu0 0.0
    %6050 = vmatprep.subr.mxu0 0.0
    %6051 = vmatpush2.msra.mxu0 0.0
    %6052 = vmatprep.subr.mxu0 0.0
    %6053 = vmatpush2.msra.mxu0 0.0
    %6054 = vmatprep.subr.mxu0 0.0
    %6055 = vmatpush2.msra.mxu0 0.0
    %6056 = vmatprep.subr.mxu0 0.0
    %6057 = vmatpush2.msra.mxu0 0.0
    %6058 = vmatprep.subr.mxu0 0.0
    %6059 = vmatpush2.msra.mxu0 0.0
    %6060 = vmatprep.subr.mxu0 0.0
    %6061 = vmatpush2.msra.mxu0 0.0
    %6062 = vmatprep.subr.mxu0 0.0
    %6063 = vmatpush2.msra.mxu0 0.0
    %6064 = vmatprep.subr.mxu0 0.0
    %6065 = vmatpush2.msra.mxu0 0.0
    %6066 = vmatprep.subr.mxu0 0.0
    %6067 = vmatpush2.msra.mxu0 0.0
    %6068 = vmatprep.subr.mxu0 0.0
    %6069 = vmatpush2.msra.mxu0 0.0
    %6070 = vmatprep.subr.mxu0 0.0
    %6071 = vmatpush2.msra.mxu0 0.0
    %6072 = vmatprep.subr.mxu0 0.0
    %6073 = vmatpush2.msra.mxu0 0.0
    %6074 = vmatprep.subr.mxu0 0.0
    %6075 = vmatpush2.msra.mxu0 0.0
    %6076 = vmatprep.subr.mxu0 0.0
    %6077 = vmatpush2.msra.mxu0 0.0
    %6078 = vmatprep.mubr.f32.mxu0 0.0
    %6079 = vmatmul.mubr.f32.gmra.mxu0 %v5868
    %v6080 = vpop.f32.mrf.mxu0
    %v6081 = vadd.f32 %v1011, %v6080
    %v6082 = vpop.f32.mrf.mxu0
    %6083 = vdwg.mxu0
    %6084 = vmatprep.subr.mxu0 0.0
    %6085 = vmatpush1.msra.mxu0 0.0
    %6086 = vmatprep.subr.mxu0 0.0
    %6087 = vmatpush1.msra.mxu0 0.0
    %6088 = vmatprep.subr.mxu0 0.0
    %6089 = vmatpush1.msra.mxu0 0.0
    %6090 = vmatprep.subr.mxu0 0.0
    %6091 = vmatpush1.msra.mxu0 0.0
    %6092 = vmatprep.subr.mxu0 0.0
    %6093 = vmatpush1.msra.mxu0 0.0
    %6094 = vmatprep.subr.mxu0 0.0
    %6095 = vmatpush1.msra.mxu0 0.0
    %6096 = vmatprep.subr.mxu0 0.0
    %6097 = vmatpush1.msra.mxu0 0.0
    %6098 = vmatprep.subr.mxu0 0.0
    %6099 = vmatpush1.msra.mxu0 0.0
    %6100 = vmatprep.subr.mxu0 0.0
    %6101 = vmatpush1.msra.mxu0 0.0
    %6102 = vmatprep.subr.mxu0 0.0
    %6103 = vmatpush1.msra.mxu0 0.0
    %6104 = vmatprep.subr.mxu0 0.0
    %6105 = vmatpush1.msra.mxu0 0.0
    %6106 = vmatprep.subr.mxu0 0.0
    %6107 = vmatpush1.msra.mxu0 0.0
    %6108 = vmatprep.subr.mxu0 0.0
    %6109 = vmatpush1.msra.mxu0 %v988
    %6110 = vmatprep.subr.mxu0 0.0
    %6111 = vmatpush1.msra.mxu0 %v987
    %6112 = vmatprep.subr.mxu0 0.0
    %6113 = vmatpush1.msra.mxu0 %v986
    %6114 = vmatprep.subr.mxu0 0.0
    %6115 = vmatpush1.msra.mxu0 %v985
    %6116 = vmatprep.subr.mxu0 0.0
    %6117 = vmatpush2.msra.mxu0 0.0
    %6118 = vmatprep.subr.mxu0 0.0
    %6119 = vmatpush2.msra.mxu0 0.0
    %6120 = vmatprep.subr.mxu0 0.0
    %6121 = vmatpush2.msra.mxu0 0.0
    %6122 = vmatprep.subr.mxu0 0.0
    %6123 = vmatpush2.msra.mxu0 0.0
    %6124 = vmatprep.subr.mxu0 0.0
    %6125 = vmatpush2.msra.mxu0 0.0
    %6126 = vmatprep.subr.mxu0 0.0
    %6127 = vmatpush2.msra.mxu0 0.0
    %6128 = vmatprep.subr.mxu0 0.0
    %6129 = vmatpush2.msra.mxu0 0.0
    %6130 = vmatprep.subr.mxu0 0.0
    %6131 = vmatpush2.msra.mxu0 0.0
    %6132 = vmatprep.subr.mxu0 0.0
    %6133 = vmatpush2.msra.mxu0 0.0
    %6134 = vmatprep.subr.mxu0 0.0
    %6135 = vmatpush2.msra.mxu0 0.0
    %6136 = vmatprep.subr.mxu0 0.0
    %6137 = vmatpush2.msra.mxu0 0.0
    %6138 = vmatprep.subr.mxu0 0.0
    %6139 = vmatpush2.msra.mxu0 0.0
    %6140 = vmatprep.subr.mxu0 0.0
    %6141 = vmatpush2.msra.mxu0 0.0
    %6142 = vmatprep.subr.mxu0 0.0
    %6143 = vmatpush2.msra.mxu0 0.0
    %6144 = vmatprep.subr.mxu0 0.0
    %6145 = vmatpush2.msra.mxu0 0.0
    %6146 = vmatprep.subr.mxu0 0.0
    %6147 = vmatpush2.msra.mxu0 0.0
    %6148 = vmatprep.mubr.f32.mxu0 0.0
    %6149 = vmatmul.mubr.f32.gmra.mxu0 %v5941
    %v6150 = vpop.f32.mrf.mxu0
    %v6151 = vadd.f32 0.0, %v6150
    %v6152 = vpop.f32.mrf.mxu0
    %6153 = vdwg.mxu0
    %v6154 = vadd.f32 %v6081, %v6151
    %6155 = vmatprep.subr.mxu0 0.0
    %6156 = vmatpush1.msra.mxu0 0.0
    %6157 = vmatprep.subr.mxu0 0.0
    %6158 = vmatpush1.msra.mxu0 0.0
    %6159 = vmatprep.subr.mxu0 0.0
    %6160 = vmatpush1.msra.mxu0 0.0
    %6161 = vmatprep.subr.mxu0 0.0
    %6162 = vmatpush1.msra.mxu0 0.0
    %6163 = vmatprep.subr.mxu0 0.0
    %6164 = vmatpush1.msra.mxu0 0.0
    %6165 = vmatprep.subr.mxu0 0.0
    %6166 = vmatpush1.msra.mxu0 0.0
    %6167 = vmatprep.subr.mxu0 0.0
    %6168 = vmatpush1.msra.mxu0 0.0
    %6169 = vmatprep.subr.mxu0 0.0
    %6170 = vmatpush1.msra.mxu0 0.0
    %6171 = vmatprep.subr.mxu0 0.0
    %6172 = vmatpush1.msra.mxu0 0.0
    %6173 = vmatprep.subr.mxu0 0.0
    %6174 = vmatpush1.msra.mxu0 0.0
    %6175 = vmatprep.subr.mxu0 0.0
    %6176 = vmatpush1.msra.mxu0 0.0
    %6177 = vmatprep.subr.mxu0 0.0
    %6178 = vmatpush1.msra.mxu0 0.0
    %6179 = vmatprep.subr.mxu0 0.0
    %6180 = vmatpush1.msra.mxu0 %v976
    %6181 = vmatprep.subr.mxu0 0.0
    %6182 = vmatpush1.msra.mxu0 %v975
    %6183 = vmatprep.subr.mxu0 0.0
    %6184 = vmatpush1.msra.mxu0 %v974
    %6185 = vmatprep.subr.mxu0 0.0
    %6186 = vmatpush1.msra.mxu0 %v973
    %6187 = vmatprep.subr.mxu0 0.0
    %6188 = vmatpush2.msra.mxu0 0.0
    %6189 = vmatprep.subr.mxu0 0.0
    %6190 = vmatpush2.msra.mxu0 0.0
    %6191 = vmatprep.subr.mxu0 0.0
    %6192 = vmatpush2.msra.mxu0 0.0
    %6193 = vmatprep.subr.mxu0 0.0
    %6194 = vmatpush2.msra.mxu0 0.0
    %6195 = vmatprep.subr.mxu0 0.0
    %6196 = vmatpush2.msra.mxu0 0.0
    %6197 = vmatprep.subr.mxu0 0.0
    %6198 = vmatpush2.msra.mxu0 0.0
    %6199 = vmatprep.subr.mxu0 0.0
    %6200 = vmatpush2.msra.mxu0 0.0
    %6201 = vmatprep.subr.mxu0 0.0
    %6202 = vmatpush2.msra.mxu0 0.0
    %6203 = vmatprep.subr.mxu0 0.0
    %6204 = vmatpush2.msra.mxu0 0.0
    %6205 = vmatprep.subr.mxu0 0.0
    %6206 = vmatpush2.msra.mxu0 0.0
    %6207 = vmatprep.subr.mxu0 0.0
    %6208 = vmatpush2.msra.mxu0 0.0
    %6209 = vmatprep.subr.mxu0 0.0
    %6210 = vmatpush2.msra.mxu0 0.0
    %6211 = vmatprep.subr.mxu0 0.0
    %6212 = vmatpush2.msra.mxu0 0.0
    %6213 = vmatprep.subr.mxu0 0.0
    %6214 = vmatpush2.msra.mxu0 0.0
    %6215 = vmatprep.subr.mxu0 0.0
    %6216 = vmatpush2.msra.mxu0 0.0
    %6217 = vmatprep.subr.mxu0 0.0
    %6218 = vmatpush2.msra.mxu0 0.0
    %6219 = vmatprep.mubr.f32.mxu0 0.0
    %6220 = vmatmul.mubr.f32.gmra.mxu0 %v5868
    %v6221 = vpop.f32.mrf.mxu0
    %v6222 = vadd.f32 %v1017, %v6221
    %v6223 = vpop.f32.mrf.mxu0
    %6224 = vdwg.mxu0
    %6225 = vmatprep.subr.mxu0 0.0
    %6226 = vmatpush1.msra.mxu0 0.0
    %6227 = vmatprep.subr.mxu0 0.0
    %6228 = vmatpush1.msra.mxu0 0.0
    %6229 = vmatprep.subr.mxu0 0.0
    %6230 = vmatpush1.msra.mxu0 0.0
    %6231 = vmatprep.subr.mxu0 0.0
    %6232 = vmatpush1.msra.mxu0 0.0
    %6233 = vmatprep.subr.mxu0 0.0
    %6234 = vmatpush1.msra.mxu0 0.0
    %6235 = vmatprep.subr.mxu0 0.0
    %6236 = vmatpush1.msra.mxu0 0.0
    %6237 = vmatprep.subr.mxu0 0.0
    %6238 = vmatpush1.msra.mxu0 0.0
    %6239 = vmatprep.subr.mxu0 0.0
    %6240 = vmatpush1.msra.mxu0 0.0
    %6241 = vmatprep.subr.mxu0 0.0
    %6242 = vmatpush1.msra.mxu0 0.0
    %6243 = vmatprep.subr.mxu0 0.0
    %6244 = vmatpush1.msra.mxu0 0.0
    %6245 = vmatprep.subr.mxu0 0.0
    %6246 = vmatpush1.msra.mxu0 0.0
    %6247 = vmatprep.subr.mxu0 0.0
    %6248 = vmatpush1.msra.mxu0 0.0
    %6249 = vmatprep.subr.mxu0 0.0
    %6250 = vmatpush1.msra.mxu0 %v992
    %6251 = vmatprep.subr.mxu0 0.0
    %6252 = vmatpush1.msra.mxu0 %v991
    %6253 = vmatprep.subr.mxu0 0.0
    %6254 = vmatpush1.msra.mxu0 %v990
    %6255 = vmatprep.subr.mxu0 0.0
    %6256 = vmatpush1.msra.mxu0 %v989
    %6257 = vmatprep.subr.mxu0 0.0
    %6258 = vmatpush2.msra.mxu0 0.0
    %6259 = vmatprep.subr.mxu0 0.0
    %6260 = vmatpush2.msra.mxu0 0.0
    %6261 = vmatprep.subr.mxu0 0.0
    %6262 = vmatpush2.msra.mxu0 0.0
    %6263 = vmatprep.subr.mxu0 0.0
    %6264 = vmatpush2.msra.mxu0 0.0
    %6265 = vmatprep.subr.mxu0 0.0
    %6266 = vmatpush2.msra.mxu0 0.0
    %6267 = vmatprep.subr.mxu0 0.0
    %6268 = vmatpush2.msra.mxu0 0.0
    %6269 = vmatprep.subr.mxu0 0.0
    %6270 = vmatpush2.msra.mxu0 0.0
    %6271 = vmatprep.subr.mxu0 0.0
    %6272 = vmatpush2.msra.mxu0 0.0
    %6273 = vmatprep.subr.mxu0 0.0
    %6274 = vmatpush2.msra.mxu0 0.0
    %6275 = vmatprep.subr.mxu0 0.0
    %6276 = vmatpush2.msra.mxu0 0.0
    %6277 = vmatprep.subr.mxu0 0.0
    %6278 = vmatpush2.msra.mxu0 0.0
    %6279 = vmatprep.subr.mxu0 0.0
    %6280 = vmatpush2.msra.mxu0 0.0
    %6281 = vmatprep.subr.mxu0 0.0
    %6282 = vmatpush2.msra.mxu0 0.0
    %6283 = vmatprep.subr.mxu0 0.0
    %6284 = vmatpush2.msra.mxu0 0.0
    %6285 = vmatprep.subr.mxu0 0.0
    %6286 = vmatpush2.msra.mxu0 0.0
    %6287 = vmatprep.subr.mxu0 0.0
    %6288 = vmatpush2.msra.mxu0 0.0
    %6289 = vmatprep.mubr.f32.mxu0 0.0
    %6290 = vmatmul.mubr.f32.gmra.mxu0 %v5941
    %v6291 = vpop.f32.mrf.mxu0
    %v6292 = vadd.f32 0.0, %v6291
    %v6293 = vpop.f32.mrf.mxu0
    %6294 = vdwg.mxu0
    %v6295 = vadd.f32 %v6222, %v6292
    %6296 = vmatprep.subr.mxu0 0.0
    %6297 = vmatpush1.msra.mxu0 0.0
    %6298 = vmatprep.subr.mxu0 0.0
    %6299 = vmatpush1.msra.mxu0 0.0
    %6300 = vmatprep.subr.mxu0 0.0
    %6301 = vmatpush1.msra.mxu0 0.0
    %6302 = vmatprep.subr.mxu0 0.0
    %6303 = vmatpush1.msra.mxu0 0.0
    %6304 = vmatprep.subr.mxu0 0.0
    %6305 = vmatpush1.msra.mxu0 0.0
    %6306 = vmatprep.subr.mxu0 0.0
    %6307 = vmatpush1.msra.mxu0 0.0
    %6308 = vmatprep.subr.mxu0 0.0
    %6309 = vmatpush1.msra.mxu0 0.0
    %6310 = vmatprep.subr.mxu0 0.0
    %6311 = vmatpush1.msra.mxu0 0.0
    %6312 = vmatprep.subr.mxu0 0.0
    %6313 = vmatpush1.msra.mxu0 0.0
    %6314 = vmatprep.subr.mxu0 0.0
    %6315 = vmatpush1.msra.mxu0 0.0
    %6316 = vmatprep.subr.mxu0 0.0
    %6317 = vmatpush1.msra.mxu0 0.0
    %6318 = vmatprep.subr.mxu0 0.0
    %6319 = vmatpush1.msra.mxu0 0.0
    %6320 = vmatprep.subr.mxu0 0.0
    %6321 = vmatpush1.msra.mxu0 %v980
    %6322 = vmatprep.subr.mxu0 0.0
    %6323 = vmatpush1.msra.mxu0 %v979
    %6324 = vmatprep.subr.mxu0 0.0
    %6325 = vmatpush1.msra.mxu0 %v978
    %6326 = vmatprep.subr.mxu0 0.0
    %6327 = vmatpush1.msra.mxu0 %v977
    %6328 = vmatprep.subr.mxu0 0.0
    %6329 = vmatpush2.msra.mxu0 0.0
    %6330 = vmatprep.subr.mxu0 0.0
    %6331 = vmatpush2.msra.mxu0 0.0
    %6332 = vmatprep.subr.mxu0 0.0
    %6333 = vmatpush2.msra.mxu0 0.0
    %6334 = vmatprep.subr.mxu0 0.0
    %6335 = vmatpush2.msra.mxu0 0.0
    %6336 = vmatprep.subr.mxu0 0.0
    %6337 = vmatpush2.msra.mxu0 0.0
    %6338 = vmatprep.subr.mxu0 0.0
    %6339 = vmatpush2.msra.mxu0 0.0
    %6340 = vmatprep.subr.mxu0 0.0
    %6341 = vmatpush2.msra.mxu0 0.0
    %6342 = vmatprep.subr.mxu0 0.0
    %6343 = vmatpush2.msra.mxu0 0.0
    %6344 = vmatprep.subr.mxu0 0.0
    %6345 = vmatpush2.msra.mxu0 0.0
    %6346 = vmatprep.subr.mxu0 0.0
    %6347 = vmatpush2.msra.mxu0 0.0
    %6348 = vmatprep.subr.mxu0 0.0
    %6349 = vmatpush2.msra.mxu0 0.0
    %6350 = vmatprep.subr.mxu0 0.0
    %6351 = vmatpush2.msra.mxu0 0.0
    %6352 = vmatprep.subr.mxu0 0.0
    %6353 = vmatpush2.msra.mxu0 0.0
    %6354 = vmatprep.subr.mxu0 0.0
    %6355 = vmatpush2.msra.mxu0 0.0
    %6356 = vmatprep.subr.mxu0 0.0
    %6357 = vmatpush2.msra.mxu0 0.0
    %6358 = vmatprep.subr.mxu0 0.0
    %6359 = vmatpush2.msra.mxu0 0.0
    %6360 = vmatprep.mubr.f32.mxu0 0.0
    %6361 = vmatmul.mubr.f32.gmra.mxu0 %v5868
    %v6362 = vpop.f32.mrf.mxu0
    %v6363 = vadd.f32 %v1023, %v6362
    %v6364 = vpop.f32.mrf.mxu0
    %6365 = vdwg.mxu0
    %6366 = vmatprep.subr.mxu0 0.0
    %6367 = vmatpush1.msra.mxu0 0.0
    %6368 = vmatprep.subr.mxu0 0.0
    %6369 = vmatpush1.msra.mxu0 0.0
    %6370 = vmatprep.subr.mxu0 0.0
    %6371 = vmatpush1.msra.mxu0 0.0
    %6372 = vmatprep.subr.mxu0 0.0
    %6373 = vmatpush1.msra.mxu0 0.0
    %6374 = vmatprep.subr.mxu0 0.0
    %6375 = vmatpush1.msra.mxu0 0.0
    %6376 = vmatprep.subr.mxu0 0.0
    %6377 = vmatpush1.msra.mxu0 0.0
    %6378 = vmatprep.subr.mxu0 0.0
    %6379 = vmatpush1.msra.mxu0 0.0
    %6380 = vmatprep.subr.mxu0 0.0
    %6381 = vmatpush1.msra.mxu0 0.0
    %6382 = vmatprep.subr.mxu0 0.0
    %6383 = vmatpush1.msra.mxu0 0.0
    %6384 = vmatprep.subr.mxu0 0.0
    %6385 = vmatpush1.msra.mxu0 0.0
    %6386 = vmatprep.subr.mxu0 0.0
    %6387 = vmatpush1.msra.mxu0 0.0
    %6388 = vmatprep.subr.mxu0 0.0
    %6389 = vmatpush1.msra.mxu0 0.0
    %6390 = vmatprep.subr.mxu0 0.0
    %6391 = vmatpush1.msra.mxu0 %v996
    %6392 = vmatprep.subr.mxu0 0.0
    %6393 = vmatpush1.msra.mxu0 %v995
    %6394 = vmatprep.subr.mxu0 0.0
    %6395 = vmatpush1.msra.mxu0 %v994
    %6396 = vmatprep.subr.mxu0 0.0
    %6397 = vmatpush1.msra.mxu0 %v993
    %6398 = vmatprep.subr.mxu0 0.0
    %6399 = vmatpush2.msra.mxu0 0.0
    %6400 = vmatprep.subr.mxu0 0.0
    %6401 = vmatpush2.msra.mxu0 0.0
    %6402 = vmatprep.subr.mxu0 0.0
    %6403 = vmatpush2.msra.mxu0 0.0
    %6404 = vmatprep.subr.mxu0 0.0
    %6405 = vmatpush2.msra.mxu0 0.0
    %6406 = vmatprep.subr.mxu0 0.0
    %6407 = vmatpush2.msra.mxu0 0.0
    %6408 = vmatprep.subr.mxu0 0.0
    %6409 = vmatpush2.msra.mxu0 0.0
    %6410 = vmatprep.subr.mxu0 0.0
    %6411 = vmatpush2.msra.mxu0 0.0
    %6412 = vmatprep.subr.mxu0 0.0
    %6413 = vmatpush2.msra.mxu0 0.0
    %6414 = vmatprep.subr.mxu0 0.0
    %6415 = vmatpush2.msra.mxu0 0.0
    %6416 = vmatprep.subr.mxu0 0.0
    %6417 = vmatpush2.msra.mxu0 0.0
    %6418 = vmatprep.subr.mxu0 0.0
    %6419 = vmatpush2.msra.mxu0 0.0
    %6420 = vmatprep.subr.mxu0 0.0
    %6421 = vmatpush2.msra.mxu0 0.0
    %6422 = vmatprep.subr.mxu0 0.0
    %6423 = vmatpush2.msra.mxu0 0.0
    %6424 = vmatprep.subr.mxu0 0.0
    %6425 = vmatpush2.msra.mxu0 0.0
    %6426 = vmatprep.subr.mxu0 0.0
    %6427 = vmatpush2.msra.mxu0 0.0
    %6428 = vmatprep.subr.mxu0 0.0
    %6429 = vmatpush2.msra.mxu0 0.0
    %6430 = vmatprep.mubr.f32.mxu0 0.0
    %6431 = vmatmul.mubr.f32.gmra.mxu0 %v5941
    %v6432 = vpop.f32.mrf.mxu0
    %v6433 = vadd.f32 0.0, %v6432
    %v6434 = vpop.f32.mrf.mxu0
    %6435 = vdwg.mxu0
    %v6436 = vadd.f32 %v6363, %v6433
    %v6437 = vxor.u32 %v6013, 2147483648
    %v6438 = vmul.f32 %v6437, 1.442695
    %v6439 = vpow.pop %v6438
    %v6440 = vadd.f32 %v6439, 1.0
    %v6441 = vrcp.pop %v6440
    %v6442 = vmul.f32 1.0, %v6441
    %v6443 = vxor.u32 %v6154, 2147483648
    %v6444 = vmul.f32 %v6443, 1.442695
    %v6445 = vpow.pop %v6444
    %v6446 = vadd.f32 %v6445, 1.0
    %v6447 = vrcp.pop %v6446
    %v6448 = vmul.f32 1.0, %v6447
    %v6449 = vtanh.pop %v6295
    %v6450 = vxor.u32 %v6436, 2147483648
    %v6451 = vmul.f32 %v6450, 1.442695
    %v6452 = vpow.pop %v6451
    %v6453 = vadd.f32 %v6452, 1.0
    %v6454 = vrcp.pop %v6453
    %v6455 = vmul.f32 1.0, %v6454
    %v6456 = vmul.f32 %v6448, %v5552
    %v6457 = vmul.f32 %v6442, %v6449
    %v6458 = vadd.f32 %v6456, %v6457
    %v6459 = vtanh.pop %v6458
    %v6460 = vmul.f32 %v6455, %v6459
    %v6461 = vld [vmem:[#allocation2 + $0x30] sm:$0xff]
    %6462 = vmatprep.subr.mxu0 0.0
    %6463 = vmatpush1.msra.mxu0 0.0
    %6464 = vmatprep.subr.mxu0 0.0
    %6465 = vmatpush1.msra.mxu0 0.0
    %6466 = vmatprep.subr.mxu0 0.0
    %6467 = vmatpush1.msra.mxu0 0.0
    %6468 = vmatprep.subr.mxu0 0.0
    %6469 = vmatpush1.msra.mxu0 0.0
    %6470 = vmatprep.subr.mxu0 0.0
    %6471 = vmatpush1.msra.mxu0 0.0
    %6472 = vmatprep.subr.mxu0 0.0
    %6473 = vmatpush1.msra.mxu0 0.0
    %6474 = vmatprep.subr.mxu0 0.0
    %6475 = vmatpush1.msra.mxu0 0.0
    %6476 = vmatprep.subr.mxu0 0.0
    %6477 = vmatpush1.msra.mxu0 0.0
    %6478 = vmatprep.subr.mxu0 0.0
    %6479 = vmatpush1.msra.mxu0 0.0
    %6480 = vmatprep.subr.mxu0 0.0
    %6481 = vmatpush1.msra.mxu0 0.0
    %6482 = vmatprep.subr.mxu0 0.0
    %6483 = vmatpush1.msra.mxu0 0.0
    %6484 = vmatprep.subr.mxu0 0.0
    %6485 = vmatpush1.msra.mxu0 0.0
    %6486 = vmatprep.subr.mxu0 0.0
    %6487 = vmatpush1.msra.mxu0 %v425
    %6488 = vmatprep.subr.mxu0 0.0
    %6489 = vmatpush1.msra.mxu0 %v424
    %6490 = vmatprep.subr.mxu0 0.0
    %6491 = vmatpush1.msra.mxu0 %v423
    %6492 = vmatprep.subr.mxu0 0.0
    %6493 = vmatpush1.msra.mxu0 %v422
    %6494 = vmatprep.subr.mxu0 0.0
    %6495 = vmatpush2.msra.mxu0 0.0
    %6496 = vmatprep.subr.mxu0 0.0
    %6497 = vmatpush2.msra.mxu0 0.0
    %6498 = vmatprep.subr.mxu0 0.0
    %6499 = vmatpush2.msra.mxu0 0.0
    %6500 = vmatprep.subr.mxu0 0.0
    %6501 = vmatpush2.msra.mxu0 0.0
    %6502 = vmatprep.subr.mxu0 0.0
    %6503 = vmatpush2.msra.mxu0 0.0
    %6504 = vmatprep.subr.mxu0 0.0
    %6505 = vmatpush2.msra.mxu0 0.0
    %6506 = vmatprep.subr.mxu0 0.0
    %6507 = vmatpush2.msra.mxu0 0.0
    %6508 = vmatprep.subr.mxu0 0.0
    %6509 = vmatpush2.msra.mxu0 0.0
    %6510 = vmatprep.subr.mxu0 0.0
    %6511 = vmatpush2.msra.mxu0 0.0
    %6512 = vmatprep.subr.mxu0 0.0
    %6513 = vmatpush2.msra.mxu0 0.0
    %6514 = vmatprep.subr.mxu0 0.0
    %6515 = vmatpush2.msra.mxu0 0.0
    %6516 = vmatprep.subr.mxu0 0.0
    %6517 = vmatpush2.msra.mxu0 0.0
    %6518 = vmatprep.subr.mxu0 0.0
    %6519 = vmatpush2.msra.mxu0 0.0
    %6520 = vmatprep.subr.mxu0 0.0
    %6521 = vmatpush2.msra.mxu0 0.0
    %6522 = vmatprep.subr.mxu0 0.0
    %6523 = vmatpush2.msra.mxu0 0.0
    %6524 = vmatprep.subr.mxu0 0.0
    %6525 = vmatpush2.msra.mxu0 0.0
    %6526 = vmatprep.mubr.f32.mxu0 0.0
    %6527 = vmatmul.mubr.f32.gmra.mxu0 %v5868
    %v6528 = vpop.f32.mrf.mxu0
    %v6529 = vadd.f32 0.0, %v6528
    %v6530 = vpop.f32.mrf.mxu0
    %6531 = vdwg.mxu0
    %v6532 = vadd.f32 %v6461, %v6529
    %v6533 = vld [vmem:[#allocation3 + $0x30] sm:$0xff]
    %6534 = vmatprep.subr.mxu0 0.0
    %6535 = vmatpush1.msra.mxu0 0.0
    %6536 = vmatprep.subr.mxu0 0.0
    %6537 = vmatpush1.msra.mxu0 0.0
    %6538 = vmatprep.subr.mxu0 0.0
    %6539 = vmatpush1.msra.mxu0 0.0
    %6540 = vmatprep.subr.mxu0 0.0
    %6541 = vmatpush1.msra.mxu0 0.0
    %6542 = vmatprep.subr.mxu0 0.0
    %6543 = vmatpush1.msra.mxu0 0.0
    %6544 = vmatprep.subr.mxu0 0.0
    %6545 = vmatpush1.msra.mxu0 0.0
    %6546 = vmatprep.subr.mxu0 0.0
    %6547 = vmatpush1.msra.mxu0 0.0
    %6548 = vmatprep.subr.mxu0 0.0
    %6549 = vmatpush1.msra.mxu0 0.0
    %6550 = vmatprep.subr.mxu0 0.0
    %6551 = vmatpush1.msra.mxu0 0.0
    %6552 = vmatprep.subr.mxu0 0.0
    %6553 = vmatpush1.msra.mxu0 0.0
    %6554 = vmatprep.subr.mxu0 0.0
    %6555 = vmatpush1.msra.mxu0 0.0
    %6556 = vmatprep.subr.mxu0 0.0
    %6557 = vmatpush1.msra.mxu0 0.0
    %6558 = vmatprep.subr.mxu0 0.0
    %6559 = vmatpush1.msra.mxu0 %v429
    %6560 = vmatprep.subr.mxu0 0.0
    %6561 = vmatpush1.msra.mxu0 %v428
    %6562 = vmatprep.subr.mxu0 0.0
    %6563 = vmatpush1.msra.mxu0 %v427
    %6564 = vmatprep.subr.mxu0 0.0
    %6565 = vmatpush1.msra.mxu0 %v426
    %6566 = vmatprep.subr.mxu0 0.0
    %6567 = vmatpush2.msra.mxu0 0.0
    %6568 = vmatprep.subr.mxu0 0.0
    %6569 = vmatpush2.msra.mxu0 0.0
    %6570 = vmatprep.subr.mxu0 0.0
    %6571 = vmatpush2.msra.mxu0 0.0
    %6572 = vmatprep.subr.mxu0 0.0
    %6573 = vmatpush2.msra.mxu0 0.0
    %6574 = vmatprep.subr.mxu0 0.0
    %6575 = vmatpush2.msra.mxu0 0.0
    %6576 = vmatprep.subr.mxu0 0.0
    %6577 = vmatpush2.msra.mxu0 0.0
    %6578 = vmatprep.subr.mxu0 0.0
    %6579 = vmatpush2.msra.mxu0 0.0
    %6580 = vmatprep.subr.mxu0 0.0
    %6581 = vmatpush2.msra.mxu0 0.0
    %6582 = vmatprep.subr.mxu0 0.0
    %6583 = vmatpush2.msra.mxu0 0.0
    %6584 = vmatprep.subr.mxu0 0.0
    %6585 = vmatpush2.msra.mxu0 0.0
    %6586 = vmatprep.subr.mxu0 0.0
    %6587 = vmatpush2.msra.mxu0 0.0
    %6588 = vmatprep.subr.mxu0 0.0
    %6589 = vmatpush2.msra.mxu0 0.0
    %6590 = vmatprep.subr.mxu0 0.0
    %6591 = vmatpush2.msra.mxu0 0.0
    %6592 = vmatprep.subr.mxu0 0.0
    %6593 = vmatpush2.msra.mxu0 0.0
    %6594 = vmatprep.subr.mxu0 0.0
    %6595 = vmatpush2.msra.mxu0 0.0
    %6596 = vmatprep.subr.mxu0 0.0
    %6597 = vmatpush2.msra.mxu0 0.0
    %6598 = vmatprep.mubr.f32.mxu0 0.0
    %6599 = vmatmul.mubr.f32.gmra.mxu0 %v5868
    %v6600 = vpop.f32.mrf.mxu0
    %v6601 = vadd.f32 0.0, %v6600
    %v6602 = vpop.f32.mrf.mxu0
    %6603 = vdwg.mxu0
    %v6604 = vadd.f32 %v6533, %v6601
    %v6605 = vld [vmem:[#allocation4 + $0x30] sm:$0xff]
    %6606 = vmatprep.subr.mxu0 0.0
    %6607 = vmatpush1.msra.mxu0 0.0
    %6608 = vmatprep.subr.mxu0 0.0
    %6609 = vmatpush1.msra.mxu0 0.0
    %6610 = vmatprep.subr.mxu0 0.0
    %6611 = vmatpush1.msra.mxu0 0.0
    %6612 = vmatprep.subr.mxu0 0.0
    %6613 = vmatpush1.msra.mxu0 0.0
    %6614 = vmatprep.subr.mxu0 0.0
    %6615 = vmatpush1.msra.mxu0 0.0
    %6616 = vmatprep.subr.mxu0 0.0
    %6617 = vmatpush1.msra.mxu0 0.0
    %6618 = vmatprep.subr.mxu0 0.0
    %6619 = vmatpush1.msra.mxu0 0.0
    %6620 = vmatprep.subr.mxu0 0.0
    %6621 = vmatpush1.msra.mxu0 0.0
    %6622 = vmatprep.subr.mxu0 0.0
    %6623 = vmatpush1.msra.mxu0 0.0
    %6624 = vmatprep.subr.mxu0 0.0
    %6625 = vmatpush1.msra.mxu0 0.0
    %6626 = vmatprep.subr.mxu0 0.0
    %6627 = vmatpush1.msra.mxu0 0.0
    %6628 = vmatprep.subr.mxu0 0.0
    %6629 = vmatpush1.msra.mxu0 0.0
    %6630 = vmatprep.subr.mxu0 0.0
    %6631 = vmatpush1.msra.mxu0 %v433
    %6632 = vmatprep.subr.mxu0 0.0
    %6633 = vmatpush1.msra.mxu0 %v432
    %6634 = vmatprep.subr.mxu0 0.0
    %6635 = vmatpush1.msra.mxu0 %v431
    %6636 = vmatprep.subr.mxu0 0.0
    %6637 = vmatpush1.msra.mxu0 %v430
    %6638 = vmatprep.subr.mxu0 0.0
    %6639 = vmatpush2.msra.mxu0 0.0
    %6640 = vmatprep.subr.mxu0 0.0
    %6641 = vmatpush2.msra.mxu0 0.0
    %6642 = vmatprep.subr.mxu0 0.0
    %6643 = vmatpush2.msra.mxu0 0.0
    %6644 = vmatprep.subr.mxu0 0.0
    %6645 = vmatpush2.msra.mxu0 0.0
    %6646 = vmatprep.subr.mxu0 0.0
    %6647 = vmatpush2.msra.mxu0 0.0
    %6648 = vmatprep.subr.mxu0 0.0
    %6649 = vmatpush2.msra.mxu0 0.0
    %6650 = vmatprep.subr.mxu0 0.0
    %6651 = vmatpush2.msra.mxu0 0.0
    %6652 = vmatprep.subr.mxu0 0.0
    %6653 = vmatpush2.msra.mxu0 0.0
    %6654 = vmatprep.subr.mxu0 0.0
    %6655 = vmatpush2.msra.mxu0 0.0
    %6656 = vmatprep.subr.mxu0 0.0
    %6657 = vmatpush2.msra.mxu0 0.0
    %6658 = vmatprep.subr.mxu0 0.0
    %6659 = vmatpush2.msra.mxu0 0.0
    %6660 = vmatprep.subr.mxu0 0.0
    %6661 = vmatpush2.msra.mxu0 0.0
    %6662 = vmatprep.subr.mxu0 0.0
    %6663 = vmatpush2.msra.mxu0 0.0
    %6664 = vmatprep.subr.mxu0 0.0
    %6665 = vmatpush2.msra.mxu0 0.0
    %6666 = vmatprep.subr.mxu0 0.0
    %6667 = vmatpush2.msra.mxu0 0.0
    %6668 = vmatprep.subr.mxu0 0.0
    %6669 = vmatpush2.msra.mxu0 0.0
    %6670 = vmatprep.mubr.f32.mxu0 0.0
    %6671 = vmatmul.mubr.f32.gmra.mxu0 %v5868
    %v6672 = vpop.f32.mrf.mxu0
    %v6673 = vadd.f32 0.0, %v6672
    %v6674 = vpop.f32.mrf.mxu0
    %6675 = vdwg.mxu0
    %v6676 = vadd.f32 %v6605, %v6673
    %v6677 = vld [vmem:[#allocation5 + $0x30] sm:$0xff]
    %6678 = vmatprep.subr.mxu0 0.0
    %6679 = vmatpush1.msra.mxu0 0.0
    %6680 = vmatprep.subr.mxu0 0.0
    %6681 = vmatpush1.msra.mxu0 0.0
    %6682 = vmatprep.subr.mxu0 0.0
    %6683 = vmatpush1.msra.mxu0 0.0
    %6684 = vmatprep.subr.mxu0 0.0
    %6685 = vmatpush1.msra.mxu0 0.0
    %6686 = vmatprep.subr.mxu0 0.0
    %6687 = vmatpush1.msra.mxu0 0.0
    %6688 = vmatprep.subr.mxu0 0.0
    %6689 = vmatpush1.msra.mxu0 0.0
    %6690 = vmatprep.subr.mxu0 0.0
    %6691 = vmatpush1.msra.mxu0 0.0
    %6692 = vmatprep.subr.mxu0 0.0
    %6693 = vmatpush1.msra.mxu0 0.0
    %6694 = vmatprep.subr.mxu0 0.0
    %6695 = vmatpush1.msra.mxu0 0.0
    %6696 = vmatprep.subr.mxu0 0.0
    %6697 = vmatpush1.msra.mxu0 0.0
    %6698 = vmatprep.subr.mxu0 0.0
    %6699 = vmatpush1.msra.mxu0 0.0
    %6700 = vmatprep.subr.mxu0 0.0
    %6701 = vmatpush1.msra.mxu0 0.0
    %6702 = vmatprep.subr.mxu0 0.0
    %6703 = vmatpush1.msra.mxu0 %v437
    %6704 = vmatprep.subr.mxu0 0.0
    %6705 = vmatpush1.msra.mxu0 %v436
    %6706 = vmatprep.subr.mxu0 0.0
    %6707 = vmatpush1.msra.mxu0 %v435
    %6708 = vmatprep.subr.mxu0 0.0
    %6709 = vmatpush1.msra.mxu0 %v434
    %6710 = vmatprep.subr.mxu0 0.0
    %6711 = vmatpush2.msra.mxu0 0.0
    %6712 = vmatprep.subr.mxu0 0.0
    %6713 = vmatpush2.msra.mxu0 0.0
    %6714 = vmatprep.subr.mxu0 0.0
    %6715 = vmatpush2.msra.mxu0 0.0
    %6716 = vmatprep.subr.mxu0 0.0
    %6717 = vmatpush2.msra.mxu0 0.0
    %6718 = vmatprep.subr.mxu0 0.0
    %6719 = vmatpush2.msra.mxu0 0.0
    %6720 = vmatprep.subr.mxu0 0.0
    %6721 = vmatpush2.msra.mxu0 0.0
    %6722 = vmatprep.subr.mxu0 0.0
    %6723 = vmatpush2.msra.mxu0 0.0
    %6724 = vmatprep.subr.mxu0 0.0
    %6725 = vmatpush2.msra.mxu0 0.0
    %6726 = vmatprep.subr.mxu0 0.0
    %6727 = vmatpush2.msra.mxu0 0.0
    %6728 = vmatprep.subr.mxu0 0.0
    %6729 = vmatpush2.msra.mxu0 0.0
    %6730 = vmatprep.subr.mxu0 0.0
    %6731 = vmatpush2.msra.mxu0 0.0
    %6732 = vmatprep.subr.mxu0 0.0
    %6733 = vmatpush2.msra.mxu0 0.0
    %6734 = vmatprep.subr.mxu0 0.0
    %6735 = vmatpush2.msra.mxu0 0.0
    %6736 = vmatprep.subr.mxu0 0.0
    %6737 = vmatpush2.msra.mxu0 0.0
    %6738 = vmatprep.subr.mxu0 0.0
    %6739 = vmatpush2.msra.mxu0 0.0
    %6740 = vmatprep.subr.mxu0 0.0
    %6741 = vmatpush2.msra.mxu0 0.0
    %6742 = vmatprep.mubr.f32.mxu0 0.0
    %6743 = vmatmul.mubr.f32.gmra.mxu0 %v5868
    %v6744 = vpop.f32.mrf.mxu0
    %v6745 = vadd.f32 0.0, %v6744
    %v6746 = vpop.f32.mrf.mxu0
    %6747 = vdwg.mxu0
    %v6748 = vadd.f32 %v6677, %v6745
    %v6749 = vxor.u32 %v6532, 2147483648
    %v6750 = vmul.f32 %v6749, 1.442695
    %v6751 = vpow.pop %v6750
    %v6752 = vadd.f32 %v6751, 1.0
    %v6753 = vrcp.pop %v6752
    %v6754 = vmul.f32 1.0, %v6753
    %v6755 = vxor.u32 %v6604, 2147483648
    %v6756 = vmul.f32 %v6755, 1.442695
    %v6757 = vpow.pop %v6756
    %v6758 = vadd.f32 %v6757, 1.0
    %v6759 = vrcp.pop %v6758
    %v6760 = vmul.f32 1.0, %v6759
    %v6761 = vtanh.pop %v6676
    %v6762 = vxor.u32 %v6748, 2147483648
    %v6763 = vmul.f32 %v6762, 1.442695
    %v6764 = vpow.pop %v6763
    %v6765 = vadd.f32 %v6764, 1.0
    %v6766 = vrcp.pop %v6765
    %v6767 = vmul.f32 1.0, %v6766
    %v6768 = vmul.f32 %v6760, %v5864
    %v6769 = vmul.f32 %v6754, %v6761
    %v6770 = vadd.f32 %v6768, %v6769
    %v6771 = vtanh.pop %v6770
    %v6772 = vmul.f32 %v6767, %v6771
    %v6774 = vsel %vm590, %v6772, 0
    %6776 = vmatprep.subr.mxu0 0.0
    %6777 = vmatpush1.msra.mxu0 0.0
    %6778 = vmatprep.subr.mxu0 0.0
    %6779 = vmatpush1.msra.mxu0 0.0
    %6780 = vmatprep.subr.mxu0 0.0
    %6781 = vmatpush1.msra.mxu0 0.0
    %6782 = vmatprep.subr.mxu0 0.0
    %6783 = vmatpush1.msra.mxu0 0.0
    %6784 = vmatprep.subr.mxu0 0.0
    %6785 = vmatpush1.msra.mxu0 0.0
    %6786 = vmatprep.subr.mxu0 0.0
    %6787 = vmatpush1.msra.mxu0 0.0
    %6788 = vmatprep.subr.mxu0 0.0
    %6789 = vmatpush1.msra.mxu0 0.0
    %6790 = vmatprep.subr.mxu0 0.0
    %6791 = vmatpush1.msra.mxu0 0.0
    %6792 = vmatprep.subr.mxu0 0.0
    %6793 = vmatpush1.msra.mxu0 0.0
    %6794 = vmatprep.subr.mxu0 0.0
    %6795 = vmatpush1.msra.mxu0 0.0
    %6796 = vmatprep.subr.mxu0 0.0
    %6797 = vmatpush1.msra.mxu0 0.0
    %6798 = vmatprep.subr.mxu0 0.0
    %6799 = vmatpush1.msra.mxu0 0.0
    %6800 = vmatprep.subr.mxu0 0.0
    %6801 = vmatpush1.msra.mxu0 %v968
    %6802 = vmatprep.subr.mxu0 0.0
    %6803 = vmatpush1.msra.mxu0 %v967
    %6804 = vmatprep.subr.mxu0 0.0
    %6805 = vmatpush1.msra.mxu0 %v966
    %6806 = vmatprep.subr.mxu0 0.0
    %6807 = vmatpush1.msra.mxu0 %v965
    %6808 = vmatprep.subr.mxu0 0.0
    %6809 = vmatpush2.msra.mxu0 0.0
    %6810 = vmatprep.subr.mxu0 0.0
    %6811 = vmatpush2.msra.mxu0 0.0
    %6812 = vmatprep.subr.mxu0 0.0
    %6813 = vmatpush2.msra.mxu0 0.0
    %6814 = vmatprep.subr.mxu0 0.0
    %6815 = vmatpush2.msra.mxu0 0.0
    %6816 = vmatprep.subr.mxu0 0.0
    %6817 = vmatpush2.msra.mxu0 0.0
    %6818 = vmatprep.subr.mxu0 0.0
    %6819 = vmatpush2.msra.mxu0 0.0
    %6820 = vmatprep.subr.mxu0 0.0
    %6821 = vmatpush2.msra.mxu0 0.0
    %6822 = vmatprep.subr.mxu0 0.0
    %6823 = vmatpush2.msra.mxu0 0.0
    %6824 = vmatprep.subr.mxu0 0.0
    %6825 = vmatpush2.msra.mxu0 0.0
    %6826 = vmatprep.subr.mxu0 0.0
    %6827 = vmatpush2.msra.mxu0 0.0
    %6828 = vmatprep.subr.mxu0 0.0
    %6829 = vmatpush2.msra.mxu0 0.0
    %6830 = vmatprep.subr.mxu0 0.0
    %6831 = vmatpush2.msra.mxu0 0.0
    %6832 = vmatprep.subr.mxu0 0.0
    %6833 = vmatpush2.msra.mxu0 0.0
    %6834 = vmatprep.subr.mxu0 0.0
    %6835 = vmatpush2.msra.mxu0 0.0
    %6836 = vmatprep.subr.mxu0 0.0
    %6837 = vmatpush2.msra.mxu0 0.0
    %6838 = vmatprep.subr.mxu0 0.0
    %6839 = vmatpush2.msra.mxu0 0.0
    %6840 = vmatprep.mubr.f32.mxu0 0.0
    %6841 = vmatmul.mubr.f32.gmra.mxu0 %v6774
    %v6842 = vpop.f32.mrf.mxu0
    %v6843 = vadd.f32 %v1005, %v6842
    %v6844 = vpop.f32.mrf.mxu0
    %6845 = vdwg.mxu0
    %v6847 = vsel %vm590, %v6460, 0
    %6849 = vmatprep.subr.mxu0 0.0
    %6850 = vmatpush1.msra.mxu0 0.0
    %6851 = vmatprep.subr.mxu0 0.0
    %6852 = vmatpush1.msra.mxu0 0.0
    %6853 = vmatprep.subr.mxu0 0.0
    %6854 = vmatpush1.msra.mxu0 0.0
    %6855 = vmatprep.subr.mxu0 0.0
    %6856 = vmatpush1.msra.mxu0 0.0
    %6857 = vmatprep.subr.mxu0 0.0
    %6858 = vmatpush1.msra.mxu0 0.0
    %6859 = vmatprep.subr.mxu0 0.0
    %6860 = vmatpush1.msra.mxu0 0.0
    %6861 = vmatprep.subr.mxu0 0.0
    %6862 = vmatpush1.msra.mxu0 0.0
    %6863 = vmatprep.subr.mxu0 0.0
    %6864 = vmatpush1.msra.mxu0 0.0
    %6865 = vmatprep.subr.mxu0 0.0
    %6866 = vmatpush1.msra.mxu0 0.0
    %6867 = vmatprep.subr.mxu0 0.0
    %6868 = vmatpush1.msra.mxu0 0.0
    %6869 = vmatprep.subr.mxu0 0.0
    %6870 = vmatpush1.msra.mxu0 0.0
    %6871 = vmatprep.subr.mxu0 0.0
    %6872 = vmatpush1.msra.mxu0 0.0
    %6873 = vmatprep.subr.mxu0 0.0
    %6874 = vmatpush1.msra.mxu0 %v984
    %6875 = vmatprep.subr.mxu0 0.0
    %6876 = vmatpush1.msra.mxu0 %v983
    %6877 = vmatprep.subr.mxu0 0.0
    %6878 = vmatpush1.msra.mxu0 %v982
    %6879 = vmatprep.subr.mxu0 0.0
    %6880 = vmatpush1.msra.mxu0 %v981
    %6881 = vmatprep.subr.mxu0 0.0
    %6882 = vmatpush2.msra.mxu0 0.0
    %6883 = vmatprep.subr.mxu0 0.0
    %6884 = vmatpush2.msra.mxu0 0.0
    %6885 = vmatprep.subr.mxu0 0.0
    %6886 = vmatpush2.msra.mxu0 0.0
    %6887 = vmatprep.subr.mxu0 0.0
    %6888 = vmatpush2.msra.mxu0 0.0
    %6889 = vmatprep.subr.mxu0 0.0
    %6890 = vmatpush2.msra.mxu0 0.0
    %6891 = vmatprep.subr.mxu0 0.0
    %6892 = vmatpush2.msra.mxu0 0.0
    %6893 = vmatprep.subr.mxu0 0.0
    %6894 = vmatpush2.msra.mxu0 0.0
    %6895 = vmatprep.subr.mxu0 0.0
    %6896 = vmatpush2.msra.mxu0 0.0
    %6897 = vmatprep.subr.mxu0 0.0
    %6898 = vmatpush2.msra.mxu0 0.0
    %6899 = vmatprep.subr.mxu0 0.0
    %6900 = vmatpush2.msra.mxu0 0.0
    %6901 = vmatprep.subr.mxu0 0.0
    %6902 = vmatpush2.msra.mxu0 0.0
    %6903 = vmatprep.subr.mxu0 0.0
    %6904 = vmatpush2.msra.mxu0 0.0
    %6905 = vmatprep.subr.mxu0 0.0
    %6906 = vmatpush2.msra.mxu0 0.0
    %6907 = vmatprep.subr.mxu0 0.0
    %6908 = vmatpush2.msra.mxu0 0.0
    %6909 = vmatprep.subr.mxu0 0.0
    %6910 = vmatpush2.msra.mxu0 0.0
    %6911 = vmatprep.subr.mxu0 0.0
    %6912 = vmatpush2.msra.mxu0 0.0
    %6913 = vmatprep.mubr.f32.mxu0 0.0
    %6914 = vmatmul.mubr.f32.gmra.mxu0 %v6847
    %v6915 = vpop.f32.mrf.mxu0
    %v6916 = vadd.f32 0.0, %v6915
    %v6917 = vpop.f32.mrf.mxu0
    %6918 = vdwg.mxu0
    %v6919 = vadd.f32 %v6843, %v6916
    %6920 = vmatprep.subr.mxu0 0.0
    %6921 = vmatpush1.msra.mxu0 0.0
    %6922 = vmatprep.subr.mxu0 0.0
    %6923 = vmatpush1.msra.mxu0 0.0
    %6924 = vmatprep.subr.mxu0 0.0
    %6925 = vmatpush1.msra.mxu0 0.0
    %6926 = vmatprep.subr.mxu0 0.0
    %6927 = vmatpush1.msra.mxu0 0.0
    %6928 = vmatprep.subr.mxu0 0.0
    %6929 = vmatpush1.msra.mxu0 0.0
    %6930 = vmatprep.subr.mxu0 0.0
    %6931 = vmatpush1.msra.mxu0 0.0
    %6932 = vmatprep.subr.mxu0 0.0
    %6933 = vmatpush1.msra.mxu0 0.0
    %6934 = vmatprep.subr.mxu0 0.0
    %6935 = vmatpush1.msra.mxu0 0.0
    %6936 = vmatprep.subr.mxu0 0.0
    %6937 = vmatpush1.msra.mxu0 0.0
    %6938 = vmatprep.subr.mxu0 0.0
    %6939 = vmatpush1.msra.mxu0 0.0
    %6940 = vmatprep.subr.mxu0 0.0
    %6941 = vmatpush1.msra.mxu0 0.0
    %6942 = vmatprep.subr.mxu0 0.0
    %6943 = vmatpush1.msra.mxu0 0.0
    %6944 = vmatprep.subr.mxu0 0.0
    %6945 = vmatpush1.msra.mxu0 %v972
    %6946 = vmatprep.subr.mxu0 0.0
    %6947 = vmatpush1.msra.mxu0 %v971
    %6948 = vmatprep.subr.mxu0 0.0
    %6949 = vmatpush1.msra.mxu0 %v970
    %6950 = vmatprep.subr.mxu0 0.0
    %6951 = vmatpush1.msra.mxu0 %v969
    %6952 = vmatprep.subr.mxu0 0.0
    %6953 = vmatpush2.msra.mxu0 0.0
    %6954 = vmatprep.subr.mxu0 0.0
    %6955 = vmatpush2.msra.mxu0 0.0
    %6956 = vmatprep.subr.mxu0 0.0
    %6957 = vmatpush2.msra.mxu0 0.0
    %6958 = vmatprep.subr.mxu0 0.0
    %6959 = vmatpush2.msra.mxu0 0.0
    %6960 = vmatprep.subr.mxu0 0.0
    %6961 = vmatpush2.msra.mxu0 0.0
    %6962 = vmatprep.subr.mxu0 0.0
    %6963 = vmatpush2.msra.mxu0 0.0
    %6964 = vmatprep.subr.mxu0 0.0
    %6965 = vmatpush2.msra.mxu0 0.0
    %6966 = vmatprep.subr.mxu0 0.0
    %6967 = vmatpush2.msra.mxu0 0.0
    %6968 = vmatprep.subr.mxu0 0.0
    %6969 = vmatpush2.msra.mxu0 0.0
    %6970 = vmatprep.subr.mxu0 0.0
    %6971 = vmatpush2.msra.mxu0 0.0
    %6972 = vmatprep.subr.mxu0 0.0
    %6973 = vmatpush2.msra.mxu0 0.0
    %6974 = vmatprep.subr.mxu0 0.0
    %6975 = vmatpush2.msra.mxu0 0.0
    %6976 = vmatprep.subr.mxu0 0.0
    %6977 = vmatpush2.msra.mxu0 0.0
    %6978 = vmatprep.subr.mxu0 0.0
    %6979 = vmatpush2.msra.mxu0 0.0
    %6980 = vmatprep.subr.mxu0 0.0
    %6981 = vmatpush2.msra.mxu0 0.0
    %6982 = vmatprep.subr.mxu0 0.0
    %6983 = vmatpush2.msra.mxu0 0.0
    %6984 = vmatprep.mubr.f32.mxu0 0.0
    %6985 = vmatmul.mubr.f32.gmra.mxu0 %v6774
    %v6986 = vpop.f32.mrf.mxu0
    %v6987 = vadd.f32 %v1011, %v6986
    %v6988 = vpop.f32.mrf.mxu0
    %6989 = vdwg.mxu0
    %6990 = vmatprep.subr.mxu0 0.0
    %6991 = vmatpush1.msra.mxu0 0.0
    %6992 = vmatprep.subr.mxu0 0.0
    %6993 = vmatpush1.msra.mxu0 0.0
    %6994 = vmatprep.subr.mxu0 0.0
    %6995 = vmatpush1.msra.mxu0 0.0
    %6996 = vmatprep.subr.mxu0 0.0
    %6997 = vmatpush1.msra.mxu0 0.0
    %6998 = vmatprep.subr.mxu0 0.0
    %6999 = vmatpush1.msra.mxu0 0.0
    %7000 = vmatprep.subr.mxu0 0.0
    %7001 = vmatpush1.msra.mxu0 0.0
    %7002 = vmatprep.subr.mxu0 0.0
    %7003 = vmatpush1.msra.mxu0 0.0
    %7004 = vmatprep.subr.mxu0 0.0
    %7005 = vmatpush1.msra.mxu0 0.0
    %7006 = vmatprep.subr.mxu0 0.0
    %7007 = vmatpush1.msra.mxu0 0.0
    %7008 = vmatprep.subr.mxu0 0.0
    %7009 = vmatpush1.msra.mxu0 0.0
    %7010 = vmatprep.subr.mxu0 0.0
    %7011 = vmatpush1.msra.mxu0 0.0
    %7012 = vmatprep.subr.mxu0 0.0
    %7013 = vmatpush1.msra.mxu0 0.0
    %7014 = vmatprep.subr.mxu0 0.0
    %7015 = vmatpush1.msra.mxu0 %v988
    %7016 = vmatprep.subr.mxu0 0.0
    %7017 = vmatpush1.msra.mxu0 %v987
    %7018 = vmatprep.subr.mxu0 0.0
    %7019 = vmatpush1.msra.mxu0 %v986
    %7020 = vmatprep.subr.mxu0 0.0
    %7021 = vmatpush1.msra.mxu0 %v985
    %7022 = vmatprep.subr.mxu0 0.0
    %7023 = vmatpush2.msra.mxu0 0.0
    %7024 = vmatprep.subr.mxu0 0.0
    %7025 = vmatpush2.msra.mxu0 0.0
    %7026 = vmatprep.subr.mxu0 0.0
    %7027 = vmatpush2.msra.mxu0 0.0
    %7028 = vmatprep.subr.mxu0 0.0
    %7029 = vmatpush2.msra.mxu0 0.0
    %7030 = vmatprep.subr.mxu0 0.0
    %7031 = vmatpush2.msra.mxu0 0.0
    %7032 = vmatprep.subr.mxu0 0.0
    %7033 = vmatpush2.msra.mxu0 0.0
    %7034 = vmatprep.subr.mxu0 0.0
    %7035 = vmatpush2.msra.mxu0 0.0
    %7036 = vmatprep.subr.mxu0 0.0
    %7037 = vmatpush2.msra.mxu0 0.0
    %7038 = vmatprep.subr.mxu0 0.0
    %7039 = vmatpush2.msra.mxu0 0.0
    %7040 = vmatprep.subr.mxu0 0.0
    %7041 = vmatpush2.msra.mxu0 0.0
    %7042 = vmatprep.subr.mxu0 0.0
    %7043 = vmatpush2.msra.mxu0 0.0
    %7044 = vmatprep.subr.mxu0 0.0
    %7045 = vmatpush2.msra.mxu0 0.0
    %7046 = vmatprep.subr.mxu0 0.0
    %7047 = vmatpush2.msra.mxu0 0.0
    %7048 = vmatprep.subr.mxu0 0.0
    %7049 = vmatpush2.msra.mxu0 0.0
    %7050 = vmatprep.subr.mxu0 0.0
    %7051 = vmatpush2.msra.mxu0 0.0
    %7052 = vmatprep.subr.mxu0 0.0
    %7053 = vmatpush2.msra.mxu0 0.0
    %7054 = vmatprep.mubr.f32.mxu0 0.0
    %7055 = vmatmul.mubr.f32.gmra.mxu0 %v6847
    %v7056 = vpop.f32.mrf.mxu0
    %v7057 = vadd.f32 0.0, %v7056
    %v7058 = vpop.f32.mrf.mxu0
    %7059 = vdwg.mxu0
    %v7060 = vadd.f32 %v6987, %v7057
    %7061 = vmatprep.subr.mxu0 0.0
    %7062 = vmatpush1.msra.mxu0 0.0
    %7063 = vmatprep.subr.mxu0 0.0
    %7064 = vmatpush1.msra.mxu0 0.0
    %7065 = vmatprep.subr.mxu0 0.0
    %7066 = vmatpush1.msra.mxu0 0.0
    %7067 = vmatprep.subr.mxu0 0.0
    %7068 = vmatpush1.msra.mxu0 0.0
    %7069 = vmatprep.subr.mxu0 0.0
    %7070 = vmatpush1.msra.mxu0 0.0
    %7071 = vmatprep.subr.mxu0 0.0
    %7072 = vmatpush1.msra.mxu0 0.0
    %7073 = vmatprep.subr.mxu0 0.0
    %7074 = vmatpush1.msra.mxu0 0.0
    %7075 = vmatprep.subr.mxu0 0.0
    %7076 = vmatpush1.msra.mxu0 0.0
    %7077 = vmatprep.subr.mxu0 0.0
    %7078 = vmatpush1.msra.mxu0 0.0
    %7079 = vmatprep.subr.mxu0 0.0
    %7080 = vmatpush1.msra.mxu0 0.0
    %7081 = vmatprep.subr.mxu0 0.0
    %7082 = vmatpush1.msra.mxu0 0.0
    %7083 = vmatprep.subr.mxu0 0.0
    %7084 = vmatpush1.msra.mxu0 0.0
    %7085 = vmatprep.subr.mxu0 0.0
    %7086 = vmatpush1.msra.mxu0 %v976
    %7087 = vmatprep.subr.mxu0 0.0
    %7088 = vmatpush1.msra.mxu0 %v975
    %7089 = vmatprep.subr.mxu0 0.0
    %7090 = vmatpush1.msra.mxu0 %v974
    %7091 = vmatprep.subr.mxu0 0.0
    %7092 = vmatpush1.msra.mxu0 %v973
    %7093 = vmatprep.subr.mxu0 0.0
    %7094 = vmatpush2.msra.mxu0 0.0
    %7095 = vmatprep.subr.mxu0 0.0
    %7096 = vmatpush2.msra.mxu0 0.0
    %7097 = vmatprep.subr.mxu0 0.0
    %7098 = vmatpush2.msra.mxu0 0.0
    %7099 = vmatprep.subr.mxu0 0.0
    %7100 = vmatpush2.msra.mxu0 0.0
    %7101 = vmatprep.subr.mxu0 0.0
    %7102 = vmatpush2.msra.mxu0 0.0
    %7103 = vmatprep.subr.mxu0 0.0
    %7104 = vmatpush2.msra.mxu0 0.0
    %7105 = vmatprep.subr.mxu0 0.0
    %7106 = vmatpush2.msra.mxu0 0.0
    %7107 = vmatprep.subr.mxu0 0.0
    %7108 = vmatpush2.msra.mxu0 0.0
    %7109 = vmatprep.subr.mxu0 0.0
    %7110 = vmatpush2.msra.mxu0 0.0
    %7111 = vmatprep.subr.mxu0 0.0
    %7112 = vmatpush2.msra.mxu0 0.0
    %7113 = vmatprep.subr.mxu0 0.0
    %7114 = vmatpush2.msra.mxu0 0.0
    %7115 = vmatprep.subr.mxu0 0.0
    %7116 = vmatpush2.msra.mxu0 0.0
    %7117 = vmatprep.subr.mxu0 0.0
    %7118 = vmatpush2.msra.mxu0 0.0
    %7119 = vmatprep.subr.mxu0 0.0
    %7120 = vmatpush2.msra.mxu0 0.0
    %7121 = vmatprep.subr.mxu0 0.0
    %7122 = vmatpush2.msra.mxu0 0.0
    %7123 = vmatprep.subr.mxu0 0.0
    %7124 = vmatpush2.msra.mxu0 0.0
    %7125 = vmatprep.mubr.f32.mxu0 0.0
    %7126 = vmatmul.mubr.f32.gmra.mxu0 %v6774
    %v7127 = vpop.f32.mrf.mxu0
    %v7128 = vadd.f32 %v1017, %v7127
    %v7129 = vpop.f32.mrf.mxu0
    %7130 = vdwg.mxu0
    %7131 = vmatprep.subr.mxu0 0.0
    %7132 = vmatpush1.msra.mxu0 0.0
    %7133 = vmatprep.subr.mxu0 0.0
    %7134 = vmatpush1.msra.mxu0 0.0
    %7135 = vmatprep.subr.mxu0 0.0
    %7136 = vmatpush1.msra.mxu0 0.0
    %7137 = vmatprep.subr.mxu0 0.0
    %7138 = vmatpush1.msra.mxu0 0.0
    %7139 = vmatprep.subr.mxu0 0.0
    %7140 = vmatpush1.msra.mxu0 0.0
    %7141 = vmatprep.subr.mxu0 0.0
    %7142 = vmatpush1.msra.mxu0 0.0
    %7143 = vmatprep.subr.mxu0 0.0
    %7144 = vmatpush1.msra.mxu0 0.0
    %7145 = vmatprep.subr.mxu0 0.0
    %7146 = vmatpush1.msra.mxu0 0.0
    %7147 = vmatprep.subr.mxu0 0.0
    %7148 = vmatpush1.msra.mxu0 0.0
    %7149 = vmatprep.subr.mxu0 0.0
    %7150 = vmatpush1.msra.mxu0 0.0
    %7151 = vmatprep.subr.mxu0 0.0
    %7152 = vmatpush1.msra.mxu0 0.0
    %7153 = vmatprep.subr.mxu0 0.0
    %7154 = vmatpush1.msra.mxu0 0.0
    %7155 = vmatprep.subr.mxu0 0.0
    %7156 = vmatpush1.msra.mxu0 %v992
    %7157 = vmatprep.subr.mxu0 0.0
    %7158 = vmatpush1.msra.mxu0 %v991
    %7159 = vmatprep.subr.mxu0 0.0
    %7160 = vmatpush1.msra.mxu0 %v990
    %7161 = vmatprep.subr.mxu0 0.0
    %7162 = vmatpush1.msra.mxu0 %v989
    %7163 = vmatprep.subr.mxu0 0.0
    %7164 = vmatpush2.msra.mxu0 0.0
    %7165 = vmatprep.subr.mxu0 0.0
    %7166 = vmatpush2.msra.mxu0 0.0
    %7167 = vmatprep.subr.mxu0 0.0
    %7168 = vmatpush2.msra.mxu0 0.0
    %7169 = vmatprep.subr.mxu0 0.0
    %7170 = vmatpush2.msra.mxu0 0.0
    %7171 = vmatprep.subr.mxu0 0.0
    %7172 = vmatpush2.msra.mxu0 0.0
    %7173 = vmatprep.subr.mxu0 0.0
    %7174 = vmatpush2.msra.mxu0 0.0
    %7175 = vmatprep.subr.mxu0 0.0
    %7176 = vmatpush2.msra.mxu0 0.0
    %7177 = vmatprep.subr.mxu0 0.0
    %7178 = vmatpush2.msra.mxu0 0.0
    %7179 = vmatprep.subr.mxu0 0.0
    %7180 = vmatpush2.msra.mxu0 0.0
    %7181 = vmatprep.subr.mxu0 0.0
    %7182 = vmatpush2.msra.mxu0 0.0
    %7183 = vmatprep.subr.mxu0 0.0
    %7184 = vmatpush2.msra.mxu0 0.0
    %7185 = vmatprep.subr.mxu0 0.0
    %7186 = vmatpush2.msra.mxu0 0.0
    %7187 = vmatprep.subr.mxu0 0.0
    %7188 = vmatpush2.msra.mxu0 0.0
    %7189 = vmatprep.subr.mxu0 0.0
    %7190 = vmatpush2.msra.mxu0 0.0
    %7191 = vmatprep.subr.mxu0 0.0
    %7192 = vmatpush2.msra.mxu0 0.0
    %7193 = vmatprep.subr.mxu0 0.0
    %7194 = vmatpush2.msra.mxu0 0.0
    %7195 = vmatprep.mubr.f32.mxu0 0.0
    %7196 = vmatmul.mubr.f32.gmra.mxu0 %v6847
    %v7197 = vpop.f32.mrf.mxu0
    %v7198 = vadd.f32 0.0, %v7197
    %v7199 = vpop.f32.mrf.mxu0
    %7200 = vdwg.mxu0
    %v7201 = vadd.f32 %v7128, %v7198
    %7202 = vmatprep.subr.mxu0 0.0
    %7203 = vmatpush1.msra.mxu0 0.0
    %7204 = vmatprep.subr.mxu0 0.0
    %7205 = vmatpush1.msra.mxu0 0.0
    %7206 = vmatprep.subr.mxu0 0.0
    %7207 = vmatpush1.msra.mxu0 0.0
    %7208 = vmatprep.subr.mxu0 0.0
    %7209 = vmatpush1.msra.mxu0 0.0
    %7210 = vmatprep.subr.mxu0 0.0
    %7211 = vmatpush1.msra.mxu0 0.0
    %7212 = vmatprep.subr.mxu0 0.0
    %7213 = vmatpush1.msra.mxu0 0.0
    %7214 = vmatprep.subr.mxu0 0.0
    %7215 = vmatpush1.msra.mxu0 0.0
    %7216 = vmatprep.subr.mxu0 0.0
    %7217 = vmatpush1.msra.mxu0 0.0
    %7218 = vmatprep.subr.mxu0 0.0
    %7219 = vmatpush1.msra.mxu0 0.0
    %7220 = vmatprep.subr.mxu0 0.0
    %7221 = vmatpush1.msra.mxu0 0.0
    %7222 = vmatprep.subr.mxu0 0.0
    %7223 = vmatpush1.msra.mxu0 0.0
    %7224 = vmatprep.subr.mxu0 0.0
    %7225 = vmatpush1.msra.mxu0 0.0
    %7226 = vmatprep.subr.mxu0 0.0
    %7227 = vmatpush1.msra.mxu0 %v980
    %7228 = vmatprep.subr.mxu0 0.0
    %7229 = vmatpush1.msra.mxu0 %v979
    %7230 = vmatprep.subr.mxu0 0.0
    %7231 = vmatpush1.msra.mxu0 %v978
    %7232 = vmatprep.subr.mxu0 0.0
    %7233 = vmatpush1.msra.mxu0 %v977
    %7234 = vmatprep.subr.mxu0 0.0
    %7235 = vmatpush2.msra.mxu0 0.0
    %7236 = vmatprep.subr.mxu0 0.0
    %7237 = vmatpush2.msra.mxu0 0.0
    %7238 = vmatprep.subr.mxu0 0.0
    %7239 = vmatpush2.msra.mxu0 0.0
    %7240 = vmatprep.subr.mxu0 0.0
    %7241 = vmatpush2.msra.mxu0 0.0
    %7242 = vmatprep.subr.mxu0 0.0
    %7243 = vmatpush2.msra.mxu0 0.0
    %7244 = vmatprep.subr.mxu0 0.0
    %7245 = vmatpush2.msra.mxu0 0.0
    %7246 = vmatprep.subr.mxu0 0.0
    %7247 = vmatpush2.msra.mxu0 0.0
    %7248 = vmatprep.subr.mxu0 0.0
    %7249 = vmatpush2.msra.mxu0 0.0
    %7250 = vmatprep.subr.mxu0 0.0
    %7251 = vmatpush2.msra.mxu0 0.0
    %7252 = vmatprep.subr.mxu0 0.0
    %7253 = vmatpush2.msra.mxu0 0.0
    %7254 = vmatprep.subr.mxu0 0.0
    %7255 = vmatpush2.msra.mxu0 0.0
    %7256 = vmatprep.subr.mxu0 0.0
    %7257 = vmatpush2.msra.mxu0 0.0
    %7258 = vmatprep.subr.mxu0 0.0
    %7259 = vmatpush2.msra.mxu0 0.0
    %7260 = vmatprep.subr.mxu0 0.0
    %7261 = vmatpush2.msra.mxu0 0.0
    %7262 = vmatprep.subr.mxu0 0.0
    %7263 = vmatpush2.msra.mxu0 0.0
    %7264 = vmatprep.subr.mxu0 0.0
    %7265 = vmatpush2.msra.mxu0 0.0
    %7266 = vmatprep.mubr.f32.mxu0 0.0
    %7267 = vmatmul.mubr.f32.gmra.mxu0 %v6774
    %v7268 = vpop.f32.mrf.mxu0
    %v7269 = vadd.f32 %v1023, %v7268
    %v7270 = vpop.f32.mrf.mxu0
    %7271 = vdwg.mxu0
    %7272 = vmatprep.subr.mxu0 0.0
    %7273 = vmatpush1.msra.mxu0 0.0
    %7274 = vmatprep.subr.mxu0 0.0
    %7275 = vmatpush1.msra.mxu0 0.0
    %7276 = vmatprep.subr.mxu0 0.0
    %7277 = vmatpush1.msra.mxu0 0.0
    %7278 = vmatprep.subr.mxu0 0.0
    %7279 = vmatpush1.msra.mxu0 0.0
    %7280 = vmatprep.subr.mxu0 0.0
    %7281 = vmatpush1.msra.mxu0 0.0
    %7282 = vmatprep.subr.mxu0 0.0
    %7283 = vmatpush1.msra.mxu0 0.0
    %7284 = vmatprep.subr.mxu0 0.0
    %7285 = vmatpush1.msra.mxu0 0.0
    %7286 = vmatprep.subr.mxu0 0.0
    %7287 = vmatpush1.msra.mxu0 0.0
    %7288 = vmatprep.subr.mxu0 0.0
    %7289 = vmatpush1.msra.mxu0 0.0
    %7290 = vmatprep.subr.mxu0 0.0
    %7291 = vmatpush1.msra.mxu0 0.0
    %7292 = vmatprep.subr.mxu0 0.0
    %7293 = vmatpush1.msra.mxu0 0.0
    %7294 = vmatprep.subr.mxu0 0.0
    %7295 = vmatpush1.msra.mxu0 0.0
    %7296 = vmatprep.subr.mxu0 0.0
    %7297 = vmatpush1.msra.mxu0 %v996
    %7298 = vmatprep.subr.mxu0 0.0
    %7299 = vmatpush1.msra.mxu0 %v995
    %7300 = vmatprep.subr.mxu0 0.0
    %7301 = vmatpush1.msra.mxu0 %v994
    %7302 = vmatprep.subr.mxu0 0.0
    %7303 = vmatpush1.msra.mxu0 %v993
    %7304 = vmatprep.subr.mxu0 0.0
    %7305 = vmatpush2.msra.mxu0 0.0
    %7306 = vmatprep.subr.mxu0 0.0
    %7307 = vmatpush2.msra.mxu0 0.0
    %7308 = vmatprep.subr.mxu0 0.0
    %7309 = vmatpush2.msra.mxu0 0.0
    %7310 = vmatprep.subr.mxu0 0.0
    %7311 = vmatpush2.msra.mxu0 0.0
    %7312 = vmatprep.subr.mxu0 0.0
    %7313 = vmatpush2.msra.mxu0 0.0
    %7314 = vmatprep.subr.mxu0 0.0
    %7315 = vmatpush2.msra.mxu0 0.0
    %7316 = vmatprep.subr.mxu0 0.0
    %7317 = vmatpush2.msra.mxu0 0.0
    %7318 = vmatprep.subr.mxu0 0.0
    %7319 = vmatpush2.msra.mxu0 0.0
    %7320 = vmatprep.subr.mxu0 0.0
    %7321 = vmatpush2.msra.mxu0 0.0
    %7322 = vmatprep.subr.mxu0 0.0
    %7323 = vmatpush2.msra.mxu0 0.0
    %7324 = vmatprep.subr.mxu0 0.0
    %7325 = vmatpush2.msra.mxu0 0.0
    %7326 = vmatprep.subr.mxu0 0.0
    %7327 = vmatpush2.msra.mxu0 0.0
    %7328 = vmatprep.subr.mxu0 0.0
    %7329 = vmatpush2.msra.mxu0 0.0
    %7330 = vmatprep.subr.mxu0 0.0
    %7331 = vmatpush2.msra.mxu0 0.0
    %7332 = vmatprep.subr.mxu0 0.0
    %7333 = vmatpush2.msra.mxu0 0.0
    %7334 = vmatprep.subr.mxu0 0.0
    %7335 = vmatpush2.msra.mxu0 0.0
    %7336 = vmatprep.mubr.f32.mxu0 0.0
    %7337 = vmatmul.mubr.f32.gmra.mxu0 %v6847
    %v7338 = vpop.f32.mrf.mxu0
    %v7339 = vadd.f32 0.0, %v7338
    %v7340 = vpop.f32.mrf.mxu0
    %7341 = vdwg.mxu0
    %v7342 = vadd.f32 %v7269, %v7339
    %v7343 = vxor.u32 %v6919, 2147483648
    %v7344 = vmul.f32 %v7343, 1.442695
    %v7345 = vpow.pop %v7344
    %v7346 = vadd.f32 %v7345, 1.0
    %v7347 = vrcp.pop %v7346
    %v7348 = vmul.f32 1.0, %v7347
    %v7349 = vxor.u32 %v7060, 2147483648
    %v7350 = vmul.f32 %v7349, 1.442695
    %v7351 = vpow.pop %v7350
    %v7352 = vadd.f32 %v7351, 1.0
    %v7353 = vrcp.pop %v7352
    %v7354 = vmul.f32 1.0, %v7353
    %v7355 = vtanh.pop %v7201
    %v7356 = vxor.u32 %v7342, 2147483648
    %v7357 = vmul.f32 %v7356, 1.442695
    %v7358 = vpow.pop %v7357
    %v7359 = vadd.f32 %v7358, 1.0
    %v7360 = vrcp.pop %v7359
    %v7361 = vmul.f32 1.0, %v7360
    %v7362 = vmul.f32 %v7354, %v6458
    %v7363 = vmul.f32 %v7348, %v7355
    %v7364 = vadd.f32 %v7362, %v7363
    %v7365 = vtanh.pop %v7364
    %v7366 = vmul.f32 %v7361, %v7365
    %v7367 = vld [vmem:[#allocation2 + $0x38] sm:$0xff]
    %7368 = vmatprep.subr.mxu0 0.0
    %7369 = vmatpush1.msra.mxu0 0.0
    %7370 = vmatprep.subr.mxu0 0.0
    %7371 = vmatpush1.msra.mxu0 0.0
    %7372 = vmatprep.subr.mxu0 0.0
    %7373 = vmatpush1.msra.mxu0 0.0
    %7374 = vmatprep.subr.mxu0 0.0
    %7375 = vmatpush1.msra.mxu0 0.0
    %7376 = vmatprep.subr.mxu0 0.0
    %7377 = vmatpush1.msra.mxu0 0.0
    %7378 = vmatprep.subr.mxu0 0.0
    %7379 = vmatpush1.msra.mxu0 0.0
    %7380 = vmatprep.subr.mxu0 0.0
    %7381 = vmatpush1.msra.mxu0 0.0
    %7382 = vmatprep.subr.mxu0 0.0
    %7383 = vmatpush1.msra.mxu0 0.0
    %7384 = vmatprep.subr.mxu0 0.0
    %7385 = vmatpush1.msra.mxu0 0.0
    %7386 = vmatprep.subr.mxu0 0.0
    %7387 = vmatpush1.msra.mxu0 0.0
    %7388 = vmatprep.subr.mxu0 0.0
    %7389 = vmatpush1.msra.mxu0 0.0
    %7390 = vmatprep.subr.mxu0 0.0
    %7391 = vmatpush1.msra.mxu0 0.0
    %7392 = vmatprep.subr.mxu0 0.0
    %7393 = vmatpush1.msra.mxu0 %v425
    %7394 = vmatprep.subr.mxu0 0.0
    %7395 = vmatpush1.msra.mxu0 %v424
    %7396 = vmatprep.subr.mxu0 0.0
    %7397 = vmatpush1.msra.mxu0 %v423
    %7398 = vmatprep.subr.mxu0 0.0
    %7399 = vmatpush1.msra.mxu0 %v422
    %7400 = vmatprep.subr.mxu0 0.0
    %7401 = vmatpush2.msra.mxu0 0.0
    %7402 = vmatprep.subr.mxu0 0.0
    %7403 = vmatpush2.msra.mxu0 0.0
    %7404 = vmatprep.subr.mxu0 0.0
    %7405 = vmatpush2.msra.mxu0 0.0
    %7406 = vmatprep.subr.mxu0 0.0
    %7407 = vmatpush2.msra.mxu0 0.0
    %7408 = vmatprep.subr.mxu0 0.0
    %7409 = vmatpush2.msra.mxu0 0.0
    %7410 = vmatprep.subr.mxu0 0.0
    %7411 = vmatpush2.msra.mxu0 0.0
    %7412 = vmatprep.subr.mxu0 0.0
    %7413 = vmatpush2.msra.mxu0 0.0
    %7414 = vmatprep.subr.mxu0 0.0
    %7415 = vmatpush2.msra.mxu0 0.0
    %7416 = vmatprep.subr.mxu0 0.0
    %7417 = vmatpush2.msra.mxu0 0.0
    %7418 = vmatprep.subr.mxu0 0.0
    %7419 = vmatpush2.msra.mxu0 0.0
    %7420 = vmatprep.subr.mxu0 0.0
    %7421 = vmatpush2.msra.mxu0 0.0
    %7422 = vmatprep.subr.mxu0 0.0
    %7423 = vmatpush2.msra.mxu0 0.0
    %7424 = vmatprep.subr.mxu0 0.0
    %7425 = vmatpush2.msra.mxu0 0.0
    %7426 = vmatprep.subr.mxu0 0.0
    %7427 = vmatpush2.msra.mxu0 0.0
    %7428 = vmatprep.subr.mxu0 0.0
    %7429 = vmatpush2.msra.mxu0 0.0
    %7430 = vmatprep.subr.mxu0 0.0
    %7431 = vmatpush2.msra.mxu0 0.0
    %7432 = vmatprep.mubr.f32.mxu0 0.0
    %7433 = vmatmul.mubr.f32.gmra.mxu0 %v6774
    %v7434 = vpop.f32.mrf.mxu0
    %v7435 = vadd.f32 0.0, %v7434
    %v7436 = vpop.f32.mrf.mxu0
    %7437 = vdwg.mxu0
    %v7438 = vadd.f32 %v7367, %v7435
    %v7439 = vld [vmem:[#allocation3 + $0x38] sm:$0xff]
    %7440 = vmatprep.subr.mxu0 0.0
    %7441 = vmatpush1.msra.mxu0 0.0
    %7442 = vmatprep.subr.mxu0 0.0
    %7443 = vmatpush1.msra.mxu0 0.0
    %7444 = vmatprep.subr.mxu0 0.0
    %7445 = vmatpush1.msra.mxu0 0.0
    %7446 = vmatprep.subr.mxu0 0.0
    %7447 = vmatpush1.msra.mxu0 0.0
    %7448 = vmatprep.subr.mxu0 0.0
    %7449 = vmatpush1.msra.mxu0 0.0
    %7450 = vmatprep.subr.mxu0 0.0
    %7451 = vmatpush1.msra.mxu0 0.0
    %7452 = vmatprep.subr.mxu0 0.0
    %7453 = vmatpush1.msra.mxu0 0.0
    %7454 = vmatprep.subr.mxu0 0.0
    %7455 = vmatpush1.msra.mxu0 0.0
    %7456 = vmatprep.subr.mxu0 0.0
    %7457 = vmatpush1.msra.mxu0 0.0
    %7458 = vmatprep.subr.mxu0 0.0
    %7459 = vmatpush1.msra.mxu0 0.0
    %7460 = vmatprep.subr.mxu0 0.0
    %7461 = vmatpush1.msra.mxu0 0.0
    %7462 = vmatprep.subr.mxu0 0.0
    %7463 = vmatpush1.msra.mxu0 0.0
    %7464 = vmatprep.subr.mxu0 0.0
    %7465 = vmatpush1.msra.mxu0 %v429
    %7466 = vmatprep.subr.mxu0 0.0
    %7467 = vmatpush1.msra.mxu0 %v428
    %7468 = vmatprep.subr.mxu0 0.0
    %7469 = vmatpush1.msra.mxu0 %v427
    %7470 = vmatprep.subr.mxu0 0.0
    %7471 = vmatpush1.msra.mxu0 %v426
    %7472 = vmatprep.subr.mxu0 0.0
    %7473 = vmatpush2.msra.mxu0 0.0
    %7474 = vmatprep.subr.mxu0 0.0
    %7475 = vmatpush2.msra.mxu0 0.0
    %7476 = vmatprep.subr.mxu0 0.0
    %7477 = vmatpush2.msra.mxu0 0.0
    %7478 = vmatprep.subr.mxu0 0.0
    %7479 = vmatpush2.msra.mxu0 0.0
    %7480 = vmatprep.subr.mxu0 0.0
    %7481 = vmatpush2.msra.mxu0 0.0
    %7482 = vmatprep.subr.mxu0 0.0
    %7483 = vmatpush2.msra.mxu0 0.0
    %7484 = vmatprep.subr.mxu0 0.0
    %7485 = vmatpush2.msra.mxu0 0.0
    %7486 = vmatprep.subr.mxu0 0.0
    %7487 = vmatpush2.msra.mxu0 0.0
    %7488 = vmatprep.subr.mxu0 0.0
    %7489 = vmatpush2.msra.mxu0 0.0
    %7490 = vmatprep.subr.mxu0 0.0
    %7491 = vmatpush2.msra.mxu0 0.0
    %7492 = vmatprep.subr.mxu0 0.0
    %7493 = vmatpush2.msra.mxu0 0.0
    %7494 = vmatprep.subr.mxu0 0.0
    %7495 = vmatpush2.msra.mxu0 0.0
    %7496 = vmatprep.subr.mxu0 0.0
    %7497 = vmatpush2.msra.mxu0 0.0
    %7498 = vmatprep.subr.mxu0 0.0
    %7499 = vmatpush2.msra.mxu0 0.0
    %7500 = vmatprep.subr.mxu0 0.0
    %7501 = vmatpush2.msra.mxu0 0.0
    %7502 = vmatprep.subr.mxu0 0.0
    %7503 = vmatpush2.msra.mxu0 0.0
    %7504 = vmatprep.mubr.f32.mxu0 0.0
    %7505 = vmatmul.mubr.f32.gmra.mxu0 %v6774
    %v7506 = vpop.f32.mrf.mxu0
    %v7507 = vadd.f32 0.0, %v7506
    %v7508 = vpop.f32.mrf.mxu0
    %7509 = vdwg.mxu0
    %v7510 = vadd.f32 %v7439, %v7507
    %v7511 = vld [vmem:[#allocation4 + $0x38] sm:$0xff]
    %7512 = vmatprep.subr.mxu0 0.0
    %7513 = vmatpush1.msra.mxu0 0.0
    %7514 = vmatprep.subr.mxu0 0.0
    %7515 = vmatpush1.msra.mxu0 0.0
    %7516 = vmatprep.subr.mxu0 0.0
    %7517 = vmatpush1.msra.mxu0 0.0
    %7518 = vmatprep.subr.mxu0 0.0
    %7519 = vmatpush1.msra.mxu0 0.0
    %7520 = vmatprep.subr.mxu0 0.0
    %7521 = vmatpush1.msra.mxu0 0.0
    %7522 = vmatprep.subr.mxu0 0.0
    %7523 = vmatpush1.msra.mxu0 0.0
    %7524 = vmatprep.subr.mxu0 0.0
    %7525 = vmatpush1.msra.mxu0 0.0
    %7526 = vmatprep.subr.mxu0 0.0
    %7527 = vmatpush1.msra.mxu0 0.0
    %7528 = vmatprep.subr.mxu0 0.0
    %7529 = vmatpush1.msra.mxu0 0.0
    %7530 = vmatprep.subr.mxu0 0.0
    %7531 = vmatpush1.msra.mxu0 0.0
    %7532 = vmatprep.subr.mxu0 0.0
    %7533 = vmatpush1.msra.mxu0 0.0
    %7534 = vmatprep.subr.mxu0 0.0
    %7535 = vmatpush1.msra.mxu0 0.0
    %7536 = vmatprep.subr.mxu0 0.0
    %7537 = vmatpush1.msra.mxu0 %v433
    %7538 = vmatprep.subr.mxu0 0.0
    %7539 = vmatpush1.msra.mxu0 %v432
    %7540 = vmatprep.subr.mxu0 0.0
    %7541 = vmatpush1.msra.mxu0 %v431
    %7542 = vmatprep.subr.mxu0 0.0
    %7543 = vmatpush1.msra.mxu0 %v430
    %7544 = vmatprep.subr.mxu0 0.0
    %7545 = vmatpush2.msra.mxu0 0.0
    %7546 = vmatprep.subr.mxu0 0.0
    %7547 = vmatpush2.msra.mxu0 0.0
    %7548 = vmatprep.subr.mxu0 0.0
    %7549 = vmatpush2.msra.mxu0 0.0
    %7550 = vmatprep.subr.mxu0 0.0
    %7551 = vmatpush2.msra.mxu0 0.0
    %7552 = vmatprep.subr.mxu0 0.0
    %7553 = vmatpush2.msra.mxu0 0.0
    %7554 = vmatprep.subr.mxu0 0.0
    %7555 = vmatpush2.msra.mxu0 0.0
    %7556 = vmatprep.subr.mxu0 0.0
    %7557 = vmatpush2.msra.mxu0 0.0
    %7558 = vmatprep.subr.mxu0 0.0
    %7559 = vmatpush2.msra.mxu0 0.0
    %7560 = vmatprep.subr.mxu0 0.0
    %7561 = vmatpush2.msra.mxu0 0.0
    %7562 = vmatprep.subr.mxu0 0.0
    %7563 = vmatpush2.msra.mxu0 0.0
    %7564 = vmatprep.subr.mxu0 0.0
    %7565 = vmatpush2.msra.mxu0 0.0
    %7566 = vmatprep.subr.mxu0 0.0
    %7567 = vmatpush2.msra.mxu0 0.0
    %7568 = vmatprep.subr.mxu0 0.0
    %7569 = vmatpush2.msra.mxu0 0.0
    %7570 = vmatprep.subr.mxu0 0.0
    %7571 = vmatpush2.msra.mxu0 0.0
    %7572 = vmatprep.subr.mxu0 0.0
    %7573 = vmatpush2.msra.mxu0 0.0
    %7574 = vmatprep.subr.mxu0 0.0
    %7575 = vmatpush2.msra.mxu0 0.0
    %7576 = vmatprep.mubr.f32.mxu0 0.0
    %7577 = vmatmul.mubr.f32.gmra.mxu0 %v6774
    %v7578 = vpop.f32.mrf.mxu0
    %v7579 = vadd.f32 0.0, %v7578
    %v7580 = vpop.f32.mrf.mxu0
    %7581 = vdwg.mxu0
    %v7582 = vadd.f32 %v7511, %v7579
    %v7583 = vld [vmem:[#allocation5 + $0x38] sm:$0xff]
    %7584 = vmatprep.subr.mxu0 0.0
    %7585 = vmatpush1.msra.mxu0 0.0
    %7586 = vmatprep.subr.mxu0 0.0
    %7587 = vmatpush1.msra.mxu0 0.0
    %7588 = vmatprep.subr.mxu0 0.0
    %7589 = vmatpush1.msra.mxu0 0.0
    %7590 = vmatprep.subr.mxu0 0.0
    %7591 = vmatpush1.msra.mxu0 0.0
    %7592 = vmatprep.subr.mxu0 0.0
    %7593 = vmatpush1.msra.mxu0 0.0
    %7594 = vmatprep.subr.mxu0 0.0
    %7595 = vmatpush1.msra.mxu0 0.0
    %7596 = vmatprep.subr.mxu0 0.0
    %7597 = vmatpush1.msra.mxu0 0.0
    %7598 = vmatprep.subr.mxu0 0.0
    %7599 = vmatpush1.msra.mxu0 0.0
    %7600 = vmatprep.subr.mxu0 0.0
    %7601 = vmatpush1.msra.mxu0 0.0
    %7602 = vmatprep.subr.mxu0 0.0
    %7603 = vmatpush1.msra.mxu0 0.0
    %7604 = vmatprep.subr.mxu0 0.0
    %7605 = vmatpush1.msra.mxu0 0.0
    %7606 = vmatprep.subr.mxu0 0.0
    %7607 = vmatpush1.msra.mxu0 0.0
    %7608 = vmatprep.subr.mxu0 0.0
    %7609 = vmatpush1.msra.mxu0 %v437
    %7610 = vmatprep.subr.mxu0 0.0
    %7611 = vmatpush1.msra.mxu0 %v436
    %7612 = vmatprep.subr.mxu0 0.0
    %7613 = vmatpush1.msra.mxu0 %v435
    %7614 = vmatprep.subr.mxu0 0.0
    %7615 = vmatpush1.msra.mxu0 %v434
    %7616 = vmatprep.subr.mxu0 0.0
    %7617 = vmatpush2.msra.mxu0 0.0
    %7618 = vmatprep.subr.mxu0 0.0
    %7619 = vmatpush2.msra.mxu0 0.0
    %7620 = vmatprep.subr.mxu0 0.0
    %7621 = vmatpush2.msra.mxu0 0.0
    %7622 = vmatprep.subr.mxu0 0.0
    %7623 = vmatpush2.msra.mxu0 0.0
    %7624 = vmatprep.subr.mxu0 0.0
    %7625 = vmatpush2.msra.mxu0 0.0
    %7626 = vmatprep.subr.mxu0 0.0
    %7627 = vmatpush2.msra.mxu0 0.0
    %7628 = vmatprep.subr.mxu0 0.0
    %7629 = vmatpush2.msra.mxu0 0.0
    %7630 = vmatprep.subr.mxu0 0.0
    %7631 = vmatpush2.msra.mxu0 0.0
    %7632 = vmatprep.subr.mxu0 0.0
    %7633 = vmatpush2.msra.mxu0 0.0
    %7634 = vmatprep.subr.mxu0 0.0
    %7635 = vmatpush2.msra.mxu0 0.0
    %7636 = vmatprep.subr.mxu0 0.0
    %7637 = vmatpush2.msra.mxu0 0.0
    %7638 = vmatprep.subr.mxu0 0.0
    %7639 = vmatpush2.msra.mxu0 0.0
    %7640 = vmatprep.subr.mxu0 0.0
    %7641 = vmatpush2.msra.mxu0 0.0
    %7642 = vmatprep.subr.mxu0 0.0
    %7643 = vmatpush2.msra.mxu0 0.0
    %7644 = vmatprep.subr.mxu0 0.0
    %7645 = vmatpush2.msra.mxu0 0.0
    %7646 = vmatprep.subr.mxu0 0.0
    %7647 = vmatpush2.msra.mxu0 0.0
    %7648 = vmatprep.mubr.f32.mxu0 0.0
    %7649 = vmatmul.mubr.f32.gmra.mxu0 %v6774
    %v7650 = vpop.f32.mrf.mxu0
    %v7651 = vadd.f32 0.0, %v7650
    %v7652 = vpop.f32.mrf.mxu0
    %7653 = vdwg.mxu0
    %v7654 = vadd.f32 %v7583, %v7651
    %v7655 = vxor.u32 %v7438, 2147483648
    %v7656 = vmul.f32 %v7655, 1.442695
    %v7657 = vpow.pop %v7656
    %v7658 = vadd.f32 %v7657, 1.0
    %v7659 = vrcp.pop %v7658
    %v7660 = vmul.f32 1.0, %v7659
    %v7661 = vxor.u32 %v7510, 2147483648
    %v7662 = vmul.f32 %v7661, 1.442695
    %v7663 = vpow.pop %v7662
    %v7664 = vadd.f32 %v7663, 1.0
    %v7665 = vrcp.pop %v7664
    %v7666 = vmul.f32 1.0, %v7665
    %v7667 = vtanh.pop %v7582
    %v7668 = vxor.u32 %v7654, 2147483648
    %v7669 = vmul.f32 %v7668, 1.442695
    %v7670 = vpow.pop %v7669
    %v7671 = vadd.f32 %v7670, 1.0
    %v7672 = vrcp.pop %v7671
    %v7673 = vmul.f32 1.0, %v7672
    %v7674 = vmul.f32 %v7666, %v6770
    %v7675 = vmul.f32 %v7660, %v7667
    %v7676 = vadd.f32 %v7674, %v7675
    %v7677 = vtanh.pop %v7676
    %v7678 = vmul.f32 %v7673, %v7677
    %v7680 = vsel %vm590, %v7678, 0
    %7682 = vmatprep.subr.mxu0 0.0
    %7683 = vmatpush1.msra.mxu0 0.0
    %7684 = vmatprep.subr.mxu0 0.0
    %7685 = vmatpush1.msra.mxu0 0.0
    %7686 = vmatprep.subr.mxu0 0.0
    %7687 = vmatpush1.msra.mxu0 0.0
    %7688 = vmatprep.subr.mxu0 0.0
    %7689 = vmatpush1.msra.mxu0 0.0
    %7690 = vmatprep.subr.mxu0 0.0
    %7691 = vmatpush1.msra.mxu0 0.0
    %7692 = vmatprep.subr.mxu0 0.0
    %7693 = vmatpush1.msra.mxu0 0.0
    %7694 = vmatprep.subr.mxu0 0.0
    %7695 = vmatpush1.msra.mxu0 0.0
    %7696 = vmatprep.subr.mxu0 0.0
    %7697 = vmatpush1.msra.mxu0 0.0
    %7698 = vmatprep.subr.mxu0 0.0
    %7699 = vmatpush1.msra.mxu0 0.0
    %7700 = vmatprep.subr.mxu0 0.0
    %7701 = vmatpush1.msra.mxu0 0.0
    %7702 = vmatprep.subr.mxu0 0.0
    %7703 = vmatpush1.msra.mxu0 0.0
    %7704 = vmatprep.subr.mxu0 0.0
    %7705 = vmatpush1.msra.mxu0 0.0
    %7706 = vmatprep.subr.mxu0 0.0
    %7707 = vmatpush1.msra.mxu0 %v968
    %7708 = vmatprep.subr.mxu0 0.0
    %7709 = vmatpush1.msra.mxu0 %v967
    %7710 = vmatprep.subr.mxu0 0.0
    %7711 = vmatpush1.msra.mxu0 %v966
    %7712 = vmatprep.subr.mxu0 0.0
    %7713 = vmatpush1.msra.mxu0 %v965
    %7714 = vmatprep.subr.mxu0 0.0
    %7715 = vmatpush2.msra.mxu0 0.0
    %7716 = vmatprep.subr.mxu0 0.0
    %7717 = vmatpush2.msra.mxu0 0.0
    %7718 = vmatprep.subr.mxu0 0.0
    %7719 = vmatpush2.msra.mxu0 0.0
    %7720 = vmatprep.subr.mxu0 0.0
    %7721 = vmatpush2.msra.mxu0 0.0
    %7722 = vmatprep.subr.mxu0 0.0
    %7723 = vmatpush2.msra.mxu0 0.0
    %7724 = vmatprep.subr.mxu0 0.0
    %7725 = vmatpush2.msra.mxu0 0.0
    %7726 = vmatprep.subr.mxu0 0.0
    %7727 = vmatpush2.msra.mxu0 0.0
    %7728 = vmatprep.subr.mxu0 0.0
    %7729 = vmatpush2.msra.mxu0 0.0
    %7730 = vmatprep.subr.mxu0 0.0
    %7731 = vmatpush2.msra.mxu0 0.0
    %7732 = vmatprep.subr.mxu0 0.0
    %7733 = vmatpush2.msra.mxu0 0.0
    %7734 = vmatprep.subr.mxu0 0.0
    %7735 = vmatpush2.msra.mxu0 0.0
    %7736 = vmatprep.subr.mxu0 0.0
    %7737 = vmatpush2.msra.mxu0 0.0
    %7738 = vmatprep.subr.mxu0 0.0
    %7739 = vmatpush2.msra.mxu0 0.0
    %7740 = vmatprep.subr.mxu0 0.0
    %7741 = vmatpush2.msra.mxu0 0.0
    %7742 = vmatprep.subr.mxu0 0.0
    %7743 = vmatpush2.msra.mxu0 0.0
    %7744 = vmatprep.subr.mxu0 0.0
    %7745 = vmatpush2.msra.mxu0 0.0
    %7746 = vmatprep.mubr.f32.mxu0 0.0
    %7747 = vmatmul.mubr.f32.gmra.mxu0 %v7680
    %v7748 = vpop.f32.mrf.mxu0
    %v7749 = vadd.f32 %v1005, %v7748
    %v7750 = vpop.f32.mrf.mxu0
    %7751 = vdwg.mxu0
    %v7753 = vsel %vm590, %v7366, 0
    %7755 = vmatprep.subr.mxu0 0.0
    %7756 = vmatpush1.msra.mxu0 0.0
    %7757 = vmatprep.subr.mxu0 0.0
    %7758 = vmatpush1.msra.mxu0 0.0
    %7759 = vmatprep.subr.mxu0 0.0
    %7760 = vmatpush1.msra.mxu0 0.0
    %7761 = vmatprep.subr.mxu0 0.0
    %7762 = vmatpush1.msra.mxu0 0.0
    %7763 = vmatprep.subr.mxu0 0.0
    %7764 = vmatpush1.msra.mxu0 0.0
    %7765 = vmatprep.subr.mxu0 0.0
    %7766 = vmatpush1.msra.mxu0 0.0
    %7767 = vmatprep.subr.mxu0 0.0
    %7768 = vmatpush1.msra.mxu0 0.0
    %7769 = vmatprep.subr.mxu0 0.0
    %7770 = vmatpush1.msra.mxu0 0.0
    %7771 = vmatprep.subr.mxu0 0.0
    %7772 = vmatpush1.msra.mxu0 0.0
    %7773 = vmatprep.subr.mxu0 0.0
    %7774 = vmatpush1.msra.mxu0 0.0
    %7775 = vmatprep.subr.mxu0 0.0
    %7776 = vmatpush1.msra.mxu0 0.0
    %7777 = vmatprep.subr.mxu0 0.0
    %7778 = vmatpush1.msra.mxu0 0.0
    %7779 = vmatprep.subr.mxu0 0.0
    %7780 = vmatpush1.msra.mxu0 %v984
    %7781 = vmatprep.subr.mxu0 0.0
    %7782 = vmatpush1.msra.mxu0 %v983
    %7783 = vmatprep.subr.mxu0 0.0
    %7784 = vmatpush1.msra.mxu0 %v982
    %7785 = vmatprep.subr.mxu0 0.0
    %7786 = vmatpush1.msra.mxu0 %v981
    %7787 = vmatprep.subr.mxu0 0.0
    %7788 = vmatpush2.msra.mxu0 0.0
    %7789 = vmatprep.subr.mxu0 0.0
    %7790 = vmatpush2.msra.mxu0 0.0
    %7791 = vmatprep.subr.mxu0 0.0
    %7792 = vmatpush2.msra.mxu0 0.0
    %7793 = vmatprep.subr.mxu0 0.0
    %7794 = vmatpush2.msra.mxu0 0.0
    %7795 = vmatprep.subr.mxu0 0.0
    %7796 = vmatpush2.msra.mxu0 0.0
    %7797 = vmatprep.subr.mxu0 0.0
    %7798 = vmatpush2.msra.mxu0 0.0
    %7799 = vmatprep.subr.mxu0 0.0
    %7800 = vmatpush2.msra.mxu0 0.0
    %7801 = vmatprep.subr.mxu0 0.0
    %7802 = vmatpush2.msra.mxu0 0.0
    %7803 = vmatprep.subr.mxu0 0.0
    %7804 = vmatpush2.msra.mxu0 0.0
    %7805 = vmatprep.subr.mxu0 0.0
    %7806 = vmatpush2.msra.mxu0 0.0
    %7807 = vmatprep.subr.mxu0 0.0
    %7808 = vmatpush2.msra.mxu0 0.0
    %7809 = vmatprep.subr.mxu0 0.0
    %7810 = vmatpush2.msra.mxu0 0.0
    %7811 = vmatprep.subr.mxu0 0.0
    %7812 = vmatpush2.msra.mxu0 0.0
    %7813 = vmatprep.subr.mxu0 0.0
    %7814 = vmatpush2.msra.mxu0 0.0
    %7815 = vmatprep.subr.mxu0 0.0
    %7816 = vmatpush2.msra.mxu0 0.0
    %7817 = vmatprep.subr.mxu0 0.0
    %7818 = vmatpush2.msra.mxu0 0.0
    %7819 = vmatprep.mubr.f32.mxu0 0.0
    %7820 = vmatmul.mubr.f32.gmra.mxu0 %v7753
    %v7821 = vpop.f32.mrf.mxu0
    %v7822 = vadd.f32 0.0, %v7821
    %v7823 = vpop.f32.mrf.mxu0
    %7824 = vdwg.mxu0
    %v7825 = vadd.f32 %v7749, %v7822
    %7826 = vmatprep.subr.mxu0 0.0
    %7827 = vmatpush1.msra.mxu0 0.0
    %7828 = vmatprep.subr.mxu0 0.0
    %7829 = vmatpush1.msra.mxu0 0.0
    %7830 = vmatprep.subr.mxu0 0.0
    %7831 = vmatpush1.msra.mxu0 0.0
    %7832 = vmatprep.subr.mxu0 0.0
    %7833 = vmatpush1.msra.mxu0 0.0
    %7834 = vmatprep.subr.mxu0 0.0
    %7835 = vmatpush1.msra.mxu0 0.0
    %7836 = vmatprep.subr.mxu0 0.0
    %7837 = vmatpush1.msra.mxu0 0.0
    %7838 = vmatprep.subr.mxu0 0.0
    %7839 = vmatpush1.msra.mxu0 0.0
    %7840 = vmatprep.subr.mxu0 0.0
    %7841 = vmatpush1.msra.mxu0 0.0
    %7842 = vmatprep.subr.mxu0 0.0
    %7843 = vmatpush1.msra.mxu0 0.0
    %7844 = vmatprep.subr.mxu0 0.0
    %7845 = vmatpush1.msra.mxu0 0.0
    %7846 = vmatprep.subr.mxu0 0.0
    %7847 = vmatpush1.msra.mxu0 0.0
    %7848 = vmatprep.subr.mxu0 0.0
    %7849 = vmatpush1.msra.mxu0 0.0
    %7850 = vmatprep.subr.mxu0 0.0
    %7851 = vmatpush1.msra.mxu0 %v972
    %7852 = vmatprep.subr.mxu0 0.0
    %7853 = vmatpush1.msra.mxu0 %v971
    %7854 = vmatprep.subr.mxu0 0.0
    %7855 = vmatpush1.msra.mxu0 %v970
    %7856 = vmatprep.subr.mxu0 0.0
    %7857 = vmatpush1.msra.mxu0 %v969
    %7858 = vmatprep.subr.mxu0 0.0
    %7859 = vmatpush2.msra.mxu0 0.0
    %7860 = vmatprep.subr.mxu0 0.0
    %7861 = vmatpush2.msra.mxu0 0.0
    %7862 = vmatprep.subr.mxu0 0.0
    %7863 = vmatpush2.msra.mxu0 0.0
    %7864 = vmatprep.subr.mxu0 0.0
    %7865 = vmatpush2.msra.mxu0 0.0
    %7866 = vmatprep.subr.mxu0 0.0
    %7867 = vmatpush2.msra.mxu0 0.0
    %7868 = vmatprep.subr.mxu0 0.0
    %7869 = vmatpush2.msra.mxu0 0.0
    %7870 = vmatprep.subr.mxu0 0.0
    %7871 = vmatpush2.msra.mxu0 0.0
    %7872 = vmatprep.subr.mxu0 0.0
    %7873 = vmatpush2.msra.mxu0 0.0
    %7874 = vmatprep.subr.mxu0 0.0
    %7875 = vmatpush2.msra.mxu0 0.0
    %7876 = vmatprep.subr.mxu0 0.0
    %7877 = vmatpush2.msra.mxu0 0.0
    %7878 = vmatprep.subr.mxu0 0.0
    %7879 = vmatpush2.msra.mxu0 0.0
    %7880 = vmatprep.subr.mxu0 0.0
    %7881 = vmatpush2.msra.mxu0 0.0
    %7882 = vmatprep.subr.mxu0 0.0
    %7883 = vmatpush2.msra.mxu0 0.0
    %7884 = vmatprep.subr.mxu0 0.0
    %7885 = vmatpush2.msra.mxu0 0.0
    %7886 = vmatprep.subr.mxu0 0.0
    %7887 = vmatpush2.msra.mxu0 0.0
    %7888 = vmatprep.subr.mxu0 0.0
    %7889 = vmatpush2.msra.mxu0 0.0
    %7890 = vmatprep.mubr.f32.mxu0 0.0
    %7891 = vmatmul.mubr.f32.gmra.mxu0 %v7680
    %v7892 = vpop.f32.mrf.mxu0
    %v7893 = vadd.f32 %v1011, %v7892
    %v7894 = vpop.f32.mrf.mxu0
    %7895 = vdwg.mxu0
    %7896 = vmatprep.subr.mxu0 0.0
    %7897 = vmatpush1.msra.mxu0 0.0
    %7898 = vmatprep.subr.mxu0 0.0
    %7899 = vmatpush1.msra.mxu0 0.0
    %7900 = vmatprep.subr.mxu0 0.0
    %7901 = vmatpush1.msra.mxu0 0.0
    %7902 = vmatprep.subr.mxu0 0.0
    %7903 = vmatpush1.msra.mxu0 0.0
    %7904 = vmatprep.subr.mxu0 0.0
    %7905 = vmatpush1.msra.mxu0 0.0
    %7906 = vmatprep.subr.mxu0 0.0
    %7907 = vmatpush1.msra.mxu0 0.0
    %7908 = vmatprep.subr.mxu0 0.0
    %7909 = vmatpush1.msra.mxu0 0.0
    %7910 = vmatprep.subr.mxu0 0.0
    %7911 = vmatpush1.msra.mxu0 0.0
    %7912 = vmatprep.subr.mxu0 0.0
    %7913 = vmatpush1.msra.mxu0 0.0
    %7914 = vmatprep.subr.mxu0 0.0
    %7915 = vmatpush1.msra.mxu0 0.0
    %7916 = vmatprep.subr.mxu0 0.0
    %7917 = vmatpush1.msra.mxu0 0.0
    %7918 = vmatprep.subr.mxu0 0.0
    %7919 = vmatpush1.msra.mxu0 0.0
    %7920 = vmatprep.subr.mxu0 0.0
    %7921 = vmatpush1.msra.mxu0 %v988
    %7922 = vmatprep.subr.mxu0 0.0
    %7923 = vmatpush1.msra.mxu0 %v987
    %7924 = vmatprep.subr.mxu0 0.0
    %7925 = vmatpush1.msra.mxu0 %v986
    %7926 = vmatprep.subr.mxu0 0.0
    %7927 = vmatpush1.msra.mxu0 %v985
    %7928 = vmatprep.subr.mxu0 0.0
    %7929 = vmatpush2.msra.mxu0 0.0
    %7930 = vmatprep.subr.mxu0 0.0
    %7931 = vmatpush2.msra.mxu0 0.0
    %7932 = vmatprep.subr.mxu0 0.0
    %7933 = vmatpush2.msra.mxu0 0.0
    %7934 = vmatprep.subr.mxu0 0.0
    %7935 = vmatpush2.msra.mxu0 0.0
    %7936 = vmatprep.subr.mxu0 0.0
    %7937 = vmatpush2.msra.mxu0 0.0
    %7938 = vmatprep.subr.mxu0 0.0
    %7939 = vmatpush2.msra.mxu0 0.0
    %7940 = vmatprep.subr.mxu0 0.0
    %7941 = vmatpush2.msra.mxu0 0.0
    %7942 = vmatprep.subr.mxu0 0.0
    %7943 = vmatpush2.msra.mxu0 0.0
    %7944 = vmatprep.subr.mxu0 0.0
    %7945 = vmatpush2.msra.mxu0 0.0
    %7946 = vmatprep.subr.mxu0 0.0
    %7947 = vmatpush2.msra.mxu0 0.0
    %7948 = vmatprep.subr.mxu0 0.0
    %7949 = vmatpush2.msra.mxu0 0.0
    %7950 = vmatprep.subr.mxu0 0.0
    %7951 = vmatpush2.msra.mxu0 0.0
    %7952 = vmatprep.subr.mxu0 0.0
    %7953 = vmatpush2.msra.mxu0 0.0
    %7954 = vmatprep.subr.mxu0 0.0
    %7955 = vmatpush2.msra.mxu0 0.0
    %7956 = vmatprep.subr.mxu0 0.0
    %7957 = vmatpush2.msra.mxu0 0.0
    %7958 = vmatprep.subr.mxu0 0.0
    %7959 = vmatpush2.msra.mxu0 0.0
    %7960 = vmatprep.mubr.f32.mxu0 0.0
    %7961 = vmatmul.mubr.f32.gmra.mxu0 %v7753
    %v7962 = vpop.f32.mrf.mxu0
    %v7963 = vadd.f32 0.0, %v7962
    %v7964 = vpop.f32.mrf.mxu0
    %7965 = vdwg.mxu0
    %v7966 = vadd.f32 %v7893, %v7963
    %7967 = vmatprep.subr.mxu0 0.0
    %7968 = vmatpush1.msra.mxu0 0.0
    %7969 = vmatprep.subr.mxu0 0.0
    %7970 = vmatpush1.msra.mxu0 0.0
    %7971 = vmatprep.subr.mxu0 0.0
    %7972 = vmatpush1.msra.mxu0 0.0
    %7973 = vmatprep.subr.mxu0 0.0
    %7974 = vmatpush1.msra.mxu0 0.0
    %7975 = vmatprep.subr.mxu0 0.0
    %7976 = vmatpush1.msra.mxu0 0.0
    %7977 = vmatprep.subr.mxu0 0.0
    %7978 = vmatpush1.msra.mxu0 0.0
    %7979 = vmatprep.subr.mxu0 0.0
    %7980 = vmatpush1.msra.mxu0 0.0
    %7981 = vmatprep.subr.mxu0 0.0
    %7982 = vmatpush1.msra.mxu0 0.0
    %7983 = vmatprep.subr.mxu0 0.0
    %7984 = vmatpush1.msra.mxu0 0.0
    %7985 = vmatprep.subr.mxu0 0.0
    %7986 = vmatpush1.msra.mxu0 0.0
    %7987 = vmatprep.subr.mxu0 0.0
    %7988 = vmatpush1.msra.mxu0 0.0
    %7989 = vmatprep.subr.mxu0 0.0
    %7990 = vmatpush1.msra.mxu0 0.0
    %7991 = vmatprep.subr.mxu0 0.0
    %7992 = vmatpush1.msra.mxu0 %v976
    %7993 = vmatprep.subr.mxu0 0.0
    %7994 = vmatpush1.msra.mxu0 %v975
    %7995 = vmatprep.subr.mxu0 0.0
    %7996 = vmatpush1.msra.mxu0 %v974
    %7997 = vmatprep.subr.mxu0 0.0
    %7998 = vmatpush1.msra.mxu0 %v973
    %7999 = vmatprep.subr.mxu0 0.0
    %8000 = vmatpush2.msra.mxu0 0.0
    %8001 = vmatprep.subr.mxu0 0.0
    %8002 = vmatpush2.msra.mxu0 0.0
    %8003 = vmatprep.subr.mxu0 0.0
    %8004 = vmatpush2.msra.mxu0 0.0
    %8005 = vmatprep.subr.mxu0 0.0
    %8006 = vmatpush2.msra.mxu0 0.0
    %8007 = vmatprep.subr.mxu0 0.0
    %8008 = vmatpush2.msra.mxu0 0.0
    %8009 = vmatprep.subr.mxu0 0.0
    %8010 = vmatpush2.msra.mxu0 0.0
    %8011 = vmatprep.subr.mxu0 0.0
    %8012 = vmatpush2.msra.mxu0 0.0
    %8013 = vmatprep.subr.mxu0 0.0
    %8014 = vmatpush2.msra.mxu0 0.0
    %8015 = vmatprep.subr.mxu0 0.0
    %8016 = vmatpush2.msra.mxu0 0.0
    %8017 = vmatprep.subr.mxu0 0.0
    %8018 = vmatpush2.msra.mxu0 0.0
    %8019 = vmatprep.subr.mxu0 0.0
    %8020 = vmatpush2.msra.mxu0 0.0
    %8021 = vmatprep.subr.mxu0 0.0
    %8022 = vmatpush2.msra.mxu0 0.0
    %8023 = vmatprep.subr.mxu0 0.0
    %8024 = vmatpush2.msra.mxu0 0.0
    %8025 = vmatprep.subr.mxu0 0.0
    %8026 = vmatpush2.msra.mxu0 0.0
    %8027 = vmatprep.subr.mxu0 0.0
    %8028 = vmatpush2.msra.mxu0 0.0
    %8029 = vmatprep.subr.mxu0 0.0
    %8030 = vmatpush2.msra.mxu0 0.0
    %8031 = vmatprep.mubr.f32.mxu0 0.0
    %8032 = vmatmul.mubr.f32.gmra.mxu0 %v7680
    %v8033 = vpop.f32.mrf.mxu0
    %v8034 = vadd.f32 %v1017, %v8033
    %v8035 = vpop.f32.mrf.mxu0
    %8036 = vdwg.mxu0
    %8037 = vmatprep.subr.mxu0 0.0
    %8038 = vmatpush1.msra.mxu0 0.0
    %8039 = vmatprep.subr.mxu0 0.0
    %8040 = vmatpush1.msra.mxu0 0.0
    %8041 = vmatprep.subr.mxu0 0.0
    %8042 = vmatpush1.msra.mxu0 0.0
    %8043 = vmatprep.subr.mxu0 0.0
    %8044 = vmatpush1.msra.mxu0 0.0
    %8045 = vmatprep.subr.mxu0 0.0
    %8046 = vmatpush1.msra.mxu0 0.0
    %8047 = vmatprep.subr.mxu0 0.0
    %8048 = vmatpush1.msra.mxu0 0.0
    %8049 = vmatprep.subr.mxu0 0.0
    %8050 = vmatpush1.msra.mxu0 0.0
    %8051 = vmatprep.subr.mxu0 0.0
    %8052 = vmatpush1.msra.mxu0 0.0
    %8053 = vmatprep.subr.mxu0 0.0
    %8054 = vmatpush1.msra.mxu0 0.0
    %8055 = vmatprep.subr.mxu0 0.0
    %8056 = vmatpush1.msra.mxu0 0.0
    %8057 = vmatprep.subr.mxu0 0.0
    %8058 = vmatpush1.msra.mxu0 0.0
    %8059 = vmatprep.subr.mxu0 0.0
    %8060 = vmatpush1.msra.mxu0 0.0
    %8061 = vmatprep.subr.mxu0 0.0
    %8062 = vmatpush1.msra.mxu0 %v992
    %8063 = vmatprep.subr.mxu0 0.0
    %8064 = vmatpush1.msra.mxu0 %v991
    %8065 = vmatprep.subr.mxu0 0.0
    %8066 = vmatpush1.msra.mxu0 %v990
    %8067 = vmatprep.subr.mxu0 0.0
    %8068 = vmatpush1.msra.mxu0 %v989
    %8069 = vmatprep.subr.mxu0 0.0
    %8070 = vmatpush2.msra.mxu0 0.0
    %8071 = vmatprep.subr.mxu0 0.0
    %8072 = vmatpush2.msra.mxu0 0.0
    %8073 = vmatprep.subr.mxu0 0.0
    %8074 = vmatpush2.msra.mxu0 0.0
    %8075 = vmatprep.subr.mxu0 0.0
    %8076 = vmatpush2.msra.mxu0 0.0
    %8077 = vmatprep.subr.mxu0 0.0
    %8078 = vmatpush2.msra.mxu0 0.0
    %8079 = vmatprep.subr.mxu0 0.0
    %8080 = vmatpush2.msra.mxu0 0.0
    %8081 = vmatprep.subr.mxu0 0.0
    %8082 = vmatpush2.msra.mxu0 0.0
    %8083 = vmatprep.subr.mxu0 0.0
    %8084 = vmatpush2.msra.mxu0 0.0
    %8085 = vmatprep.subr.mxu0 0.0
    %8086 = vmatpush2.msra.mxu0 0.0
    %8087 = vmatprep.subr.mxu0 0.0
    %8088 = vmatpush2.msra.mxu0 0.0
    %8089 = vmatprep.subr.mxu0 0.0
    %8090 = vmatpush2.msra.mxu0 0.0
    %8091 = vmatprep.subr.mxu0 0.0
    %8092 = vmatpush2.msra.mxu0 0.0
    %8093 = vmatprep.subr.mxu0 0.0
    %8094 = vmatpush2.msra.mxu0 0.0
    %8095 = vmatprep.subr.mxu0 0.0
    %8096 = vmatpush2.msra.mxu0 0.0
    %8097 = vmatprep.subr.mxu0 0.0
    %8098 = vmatpush2.msra.mxu0 0.0
    %8099 = vmatprep.subr.mxu0 0.0
    %8100 = vmatpush2.msra.mxu0 0.0
    %8101 = vmatprep.mubr.f32.mxu0 0.0
    %8102 = vmatmul.mubr.f32.gmra.mxu0 %v7753
    %v8103 = vpop.f32.mrf.mxu0
    %v8104 = vadd.f32 0.0, %v8103
    %v8105 = vpop.f32.mrf.mxu0
    %8106 = vdwg.mxu0
    %v8107 = vadd.f32 %v8034, %v8104
    %8108 = vmatprep.subr.mxu0 0.0
    %8109 = vmatpush1.msra.mxu0 0.0
    %8110 = vmatprep.subr.mxu0 0.0
    %8111 = vmatpush1.msra.mxu0 0.0
    %8112 = vmatprep.subr.mxu0 0.0
    %8113 = vmatpush1.msra.mxu0 0.0
    %8114 = vmatprep.subr.mxu0 0.0
    %8115 = vmatpush1.msra.mxu0 0.0
    %8116 = vmatprep.subr.mxu0 0.0
    %8117 = vmatpush1.msra.mxu0 0.0
    %8118 = vmatprep.subr.mxu0 0.0
    %8119 = vmatpush1.msra.mxu0 0.0
    %8120 = vmatprep.subr.mxu0 0.0
    %8121 = vmatpush1.msra.mxu0 0.0
    %8122 = vmatprep.subr.mxu0 0.0
    %8123 = vmatpush1.msra.mxu0 0.0
    %8124 = vmatprep.subr.mxu0 0.0
    %8125 = vmatpush1.msra.mxu0 0.0
    %8126 = vmatprep.subr.mxu0 0.0
    %8127 = vmatpush1.msra.mxu0 0.0
    %8128 = vmatprep.subr.mxu0 0.0
    %8129 = vmatpush1.msra.mxu0 0.0
    %8130 = vmatprep.subr.mxu0 0.0
    %8131 = vmatpush1.msra.mxu0 0.0
    %8132 = vmatprep.subr.mxu0 0.0
    %8133 = vmatpush1.msra.mxu0 %v980
    %8134 = vmatprep.subr.mxu0 0.0
    %8135 = vmatpush1.msra.mxu0 %v979
    %8136 = vmatprep.subr.mxu0 0.0
    %8137 = vmatpush1.msra.mxu0 %v978
    %8138 = vmatprep.subr.mxu0 0.0
    %8139 = vmatpush1.msra.mxu0 %v977
    %8140 = vmatprep.subr.mxu0 0.0
    %8141 = vmatpush2.msra.mxu0 0.0
    %8142 = vmatprep.subr.mxu0 0.0
    %8143 = vmatpush2.msra.mxu0 0.0
    %8144 = vmatprep.subr.mxu0 0.0
    %8145 = vmatpush2.msra.mxu0 0.0
    %8146 = vmatprep.subr.mxu0 0.0
    %8147 = vmatpush2.msra.mxu0 0.0
    %8148 = vmatprep.subr.mxu0 0.0
    %8149 = vmatpush2.msra.mxu0 0.0
    %8150 = vmatprep.subr.mxu0 0.0
    %8151 = vmatpush2.msra.mxu0 0.0
    %8152 = vmatprep.subr.mxu0 0.0
    %8153 = vmatpush2.msra.mxu0 0.0
    %8154 = vmatprep.subr.mxu0 0.0
    %8155 = vmatpush2.msra.mxu0 0.0
    %8156 = vmatprep.subr.mxu0 0.0
    %8157 = vmatpush2.msra.mxu0 0.0
    %8158 = vmatprep.subr.mxu0 0.0
    %8159 = vmatpush2.msra.mxu0 0.0
    %8160 = vmatprep.subr.mxu0 0.0
    %8161 = vmatpush2.msra.mxu0 0.0
    %8162 = vmatprep.subr.mxu0 0.0
    %8163 = vmatpush2.msra.mxu0 0.0
    %8164 = vmatprep.subr.mxu0 0.0
    %8165 = vmatpush2.msra.mxu0 0.0
    %8166 = vmatprep.subr.mxu0 0.0
    %8167 = vmatpush2.msra.mxu0 0.0
    %8168 = vmatprep.subr.mxu0 0.0
    %8169 = vmatpush2.msra.mxu0 0.0
    %8170 = vmatprep.subr.mxu0 0.0
    %8171 = vmatpush2.msra.mxu0 0.0
    %8172 = vmatprep.mubr.f32.mxu0 0.0
    %8173 = vmatmul.mubr.f32.gmra.mxu0 %v7680
    %v8174 = vpop.f32.mrf.mxu0
    %v8175 = vadd.f32 %v1023, %v8174
    %v8176 = vpop.f32.mrf.mxu0
    %8177 = vdwg.mxu0
    %8178 = vmatprep.subr.mxu0 0.0
    %8179 = vmatpush1.msra.mxu0 0.0
    %8180 = vmatprep.subr.mxu0 0.0
    %8181 = vmatpush1.msra.mxu0 0.0
    %8182 = vmatprep.subr.mxu0 0.0
    %8183 = vmatpush1.msra.mxu0 0.0
    %8184 = vmatprep.subr.mxu0 0.0
    %8185 = vmatpush1.msra.mxu0 0.0
    %8186 = vmatprep.subr.mxu0 0.0
    %8187 = vmatpush1.msra.mxu0 0.0
    %8188 = vmatprep.subr.mxu0 0.0
    %8189 = vmatpush1.msra.mxu0 0.0
    %8190 = vmatprep.subr.mxu0 0.0
    %8191 = vmatpush1.msra.mxu0 0.0
    %8192 = vmatprep.subr.mxu0 0.0
    %8193 = vmatpush1.msra.mxu0 0.0
    %8194 = vmatprep.subr.mxu0 0.0
    %8195 = vmatpush1.msra.mxu0 0.0
    %8196 = vmatprep.subr.mxu0 0.0
    %8197 = vmatpush1.msra.mxu0 0.0
    %8198 = vmatprep.subr.mxu0 0.0
    %8199 = vmatpush1.msra.mxu0 0.0
    %8200 = vmatprep.subr.mxu0 0.0
    %8201 = vmatpush1.msra.mxu0 0.0
    %8202 = vmatprep.subr.mxu0 0.0
    %8203 = vmatpush1.msra.mxu0 %v996
    %8204 = vmatprep.subr.mxu0 0.0
    %8205 = vmatpush1.msra.mxu0 %v995
    %8206 = vmatprep.subr.mxu0 0.0
    %8207 = vmatpush1.msra.mxu0 %v994
    %8208 = vmatprep.subr.mxu0 0.0
    %8209 = vmatpush1.msra.mxu0 %v993
    %8210 = vmatprep.subr.mxu0 0.0
    %8211 = vmatpush2.msra.mxu0 0.0
    %8212 = vmatprep.subr.mxu0 0.0
    %8213 = vmatpush2.msra.mxu0 0.0
    %8214 = vmatprep.subr.mxu0 0.0
    %8215 = vmatpush2.msra.mxu0 0.0
    %8216 = vmatprep.subr.mxu0 0.0
    %8217 = vmatpush2.msra.mxu0 0.0
    %8218 = vmatprep.subr.mxu0 0.0
    %8219 = vmatpush2.msra.mxu0 0.0
    %8220 = vmatprep.subr.mxu0 0.0
    %8221 = vmatpush2.msra.mxu0 0.0
    %8222 = vmatprep.subr.mxu0 0.0
    %8223 = vmatpush2.msra.mxu0 0.0
    %8224 = vmatprep.subr.mxu0 0.0
    %8225 = vmatpush2.msra.mxu0 0.0
    %8226 = vmatprep.subr.mxu0 0.0
    %8227 = vmatpush2.msra.mxu0 0.0
    %8228 = vmatprep.subr.mxu0 0.0
    %8229 = vmatpush2.msra.mxu0 0.0
    %8230 = vmatprep.subr.mxu0 0.0
    %8231 = vmatpush2.msra.mxu0 0.0
    %8232 = vmatprep.subr.mxu0 0.0
    %8233 = vmatpush2.msra.mxu0 0.0
    %8234 = vmatprep.subr.mxu0 0.0
    %8235 = vmatpush2.msra.mxu0 0.0
    %8236 = vmatprep.subr.mxu0 0.0
    %8237 = vmatpush2.msra.mxu0 0.0
    %8238 = vmatprep.subr.mxu0 0.0
    %8239 = vmatpush2.msra.mxu0 0.0
    %8240 = vmatprep.subr.mxu0 0.0
    %8241 = vmatpush2.msra.mxu0 0.0
    %8242 = vmatprep.mubr.f32.mxu0 0.0
    %8243 = vmatmul.mubr.f32.gmra.mxu0 %v7753
    %v8244 = vpop.f32.mrf.mxu0
    %v8245 = vadd.f32 0.0, %v8244
    %v8246 = vpop.f32.mrf.mxu0
    %8247 = vdwg.mxu0
    %v8248 = vadd.f32 %v8175, %v8245
    %v8249 = vxor.u32 %v7825, 2147483648
    %v8250 = vmul.f32 %v8249, 1.442695
    %v8251 = vpow.pop %v8250
    %v8252 = vadd.f32 %v8251, 1.0
    %v8253 = vrcp.pop %v8252
    %v8254 = vmul.f32 1.0, %v8253
    %v8255 = vxor.u32 %v7966, 2147483648
    %v8256 = vmul.f32 %v8255, 1.442695
    %v8257 = vpow.pop %v8256
    %v8258 = vadd.f32 %v8257, 1.0
    %v8259 = vrcp.pop %v8258
    %v8260 = vmul.f32 1.0, %v8259
    %v8261 = vtanh.pop %v8107
    %v8262 = vxor.u32 %v8248, 2147483648
    %v8263 = vmul.f32 %v8262, 1.442695
    %v8264 = vpow.pop %v8263
    %v8265 = vadd.f32 %v8264, 1.0
    %v8266 = vrcp.pop %v8265
    %v8267 = vmul.f32 1.0, %v8266
    %v8268 = vmul.f32 %v8260, %v7364
    %v8269 = vmul.f32 %v8254, %v8261
    %v8270 = vadd.f32 %v8268, %v8269
    %v8271 = vtanh.pop %v8270
    %v8272 = vmul.f32 %v8267, %v8271
    %v8273 = vld [vmem:[#allocation33] sm:$0xff]
    %v8274 = vld [vmem:[#allocation33 + $0x8] sm:$0xff]
    %v8275 = vld [vmem:[#allocation33 + $0x10] sm:$0xff]
    %v8276 = vld [vmem:[#allocation33 + $0x18] sm:$0xff]
    %v8277 = vld [vmem:[#allocation35] sm:$0x1]
    %v8279 = vlaneseq
    %v8280 = vshrl.u32 %v8279, 7
    %v8281 = vsub.s32 0, %v8280
    %v8282 = vrot.slane %v8277, %v8281
    %v8285 = vsel %vm590, %v8272, 0
    %8287 = vmatprep.subr.mxu0 0.0
    %8288 = vmatpush1.msra.mxu0 0.0
    %8289 = vmatprep.subr.mxu0 0.0
    %8290 = vmatpush1.msra.mxu0 0.0
    %8291 = vmatprep.subr.mxu0 0.0
    %8292 = vmatpush1.msra.mxu0 0.0
    %8293 = vmatprep.subr.mxu0 0.0
    %8294 = vmatpush1.msra.mxu0 0.0
    %8295 = vmatprep.subr.mxu0 0.0
    %8296 = vmatpush1.msra.mxu0 0.0
    %8297 = vmatprep.subr.mxu0 0.0
    %8298 = vmatpush1.msra.mxu0 0.0
    %8299 = vmatprep.subr.mxu0 0.0
    %8300 = vmatpush1.msra.mxu0 0.0
    %8301 = vmatprep.subr.mxu0 0.0
    %8302 = vmatpush1.msra.mxu0 0.0
    %8303 = vmatprep.subr.mxu0 0.0
    %8304 = vmatpush1.msra.mxu0 0.0
    %8305 = vmatprep.subr.mxu0 0.0
    %8306 = vmatpush1.msra.mxu0 0.0
    %8307 = vmatprep.subr.mxu0 0.0
    %8308 = vmatpush1.msra.mxu0 0.0
    %8309 = vmatprep.subr.mxu0 0.0
    %8310 = vmatpush1.msra.mxu0 0.0
    %8311 = vmatprep.subr.mxu0 0.0
    %8312 = vmatpush1.msra.mxu0 %v8276
    %8313 = vmatprep.subr.mxu0 0.0
    %8314 = vmatpush1.msra.mxu0 %v8275
    %8315 = vmatprep.subr.mxu0 0.0
    %8316 = vmatpush1.msra.mxu0 %v8274
    %8317 = vmatprep.subr.mxu0 0.0
    %8318 = vmatpush1.msra.mxu0 %v8273
    %8319 = vmatprep.subr.mxu0 0.0
    %8320 = vmatpush2.msra.mxu0 0.0
    %8321 = vmatprep.subr.mxu0 0.0
    %8322 = vmatpush2.msra.mxu0 0.0
    %8323 = vmatprep.subr.mxu0 0.0
    %8324 = vmatpush2.msra.mxu0 0.0
    %8325 = vmatprep.subr.mxu0 0.0
    %8326 = vmatpush2.msra.mxu0 0.0
    %8327 = vmatprep.subr.mxu0 0.0
    %8328 = vmatpush2.msra.mxu0 0.0
    %8329 = vmatprep.subr.mxu0 0.0
    %8330 = vmatpush2.msra.mxu0 0.0
    %8331 = vmatprep.subr.mxu0 0.0
    %8332 = vmatpush2.msra.mxu0 0.0
    %8333 = vmatprep.subr.mxu0 0.0
    %8334 = vmatpush2.msra.mxu0 0.0
    %8335 = vmatprep.subr.mxu0 0.0
    %8336 = vmatpush2.msra.mxu0 0.0
    %8337 = vmatprep.subr.mxu0 0.0
    %8338 = vmatpush2.msra.mxu0 0.0
    %8339 = vmatprep.subr.mxu0 0.0
    %8340 = vmatpush2.msra.mxu0 0.0
    %8341 = vmatprep.subr.mxu0 0.0
    %8342 = vmatpush2.msra.mxu0 0.0
    %8343 = vmatprep.subr.mxu0 0.0
    %8344 = vmatpush2.msra.mxu0 0.0
    %8345 = vmatprep.subr.mxu0 0.0
    %8346 = vmatpush2.msra.mxu0 0.0
    %8347 = vmatprep.subr.mxu0 0.0
    %8348 = vmatpush2.msra.mxu0 0.0
    %8349 = vmatprep.subr.mxu0 0.0
    %8350 = vmatpush2.msra.mxu0 0.0
    %8351 = vmatprep.mubr.f32.mxu0 0.0
    %8352 = vmatmul.mubr.f32.gmra.mxu0 %v8285
    %v8353 = vpop.f32.mrf.mxu0
    %v8354 = vadd.f32 %v8282, %v8353
    %v8355 = vpop.f32.mrf.mxu0
    %8356 = vdwg.mxu0
    %v8357 = vmax.f32 %v8354, 0.0
    %v8358 = vld [vmem:[%s55] sm:$0xff]
    %v8359 = vld [vmem:[%s55 + $0x8] sm:$0xff]
    %v8360 = vld [vmem:[%s55 + $0x10] sm:$0xff]
    %v8361 = vld [vmem:[%s55 + $0x18] sm:$0xff]
    %v8362 = vld [vmem:[#allocation36] sm:$0x1]
    %v8364 = vlaneseq
    %v8365 = vshrl.u32 %v8364, 7
    %v8366 = vsub.s32 0, %v8365
    %v8367 = vrot.slane %v8362, %v8366
    %v8370 = vsel %vm590, %v8357, 0
    %8372 = vmatprep.subr.mxu0 0.0
    %8373 = vmatpush1.msra.mxu0 0.0
    %8374 = vmatprep.subr.mxu0 0.0
    %8375 = vmatpush1.msra.mxu0 0.0
    %8376 = vmatprep.subr.mxu0 0.0
    %8377 = vmatpush1.msra.mxu0 0.0
    %8378 = vmatprep.subr.mxu0 0.0
    %8379 = vmatpush1.msra.mxu0 0.0
    %8380 = vmatprep.subr.mxu0 0.0
    %8381 = vmatpush1.msra.mxu0 0.0
    %8382 = vmatprep.subr.mxu0 0.0
    %8383 = vmatpush1.msra.mxu0 0.0
    %8384 = vmatprep.subr.mxu0 0.0
    %8385 = vmatpush1.msra.mxu0 0.0
    %8386 = vmatprep.subr.mxu0 0.0
    %8387 = vmatpush1.msra.mxu0 0.0
    %8388 = vmatprep.subr.mxu0 0.0
    %8389 = vmatpush1.msra.mxu0 0.0
    %8390 = vmatprep.subr.mxu0 0.0
    %8391 = vmatpush1.msra.mxu0 0.0
    %8392 = vmatprep.subr.mxu0 0.0
    %8393 = vmatpush1.msra.mxu0 0.0
    %8394 = vmatprep.subr.mxu0 0.0
    %8395 = vmatpush1.msra.mxu0 0.0
    %8396 = vmatprep.subr.mxu0 0.0
    %8397 = vmatpush1.msra.mxu0 %v8361
    %8398 = vmatprep.subr.mxu0 0.0
    %8399 = vmatpush1.msra.mxu0 %v8360
    %8400 = vmatprep.subr.mxu0 0.0
    %8401 = vmatpush1.msra.mxu0 %v8359
    %8402 = vmatprep.subr.mxu0 0.0
    %8403 = vmatpush1.msra.mxu0 %v8358
    %8404 = vmatprep.subr.mxu0 0.0
    %8405 = vmatpush2.msra.mxu0 0.0
    %8406 = vmatprep.subr.mxu0 0.0
    %8407 = vmatpush2.msra.mxu0 0.0
    %8408 = vmatprep.subr.mxu0 0.0
    %8409 = vmatpush2.msra.mxu0 0.0
    %8410 = vmatprep.subr.mxu0 0.0
    %8411 = vmatpush2.msra.mxu0 0.0
    %8412 = vmatprep.subr.mxu0 0.0
    %8413 = vmatpush2.msra.mxu0 0.0
    %8414 = vmatprep.subr.mxu0 0.0
    %8415 = vmatpush2.msra.mxu0 0.0
    %8416 = vmatprep.subr.mxu0 0.0
    %8417 = vmatpush2.msra.mxu0 0.0
    %8418 = vmatprep.subr.mxu0 0.0
    %8419 = vmatpush2.msra.mxu0 0.0
    %8420 = vmatprep.subr.mxu0 0.0
    %8421 = vmatpush2.msra.mxu0 0.0
    %8422 = vmatprep.subr.mxu0 0.0
    %8423 = vmatpush2.msra.mxu0 0.0
    %8424 = vmatprep.subr.mxu0 0.0
    %8425 = vmatpush2.msra.mxu0 0.0
    %8426 = vmatprep.subr.mxu0 0.0
    %8427 = vmatpush2.msra.mxu0 0.0
    %8428 = vmatprep.subr.mxu0 0.0
    %8429 = vmatpush2.msra.mxu0 0.0
    %8430 = vmatprep.subr.mxu0 0.0
    %8431 = vmatpush2.msra.mxu0 0.0
    %8432 = vmatprep.subr.mxu0 0.0
    %8433 = vmatpush2.msra.mxu0 0.0
    %8434 = vmatprep.subr.mxu0 0.0
    %8435 = vmatpush2.msra.mxu0 0.0
    %8436 = vmatprep.mubr.f32.mxu0 0.0
    %8437 = vmatmul.mubr.f32.gmra.mxu0 %v8370
    %v8438 = vpop.f32.mrf.mxu0
    %v8439 = vadd.f32 %v8367, %v8438
    %v8440 = vpop.f32.mrf.mxu0
    %8441 = vdwg.mxu0
    %v8442 = vmax.f32 %v8439, 0.0
    %v8443 = vld [vmem:[#allocation38] sm:$0xff]
    %v8444 = vld [vmem:[#allocation38 + $0x8] sm:$0xff]
    %v8445 = vld [vmem:[#allocation39] sm:$0x1]
    %v8447 = vlaneseq
    %v8448 = vshrl.u32 %v8447, 7
    %v8449 = vsub.s32 0, %v8448
    %v8450 = vrot.slane %v8445, %v8449
    %vm8452 = vcmask 130048
    %v8454 = vsel %vm8452, %v8442, 0
    %8456 = vmatprep.subr.mxu0 0.0
    %8457 = vmatpush1.msra.mxu0 0.0
    %8458 = vmatprep.subr.mxu0 0.0
    %8459 = vmatpush1.msra.mxu0 0.0
    %8460 = vmatprep.subr.mxu0 0.0
    %8461 = vmatpush1.msra.mxu0 0.0
    %8462 = vmatprep.subr.mxu0 0.0
    %8463 = vmatpush1.msra.mxu0 0.0
    %8464 = vmatprep.subr.mxu0 0.0
    %8465 = vmatpush1.msra.mxu0 0.0
    %8466 = vmatprep.subr.mxu0 0.0
    %8467 = vmatpush1.msra.mxu0 0.0
    %8468 = vmatprep.subr.mxu0 0.0
    %8469 = vmatpush1.msra.mxu0 0.0
    %8470 = vmatprep.subr.mxu0 0.0
    %8471 = vmatpush1.msra.mxu0 0.0
    %8472 = vmatprep.subr.mxu0 0.0
    %8473 = vmatpush1.msra.mxu0 0.0
    %8474 = vmatprep.subr.mxu0 0.0
    %8475 = vmatpush1.msra.mxu0 0.0
    %8476 = vmatprep.subr.mxu0 0.0
    %8477 = vmatpush1.msra.mxu0 0.0
    %8478 = vmatprep.subr.mxu0 0.0
    %8479 = vmatpush1.msra.mxu0 0.0
    %8480 = vmatprep.subr.mxu0 0.0
    %8481 = vmatpush1.msra.mxu0 0.0
    %8482 = vmatprep.subr.mxu0 0.0
    %8483 = vmatpush1.msra.mxu0 0.0
    %8484 = vmatprep.subr.mxu0 0.0
    %8485 = vmatpush1.msra.mxu0 %v8444
    %8486 = vmatprep.subr.mxu0 0.0
    %8487 = vmatpush1.msra.mxu0 %v8443
    %8488 = vmatprep.subr.mxu0 0.0
    %8489 = vmatpush2.msra.mxu0 0.0
    %8490 = vmatprep.subr.mxu0 0.0
    %8491 = vmatpush2.msra.mxu0 0.0
    %8492 = vmatprep.subr.mxu0 0.0
    %8493 = vmatpush2.msra.mxu0 0.0
    %8494 = vmatprep.subr.mxu0 0.0
    %8495 = vmatpush2.msra.mxu0 0.0
    %8496 = vmatprep.subr.mxu0 0.0
    %8497 = vmatpush2.msra.mxu0 0.0
    %8498 = vmatprep.subr.mxu0 0.0
    %8499 = vmatpush2.msra.mxu0 0.0
    %8500 = vmatprep.subr.mxu0 0.0
    %8501 = vmatpush2.msra.mxu0 0.0
    %8502 = vmatprep.subr.mxu0 0.0
    %8503 = vmatpush2.msra.mxu0 0.0
    %8504 = vmatprep.subr.mxu0 0.0
    %8505 = vmatpush2.msra.mxu0 0.0
    %8506 = vmatprep.subr.mxu0 0.0
    %8507 = vmatpush2.msra.mxu0 0.0
    %8508 = vmatprep.subr.mxu0 0.0
    %8509 = vmatpush2.msra.mxu0 0.0
    %8510 = vmatprep.subr.mxu0 0.0
    %8511 = vmatpush2.msra.mxu0 0.0
    %8512 = vmatprep.subr.mxu0 0.0
    %8513 = vmatpush2.msra.mxu0 0.0
    %8514 = vmatprep.subr.mxu0 0.0
    %8515 = vmatpush2.msra.mxu0 0.0
    %8516 = vmatprep.subr.mxu0 0.0
    %8517 = vmatpush2.msra.mxu0 0.0
    %8518 = vmatprep.subr.mxu0 0.0
    %8519 = vmatpush2.msra.mxu0 0.0
    %8520 = vmatprep.mubr.f32.mxu0 0.0
    %8521 = vmatmul.mubr.f32.gmra.mxu0 %v8454
    %v8522 = vpop.f32.mrf.mxu0
    %v8523 = vadd.f32 %v8450, %v8522
    %v8524 = vpop.f32.mrf.mxu0
    %8525 = vdwg.mxu0
    %v8526 = vmax.f32 %v8523, 0.0
    %v8527 = vld [vmem:[%s63] sm:$0xff]
    %v8528 = vld [vmem:[%s63 + $0x8] sm:$0xff]
    %v8529 = vld [vmem:[%s63 + $0x10] sm:$0xff]
    %v8530 = vld [vmem:[%s63 + $0x18] sm:$0xff]
    %v8531 = vld [vmem:[#allocation41] sm:$0x1]
    %v8533 = vlaneseq
    %v8534 = vshrl.u32 %v8533, 7
    %v8535 = vsub.s32 0, %v8534
    %v8536 = vrot.slane %v8531, %v8535
    %v8539 = vsel %vm590, %v8526, 0
    %8541 = vmatprep.subr.mxu0 0.0
    %8542 = vmatpush1.msra.mxu0 0.0
    %8543 = vmatprep.subr.mxu0 0.0
    %8544 = vmatpush1.msra.mxu0 0.0
    %8545 = vmatprep.subr.mxu0 0.0
    %8546 = vmatpush1.msra.mxu0 0.0
    %8547 = vmatprep.subr.mxu0 0.0
    %8548 = vmatpush1.msra.mxu0 0.0
    %8549 = vmatprep.subr.mxu0 0.0
    %8550 = vmatpush1.msra.mxu0 0.0
    %8551 = vmatprep.subr.mxu0 0.0
    %8552 = vmatpush1.msra.mxu0 0.0
    %8553 = vmatprep.subr.mxu0 0.0
    %8554 = vmatpush1.msra.mxu0 0.0
    %8555 = vmatprep.subr.mxu0 0.0
    %8556 = vmatpush1.msra.mxu0 0.0
    %8557 = vmatprep.subr.mxu0 0.0
    %8558 = vmatpush1.msra.mxu0 0.0
    %8559 = vmatprep.subr.mxu0 0.0
    %8560 = vmatpush1.msra.mxu0 0.0
    %8561 = vmatprep.subr.mxu0 0.0
    %8562 = vmatpush1.msra.mxu0 0.0
    %8563 = vmatprep.subr.mxu0 0.0
    %8564 = vmatpush1.msra.mxu0 0.0
    %8565 = vmatprep.subr.mxu0 0.0
    %8566 = vmatpush1.msra.mxu0 %v8530
    %8567 = vmatprep.subr.mxu0 0.0
    %8568 = vmatpush1.msra.mxu0 %v8529
    %8569 = vmatprep.subr.mxu0 0.0
    %8570 = vmatpush1.msra.mxu0 %v8528
    %8571 = vmatprep.subr.mxu0 0.0
    %8572 = vmatpush1.msra.mxu0 %v8527
    %8573 = vmatprep.subr.mxu0 0.0
    %8574 = vmatpush2.msra.mxu0 0.0
    %8575 = vmatprep.subr.mxu0 0.0
    %8576 = vmatpush2.msra.mxu0 0.0
    %8577 = vmatprep.subr.mxu0 0.0
    %8578 = vmatpush2.msra.mxu0 0.0
    %8579 = vmatprep.subr.mxu0 0.0
    %8580 = vmatpush2.msra.mxu0 0.0
    %8581 = vmatprep.subr.mxu0 0.0
    %8582 = vmatpush2.msra.mxu0 0.0
    %8583 = vmatprep.subr.mxu0 0.0
    %8584 = vmatpush2.msra.mxu0 0.0
    %8585 = vmatprep.subr.mxu0 0.0
    %8586 = vmatpush2.msra.mxu0 0.0
    %8587 = vmatprep.subr.mxu0 0.0
    %8588 = vmatpush2.msra.mxu0 0.0
    %8589 = vmatprep.subr.mxu0 0.0
    %8590 = vmatpush2.msra.mxu0 0.0
    %8591 = vmatprep.subr.mxu0 0.0
    %8592 = vmatpush2.msra.mxu0 0.0
    %8593 = vmatprep.subr.mxu0 0.0
    %8594 = vmatpush2.msra.mxu0 0.0
    %8595 = vmatprep.subr.mxu0 0.0
    %8596 = vmatpush2.msra.mxu0 0.0
    %8597 = vmatprep.subr.mxu0 0.0
    %8598 = vmatpush2.msra.mxu0 0.0
    %8599 = vmatprep.subr.mxu0 0.0
    %8600 = vmatpush2.msra.mxu0 0.0
    %8601 = vmatprep.subr.mxu0 0.0
    %8602 = vmatpush2.msra.mxu0 0.0
    %8603 = vmatprep.subr.mxu0 0.0
    %8604 = vmatpush2.msra.mxu0 0.0
    %8605 = vmatprep.mubr.f32.mxu0 0.0
    %8606 = vmatmul.mubr.f32.gmra.mxu0 %v8539
    %v8607 = vpop.f32.mrf.mxu0
    %v8608 = vadd.f32 %v8536, %v8607
    %v8609 = vpop.f32.mrf.mxu0
    %8610 = vdwg.mxu0
    %vm8611 = vcmask 25600
    %8612 = vst.msk [vmem:[#allocation42] sm:$0x3] %vm8611, %v8608
    // Predicated region
    $region226: #{lstm_model_abc_forward.1} parent=1 // pred_check
      _
    $region227: #{lstm_model_abc_forward.1} parent=1 // pred_check_branch
      %8614 = sbr.rel (0) target = $region229
    $region228: #{lstm_model_abc_forward.1} parent=1 // pred_region
      %s8616 = ssub.s32 32, 32
      %8617 = vsyncadd [#allocation8], %s8616
      %s8619 = sshll.u32 [#allocation42], 4
      %s8620 = int_to_ptr.vmem [resolvable:$true] %s8619
      %8622 = dma.vmem_to_hbm [thread:$0]  %s8620, 32, %s67, [#allocation8]
    $region229: #{lstm_model_abc_forward.1} parent=1 // pred_fallthru
      _
    // Predicated region
    $region230: #{lstm_model_abc_forward.1} parent=1 // pred_check
      _
    $region231: #{lstm_model_abc_forward.1} parent=1 // pred_check_branch
      %8624 = sbr.rel (0) target = $region233
    $region232: #{lstm_model_abc_forward.1} parent=1 // pred_region
      %8625 = dma.done [#allocation8], 32
    $region233: #{lstm_model_abc_forward.1} parent=1 // pred_fallthru
      _
    %8626 = vsyncpa [#allocation7], 1
    %8627 = vsyncpa [#allocation10], 1
    %8628 = vsyncpa [#allocation13], 1
    %8629 = vsyncpa [#allocation16], 1
    %8630 = vsyncpa [#allocation19], 1
    %8631 = vsyncpa [#allocation22], 1
    %8632 = vsyncpa [#allocation25], 1
    %8633 = vsyncpa [#allocation28], 1
    %8634 = vsyncpa [#allocation31], 1
    %8635 = vsyncpa [#allocation34], 1
    %8636 = vsyncpa [#allocation37], 1
    %8637 = vsyncpa [#allocation40], 1
    %8638 = vsyncpa [#allocation8], 1

</llo_original>
